<compile_context>
chip_gen: v5e
topology: v5e:2x2
jax: 0.10.0
libtpu: 0.0.40
codegen_flags: <defaults>
</compile_context>

<pallas_src>
import jax
import jax.numpy as jnp
from jax import lax
from jax.experimental import pallas as pl
from jax.experimental.pallas import tpu as pltpu


# -----------------------------------------------------------------------------
# Feature probes (computed once, outside the jitted model)
# -----------------------------------------------------------------------------
_BUFFERED_ONE = None
_CPARAMS = None


def _buffered_one_supported():
    """Probe whether BlockSpec(pipeline_mode=pl.Buffered(1)) works on this JAX."""
    global _BUFFERED_ONE
    if _BUFFERED_ONE is None:
        try:
            def k(x_ref, o_ref):
                o_ref[...] = x_ref[...] + 1.0

            x = jnp.zeros((8, 128), jnp.float32)
            out = pl.pallas_call(
                k,
                out_shape=jax.ShapeDtypeStruct((8, 128), jnp.float32),
                grid=(2,),
                in_specs=[pl.BlockSpec((8, 128), lambda i: (0, 0),
                                       pipeline_mode=pl.Buffered(1))],
                out_specs=pl.BlockSpec((8, 128), lambda i: (0, 0)),
            )(x)
            _BUFFERED_ONE = bool(jnp.allclose(jax.block_until_ready(out), 1.0))
        except Exception:
            _BUFFERED_ONE = False
    return _BUFFERED_ONE


def _compiler_params():
    """Grid semantics + explicit VMEM limit scaled to the actual chip."""
    global _CPARAMS
    if _CPARAMS is None:
        kwargs = dict(dimension_semantics=("parallel",))
        try:
            info = pltpu.get_tpu_info()
            cap = None
            for name in ("vmem_capacity_bytes", "vmem_size_bytes", "vmem_bytes"):
                cap = getattr(info, name, None)
                if cap:
                    break
            if cap:
                # leave ~25% headroom under the physical per-core VMEM
                # (v5e/v6e: 128 MiB -> 96 MiB limit; v7x: 64 MiB -> 48 MiB).
                kwargs["vmem_limit_bytes"] = int(cap) * 3 // 4
        except Exception:
            pass
        _CPARAMS = pltpu.CompilerParams(**kwargs)
    return _CPARAMS


# -----------------------------------------------------------------------------
# In-kernel building blocks
# -----------------------------------------------------------------------------
def _run_chain(t2, Hc, Wc, refs):
    """Apply R pre-activation bottleneck resblocks to t2 of shape (Hc*Wc, C) f32."""
    (s1, b1, w1, s2, b2, w9, s3, b3, w2) = refs
    R = s1.shape[0]
    Cb = w1.shape[2]

    def body(r, t):
        xres = t
        # stage 1: BN -> ReLU -> 1x1 conv (bf16 MXU, f32 accumulation)
        a = jnp.maximum(t * s1[r] + b1[r], 0.0)
        a = jnp.dot(a.astype(jnp.bfloat16), w1[r],
                    preferred_element_type=jnp.float32)              # (HW, Cb)
        # stage 2: BN -> ReLU -> 3x3 conv (pad 1) as THREE accumulating
        # K=3*Cb matmuls (one per kernel row kh).  Only the kw neighbourhood
        # (catw, 3*Cb lanes) is materialized; the kh shifts commute with the
        # matmul and are applied to the small Cb-wide f32 partial outputs.
        a = jnp.maximum(a * s2[r] + b2[r], 0.0).astype(jnp.bfloat16)
        a3 = a.reshape(Hc, Wc, Cb)
        zc = jnp.zeros((Hc, 1, Cb), jnp.bfloat16)
        left = jnp.concatenate([zc, a3[:, :Wc - 1, :]], axis=1)      # value @ w-1
        right = jnp.concatenate([a3[:, 1:, :], zc], axis=1)          # value @ w+1
        catw = jnp.concatenate([left, a3, right], axis=2)            # (Hc,Wc,3Cb)
        catw = catw.reshape(Hc * Wc, 3 * Cb)
        w9r = w9[r]                                                  # (9Cb, Cb)
        p0 = jnp.dot(catw, w9r[:3 * Cb],
                     preferred_element_type=jnp.float32).reshape(Hc, Wc, Cb)
        p1 = jnp.dot(catw, w9r[3 * Cb:6 * Cb],
                     preferred_element_type=jnp.float32).reshape(Hc, Wc, Cb)
        p2 = jnp.dot(catw, w9r[6 * Cb:],
                     preferred_element_type=jnp.float32).reshape(Hc, Wc, Cb)
        zr = jnp.zeros((1, Wc, Cb), jnp.float32)
        a = (jnp.concatenate([zr, p0[:Hc - 1]], axis=0)              # kh=0 @ h-1
             + p1                                                    # kh=1 @ h
             + jnp.concatenate([p2[1:], zr], axis=0))                # kh=2 @ h+1
        a = a.reshape(Hc * Wc, Cb)
        # stage 3: BN -> ReLU -> 1x1 conv
        a = jnp.maximum(a * s3[r] + b3[r], 0.0)
        a = jnp.dot(a.astype(jnp.bfloat16), w2[r],
                    preferred_element_type=jnp.float32)              # (HW, C)
        # identity residual + ReLU
        return jnp.maximum(a + xres, 0.0)

    if R == 1:
        return body(0, t2)
    # fori_loop (not a static Python loop) bounds live ranges / peak VMEM.
    return lax.fori_loop(0, R, body, t2)


# -----------------------------------------------------------------------------
# Pallas kernels
# -----------------------------------------------------------------------------
def _down_kernel(x_ref, sel_ref, s1, b1, w1, s2, b2, w9, s3, b3, w2, o_ref):
    """2x2 maxpool fused with the downsample resblock chain."""
    _, H, W, C = x_ref.shape
    Ho, Wo = H // 2, W // 2
    x = x_ref[0].astype(jnp.float32)                     # (H, W, C)
    # row-pair max via an aligned major-dim reshape
    xr = x.reshape(Ho, 2 * W, C)
    m = jnp.maximum(xr[:, :W, :], xr[:, W:, :])          # (Ho, W, C)
    # column-pair max via a shift-by-one compare (the wrapped last column is
    # junk but never selected), then ONE even-column 0/1 selection matmul to
    # compact W -> Wo (half the MXU work of selecting even and odd separately).
    msh = jnp.concatenate([m[:, 1:, :], m[:, :1, :]], axis=1)
    ms = jnp.maximum(m, msh).astype(jnp.bfloat16)        # (Ho, W, C)
    sel = jnp.broadcast_to(sel_ref[...], (Ho, Wo, W))    # sel[v, w] = (w == 2v)
    t2 = jnp.einsum('hvw,hwc->hvc', sel, ms,
                    preferred_element_type=jnp.float32).reshape(Ho * Wo, C)
    t2 = _run_chain(t2, Ho, Wo, (s1, b1, w1, s2, b2, w9, s3, b3, w2))
    o_ref[0] = t2.reshape(Ho, Wo, C).astype(o_ref.dtype)


def _merge_kernel(x_ref, y_ref, sel_ref,
                  ss1, sb1, sw1, ss2, sb2, sw9, ss3, sb3, sw2,
                  us1, ub1, uw1, us2, ub2, uw9, us3, ub3, uw2,
                  o_ref):
    """shortcut chain (full res) + upsample chain (half res) + nearest 2x + add."""
    _, H, W, C = x_ref.shape
    _, Hs, Ws, _ = y_ref.shape
    # shortcut chain at full resolution
    sc = x_ref[0].astype(jnp.float32).reshape(H * W, C)
    sc = _run_chain(sc, H, W, (ss1, sb1, sw1, ss2, sb2, sw9, ss3, sb3, sw2))
    # upsample chain at half resolution
    u2 = y_ref[0].astype(jnp.float32).reshape(Hs * Ws, C)
    u2 = _run_chain(u2, Hs, Ws, (us1, ub1, uw1, us2, ub2, uw9, us3, ub3, uw2))
    # nearest 2x upsample: W-interleave via ONE batched 0/1 selection matmul
    # at half height, then an H-repeat done as a layout-preserving major-dim
    # broadcast folded into the residual add (no 2W-wide selector matmul).
    u3 = u2.reshape(Hs, Ws, C).astype(jnp.bfloat16)
    sel = jnp.broadcast_to(sel_ref[...], (Hs, W, Ws))    # sel[a, v] = (a//2 == v)
    uw = jnp.einsum('hav,hvc->hac', sel, u3,
                    preferred_element_type=jnp.float32)  # (Hs, W, C)
    out = sc.reshape(Hs, 2, W, C) + uw[:, None, :, :]    # H-repeat by broadcast
    o_ref[0] = out.reshape(H, W, C).astype(o_ref.dtype)


# -----------------------------------------------------------------------------
# Pallas wrappers
# -----------------------------------------------------------------------------
def _rep_spec(shape):
    """Spec for an operand replicated across the batch grid (constant block)."""
    nd = len(shape)
    idx = lambda n, _nd=nd: (0,) * _nd
    if _buffered_one_supported():
        # constant blocks: single-buffer to halve their VMEM footprint vs the
        # default double-buffering (matters most on v7x 64 MiB / v5e 16 MiB).
        return pl.BlockSpec(shape, idx, pipeline_mode=pl.Buffered(1))
    return pl.BlockSpec(shape, idx)


def _pool_selector(W):
    """(W//2, W) bf16 0/1 matrix selecting even columns: sel[v, w] = (w == 2v)."""
    Wo = W // 2
    v = jnp.arange(Wo)[:, None]
    w = jnp.arange(W)[None, :]
    return (w == 2 * v).astype(jnp.bfloat16)


def _upsample_selector(W, Ws):
    """(W, Ws) bf16 0/1 matrix implementing out[a] = u[a // 2]."""
    a = jnp.arange(W)[:, None]
    v = jnp.arange(Ws)[None, :]
    return ((a // 2) == v).astype(jnp.bfloat16)


def _down_call(x, chain):
    N, H, W, C = x.shape
    Ho, Wo = H // 2, W // 2
    sel = _pool_selector(W)
    in_specs = ([pl.BlockSpec((1, H, W, C), lambda n: (n, 0, 0, 0)),
                 _rep_spec(sel.shape)]
                + [_rep_spec(a.shape) for a in chain])
    return pl.pallas_call(
        _down_kernel,
        # inter-level intermediate stored bf16 (halves HBM traffic; values are
        # already bf16-rounded by the pooling selection matmul).
        out_shape=jax.ShapeDtypeStruct((N, Ho, Wo, C), jnp.bfloat16),
        grid=(N,),
        in_specs=in_specs,
        out_specs=pl.BlockSpec((1, Ho, Wo, C), lambda n: (n, 0, 0, 0)),
        compiler_params=_compiler_params(),
    )(x, sel, *chain)


def _merge_call(x, y, short_chain, up_chain, out_dtype):
    N, H, W, C = x.shape
    _, Hs, Ws, _ = y.shape
    sel = _upsample_selector(W, Ws)
    in_specs = ([pl.BlockSpec((1, H, W, C), lambda n: (n, 0, 0, 0)),
                 pl.BlockSpec((1, Hs, Ws, C), lambda n: (n, 0, 0, 0)),
                 _rep_spec(sel.shape)]
                + [_rep_spec(a.shape) for a in short_chain]
                + [_rep_spec(a.shape) for a in up_chain])
    return pl.pallas_call(
        _merge_kernel,
        out_shape=jax.ShapeDtypeStruct((N, H, W, C), out_dtype),
        grid=(N,),
        in_specs=in_specs,
        out_specs=pl.BlockSpec((1, H, W, C), lambda n: (n, 0, 0, 0)),
        compiler_params=_compiler_params(),
    )(x, y, sel, *short_chain, *up_chain)


def hourglass2d_forward(x, params, out_dtype=jnp.float32):
    """Recursive Hourglass2d forward. x: (N, H, W, C) NHWC."""
    _, H, W, _ = x.shape
    if H % 2 or W % 2:
        # TODO(synk): general F.interpolate for odd sizes not implemented.
        raise ValueError("Pallas Hourglass2d requires even H and W per level")
    y = _down_call(x, params["down"])
    if params["inner"] is not None:
        y = hourglass2d_forward(y, params["inner"], out_dtype=jnp.bfloat16)
    return _merge_call(x, y, params["short"], params["up"], out_dtype)


# -----------------------------------------------------------------------------
# Deterministic parameter init (BatchNorm folded to inference affine)
# -----------------------------------------------------------------------------
def _init_resblock_params(key, C):
    Cb = C // 2
    ks = jax.random.split(key, 6)

    def bn_fold(k, c):
        kg, kb, km, kv = jax.random.split(k, 4)
        gamma = 1.0 + 0.1 * jax.random.normal(kg, (c,), jnp.float32)
        beta = 0.1 * jax.random.normal(kb, (c,), jnp.float32)
        mean = 0.1 * jax.random.normal(km, (c,), jnp.float32)
        var = jax.random.uniform(kv, (c,), jnp.float32, minval=0.5, maxval=1.5)
        scale = gamma / jnp.sqrt(var + 1e-5)
        bias = beta - mean * scale
        return scale.reshape(1, c), bias.reshape(1, c)

    s1, b1 = bn_fold(ks[0], C)
    s2, b2 = bn_fold(ks[1], Cb)
    s3, b3 = bn_fold(ks[2], Cb)
    w1 = jax.random.normal(ks[3], (C, Cb), jnp.float32) * (C ** -0.5)
    w3 = jax.random.normal(ks[4], (3, 3, Cb, Cb), jnp.float32) * ((9 * Cb) ** -0.5)
    w2 = jax.random.normal(ks[5], (Cb, C), jnp.float32) * (Cb ** -0.5)
    return dict(s1=s1, b1=b1, w1=w1, s2=s2, b2=b2, w3=w3, s3=s3, b3=b3, w2=w2)


def init_hourglass_params(key, C, num_nested, num_resblock=1):
    n_up = num_resblock if num_nested > 1 else num_resblock * 2
    kd, ku, ks, ki = jax.random.split(key, 4)
    return {
        "down": [_init_resblock_params(k, C)
                 for k in jax.random.split(kd, num_resblock)],
        "up": [_init_resblock_params(k, C)
               for k in jax.random.split(ku, n_up)],
        "short": [_init_resblock_params(k, C)
                  for k in jax.random.split(ks, num_resblock)],
        # PyTorch nests Hourglass2d(hidden_dim, num_nested-1) with default
        # num_resblock=1 for inner levels.
        "inner": (init_hourglass_params(ki, C, num_nested - 1, 1)
                  if num_nested > 1 else None),
    }


def _prepare_chain(chain):
    """Stack a resblock chain along a leading R axis; cast weights to bf16."""
    Cb = chain[0]["w3"].shape[2]
    s1 = jnp.stack([p["s1"] for p in chain]).astype(jnp.float32)      # (R,1,C)
    b1 = jnp.stack([p["b1"] for p in chain]).astype(jnp.float32)
    w1 = jnp.stack([p["w1"] for p in chain]).astype(jnp.bfloat16)     # (R,C,Cb)
    s2 = jnp.stack([p["s2"] for p in chain]).astype(jnp.float32)
    b2 = jnp.stack([p["b2"] for p in chain]).astype(jnp.float32)
    w9 = jnp.stack([p["w3"].reshape(9 * Cb, Cb)
                    for p in chain]).astype(jnp.bfloat16)             # (R,9Cb,Cb)
    s3 = jnp.stack([p["s3"] for p in chain]).astype(jnp.float32)
    b3 = jnp.stack([p["b3"] for p in chain]).astype(jnp.float32)
    w2 = jnp.stack([p["w2"] for p in chain]).astype(jnp.bfloat16)     # (R,Cb,C)
    return (s1, b1, w1, s2, b2, w9, s3, b3, w2)


def prepare_kernel_params(raw):
    if raw is None:
        return None
    return {
        "down": _prepare_chain(raw["down"]),
        "up": _prepare_chain(raw["up"]),
        "short": _prepare_chain(raw["short"]),
        "inner": prepare_kernel_params(raw["inner"]),
    }


# -----------------------------------------------------------------------------
# Pure-JAX reference (mirrors the kernel's bf16 matmul / rounding points)
# -----------------------------------------------------------------------------
def _round_bf16(t):
    return t.astype(jnp.bfloat16).astype(jnp.float32)


def _ref_resblock(x, p):
    def bn_relu(t, s, b):
        return jnp.maximum(t * s[0] + b[0], 0.0)

    t = bn_relu(x, p["s1"], p["b1"])
    t = jnp.einsum("nhwc,cd->nhwd", t.astype(jnp.bfloat16),
                   p["w1"].astype(jnp.bfloat16),
                   preferred_element_type=jnp.float32)
    t = bn_relu(t, p["s2"], p["b2"])
    t = jax.lax.conv_general_dilated(
        t.astype(jnp.bfloat16), p["w3"].astype(jnp.bfloat16), (1, 1), "SAME",
        dimension_numbers=("NHWC", "HWIO", "NHWC"),
        preferred_element_type=jnp.float32)
    t = bn_relu(t, p["s3"], p["b3"])
    t = jnp.einsum("nhwc,cd->nhwd", t.astype(jnp.bfloat16),
                   p["w2"].astype(jnp.bfloat16),
                   preferred_element_type=jnp.float32)
    return jnp.maximum(t + x, 0.0)


def _ref_hourglass(x, params, outer=True):
    y = jax.lax.reduce_window(x, -jnp.inf, jax.lax.max,
                              (1, 2, 2, 1), (1, 2, 2, 1), "VALID")
    y = _round_bf16(y)                      # kernel pools via bf16 selection
    for p in params["down"]:
        y = _ref_resblock(y, p)
    y = _round_bf16(y)                      # down-call output stored in bf16
    if params["inner"] is not None:
        y = _ref_hourglass(y, params["inner"], outer=False)
    for p in params["up"]:
        y = _ref_resblock(y, p)
    s = x
    for p in params["short"]:
        s = _ref_resblock(s, p)
    y = _round_bf16(y)                      # kernel upsamples via bf16 selection
    y = jnp.repeat(jnp.repeat(y, 2, axis=1), 2, axis=2)   # nearest 2x
    out = y + s
    if not outer:
        out = _round_bf16(out)              # inner merge output stored in bf16
    return out


# -----------------------------------------------------------------------------
# main
# -----------------------------------------------------------------------------
if __name__ == "__main__":
    key = jax.random.PRNGKey(0)
    kx, kp = jax.random.split(key)

    N, C, H, W = 2, 32, 16, 16            # NCHW input like the PyTorch module
    num_nested, num_resblock = 2, 1

    x_nchw = jax.random.normal(kx, (N, C, H, W), jnp.float32)
    raw_params = init_hourglass_params(kp, C, num_nested, num_resblock)
    kparams = prepare_kernel_params(raw_params)

    # run feature probes once, outside the jitted model
    _buffered_one_supported()
    _compiler_params()

    @jax.jit
    def model(x_nchw, kparams):
        x = jnp.transpose(x_nchw, (0, 2, 3, 1))          # NCHW -> NHWC
        y = hourglass2d_forward(x, kparams)
        return jnp.transpose(y, (0, 3, 1, 2))            # NHWC -> NCHW
        # TODO(synk): keep the surrounding model NHWC end-to-end to drop these
        # two full-tensor HBM round trips.

    @jax.jit
    def ref_model(x_nchw, raw):
        x = jnp.transpose(x_nchw, (0, 2, 3, 1))
        y = _ref_hourglass(x, raw)
        return jnp.transpose(y, (0, 3, 1, 2))

    out = jax.block_until_ready(model(x_nchw, kparams))
    ref = jax.block_until_ready(ref_model(x_nchw, raw_params))

    assert out.shape == (N, C, H, W), out.shape
    assert bool(jnp.all(jnp.isfinite(out)))
    max_err = float(jnp.max(jnp.abs(out - ref)))
    assert max_err < 1e-2, f"max abs error vs reference: {max_err}"

    print("KERNEL_OK")
</pallas_src>

<mosaic_0001>
module attributes {stable_mosaic.version = 11 : i64} {
  func.func @k(%arg0: i32, %arg1: memref<8x128xf32, #tpu.memory_space<vmem>>, %arg2: memref<8x128xf32, #tpu.memory_space<vmem>>) attributes {dimension_semantics = [#tpu.dimension_semantics<arbitrary>], iteration_bounds = array<i64: 2>, scalar_prefetch = 0 : i64, scratch_operands = 0 : i64, tpu.core_type = #tpu.core_type<tc>, window_params = [{pipeline_mode = #tpu.pipeline_mode<synchronous>, transform_indices = @transform_0, window_bounds = array<i64: 8, 128>}, {pipeline_mode = #tpu.pipeline_mode<synchronous>, transform_indices = @transform_1, window_bounds = array<i64: 8, 128>}]} {
    %c0 = arith.constant 0 : index
    %c0_0 = arith.constant 0 : index
    %0 = vector.load %arg1[%c0, %c0_0] : memref<8x128xf32, #tpu.memory_space<vmem>>, vector<8x128xf32>
    %cst = arith.constant 1.000000e+00 : f32
    %1 = vector.broadcast %cst : f32 to vector<8x128xf32>
    %2 = arith.addf %0, %1 : vector<8x128xf32>
    %c0_1 = arith.constant 0 : index
    %c0_2 = arith.constant 0 : index
    %3 = vector.load %arg2[%c0_1, %c0_2] : memref<8x128xf32, #tpu.memory_space<vmem>>, vector<8x128xf32>
    tpu.vector_store %arg2[%c0_1, %c0_2], %2 {strides = array<i32>} : memref<8x128xf32, #tpu.memory_space<vmem>>, vector<8x128xf32>,
    return
  }
  func.func @transform_0(%arg0: i32) -> (i32, i32) {
    %c0_i32 = arith.constant 0 : i32
    %c0_i32_0 = arith.constant 0 : i32
    %c0_i32_1 = arith.constant 0 : i32
    return %c0_i32, %c0_i32_0 : i32, i32
  }
  func.func @transform_1(%arg0: i32) -> (i32, i32) {
    %c0_i32 = arith.constant 0 : i32
    %c0_i32_0 = arith.constant 0 : i32
    %c0_i32_1 = arith.constant 0 : i32
    return %c0_i32, %c0_i32_0 : i32, i32
  }
}

module attributes {stable_mosaic.version = 11 : i64} {
  func.func @_down_kernel(%arg0: i32, %arg1: memref<1x16x16x32xf32, #tpu.memory_space<vmem>>, %arg2: memref<8x16xbf16, #tpu.memory_space<vmem>>, %arg3: memref<1x1x32xf32, #tpu.memory_space<vmem>>, %arg4: memref<1x1x32xf32, #tpu.memory_space<vmem>>, %arg5: memref<1x32x16xbf16, #tpu.memory_space<vmem>>, %arg6: memref<1x1x16xf32, #tpu.memory_space<vmem>>, %arg7: memref<1x1x16xf32, #tpu.memory_space<vmem>>, %arg8: memref<1x144x16xbf16, #tpu.memory_space<vmem>>, %arg9: memref<1x1x16xf32, #tpu.memory_space<vmem>>, %arg10: memref<1x1x16xf32, #tpu.memory_space<vmem>>, %arg11: memref<1x16x32xbf16, #tpu.memory_space<vmem>>, %arg12: memref<1x8x8x32xbf16, #tpu.memory_space<vmem>>) attributes {dimension_semantics = [#tpu.dimension_semantics<parallel>], iteration_bounds = array<i64: 2>, scalar_prefetch = 0 : i64, scratch_operands = 0 : i64, tpu.core_type = #tpu.core_type<tc>, window_params = [{transform_indices = @transform_0, window_bounds = array<i64: 1, 16, 16, 32>}, {pipeline_mode = #tpu.pipeline_mode<synchronous>, transform_indices = @transform_1, window_bounds = array<i64: 8, 16>}, {pipeline_mode = #tpu.pipeline_mode<synchronous>, transform_indices = @transform_2, window_bounds = array<i64: 1, 1, 32>}, {pipeline_mode = #tpu.pipeline_mode<synchronous>, transform_indices = @transform_3, window_bounds = array<i64: 1, 1, 32>}, {pipeline_mode = #tpu.pipeline_mode<synchronous>, transform_indices = @transform_4, window_bounds = array<i64: 1, 32, 16>}, {pipeline_mode = #tpu.pipeline_mode<synchronous>, transform_indices = @transform_5, window_bounds = array<i64: 1, 1, 16>}, {pipeline_mode = #tpu.pipeline_mode<synchronous>, transform_indices = @transform_6, window_bounds = array<i64: 1, 1, 16>}, {pipeline_mode = #tpu.pipeline_mode<synchronous>, transform_indices = @transform_7, window_bounds = array<i64: 1, 144, 16>}, {pipeline_mode = #tpu.pipeline_mode<synchronous>, transform_indices = @transform_8, window_bounds = array<i64: 1, 1, 16>}, {pipeline_mode = #tpu.pipeline_mode<synchronous>, transform_indices = @transform_9, window_bounds = array<i64: 1, 1, 16>}, {pipeline_mode = #tpu.pipeline_mode<synchronous>, transform_indices = @transform_10, window_bounds = array<i64: 1, 16, 32>}, {transform_indices = @transform_11, window_bounds = array<i64: 1, 8, 8, 32>}]} {
    %c0 = arith.constant 0 : index
    %c0_0 = arith.constant 0 : index
    %c0_1 = arith.constant 0 : index
    %c0_2 = arith.constant 0 : index
    %0 = vector.load %arg1[%c0, %c0_0, %c0_1, %c0_2] : memref<1x16x16x32xf32, #tpu.memory_space<vmem>>, vector<1x16x16x32xf32>
    %1 = vector.shape_cast %0 : vector<1x16x16x32xf32> to vector<16x16x32xf32>
    %2 = vector.shape_cast %1 : vector<16x16x32xf32> to vector<8x32x32xf32>
    %3 = vector.extract_strided_slice %2 {offsets = [0, 0, 0], sizes = [8, 16, 32], strides = [1, 1, 1]} : vector<8x32x32xf32> to vector<8x16x32xf32>
    %4 = vector.extract_strided_slice %2 {offsets = [0, 16, 0], sizes = [8, 16, 32], strides = [1, 1, 1]} : vector<8x32x32xf32> to vector<8x16x32xf32>
    %5 = arith.maximumf %3, %4 : vector<8x16x32xf32>
    %6 = vector.extract_strided_slice %5 {offsets = [0, 1, 0], sizes = [8, 15, 32], strides = [1, 1, 1]} : vector<8x16x32xf32> to vector<8x15x32xf32>
    %7 = vector.extract_strided_slice %5 {offsets = [0, 0, 0], sizes = [8, 1, 32], strides = [1, 1, 1]} : vector<8x16x32xf32> to vector<8x1x32xf32>
    %8 = tpu.concatenate %6, %7 in 1 : vector<8x15x32xf32>, vector<8x1x32xf32> -> vector<8x16x32xf32>
    %9 = arith.maximumf %5, %8 : vector<8x16x32xf32>
    %10 = arith.truncf %9 : vector<8x16x32xf32> to vector<8x16x32xbf16>
    %c0_3 = arith.constant 0 : index
    %c0_4 = arith.constant 0 : index
    %11 = vector.load %arg2[%c0_3, %c0_4] : memref<8x16xbf16, #tpu.memory_space<vmem>>, vector<8x16xbf16>
    %12 = vector.shape_cast %11 : vector<8x16xbf16> to vector<1x8x16xbf16>
    %13 = vector.broadcast %12 : vector<1x8x16xbf16> to vector<8x8x16xbf16>
    "tpu.trace_start"() <{level = 10 : i32, message = "hvw,hwc->hvc"}> : () -> ()
    %cst = arith.constant dense<0.000000e+00> : vector<8x8x32xf32>
    %14 = tpu.matmul %13, %10, %cst {dimension_numbers = #tpu.dot_dimension_numbers<[2], [1], [1], [2], [0, 0, 0, 1, 1, 2], [0], [0]>} : vector<8x8x16xbf16>, vector<8x16x32xbf16>, vector<8x8x32xf32> -> vector<8x8x32xf32>
    "tpu.trace_stop"() : () -> ()
    %15 = vector.shape_cast %14 : vector<8x8x32xf32> to vector<64x32xf32>
    %c0_5 = arith.constant 0 : index
    %c0_6 = arith.constant 0 : index
    %c0_7 = arith.constant 0 : index
    %16 = vector.load %arg3[%c0_5, %c0_6, %c0_7] : memref<1x1x32xf32, #tpu.memory_space<vmem>>, vector<1x1x32xf32>
    %17 = vector.shape_cast %16 : vector<1x1x32xf32> to vector<1x32xf32>
    %18 = vector.broadcast %17 : vector<1x32xf32> to vector<64x32xf32>
    %19 = arith.mulf %15, %18 : vector<64x32xf32>
    %c0_8 = arith.constant 0 : index
    %c0_9 = arith.constant 0 : index
    %c0_10 = arith.constant 0 : index
    %20 = vector.load %arg4[%c0_8, %c0_9, %c0_10] : memref<1x1x32xf32, #tpu.memory_space<vmem>>, vector<1x1x32xf32>
    %21 = vector.shape_cast %20 : vector<1x1x32xf32> to vector<1x32xf32>
    %22 = vector.broadcast %21 : vector<1x32xf32> to vector<64x32xf32>
    %23 = arith.addf %19, %22 : vector<64x32xf32>
    %cst_11 = arith.constant 0.000000e+00 : f32
    %24 = vector.broadcast %cst_11 : f32 to vector<64x32xf32>
    %25 = arith.maximumf %23, %24 : vector<64x32xf32>
    %26 = arith.truncf %25 : vector<64x32xf32> to vector<64x32xbf16>
    %c0_12 = arith.constant 0 : index
    %c0_13 = arith.constant 0 : index
    %c0_14 = arith.constant 0 : index
    %27 = vector.load %arg5[%c0_12, %c0_13, %c0_14] : memref<1x32x16xbf16, #tpu.memory_space<vmem>>, vector<1x32x16xbf16>
    %28 = vector.shape_cast %27 : vector<1x32x16xbf16> to vector<32x16xbf16>
    %cst_15 = arith.constant dense<0.000000e+00> : vector<64x16xf32>
    %29 = tpu.matmul %26, %28, %cst_15 {dimension_numbers = #tpu.dot_dimension_numbers<[1], [0], [0], [1], [0, 0, 1, 1], [], []>} : vector<64x32xbf16>, vector<32x16xbf16>, vector<64x16xf32> -> vector<64x16xf32>
    %c0_16 = arith.constant 0 : index
    %c0_17 = arith.constant 0 : index
    %c0_18 = arith.constant 0 : index
    %30 = vector.load %arg6[%c0_16, %c0_17, %c0_18] : memref<1x1x16xf32, #tpu.memory_space<vmem>>, vector<1x1x16xf32>
    %31 = vector.shape_cast %30 : vector<1x1x16xf32> to vector<1x16xf32>
    %32 = vector.broadcast %31 : vector<1x16xf32> to vector<64x16xf32>
    %33 = arith.mulf %29, %32 : vector<64x16xf32>
    %c0_19 = arith.constant 0 : index
    %c0_20 = arith.constant 0 : index
    %c0_21 = arith.constant 0 : index
    %34 = vector.load %arg7[%c0_19, %c0_20, %c0_21] : memref<1x1x16xf32, #tpu.memory_space<vmem>>, vector<1x1x16xf32>
    %35 = vector.shape_cast %34 : vector<1x1x16xf32> to vector<1x16xf32>
    %36 = vector.broadcast %35 : vector<1x16xf32> to vector<64x16xf32>
    %37 = arith.addf %33, %36 : vector<64x16xf32>
    %cst_22 = arith.constant 0.000000e+00 : f32
    %38 = vector.broadcast %cst_22 : f32 to vector<64x16xf32>
    %39 = arith.maximumf %37, %38 : vector<64x16xf32>
    %40 = arith.truncf %39 : vector<64x16xf32> to vector<64x16xbf16>
    %41 = vector.shape_cast %40 : vector<64x16xbf16> to vector<8x8x16xbf16>
    %cst_23 = arith.constant 0.000000e+00 : bf16
    %42 = vector.broadcast %cst_23 : bf16 to vector<8x1x16xbf16>
    %43 = vector.extract_strided_slice %41 {offsets = [0, 0, 0], sizes = [8, 7, 16], strides = [1, 1, 1]} : vector<8x8x16xbf16> to vector<8x7x16xbf16>
    %44 = tpu.concatenate %42, %43 in 1 : vector<8x1x16xbf16>, vector<8x7x16xbf16> -> vector<8x8x16xbf16>
    %45 = vector.extract_strided_slice %41 {offsets = [0, 1, 0], sizes = [8, 7, 16], strides = [1, 1, 1]} : vector<8x8x16xbf16> to vector<8x7x16xbf16>
    %46 = tpu.concatenate %45, %42 in 1 : vector<8x7x16xbf16>, vector<8x1x16xbf16> -> vector<8x8x16xbf16>
    %47 = tpu.concatenate %44, %41, %46 in 2 : vector<8x8x16xbf16>, vector<8x8x16xbf16>, vector<8x8x16xbf16> -> vector<8x8x48xbf16>
    %48 = vector.shape_cast %47 : vector<8x8x48xbf16> to vector<64x48xbf16>
    %c0_24 = arith.constant 0 : index
    %c0_25 = arith.constant 0 : index
    %c0_26 = arith.constant 0 : index
    %49 = vector.load %arg8[%c0_24, %c0_25, %c0_26] : memref<1x144x16xbf16, #tpu.memory_space<vmem>>, vector<1x144x16xbf16>
    %50 = vector.shape_cast %49 : vector<1x144x16xbf16> to vector<144x16xbf16>
    %51 = vector.extract_strided_slice %50 {offsets = [0, 0], sizes = [48, 16], strides = [1, 1]} : vector<144x16xbf16> to vector<48x16xbf16>
    %cst_27 = arith.constant dense<0.000000e+00> : vector<64x16xf32>
    %52 = tpu.matmul %48, %51, %cst_27 {dimension_numbers = #tpu.dot_dimension_numbers<[1], [0], [0], [1], [0, 0, 1, 1], [], []>} : vector<64x48xbf16>, vector<48x16xbf16>, vector<64x16xf32> -> vector<64x16xf32>
    %53 = vector.shape_cast %52 : vector<64x16xf32> to vector<8x8x16xf32>
    %54 = vector.extract_strided_slice %50 {offsets = [48, 0], sizes = [48, 16], strides = [1, 1]} : vector<144x16xbf16> to vector<48x16xbf16>
    %cst_28 = arith.constant dense<0.000000e+00> : vector<64x16xf32>
    %55 = tpu.matmul %48, %54, %cst_28 {dimension_numbers = #tpu.dot_dimension_numbers<[1], [0], [0], [1], [0, 0, 1, 1], [], []>} : vector<64x48xbf16>, vector<48x16xbf16>, vector<64x16xf32> -> vector<64x16xf32>
    %56 = vector.shape_cast %55 : vector<64x16xf32> to vector<8x8x16xf32>
    %57 = vector.extract_strided_slice %50 {offsets = [96, 0], sizes = [48, 16], strides = [1, 1]} : vector<144x16xbf16> to vector<48x16xbf16>
    %cst_29 = arith.constant dense<0.000000e+00> : vector<64x16xf32>
    %58 = tpu.matmul %48, %57, %cst_29 {dimension_numbers = #tpu.dot_dimension_numbers<[1], [0], [0], [1], [0, 0, 1, 1], [], []>} : vector<64x48xbf16>, vector<48x16xbf16>, vector<64x16xf32> -> vector<64x16xf32>
    %59 = vector.shape_cast %58 : vector<64x16xf32> to vector<8x8x16xf32>
    %cst_30 = arith.constant 0.000000e+00 : f32
    %60 = vector.broadcast %cst_30 : f32 to vector<1x8x16xf32>
    %61 = vector.extract_strided_slice %53 {offsets = [0, 0, 0], sizes = [7, 8, 16], strides = [1, 1, 1]} : vector<8x8x16xf32> to vector<7x8x16xf32>
    %62 = tpu.concatenate %60, %61 in 0 : vector<1x8x16xf32>, vector<7x8x16xf32> -> vector<8x8x16xf32>
    %63 = arith.addf %62, %56 : vector<8x8x16xf32>
    %64 = vector.extract_strided_slice %59 {offsets = [1, 0, 0], sizes = [7, 8, 16], strides = [1, 1, 1]} : vector<8x8x16xf32> to vector<7x8x16xf32>
    %65 = tpu.concatenate %64, %60 in 0 : vector<7x8x16xf32>, vector<1x8x16xf32> -> vector<8x8x16xf32>
    %66 = arith.addf %63, %65 : vector<8x8x16xf32>
    %67 = vector.shape_cast %66 : vector<8x8x16xf32> to vector<64x16xf32>
    %c0_31 = arith.constant 0 : index
    %c0_32 = arith.constant 0 : index
    %c0_33 = arith.constant 0 : index
    %68 = vector.load %arg9[%c0_31, %c0_32, %c0_33] : memref<1x1x16xf32, #tpu.memory_space<vmem>>, vector<1x1x16xf32>
    %69 = vector.shape_cast %68 : vector<1x1x16xf32> to vector<1x16xf32>
    %70 = vector.broadcast %69 : vector<1x16xf32> to vector<64x16xf32>
    %71 = arith.mulf %67, %70 : vector<64x16xf32>
    %c0_34 = arith.constant 0 : index
    %c0_35 = arith.constant 0 : index
    %c0_36 = arith.constant 0 : index
    %72 = vector.load %arg10[%c0_34, %c0_35, %c0_36] : memref<1x1x16xf32, #tpu.memory_space<vmem>>, vector<1x1x16xf32>
    %73 = vector.shape_cast %72 : vector<1x1x16xf32> to vector<1x16xf32>
    %74 = vector.broadcast %73 : vector<1x16xf32> to vector<64x16xf32>
    %75 = arith.addf %71, %74 : vector<64x16xf32>
    %cst_37 = arith.constant 0.000000e+00 : f32
    %76 = vector.broadcast %cst_37 : f32 to vector<64x16xf32>
    %77 = arith.maximumf %75, %76 : vector<64x16xf32>
    %78 = arith.truncf %77 : vector<64x16xf32> to vector<64x16xbf16>
    %c0_38 = arith.constant 0 : index
    %c0_39 = arith.constant 0 : index
    %c0_40 = arith.constant 0 : index
    %79 = vector.load %arg11[%c0_38, %c0_39, %c0_40] : memref<1x16x32xbf16, #tpu.memory_space<vmem>>, vector<1x16x32xbf16>
    %80 = vector.shape_cast %79 : vector<1x16x32xbf16> to vector<16x32xbf16>
    %cst_41 = arith.constant dense<0.000000e+00> : vector<64x32xf32>
    %81 = tpu.matmul %78, %80, %cst_41 {dimension_numbers = #tpu.dot_dimension_numbers<[1], [0], [0], [1], [0, 0, 1, 1], [], []>} : vector<64x16xbf16>, vector<16x32xbf16>, vector<64x32xf32> -> vector<64x32xf32>
    %82 = arith.addf %81, %15 : vector<64x32xf32>
    %cst_42 = arith.constant 0.000000e+00 : f32
    %83 = vector.broadcast %cst_42 : f32 to vector<64x32xf32>
    %84 = arith.maximumf %82, %83 : vector<64x32xf32>
    %85 = vector.shape_cast %84 : vector<64x32xf32> to vector<8x8x32xf32>
    %86 = arith.truncf %85 : vector<8x8x32xf32> to vector<8x8x32xbf16>
    %c0_43 = arith.constant 0 : index
    %c0_44 = arith.constant 0 : index
    %c0_45 = arith.constant 0 : index
    %c0_46 = arith.constant 0 : index
    %87 = vector.load %arg12[%c0_43, %c0_44, %c0_45, %c0_46] : memref<1x8x8x32xbf16, #tpu.memory_space<vmem>>, vector<1x8x8x32xbf16>
    %88 = vector.shape_cast %87 : vector<1x8x8x32xbf16> to vector<8x8x32xbf16>
    %89 = vector.shape_cast %86 : vector<8x8x32xbf16> to vector<1x8x8x32xbf16>
    tpu.vector_store %arg12[%c0_43, %c0_44, %c0_45, %c0_46], %89 {strides = array<i32>} : memref<1x8x8x32xbf16, #tpu.memory_space<vmem>>, vector<1x8x8x32xbf16>,
    return
  }
  func.func @transform_0(%arg0: i32) -> (i32, i32, i32, i32) {
    %c0_i32 = arith.constant 0 : i32
    %c0_i32_0 = arith.constant 0 : i32
    %c0_i32_1 = arith.constant 0 : i32
    %c0_i32_2 = arith.constant 0 : i32
    return %arg0, %c0_i32, %c0_i32_0, %c0_i32_1 : i32, i32, i32, i32
  }
  func.func @transform_1(%arg0: i32) -> (i32, i32) {
    %c0_i32 = arith.constant 0 : i32
    %c0_i32_0 = arith.constant 0 : i32
    %c0_i32_1 = arith.constant 0 : i32
    return %c0_i32, %c0_i32_0 : i32, i32
  }
  func.func @transform_2(%arg0: i32) -> (i32, i32, i32) {
    %c0_i32 = arith.constant 0 : i32
    %c0_i32_0 = arith.constant 0 : i32
    %c0_i32_1 = arith.constant 0 : i32
    %c0_i32_2 = arith.constant 0 : i32
    return %c0_i32, %c0_i32_0, %c0_i32_1 : i32, i32, i32
  }
  func.func @transform_3(%arg0: i32) -> (i32, i32, i32) {
    %c0_i32 = arith.constant 0 : i32
    %c0_i32_0 = arith.constant 0 : i32
    %c0_i32_1 = arith.constant 0 : i32
    %c0_i32_2 = arith.constant 0 : i32
    return %c0_i32, %c0_i32_0, %c0_i32_1 : i32, i32, i32
  }
  func.func @transform_4(%arg0: i32) -> (i32, i32, i32) {
    %c0_i32 = arith.constant 0 : i32
    %c0_i32_0 = arith.constant 0 : i32
    %c0_i32_1 = arith.constant 0 : i32
    %c0_i32_2 = arith.constant 0 : i32
    return %c0_i32, %c0_i32_0, %c0_i32_1 : i32, i32, i32
  }
  func.func @transform_5(%arg0: i32) -> (i32, i32, i32) {
    %c0_i32 = arith.constant 0 : i32
    %c0_i32_0 = arith.constant 0 : i32
    %c0_i32_1 = arith.constant 0 : i32
    %c0_i32_2 = arith.constant 0 : i32
    return %c0_i32, %c0_i32_0, %c0_i32_1 : i32, i32, i32
  }
  func.func @transform_6(%arg0: i32) -> (i32, i32, i32) {
    %c0_i32 = arith.constant 0 : i32
    %c0_i32_0 = arith.constant 0 : i32
    %c0_i32_1 = arith.constant 0 : i32
    %c0_i32_2 = arith.constant 0 : i32
    return %c0_i32, %c0_i32_0, %c0_i32_1 : i32, i32, i32
  }
  func.func @transform_7(%arg0: i32) -> (i32, i32, i32) {
    %c0_i32 = arith.constant 0 : i32
    %c0_i32_0 = arith.constant 0 : i32
    %c0_i32_1 = arith.constant 0 : i32
    %c0_i32_2 = arith.constant 0 : i32
    return %c0_i32, %c0_i32_0, %c0_i32_1 : i32, i32, i32
  }
  func.func @transform_8(%arg0: i32) -> (i32, i32, i32) {
    %c0_i32 = arith.constant 0 : i32
    %c0_i32_0 = arith.constant 0 : i32
    %c0_i32_1 = arith.constant 0 : i32
    %c0_i32_2 = arith.constant 0 : i32
    return %c0_i32, %c0_i32_0, %c0_i32_1 : i32, i32, i32
  }
  func.func @transform_9(%arg0: i32) -> (i32, i32, i32) {
    %c0_i32 = arith.constant 0 : i32
    %c0_i32_0 = arith.constant 0 : i32
    %c0_i32_1 = arith.constant 0 : i32
    %c0_i32_2 = arith.constant 0 : i32
    return %c0_i32, %c0_i32_0, %c0_i32_1 : i32, i32, i32
  }
  func.func @transform_10(%arg0: i32) -> (i32, i32, i32) {
    %c0_i32 = arith.constant 0 : i32
    %c0_i32_0 = arith.constant 0 : i32
    %c0_i32_1 = arith.constant 0 : i32
    %c0_i32_2 = arith.constant 0 : i32
    return %c0_i32, %c0_i32_0, %c0_i32_1 : i32, i32, i32
  }
  func.func @transform_11(%arg0: i32) -> (i32, i32, i32, i32) {
    %c0_i32 = arith.constant 0 : i32
    %c0_i32_0 = arith.constant 0 : i32
    %c0_i32_1 = arith.constant 0 : i32
    %c0_i32_2 = arith.constant 0 : i32
    return %arg0, %c0_i32, %c0_i32_0, %c0_i32_1 : i32, i32, i32, i32
  }
}

module attributes {stable_mosaic.version = 11 : i64} {
  func.func @_down_kernel(%arg0: i32, %arg1: memref<1x8x8x32xbf16, #tpu.memory_space<vmem>>, %arg2: memref<4x8xbf16, #tpu.memory_space<vmem>>, %arg3: memref<1x1x32xf32, #tpu.memory_space<vmem>>, %arg4: memref<1x1x32xf32, #tpu.memory_space<vmem>>, %arg5: memref<1x32x16xbf16, #tpu.memory_space<vmem>>, %arg6: memref<1x1x16xf32, #tpu.memory_space<vmem>>, %arg7: memref<1x1x16xf32, #tpu.memory_space<vmem>>, %arg8: memref<1x144x16xbf16, #tpu.memory_space<vmem>>, %arg9: memref<1x1x16xf32, #tpu.memory_space<vmem>>, %arg10: memref<1x1x16xf32, #tpu.memory_space<vmem>>, %arg11: memref<1x16x32xbf16, #tpu.memory_space<vmem>>, %arg12: memref<1x4x4x32xbf16, #tpu.memory_space<vmem>>) attributes {dimension_semantics = [#tpu.dimension_semantics<parallel>], iteration_bounds = array<i64: 2>, scalar_prefetch = 0 : i64, scratch_operands = 0 : i64, tpu.core_type = #tpu.core_type<tc>, window_params = [{transform_indices = @transform_0, window_bounds = array<i64: 1, 8, 8, 32>}, {pipeline_mode = #tpu.pipeline_mode<synchronous>, transform_indices = @transform_1, window_bounds = array<i64: 4, 8>}, {pipeline_mode = #tpu.pipeline_mode<synchronous>, transform_indices = @transform_2, window_bounds = array<i64: 1, 1, 32>}, {pipeline_mode = #tpu.pipeline_mode<synchronous>, transform_indices = @transform_3, window_bounds = array<i64: 1, 1, 32>}, {pipeline_mode = #tpu.pipeline_mode<synchronous>, transform_indices = @transform_4, window_bounds = array<i64: 1, 32, 16>}, {pipeline_mode = #tpu.pipeline_mode<synchronous>, transform_indices = @transform_5, window_bounds = array<i64: 1, 1, 16>}, {pipeline_mode = #tpu.pipeline_mode<synchronous>, transform_indices = @transform_6, window_bounds = array<i64: 1, 1, 16>}, {pipeline_mode = #tpu.pipeline_mode<synchronous>, transform_indices = @transform_7, window_bounds = array<i64: 1, 144, 16>}, {pipeline_mode = #tpu.pipeline_mode<synchronous>, transform_indices = @transform_8, window_bounds = array<i64: 1, 1, 16>}, {pipeline_mode = #tpu.pipeline_mode<synchronous>, transform_indices = @transform_9, window_bounds = array<i64: 1, 1, 16>}, {pipeline_mode = #tpu.pipeline_mode<synchronous>, transform_indices = @transform_10, window_bounds = array<i64: 1, 16, 32>}, {transform_indices = @transform_11, window_bounds = array<i64: 1, 4, 4, 32>}]} {
    %c0 = arith.constant 0 : index
    %c0_0 = arith.constant 0 : index
    %c0_1 = arith.constant 0 : index
    %c0_2 = arith.constant 0 : index
    %0 = vector.load %arg1[%c0, %c0_0, %c0_1, %c0_2] : memref<1x8x8x32xbf16, #tpu.memory_space<vmem>>, vector<1x8x8x32xbf16>
    %1 = vector.shape_cast %0 : vector<1x8x8x32xbf16> to vector<8x8x32xbf16>
    %2 = arith.extf %1 : vector<8x8x32xbf16> to vector<8x8x32xf32>
    %3 = vector.shape_cast %2 : vector<8x8x32xf32> to vector<4x16x32xf32>
    %4 = vector.extract_strided_slice %3 {offsets = [0, 0, 0], sizes = [4, 8, 32], strides = [1, 1, 1]} : vector<4x16x32xf32> to vector<4x8x32xf32>
    %5 = vector.extract_strided_slice %3 {offsets = [0, 8, 0], sizes = [4, 8, 32], strides = [1, 1, 1]} : vector<4x16x32xf32> to vector<4x8x32xf32>
    %6 = arith.maximumf %4, %5 : vector<4x8x32xf32>
    %7 = vector.extract_strided_slice %6 {offsets = [0, 1, 0], sizes = [4, 7, 32], strides = [1, 1, 1]} : vector<4x8x32xf32> to vector<4x7x32xf32>
    %8 = vector.extract_strided_slice %6 {offsets = [0, 0, 0], sizes = [4, 1, 32], strides = [1, 1, 1]} : vector<4x8x32xf32> to vector<4x1x32xf32>
    %9 = tpu.concatenate %7, %8 in 1 : vector<4x7x32xf32>, vector<4x1x32xf32> -> vector<4x8x32xf32>
    %10 = arith.maximumf %6, %9 : vector<4x8x32xf32>
    %11 = arith.truncf %10 : vector<4x8x32xf32> to vector<4x8x32xbf16>
    %c0_3 = arith.constant 0 : index
    %c0_4 = arith.constant 0 : index
    %12 = vector.load %arg2[%c0_3, %c0_4] : memref<4x8xbf16, #tpu.memory_space<vmem>>, vector<4x8xbf16>
    %13 = vector.shape_cast %12 : vector<4x8xbf16> to vector<1x4x8xbf16>
    %14 = vector.broadcast %13 : vector<1x4x8xbf16> to vector<4x4x8xbf16>
    "tpu.trace_start"() <{level = 10 : i32, message = "hvw,hwc->hvc"}> : () -> ()
    %cst = arith.constant dense<0.000000e+00> : vector<4x4x32xf32>
    %15 = tpu.matmul %14, %11, %cst {dimension_numbers = #tpu.dot_dimension_numbers<[2], [1], [1], [2], [0, 0, 0, 1, 1, 2], [0], [0]>} : vector<4x4x8xbf16>, vector<4x8x32xbf16>, vector<4x4x32xf32> -> vector<4x4x32xf32>
    "tpu.trace_stop"() : () -> ()
    %16 = vector.shape_cast %15 : vector<4x4x32xf32> to vector<16x32xf32>
    %c0_5 = arith.constant 0 : index
    %c0_6 = arith.constant 0 : index
    %c0_7 = arith.constant 0 : index
    %17 = vector.load %arg3[%c0_5, %c0_6, %c0_7] : memref<1x1x32xf32, #tpu.memory_space<vmem>>, vector<1x1x32xf32>
    %18 = vector.shape_cast %17 : vector<1x1x32xf32> to vector<1x32xf32>
    %19 = vector.broadcast %18 : vector<1x32xf32> to vector<16x32xf32>
    %20 = arith.mulf %16, %19 : vector<16x32xf32>
    %c0_8 = arith.constant 0 : index
    %c0_9 = arith.constant 0 : index
    %c0_10 = arith.constant 0 : index
    %21 = vector.load %arg4[%c0_8, %c0_9, %c0_10] : memref<1x1x32xf32, #tpu.memory_space<vmem>>, vector<1x1x32xf32>
    %22 = vector.shape_cast %21 : vector<1x1x32xf32> to vector<1x32xf32>
    %23 = vector.broadcast %22 : vector<1x32xf32> to vector<16x32xf32>
    %24 = arith.addf %20, %23 : vector<16x32xf32>
    %cst_11 = arith.constant 0.000000e+00 : f32
    %25 = vector.broadcast %cst_11 : f32 to vector<16x32xf32>
    %26 = arith.maximumf %24, %25 : vector<16x32xf32>
    %27 = arith.truncf %26 : vector<16x32xf32> to vector<16x32xbf16>
    %c0_12 = arith.constant 0 : index
    %c0_13 = arith.constant 0 : index
    %c0_14 = arith.constant 0 : index
    %28 = vector.load %arg5[%c0_12, %c0_13, %c0_14] : memref<1x32x16xbf16, #tpu.memory_space<vmem>>, vector<1x32x16xbf16>
    %29 = vector.shape_cast %28 : vector<1x32x16xbf16> to vector<32x16xbf16>
    %cst_15 = arith.constant dense<0.000000e+00> : vector<16x16xf32>
    %30 = tpu.matmul %27, %29, %cst_15 {dimension_numbers = #tpu.dot_dimension_numbers<[1], [0], [0], [1], [0, 0, 1, 1], [], []>} : vector<16x32xbf16>, vector<32x16xbf16>, vector<16x16xf32> -> vector<16x16xf32>
    %c0_16 = arith.constant 0 : index
    %c0_17 = arith.constant 0 : index
    %c0_18 = arith.constant 0 : index
    %31 = vector.load %arg6[%c0_16, %c0_17, %c0_18] : memref<1x1x16xf32, #tpu.memory_space<vmem>>, vector<1x1x16xf32>
    %32 = vector.shape_cast %31 : vector<1x1x16xf32> to vector<1x16xf32>
    %33 = vector.broadcast %32 : vector<1x16xf32> to vector<16x16xf32>
    %34 = arith.mulf %30, %33 : vector<16x16xf32>
    %c0_19 = arith.constant 0 : index
    %c0_20 = arith.constant 0 : index
    %c0_21 = arith.constant 0 : index
    %35 = vector.load %arg7[%c0_19, %c0_20, %c0_21] : memref<1x1x16xf32, #tpu.memory_space<vmem>>, vector<1x1x16xf32>
    %36 = vector.shape_cast %35 : vector<1x1x16xf32> to vector<1x16xf32>
    %37 = vector.broadcast %36 : vector<1x16xf32> to vector<16x16xf32>
    %38 = arith.addf %34, %37 : vector<16x16xf32>
    %cst_22 = arith.constant 0.000000e+00 : f32
    %39 = vector.broadcast %cst_22 : f32 to vector<16x16xf32>
    %40 = arith.maximumf %38, %39 : vector<16x16xf32>
    %41 = arith.truncf %40 : vector<16x16xf32> to vector<16x16xbf16>
    %42 = vector.shape_cast %41 : vector<16x16xbf16> to vector<4x4x16xbf16>
    %cst_23 = arith.constant 0.000000e+00 : bf16
    %43 = vector.broadcast %cst_23 : bf16 to vector<4x1x16xbf16>
    %44 = vector.extract_strided_slice %42 {offsets = [0, 0, 0], sizes = [4, 3, 16], strides = [1, 1, 1]} : vector<4x4x16xbf16> to vector<4x3x16xbf16>
    %45 = tpu.concatenate %43, %44 in 1 : vector<4x1x16xbf16>, vector<4x3x16xbf16> -> vector<4x4x16xbf16>
    %46 = vector.extract_strided_slice %42 {offsets = [0, 1, 0], sizes = [4, 3, 16], strides = [1, 1, 1]} : vector<4x4x16xbf16> to vector<4x3x16xbf16>
    %47 = tpu.concatenate %46, %43 in 1 : vector<4x3x16xbf16>, vector<4x1x16xbf16> -> vector<4x4x16xbf16>
    %48 = tpu.concatenate %45, %42, %47 in 2 : vector<4x4x16xbf16>, vector<4x4x16xbf16>, vector<4x4x16xbf16> -> vector<4x4x48xbf16>
    %49 = vector.shape_cast %48 : vector<4x4x48xbf16> to vector<16x48xbf16>
    %c0_24 = arith.constant 0 : index
    %c0_25 = arith.constant 0 : index
    %c0_26 = arith.constant 0 : index
    %50 = vector.load %arg8[%c0_24, %c0_25, %c0_26] : memref<1x144x16xbf16, #tpu.memory_space<vmem>>, vector<1x144x16xbf16>
    %51 = vector.shape_cast %50 : vector<1x144x16xbf16> to vector<144x16xbf16>
    %52 = vector.extract_strided_slice %51 {offsets = [0, 0], sizes = [48, 16], strides = [1, 1]} : vector<144x16xbf16> to vector<48x16xbf16>
    %cst_27 = arith.constant dense<0.000000e+00> : vector<16x16xf32>
    %53 = tpu.matmul %49, %52, %cst_27 {dimension_numbers = #tpu.dot_dimension_numbers<[1], [0], [0], [1], [0, 0, 1, 1], [], []>} : vector<16x48xbf16>, vector<48x16xbf16>, vector<16x16xf32> -> vector<16x16xf32>
    %54 = vector.shape_cast %53 : vector<16x16xf32> to vector<4x4x16xf32>
    %55 = vector.extract_strided_slice %51 {offsets = [48, 0], sizes = [48, 16], strides = [1, 1]} : vector<144x16xbf16> to vector<48x16xbf16>
    %cst_28 = arith.constant dense<0.000000e+00> : vector<16x16xf32>
    %56 = tpu.matmul %49, %55, %cst_28 {dimension_numbers = #tpu.dot_dimension_numbers<[1], [0], [0], [1], [0, 0, 1, 1], [], []>} : vector<16x48xbf16>, vector<48x16xbf16>, vector<16x16xf32> -> vector<16x16xf32>
    %57 = vector.shape_cast %56 : vector<16x16xf32> to vector<4x4x16xf32>
    %58 = vector.extract_strided_slice %51 {offsets = [96, 0], sizes = [48, 16], strides = [1, 1]} : vector<144x16xbf16> to vector<48x16xbf16>
    %cst_29 = arith.constant dense<0.000000e+00> : vector<16x16xf32>
    %59 = tpu.matmul %49, %58, %cst_29 {dimension_numbers = #tpu.dot_dimension_numbers<[1], [0], [0], [1], [0, 0, 1, 1], [], []>} : vector<16x48xbf16>, vector<48x16xbf16>, vector<16x16xf32> -> vector<16x16xf32>
    %60 = vector.shape_cast %59 : vector<16x16xf32> to vector<4x4x16xf32>
    %cst_30 = arith.constant 0.000000e+00 : f32
    %61 = vector.broadcast %cst_30 : f32 to vector<1x4x16xf32>
    %62 = vector.extract_strided_slice %54 {offsets = [0, 0, 0], sizes = [3, 4, 16], strides = [1, 1, 1]} : vector<4x4x16xf32> to vector<3x4x16xf32>
    %63 = tpu.concatenate %61, %62 in 0 : vector<1x4x16xf32>, vector<3x4x16xf32> -> vector<4x4x16xf32>
    %64 = arith.addf %63, %57 : vector<4x4x16xf32>
    %65 = vector.extract_strided_slice %60 {offsets = [1, 0, 0], sizes = [3, 4, 16], strides = [1, 1, 1]} : vector<4x4x16xf32> to vector<3x4x16xf32>
    %66 = tpu.concatenate %65, %61 in 0 : vector<3x4x16xf32>, vector<1x4x16xf32> -> vector<4x4x16xf32>
    %67 = arith.addf %64, %66 : vector<4x4x16xf32>
    %68 = vector.shape_cast %67 : vector<4x4x16xf32> to vector<16x16xf32>
    %c0_31 = arith.constant 0 : index
    %c0_32 = arith.constant 0 : index
    %c0_33 = arith.constant 0 : index
    %69 = vector.load %arg9[%c0_31, %c0_32, %c0_33] : memref<1x1x16xf32, #tpu.memory_space<vmem>>, vector<1x1x16xf32>
    %70 = vector.shape_cast %69 : vector<1x1x16xf32> to vector<1x16xf32>
    %71 = vector.broadcast %70 : vector<1x16xf32> to vector<16x16xf32>
    %72 = arith.mulf %68, %71 : vector<16x16xf32>
    %c0_34 = arith.constant 0 : index
    %c0_35 = arith.constant 0 : index
    %c0_36 = arith.constant 0 : index
    %73 = vector.load %arg10[%c0_34, %c0_35, %c0_36] : memref<1x1x16xf32, #tpu.memory_space<vmem>>, vector<1x1x16xf32>
    %74 = vector.shape_cast %73 : vector<1x1x16xf32> to vector<1x16xf32>
    %75 = vector.broadcast %74 : vector<1x16xf32> to vector<16x16xf32>
    %76 = arith.addf %72, %75 : vector<16x16xf32>
    %cst_37 = arith.constant 0.000000e+00 : f32
    %77 = vector.broadcast %cst_37 : f32 to vector<16x16xf32>
    %78 = arith.maximumf %76, %77 : vector<16x16xf32>
    %79 = arith.truncf %78 : vector<16x16xf32> to vector<16x16xbf16>
    %c0_38 = arith.constant 0 : index
    %c0_39 = arith.constant 0 : index
    %c0_40 = arith.constant 0 : index
    %80 = vector.load %arg11[%c0_38, %c0_39, %c0_40] : memref<1x16x32xbf16, #tpu.memory_space<vmem>>, vector<1x16x32xbf16>
    %81 = vector.shape_cast %80 : vector<1x16x32xbf16> to vector<16x32xbf16>
    %cst_41 = arith.constant dense<0.000000e+00> : vector<16x32xf32>
    %82 = tpu.matmul %79, %81, %cst_41 {dimension_numbers = #tpu.dot_dimension_numbers<[1], [0], [0], [1], [0, 0, 1, 1], [], []>} : vector<16x16xbf16>, vector<16x32xbf16>, vector<16x32xf32> -> vector<16x32xf32>
    %83 = arith.addf %82, %16 : vector<16x32xf32>
    %cst_42 = arith.constant 0.000000e+00 : f32
    %84 = vector.broadcast %cst_42 : f32 to vector<16x32xf32>
    %85 = arith.maximumf %83, %84 : vector<16x32xf32>
    %86 = vector.shape_cast %85 : vector<16x32xf32> to vector<4x4x32xf32>
    %87 = arith.truncf %86 : vector<4x4x32xf32> to vector<4x4x32xbf16>
    %c0_43 = arith.constant 0 : index
    %c0_44 = arith.constant 0 : index
    %c0_45 = arith.constant 0 : index
    %c0_46 = arith.constant 0 : index
    %88 = vector.load %arg12[%c0_43, %c0_44, %c0_45, %c0_46] : memref<1x4x4x32xbf16, #tpu.memory_space<vmem>>, vector<1x4x4x32xbf16>
    %89 = vector.shape_cast %88 : vector<1x4x4x32xbf16> to vector<4x4x32xbf16>
    %90 = vector.shape_cast %87 : vector<4x4x32xbf16> to vector<1x4x4x32xbf16>
    tpu.vector_store %arg12[%c0_43, %c0_44, %c0_45, %c0_46], %90 {strides = array<i32>} : memref<1x4x4x32xbf16, #tpu.memory_space<vmem>>, vector<1x4x4x32xbf16>,
    return
  }
  func.func @transform_0(%arg0: i32) -> (i32, i32, i32, i32) {
    %c0_i32 = arith.constant 0 : i32
    %c0_i32_0 = arith.constant 0 : i32
    %c0_i32_1 = arith.constant 0 : i32
    %c0_i32_2 = arith.constant 0 : i32
    return %arg0, %c0_i32, %c0_i32_0, %c0_i32_1 : i32, i32, i32, i32
  }
  func.func @transform_1(%arg0: i32) -> (i32, i32) {
    %c0_i32 = arith.constant 0 : i32
    %c0_i32_0 = arith.constant 0 : i32
    %c0_i32_1 = arith.constant 0 : i32
    return %c0_i32, %c0_i32_0 : i32, i32
  }
  func.func @transform_2(%arg0: i32) -> (i32, i32, i32) {
    %c0_i32 = arith.constant 0 : i32
    %c0_i32_0 = arith.constant 0 : i32
    %c0_i32_1 = arith.constant 0 : i32
    %c0_i32_2 = arith.constant 0 : i32
    return %c0_i32, %c0_i32_0, %c0_i32_1 : i32, i32, i32
  }
  func.func @transform_3(%arg0: i32) -> (i32, i32, i32) {
    %c0_i32 = arith.constant 0 : i32
    %c0_i32_0 = arith.constant 0 : i32
    %c0_i32_1 = arith.constant 0 : i32
    %c0_i32_2 = arith.constant 0 : i32
    return %c0_i32, %c0_i32_0, %c0_i32_1 : i32, i32, i32
  }
  func.func @transform_4(%arg0: i32) -> (i32, i32, i32) {
    %c0_i32 = arith.constant 0 : i32
    %c0_i32_0 = arith.constant 0 : i32
    %c0_i32_1 = arith.constant 0 : i32
    %c0_i32_2 = arith.constant 0 : i32
    return %c0_i32, %c0_i32_0, %c0_i32_1 : i32, i32, i32
  }
  func.func @transform_5(%arg0: i32) -> (i32, i32, i32) {
    %c0_i32 = arith.constant 0 : i32
    %c0_i32_0 = arith.constant 0 : i32
    %c0_i32_1 = arith.constant 0 : i32
    %c0_i32_2 = arith.constant 0 : i32
    return %c0_i32, %c0_i32_0, %c0_i32_1 : i32, i32, i32
  }
  func.func @transform_6(%arg0: i32) -> (i32, i32, i32) {
    %c0_i32 = arith.constant 0 : i32
    %c0_i32_0 = arith.constant 0 : i32
    %c0_i32_1 = arith.constant 0 : i32
    %c0_i32_2 = arith.constant 0 : i32
    return %c0_i32, %c0_i32_0, %c0_i32_1 : i32, i32, i32
  }
  func.func @transform_7(%arg0: i32) -> (i32, i32, i32) {
    %c0_i32 = arith.constant 0 : i32
    %c0_i32_0 = arith.constant 0 : i32
    %c0_i32_1 = arith.constant 0 : i32
    %c0_i32_2 = arith.constant 0 : i32
    return %c0_i32, %c0_i32_0, %c0_i32_1 : i32, i32, i32
  }
  func.func @transform_8(%arg0: i32) -> (i32, i32, i32) {
    %c0_i32 = arith.constant 0 : i32
    %c0_i32_0 = arith.constant 0 : i32
    %c0_i32_1 = arith.constant 0 : i32
    %c0_i32_2 = arith.constant 0 : i32
    return %c0_i32, %c0_i32_0, %c0_i32_1 : i32, i32, i32
  }
  func.func @transform_9(%arg0: i32) -> (i32, i32, i32) {
    %c0_i32 = arith.constant 0 : i32
    %c0_i32_0 = arith.constant 0 : i32
    %c0_i32_1 = arith.constant 0 : i32
    %c0_i32_2 = arith.constant 0 : i32
    return %c0_i32, %c0_i32_0, %c0_i32_1 : i32, i32, i32
  }
  func.func @transform_10(%arg0: i32) -> (i32, i32, i32) {
    %c0_i32 = arith.constant 0 : i32
    %c0_i32_0 = arith.constant 0 : i32
    %c0_i32_1 = arith.constant 0 : i32
    %c0_i32_2 = arith.constant 0 : i32
    return %c0_i32, %c0_i32_0, %c0_i32_1 : i32, i32, i32
  }
  func.func @transform_11(%arg0: i32) -> (i32, i32, i32, i32) {
    %c0_i32 = arith.constant 0 : i32
    %c0_i32_0 = arith.constant 0 : i32
    %c0_i32_1 = arith.constant 0 : i32
    %c0_i32_2 = arith.constant 0 : i32
    return %arg0, %c0_i32, %c0_i32_0, %c0_i32_1 : i32, i32, i32, i32
  }
}

module attributes {stable_mosaic.version = 11 : i64} {
  func.func @_merge_kernel(%arg0: i32, %arg1: memref<1x8x8x32xbf16, #tpu.memory_space<vmem>>, %arg2: memref<1x4x4x32xbf16, #tpu.memory_space<vmem>>, %arg3: memref<8x4xbf16, #tpu.memory_space<vmem>>, %arg4: memref<1x1x32xf32, #tpu.memory_space<vmem>>, %arg5: memref<1x1x32xf32, #tpu.memory_space<vmem>>, %arg6: memref<1x32x16xbf16, #tpu.memory_space<vmem>>, %arg7: memref<1x1x16xf32, #tpu.memory_space<vmem>>, %arg8: memref<1x1x16xf32, #tpu.memory_space<vmem>>, %arg9: memref<1x144x16xbf16, #tpu.memory_space<vmem>>, %arg10: memref<1x1x16xf32, #tpu.memory_space<vmem>>, %arg11: memref<1x1x16xf32, #tpu.memory_space<vmem>>, %arg12: memref<1x16x32xbf16, #tpu.memory_space<vmem>>, %arg13: memref<2x1x32xf32, #tpu.memory_space<vmem>>, %arg14: memref<2x1x32xf32, #tpu.memory_space<vmem>>, %arg15: memref<2x32x16xbf16, #tpu.memory_space<vmem>>, %arg16: memref<2x1x16xf32, #tpu.memory_space<vmem>>, %arg17: memref<2x1x16xf32, #tpu.memory_space<vmem>>, %arg18: memref<2x144x16xbf16, #tpu.memory_space<vmem>>, %arg19: memref<2x1x16xf32, #tpu.memory_space<vmem>>, %arg20: memref<2x1x16xf32, #tpu.memory_space<vmem>>, %arg21: memref<2x16x32xbf16, #tpu.memory_space<vmem>>, %arg22: memref<1x8x8x32xbf16, #tpu.memory_space<vmem>>) attributes {dimension_semantics = [#tpu.dimension_semantics<parallel>], iteration_bounds = array<i64: 2>, scalar_prefetch = 0 : i64, scratch_operands = 0 : i64, tpu.core_type = #tpu.core_type<tc>, window_params = [{transform_indices = @transform_0, window_bounds = array<i64: 1, 8, 8, 32>}, {transform_indices = @transform_1, window_bounds = array<i64: 1, 4, 4, 32>}, {pipeline_mode = #tpu.pipeline_mode<synchronous>, transform_indices = @transform_2, window_bounds = array<i64: 8, 4>}, {pipeline_mode = #tpu.pipeline_mode<synchronous>, transform_indices = @transform_3, window_bounds = array<i64: 1, 1, 32>}, {pipeline_mode = #tpu.pipeline_mode<synchronous>, transform_indices = @transform_4, window_bounds = array<i64: 1, 1, 32>}, {pipeline_mode = #tpu.pipeline_mode<synchronous>, transform_indices = @transform_5, window_bounds = array<i64: 1, 32, 16>}, {pipeline_mode = #tpu.pipeline_mode<synchronous>, transform_indices = @transform_6, window_bounds = array<i64: 1, 1, 16>}, {pipeline_mode = #tpu.pipeline_mode<synchronous>, transform_indices = @transform_7, window_bounds = array<i64: 1, 1, 16>}, {pipeline_mode = #tpu.pipeline_mode<synchronous>, transform_indices = @transform_8, window_bounds = array<i64: 1, 144, 16>}, {pipeline_mode = #tpu.pipeline_mode<synchronous>, transform_indices = @transform_9, window_bounds = array<i64: 1, 1, 16>}, {pipeline_mode = #tpu.pipeline_mode<synchronous>, transform_indices = @transform_10, window_bounds = array<i64: 1, 1, 16>}, {pipeline_mode = #tpu.pipeline_mode<synchronous>, transform_indices = @transform_11, window_bounds = array<i64: 1, 16, 32>}, {pipeline_mode = #tpu.pipeline_mode<synchronous>, transform_indices = @transform_12, window_bounds = array<i64: 2, 1, 32>}, {pipeline_mode = #tpu.pipeline_mode<synchronous>, transform_indices = @transform_13, window_bounds = array<i64: 2, 1, 32>}, {pipeline_mode = #tpu.pipeline_mode<synchronous>, transform_indices = @transform_14, window_bounds = array<i64: 2, 32, 16>}, {pipeline_mode = #tpu.pipeline_mode<synchronous>, transform_indices = @transform_15, window_bounds = array<i64: 2, 1, 16>}, {pipeline_mode = #tpu.pipeline_mode<synchronous>, transform_indices = @transform_16, window_bounds = array<i64: 2, 1, 16>}, {pipeline_mode = #tpu.pipeline_mode<synchronous>, transform_indices = @transform_17, window_bounds = array<i64: 2, 144, 16>}, {pipeline_mode = #tpu.pipeline_mode<synchronous>, transform_indices = @transform_18, window_bounds = array<i64: 2, 1, 16>}, {pipeline_mode = #tpu.pipeline_mode<synchronous>, transform_indices = @transform_19, window_bounds = array<i64: 2, 1, 16>}, {pipeline_mode = #tpu.pipeline_mode<synchronous>, transform_indices = @transform_20, window_bounds = array<i64: 2, 16, 32>}, {transform_indices = @transform_21, window_bounds = array<i64: 1, 8, 8, 32>}]} {
    %c0 = arith.constant 0 : index
    %c0_0 = arith.constant 0 : index
    %c0_1 = arith.constant 0 : index
    %c0_2 = arith.constant 0 : index
    %0 = vector.load %arg1[%c0, %c0_0, %c0_1, %c0_2] : memref<1x8x8x32xbf16, #tpu.memory_space<vmem>>, vector<1x8x8x32xbf16>
    %1 = vector.shape_cast %0 : vector<1x8x8x32xbf16> to vector<8x8x32xbf16>
    %2 = arith.extf %1 : vector<8x8x32xbf16> to vector<8x8x32xf32>
    %3 = vector.shape_cast %2 : vector<8x8x32xf32> to vector<64x32xf32>
    %c0_3 = arith.constant 0 : index
    %c0_4 = arith.constant 0 : index
    %c0_5 = arith.constant 0 : index
    %4 = vector.load %arg4[%c0_3, %c0_4, %c0_5] : memref<1x1x32xf32, #tpu.memory_space<vmem>>, vector<1x1x32xf32>
    %5 = vector.shape_cast %4 : vector<1x1x32xf32> to vector<1x32xf32>
    %6 = vector.broadcast %5 : vector<1x32xf32> to vector<64x32xf32>
    %7 = arith.mulf %3, %6 : vector<64x32xf32>
    %c0_6 = arith.constant 0 : index
    %c0_7 = arith.constant 0 : index
    %c0_8 = arith.constant 0 : index
    %8 = vector.load %arg5[%c0_6, %c0_7, %c0_8] : memref<1x1x32xf32, #tpu.memory_space<vmem>>, vector<1x1x32xf32>
    %9 = vector.shape_cast %8 : vector<1x1x32xf32> to vector<1x32xf32>
    %10 = vector.broadcast %9 : vector<1x32xf32> to vector<64x32xf32>
    %11 = arith.addf %7, %10 : vector<64x32xf32>
    %cst = arith.constant 0.000000e+00 : f32
    %12 = vector.broadcast %cst : f32 to vector<64x32xf32>
    %13 = arith.maximumf %11, %12 : vector<64x32xf32>
    %14 = arith.truncf %13 : vector<64x32xf32> to vector<64x32xbf16>
    %c0_9 = arith.constant 0 : index
    %c0_10 = arith.constant 0 : index
    %c0_11 = arith.constant 0 : index
    %15 = vector.load %arg6[%c0_9, %c0_10, %c0_11] : memref<1x32x16xbf16, #tpu.memory_space<vmem>>, vector<1x32x16xbf16>
    %16 = vector.shape_cast %15 : vector<1x32x16xbf16> to vector<32x16xbf16>
    %cst_12 = arith.constant dense<0.000000e+00> : vector<64x16xf32>
    %17 = tpu.matmul %14, %16, %cst_12 {dimension_numbers = #tpu.dot_dimension_numbers<[1], [0], [0], [1], [0, 0, 1, 1], [], []>} : vector<64x32xbf16>, vector<32x16xbf16>, vector<64x16xf32> -> vector<64x16xf32>
    %c0_13 = arith.constant 0 : index
    %c0_14 = arith.constant 0 : index
    %c0_15 = arith.constant 0 : index
    %18 = vector.load %arg7[%c0_13, %c0_14, %c0_15] : memref<1x1x16xf32, #tpu.memory_space<vmem>>, vector<1x1x16xf32>
    %19 = vector.shape_cast %18 : vector<1x1x16xf32> to vector<1x16xf32>
    %20 = vector.broadcast %19 : vector<1x16xf32> to vector<64x16xf32>
    %21 = arith.mulf %17, %20 : vector<64x16xf32>
    %c0_16 = arith.constant 0 : index
    %c0_17 = arith.constant 0 : index
    %c0_18 = arith.constant 0 : index
    %22 = vector.load %arg8[%c0_16, %c0_17, %c0_18] : memref<1x1x16xf32, #tpu.memory_space<vmem>>, vector<1x1x16xf32>
    %23 = vector.shape_cast %22 : vector<1x1x16xf32> to vector<1x16xf32>
    %24 = vector.broadcast %23 : vector<1x16xf32> to vector<64x16xf32>
    %25 = arith.addf %21, %24 : vector<64x16xf32>
    %cst_19 = arith.constant 0.000000e+00 : f32
    %26 = vector.broadcast %cst_19 : f32 to vector<64x16xf32>
    %27 = arith.maximumf %25, %26 : vector<64x16xf32>
    %28 = arith.truncf %27 : vector<64x16xf32> to vector<64x16xbf16>
    %29 = vector.shape_cast %28 : vector<64x16xbf16> to vector<8x8x16xbf16>
    %cst_20 = arith.constant 0.000000e+00 : bf16
    %30 = vector.broadcast %cst_20 : bf16 to vector<8x1x16xbf16>
    %31 = vector.extract_strided_slice %29 {offsets = [0, 0, 0], sizes = [8, 7, 16], strides = [1, 1, 1]} : vector<8x8x16xbf16> to vector<8x7x16xbf16>
    %32 = tpu.concatenate %30, %31 in 1 : vector<8x1x16xbf16>, vector<8x7x16xbf16> -> vector<8x8x16xbf16>
    %33 = vector.extract_strided_slice %29 {offsets = [0, 1, 0], sizes = [8, 7, 16], strides = [1, 1, 1]} : vector<8x8x16xbf16> to vector<8x7x16xbf16>
    %34 = tpu.concatenate %33, %30 in 1 : vector<8x7x16xbf16>, vector<8x1x16xbf16> -> vector<8x8x16xbf16>
    %35 = tpu.concatenate %32, %29, %34 in 2 : vector<8x8x16xbf16>, vector<8x8x16xbf16>, vector<8x8x16xbf16> -> vector<8x8x48xbf16>
    %36 = vector.shape_cast %35 : vector<8x8x48xbf16> to vector<64x48xbf16>
    %c0_21 = arith.constant 0 : index
    %c0_22 = arith.constant 0 : index
    %c0_23 = arith.constant 0 : index
    %37 = vector.load %arg9[%c0_21, %c0_22, %c0_23] : memref<1x144x16xbf16, #tpu.memory_space<vmem>>, vector<1x144x16xbf16>
    %38 = vector.shape_cast %37 : vector<1x144x16xbf16> to vector<144x16xbf16>
    %39 = vector.extract_strided_slice %38 {offsets = [0, 0], sizes = [48, 16], strides = [1, 1]} : vector<144x16xbf16> to vector<48x16xbf16>
    %cst_24 = arith.constant dense<0.000000e+00> : vector<64x16xf32>
    %40 = tpu.matmul %36, %39, %cst_24 {dimension_numbers = #tpu.dot_dimension_numbers<[1], [0], [0], [1], [0, 0, 1, 1], [], []>} : vector<64x48xbf16>, vector<48x16xbf16>, vector<64x16xf32> -> vector<64x16xf32>
    %41 = vector.shape_cast %40 : vector<64x16xf32> to vector<8x8x16xf32>
    %42 = vector.extract_strided_slice %38 {offsets = [48, 0], sizes = [48, 16], strides = [1, 1]} : vector<144x16xbf16> to vector<48x16xbf16>
    %cst_25 = arith.constant dense<0.000000e+00> : vector<64x16xf32>
    %43 = tpu.matmul %36, %42, %cst_25 {dimension_numbers = #tpu.dot_dimension_numbers<[1], [0], [0], [1], [0, 0, 1, 1], [], []>} : vector<64x48xbf16>, vector<48x16xbf16>, vector<64x16xf32> -> vector<64x16xf32>
    %44 = vector.shape_cast %43 : vector<64x16xf32> to vector<8x8x16xf32>
    %45 = vector.extract_strided_slice %38 {offsets = [96, 0], sizes = [48, 16], strides = [1, 1]} : vector<144x16xbf16> to vector<48x16xbf16>
    %cst_26 = arith.constant dense<0.000000e+00> : vector<64x16xf32>
    %46 = tpu.matmul %36, %45, %cst_26 {dimension_numbers = #tpu.dot_dimension_numbers<[1], [0], [0], [1], [0, 0, 1, 1], [], []>} : vector<64x48xbf16>, vector<48x16xbf16>, vector<64x16xf32> -> vector<64x16xf32>
    %47 = vector.shape_cast %46 : vector<64x16xf32> to vector<8x8x16xf32>
    %cst_27 = arith.constant 0.000000e+00 : f32
    %48 = vector.broadcast %cst_27 : f32 to vector<1x8x16xf32>
    %49 = vector.extract_strided_slice %41 {offsets = [0, 0, 0], sizes = [7, 8, 16], strides = [1, 1, 1]} : vector<8x8x16xf32> to vector<7x8x16xf32>
    %50 = tpu.concatenate %48, %49 in 0 : vector<1x8x16xf32>, vector<7x8x16xf32> -> vector<8x8x16xf32>
    %51 = arith.addf %50, %44 : vector<8x8x16xf32>
    %52 = vector.extract_strided_slice %47 {offsets = [1, 0, 0], sizes = [7, 8, 16], strides = [1, 1, 1]} : vector<8x8x16xf32> to vector<7x8x16xf32>
    %53 = tpu.concatenate %52, %48 in 0 : vector<7x8x16xf32>, vector<1x8x16xf32> -> vector<8x8x16xf32>
    %54 = arith.addf %51, %53 : vector<8x8x16xf32>
    %55 = vector.shape_cast %54 : vector<8x8x16xf32> to vector<64x16xf32>
    %c0_28 = arith.constant 0 : index
    %c0_29 = arith.constant 0 : index
    %c0_30 = arith.constant 0 : index
    %56 = vector.load %arg10[%c0_28, %c0_29, %c0_30] : memref<1x1x16xf32, #tpu.memory_space<vmem>>, vector<1x1x16xf32>
    %57 = vector.shape_cast %56 : vector<1x1x16xf32> to vector<1x16xf32>
    %58 = vector.broadcast %57 : vector<1x16xf32> to vector<64x16xf32>
    %59 = arith.mulf %55, %58 : vector<64x16xf32>
    %c0_31 = arith.constant 0 : index
    %c0_32 = arith.constant 0 : index
    %c0_33 = arith.constant 0 : index
    %60 = vector.load %arg11[%c0_31, %c0_32, %c0_33] : memref<1x1x16xf32, #tpu.memory_space<vmem>>, vector<1x1x16xf32>
    %61 = vector.shape_cast %60 : vector<1x1x16xf32> to vector<1x16xf32>
    %62 = vector.broadcast %61 : vector<1x16xf32> to vector<64x16xf32>
    %63 = arith.addf %59, %62 : vector<64x16xf32>
    %cst_34 = arith.constant 0.000000e+00 : f32
    %64 = vector.broadcast %cst_34 : f32 to vector<64x16xf32>
    %65 = arith.maximumf %63, %64 : vector<64x16xf32>
    %66 = arith.truncf %65 : vector<64x16xf32> to vector<64x16xbf16>
    %c0_35 = arith.constant 0 : index
    %c0_36 = arith.constant 0 : index
    %c0_37 = arith.constant 0 : index
    %67 = vector.load %arg12[%c0_35, %c0_36, %c0_37] : memref<1x16x32xbf16, #tpu.memory_space<vmem>>, vector<1x16x32xbf16>
    %68 = vector.shape_cast %67 : vector<1x16x32xbf16> to vector<16x32xbf16>
    %cst_38 = arith.constant dense<0.000000e+00> : vector<64x32xf32>
    %69 = tpu.matmul %66, %68, %cst_38 {dimension_numbers = #tpu.dot_dimension_numbers<[1], [0], [0], [1], [0, 0, 1, 1], [], []>} : vector<64x16xbf16>, vector<16x32xbf16>, vector<64x32xf32> -> vector<64x32xf32>
    %70 = arith.addf %69, %3 : vector<64x32xf32>
    %cst_39 = arith.constant 0.000000e+00 : f32
    %71 = vector.broadcast %cst_39 : f32 to vector<64x32xf32>
    %72 = arith.maximumf %70, %71 : vector<64x32xf32>
    %c0_40 = arith.constant 0 : index
    %c0_41 = arith.constant 0 : index
    %c0_42 = arith.constant 0 : index
    %c0_43 = arith.constant 0 : index
    %73 = vector.load %arg2[%c0_40, %c0_41, %c0_42, %c0_43] : memref<1x4x4x32xbf16, #tpu.memory_space<vmem>>, vector<1x4x4x32xbf16>
    %74 = vector.shape_cast %73 : vector<1x4x4x32xbf16> to vector<4x4x32xbf16>
    %75 = arith.extf %74 : vector<4x4x32xbf16> to vector<4x4x32xf32>
    %76 = vector.shape_cast %75 : vector<4x4x32xf32> to vector<16x32xf32>
    %c0_i32 = arith.constant 0 : i32
    %c2_i32 = arith.constant 2 : i32
    %77 = arith.addi %c0_i32, %c2_i32 : i32
    %c1_i32 = arith.constant 1 : i32
    %78 = scf.for %arg23 = %c0_i32 to %77 step %c1_i32 iter_args(%arg24 = %76) -> (vector<16x32xf32>)  : i32 {
      %94 = arith.index_cast %arg23 : i32 to index
      %c0_52 = arith.constant 0 : index
      %c0_53 = arith.constant 0 : index
      %95 = vector.load %arg13[%94, %c0_52, %c0_53] : memref<2x1x32xf32, #tpu.memory_space<vmem>>, vector<1x1x32xf32>
      %96 = vector.shape_cast %95 : vector<1x1x32xf32> to vector<1x32xf32>
      %97 = vector.broadcast %96 : vector<1x32xf32> to vector<16x32xf32>
      %98 = arith.mulf %arg24, %97 : vector<16x32xf32>
      %99 = arith.index_cast %arg23 : i32 to index
      %c0_54 = arith.constant 0 : index
      %c0_55 = arith.constant 0 : index
      %100 = vector.load %arg14[%99, %c0_54, %c0_55] : memref<2x1x32xf32, #tpu.memory_space<vmem>>, vector<1x1x32xf32>
      %101 = vector.shape_cast %100 : vector<1x1x32xf32> to vector<1x32xf32>
      %102 = vector.broadcast %101 : vector<1x32xf32> to vector<16x32xf32>
      %103 = arith.addf %98, %102 : vector<16x32xf32>
      %cst_56 = arith.constant 0.000000e+00 : f32
      %104 = vector.broadcast %cst_56 : f32 to vector<16x32xf32>
      %105 = arith.maximumf %103, %104 : vector<16x32xf32>
      %106 = arith.truncf %105 : vector<16x32xf32> to vector<16x32xbf16>
      %107 = arith.index_cast %arg23 : i32 to index
      %c0_57 = arith.constant 0 : index
      %c0_58 = arith.constant 0 : index
      %108 = vector.load %arg15[%107, %c0_57, %c0_58] : memref<2x32x16xbf16, #tpu.memory_space<vmem>>, vector<1x32x16xbf16>
      %109 = vector.shape_cast %108 : vector<1x32x16xbf16> to vector<32x16xbf16>
      %cst_59 = arith.constant dense<0.000000e+00> : vector<16x16xf32>
      %110 = tpu.matmul %106, %109, %cst_59 {dimension_numbers = #tpu.dot_dimension_numbers<[1], [0], [0], [1], [0, 0, 1, 1], [], []>} : vector<16x32xbf16>, vector<32x16xbf16>, vector<16x16xf32> -> vector<16x16xf32>
      %111 = arith.index_cast %arg23 : i32 to index
      %c0_60 = arith.constant 0 : index
      %c0_61 = arith.constant 0 : index
      %112 = vector.load %arg16[%111, %c0_60, %c0_61] : memref<2x1x16xf32, #tpu.memory_space<vmem>>, vector<1x1x16xf32>
      %113 = vector.shape_cast %112 : vector<1x1x16xf32> to vector<1x16xf32>
      %114 = vector.broadcast %113 : vector<1x16xf32> to vector<16x16xf32>
      %115 = arith.mulf %110, %114 : vector<16x16xf32>
      %116 = arith.index_cast %arg23 : i32 to index
      %c0_62 = arith.constant 0 : index
      %c0_63 = arith.constant 0 : index
      %117 = vector.load %arg17[%116, %c0_62, %c0_63] : memref<2x1x16xf32, #tpu.memory_space<vmem>>, vector<1x1x16xf32>
      %118 = vector.shape_cast %117 : vector<1x1x16xf32> to vector<1x16xf32>
      %119 = vector.broadcast %118 : vector<1x16xf32> to vector<16x16xf32>
      %120 = arith.addf %115, %119 : vector<16x16xf32>
      %cst_64 = arith.constant 0.000000e+00 : f32
      %121 = vector.broadcast %cst_64 : f32 to vector<16x16xf32>
      %122 = arith.maximumf %120, %121 : vector<16x16xf32>
      %123 = arith.truncf %122 : vector<16x16xf32> to vector<16x16xbf16>
      %124 = vector.shape_cast %123 : vector<16x16xbf16> to vector<4x4x16xbf16>
      %cst_65 = arith.constant 0.000000e+00 : bf16
      %125 = vector.broadcast %cst_65 : bf16 to vector<4x1x16xbf16>
      %126 = vector.extract_strided_slice %124 {offsets = [0, 0, 0], sizes = [4, 3, 16], strides = [1, 1, 1]} : vector<4x4x16xbf16> to vector<4x3x16xbf16>
      %127 = tpu.concatenate %125, %126 in 1 : vector<4x1x16xbf16>, vector<4x3x16xbf16> -> vector<4x4x16xbf16>
      %128 = vector.extract_strided_slice %124 {offsets = [0, 1, 0], sizes = [4, 3, 16], strides = [1, 1, 1]} : vector<4x4x16xbf16> to vector<4x3x16xbf16>
      %129 = tpu.concatenate %128, %125 in 1 : vector<4x3x16xbf16>, vector<4x1x16xbf16> -> vector<4x4x16xbf16>
      %130 = tpu.concatenate %127, %124, %129 in 2 : vector<4x4x16xbf16>, vector<4x4x16xbf16>, vector<4x4x16xbf16> -> vector<4x4x48xbf16>
      %131 = vector.shape_cast %130 : vector<4x4x48xbf16> to vector<16x48xbf16>
      %132 = arith.index_cast %arg23 : i32 to index
      %c0_66 = arith.constant 0 : index
      %c0_67 = arith.constant 0 : index
      %133 = vector.load %arg18[%132, %c0_66, %c0_67] : memref<2x144x16xbf16, #tpu.memory_space<vmem>>, vector<1x144x16xbf16>
      %134 = vector.shape_cast %133 : vector<1x144x16xbf16> to vector<144x16xbf16>
      %135 = vector.extract_strided_slice %134 {offsets = [0, 0], sizes = [48, 16], strides = [1, 1]} : vector<144x16xbf16> to vector<48x16xbf16>
      %cst_68 = arith.constant dense<0.000000e+00> : vector<16x16xf32>
      %136 = tpu.matmul %131, %135, %cst_68 {dimension_numbers = #tpu.dot_dimension_numbers<[1], [0], [0], [1], [0, 0, 1, 1], [], []>} : vector<16x48xbf16>, vector<48x16xbf16>, vector<16x16xf32> -> vector<16x16xf32>
      %137 = vector.shape_cast %136 : vector<16x16xf32> to vector<4x4x16xf32>
      %138 = vector.extract_strided_slice %134 {offsets = [48, 0], sizes = [48, 16], strides = [1, 1]} : vector<144x16xbf16> to vector<48x16xbf16>
      %cst_69 = arith.constant dense<0.000000e+00> : vector<16x16xf32>
      %139 = tpu.matmul %131, %138, %cst_69 {dimension_numbers = #tpu.dot_dimension_numbers<[1], [0], [0], [1], [0, 0, 1, 1], [], []>} : vector<16x48xbf16>, vector<48x16xbf16>, vector<16x16xf32> -> vector<16x16xf32>
      %140 = vector.shape_cast %139 : vector<16x16xf32> to vector<4x4x16xf32>
      %141 = vector.extract_strided_slice %134 {offsets = [96, 0], sizes = [48, 16], strides = [1, 1]} : vector<144x16xbf16> to vector<48x16xbf16>
      %cst_70 = arith.constant dense<0.000000e+00> : vector<16x16xf32>
      %142 = tpu.matmul %131, %141, %cst_70 {dimension_numbers = #tpu.dot_dimension_numbers<[1], [0], [0], [1], [0, 0, 1, 1], [], []>} : vector<16x48xbf16>, vector<48x16xbf16>, vector<16x16xf32> -> vector<16x16xf32>
      %143 = vector.shape_cast %142 : vector<16x16xf32> to vector<4x4x16xf32>
      %cst_71 = arith.constant 0.000000e+00 : f32
      %144 = vector.broadcast %cst_71 : f32 to vector<1x4x16xf32>
      %145 = vector.extract_strided_slice %137 {offsets = [0, 0, 0], sizes = [3, 4, 16], strides = [1, 1, 1]} : vector<4x4x16xf32> to vector<3x4x16xf32>
      %146 = tpu.concatenate %144, %145 in 0 : vector<1x4x16xf32>, vector<3x4x16xf32> -> vector<4x4x16xf32>
      %147 = arith.addf %146, %140 : vector<4x4x16xf32>
      %148 = vector.extract_strided_slice %143 {offsets = [1, 0, 0], sizes = [3, 4, 16], strides = [1, 1, 1]} : vector<4x4x16xf32> to vector<3x4x16xf32>
      %149 = tpu.concatenate %148, %144 in 0 : vector<3x4x16xf32>, vector<1x4x16xf32> -> vector<4x4x16xf32>
      %150 = arith.addf %147, %149 : vector<4x4x16xf32>
      %151 = vector.shape_cast %150 : vector<4x4x16xf32> to vector<16x16xf32>
      %152 = arith.index_cast %arg23 : i32 to index
      %c0_72 = arith.constant 0 : index
      %c0_73 = arith.constant 0 : index
      %153 = vector.load %arg19[%152, %c0_72, %c0_73] : memref<2x1x16xf32, #tpu.memory_space<vmem>>, vector<1x1x16xf32>
      %154 = vector.shape_cast %153 : vector<1x1x16xf32> to vector<1x16xf32>
      %155 = vector.broadcast %154 : vector<1x16xf32> to vector<16x16xf32>
      %156 = arith.mulf %151, %155 : vector<16x16xf32>
      %157 = arith.index_cast %arg23 : i32 to index
      %c0_74 = arith.constant 0 : index
      %c0_75 = arith.constant 0 : index
      %158 = vector.load %arg20[%157, %c0_74, %c0_75] : memref<2x1x16xf32, #tpu.memory_space<vmem>>, vector<1x1x16xf32>
      %159 = vector.shape_cast %158 : vector<1x1x16xf32> to vector<1x16xf32>
      %160 = vector.broadcast %159 : vector<1x16xf32> to vector<16x16xf32>
      %161 = arith.addf %156, %160 : vector<16x16xf32>
      %cst_76 = arith.constant 0.000000e+00 : f32
      %162 = vector.broadcast %cst_76 : f32 to vector<16x16xf32>
      %163 = arith.maximumf %161, %162 : vector<16x16xf32>
      %164 = arith.truncf %163 : vector<16x16xf32> to vector<16x16xbf16>
      %165 = arith.index_cast %arg23 : i32 to index
      %c0_77 = arith.constant 0 : index
      %c0_78 = arith.constant 0 : index
      %166 = vector.load %arg21[%165, %c0_77, %c0_78] : memref<2x16x32xbf16, #tpu.memory_space<vmem>>, vector<1x16x32xbf16>
      %167 = vector.shape_cast %166 : vector<1x16x32xbf16> to vector<16x32xbf16>
      %cst_79 = arith.constant dense<0.000000e+00> : vector<16x32xf32>
      %168 = tpu.matmul %164, %167, %cst_79 {dimension_numbers = #tpu.dot_dimension_numbers<[1], [0], [0], [1], [0, 0, 1, 1], [], []>} : vector<16x16xbf16>, vector<16x32xbf16>, vector<16x32xf32> -> vector<16x32xf32>
      %169 = arith.addf %168, %arg24 : vector<16x32xf32>
      %cst_80 = arith.constant 0.000000e+00 : f32
      %170 = vector.broadcast %cst_80 : f32 to vector<16x32xf32>
      %171 = arith.maximumf %169, %170 : vector<16x32xf32>
      scf.yield %171 : vector<16x32xf32>
    }
    %c2_i32_44 = arith.constant 2 : i32
    %79 = vector.shape_cast %78 : vector<16x32xf32> to vector<4x4x32xf32>
    %80 = arith.truncf %79 : vector<4x4x32xf32> to vector<4x4x32xbf16>
    %c0_45 = arith.constant 0 : index
    %c0_46 = arith.constant 0 : index
    %81 = vector.load %arg3[%c0_45, %c0_46] : memref<8x4xbf16, #tpu.memory_space<vmem>>, vector<8x4xbf16>
    %82 = vector.shape_cast %81 : vector<8x4xbf16> to vector<1x8x4xbf16>
    %83 = vector.broadcast %82 : vector<1x8x4xbf16> to vector<4x8x4xbf16>
    "tpu.trace_start"() <{level = 10 : i32, message = "hav,hvc->hac"}> : () -> ()
    %cst_47 = arith.constant dense<0.000000e+00> : vector<4x8x32xf32>
    %84 = tpu.matmul %83, %80, %cst_47 {dimension_numbers = #tpu.dot_dimension_numbers<[2], [1], [1], [2], [0, 0, 0, 1, 1, 2], [0], [0]>} : vector<4x8x4xbf16>, vector<4x4x32xbf16>, vector<4x8x32xf32> -> vector<4x8x32xf32>
    "tpu.trace_stop"() : () -> ()
    %85 = vector.shape_cast %72 : vector<64x32xf32> to vector<4x2x8x32xf32>
    %86 = vector.shape_cast %84 : vector<4x8x32xf32> to vector<4x1x8x32xf32>
    %87 = vector.broadcast %86 : vector<4x1x8x32xf32> to vector<4x2x8x32xf32>
    %88 = arith.addf %85, %87 : vector<4x2x8x32xf32>
    %89 = vector.shape_cast %88 : vector<4x2x8x32xf32> to vector<8x8x32xf32>
    %90 = arith.truncf %89 : vector<8x8x32xf32> to vector<8x8x32xbf16>
    %c0_48 = arith.constant 0 : index
    %c0_49 = arith.constant 0 : index
    %c0_50 = arith.constant 0 : index
    %c0_51 = arith.constant 0 : index
    %91 = vector.load %arg22[%c0_48, %c0_49, %c0_50, %c0_51] : memref<1x8x8x32xbf16, #tpu.memory_space<vmem>>, vector<1x8x8x32xbf16>
    %92 = vector.shape_cast %91 : vector<1x8x8x32xbf16> to vector<8x8x32xbf16>
    %93 = vector.shape_cast %90 : vector<8x8x32xbf16> to vector<1x8x8x32xbf16>
    tpu.vector_store %arg22[%c0_48, %c0_49, %c0_50, %c0_51], %93 {strides = array<i32>} : memref<1x8x8x32xbf16, #tpu.memory_space<vmem>>, vector<1x8x8x32xbf16>,
    return
  }
  func.func @transform_0(%arg0: i32) -> (i32, i32, i32, i32) {
    %c0_i32 = arith.constant 0 : i32
    %c0_i32_0 = arith.constant 0 : i32
    %c0_i32_1 = arith.constant 0 : i32
    %c0_i32_2 = arith.constant 0 : i32
    return %arg0, %c0_i32, %c0_i32_0, %c0_i32_1 : i32, i32, i32, i32
  }
  func.func @transform_1(%arg0: i32) -> (i32, i32, i32, i32) {
    %c0_i32 = arith.constant 0 : i32
    %c0_i32_0 = arith.constant 0 : i32
    %c0_i32_1 = arith.constant 0 : i32
    %c0_i32_2 = arith.constant 0 : i32
    return %arg0, %c0_i32, %c0_i32_0, %c0_i32_1 : i32, i32, i32, i32
  }
  func.func @transform_2(%arg0: i32) -> (i32, i32) {
    %c0_i32 = arith.constant 0 : i32
    %c0_i32_0 = arith.constant 0 : i32
    %c0_i32_1 = arith.constant 0 : i32
    return %c0_i32, %c0_i32_0 : i32, i32
  }
  func.func @transform_3(%arg0: i32) -> (i32, i32, i32) {
    %c0_i32 = arith.constant 0 : i32
    %c0_i32_0 = arith.constant 0 : i32
    %c0_i32_1 = arith.constant 0 : i32
    %c0_i32_2 = arith.constant 0 : i32
    return %c0_i32, %c0_i32_0, %c0_i32_1 : i32, i32, i32
  }
  func.func @transform_4(%arg0: i32) -> (i32, i32, i32) {
    %c0_i32 = arith.constant 0 : i32
    %c0_i32_0 = arith.constant 0 : i32
    %c0_i32_1 = arith.constant 0 : i32
    %c0_i32_2 = arith.constant 0 : i32
    return %c0_i32, %c0_i32_0, %c0_i32_1 : i32, i32, i32
  }
  func.func @transform_5(%arg0: i32) -> (i32, i32, i32) {
    %c0_i32 = arith.constant 0 : i32
    %c0_i32_0 = arith.constant 0 : i32
    %c0_i32_1 = arith.constant 0 : i32
    %c0_i32_2 = arith.constant 0 : i32
    return %c0_i32, %c0_i32_0, %c0_i32_1 : i32, i32, i32
  }
  func.func @transform_6(%arg0: i32) -> (i32, i32, i32) {
    %c0_i32 = arith.constant 0 : i32
    %c0_i32_0 = arith.constant 0 : i32
    %c0_i32_1 = arith.constant 0 : i32
    %c0_i32_2 = arith.constant 0 : i32
    return %c0_i32, %c0_i32_0, %c0_i32_1 : i32, i32, i32
  }
  func.func @transform_7(%arg0: i32) -> (i32, i32, i32) {
    %c0_i32 = arith.constant 0 : i32
    %c0_i32_0 = arith.constant 0 : i32
    %c0_i32_1 = arith.constant 0 : i32
    %c0_i32_2 = arith.constant 0 : i32
    return %c0_i32, %c0_i32_0, %c0_i32_1 : i32, i32, i32
  }
  func.func @transform_8(%arg0: i32) -> (i32, i32, i32) {
    %c0_i32 = arith.constant 0 : i32
    %c0_i32_0 = arith.constant 0 : i32
    %c0_i32_1 = arith.constant 0 : i32
    %c0_i32_2 = arith.constant 0 : i32
    return %c0_i32, %c0_i32_0, %c0_i32_1 : i32, i32, i32
  }
  func.func @transform_9(%arg0: i32) -> (i32, i32, i32) {
    %c0_i32 = arith.constant 0 : i32
    %c0_i32_0 = arith.constant 0 : i32
    %c0_i32_1 = arith.constant 0 : i32
    %c0_i32_2 = arith.constant 0 : i32
    return %c0_i32, %c0_i32_0, %c0_i32_1 : i32, i32, i32
  }
  func.func @transform_10(%arg0: i32) -> (i32, i32, i32) {
    %c0_i32 = arith.constant 0 : i32
    %c0_i32_0 = arith.constant 0 : i32
    %c0_i32_1 = arith.constant 0 : i32
    %c0_i32_2 = arith.constant 0 : i32
    return %c0_i32, %c0_i32_0, %c0_i32_1 : i32, i32, i32
  }
  func.func @transform_11(%arg0: i32) -> (i32, i32, i32) {
    %c0_i32 = arith.constant 0 : i32
    %c0_i32_0 = arith.constant 0 : i32
    %c0_i32_1 = arith.constant 0 : i32
    %c0_i32_2 = arith.constant 0 : i32
    return %c0_i32, %c0_i32_0, %c0_i32_1 : i32, i32, i32
  }
  func.func @transform_12(%arg0: i32) -> (i32, i32, i32) {
    %c0_i32 = arith.constant 0 : i32
    %c0_i32_0 = arith.constant 0 : i32
    %c0_i32_1 = arith.constant 0 : i32
    %c0_i32_2 = arith.constant 0 : i32
    return %c0_i32, %c0_i32_0, %c0_i32_1 : i32, i32, i32
  }
  func.func @transform_13(%arg0: i32) -> (i32, i32, i32) {
    %c0_i32 = arith.constant 0 : i32
    %c0_i32_0 = arith.constant 0 : i32
    %c0_i32_1 = arith.constant 0 : i32
    %c0_i32_2 = arith.constant 0 : i32
    return %c0_i32, %c0_i32_0, %c0_i32_1 : i32, i32, i32
  }
  func.func @transform_14(%arg0: i32) -> (i32, i32, i32) {
    %c0_i32 = arith.constant 0 : i32
    %c0_i32_0 = arith.constant 0 : i32
    %c0_i32_1 = arith.constant 0 : i32
    %c0_i32_2 = arith.constant 0 : i32
    return %c0_i32, %c0_i32_0, %c0_i32_1 : i32, i32, i32
  }
  func.func @transform_15(%arg0: i32) -> (i32, i32, i32) {
    %c0_i32 = arith.constant 0 : i32
    %c0_i32_0 = arith.constant 0 : i32
    %c0_i32_1 = arith.constant 0 : i32
    %c0_i32_2 = arith.constant 0 : i32
    return %c0_i32, %c0_i32_0, %c0_i32_1 : i32, i32, i32
  }
  func.func @transform_16(%arg0: i32) -> (i32, i32, i32) {
    %c0_i32 = arith.constant 0 : i32
    %c0_i32_0 = arith.constant 0 : i32
    %c0_i32_1 = arith.constant 0 : i32
    %c0_i32_2 = arith.constant 0 : i32
    return %c0_i32, %c0_i32_0, %c0_i32_1 : i32, i32, i32
  }
  func.func @transform_17(%arg0: i32) -> (i32, i32, i32) {
    %c0_i32 = arith.constant 0 : i32
    %c0_i32_0 = arith.constant 0 : i32
    %c0_i32_1 = arith.constant 0 : i32
    %c0_i32_2 = arith.constant 0 : i32
    return %c0_i32, %c0_i32_0, %c0_i32_1 : i32, i32, i32
  }
  func.func @transform_18(%arg0: i32) -> (i32, i32, i32) {
    %c0_i32 = arith.constant 0 : i32
    %c0_i32_0 = arith.constant 0 : i32
    %c0_i32_1 = arith.constant 0 : i32
    %c0_i32_2 = arith.constant 0 : i32
    return %c0_i32, %c0_i32_0, %c0_i32_1 : i32, i32, i32
  }
  func.func @transform_19(%arg0: i32) -> (i32, i32, i32) {
    %c0_i32 = arith.constant 0 : i32
    %c0_i32_0 = arith.constant 0 : i32
    %c0_i32_1 = arith.constant 0 : i32
    %c0_i32_2 = arith.constant 0 : i32
    return %c0_i32, %c0_i32_0, %c0_i32_1 : i32, i32, i32
  }
  func.func @transform_20(%arg0: i32) -> (i32, i32, i32) {
    %c0_i32 = arith.constant 0 : i32
    %c0_i32_0 = arith.constant 0 : i32
    %c0_i32_1 = arith.constant 0 : i32
    %c0_i32_2 = arith.constant 0 : i32
    return %c0_i32, %c0_i32_0, %c0_i32_1 : i32, i32, i32
  }
  func.func @transform_21(%arg0: i32) -> (i32, i32, i32, i32) {
    %c0_i32 = arith.constant 0 : i32
    %c0_i32_0 = arith.constant 0 : i32
    %c0_i32_1 = arith.constant 0 : i32
    %c0_i32_2 = arith.constant 0 : i32
    return %arg0, %c0_i32, %c0_i32_0, %c0_i32_1 : i32, i32, i32, i32
  }
}

module attributes {stable_mosaic.version = 11 : i64} {
  func.func @_merge_kernel(%arg0: i32, %arg1: memref<1x16x16x32xf32, #tpu.memory_space<vmem>>, %arg2: memref<1x8x8x32xbf16, #tpu.memory_space<vmem>>, %arg3: memref<16x8xbf16, #tpu.memory_space<vmem>>, %arg4: memref<1x1x32xf32, #tpu.memory_space<vmem>>, %arg5: memref<1x1x32xf32, #tpu.memory_space<vmem>>, %arg6: memref<1x32x16xbf16, #tpu.memory_space<vmem>>, %arg7: memref<1x1x16xf32, #tpu.memory_space<vmem>>, %arg8: memref<1x1x16xf32, #tpu.memory_space<vmem>>, %arg9: memref<1x144x16xbf16, #tpu.memory_space<vmem>>, %arg10: memref<1x1x16xf32, #tpu.memory_space<vmem>>, %arg11: memref<1x1x16xf32, #tpu.memory_space<vmem>>, %arg12: memref<1x16x32xbf16, #tpu.memory_space<vmem>>, %arg13: memref<1x1x32xf32, #tpu.memory_space<vmem>>, %arg14: memref<1x1x32xf32, #tpu.memory_space<vmem>>, %arg15: memref<1x32x16xbf16, #tpu.memory_space<vmem>>, %arg16: memref<1x1x16xf32, #tpu.memory_space<vmem>>, %arg17: memref<1x1x16xf32, #tpu.memory_space<vmem>>, %arg18: memref<1x144x16xbf16, #tpu.memory_space<vmem>>, %arg19: memref<1x1x16xf32, #tpu.memory_space<vmem>>, %arg20: memref<1x1x16xf32, #tpu.memory_space<vmem>>, %arg21: memref<1x16x32xbf16, #tpu.memory_space<vmem>>, %arg22: memref<1x16x16x32xf32, #tpu.memory_space<vmem>>) attributes {dimension_semantics = [#tpu.dimension_semantics<parallel>], iteration_bounds = array<i64: 2>, scalar_prefetch = 0 : i64, scratch_operands = 0 : i64, tpu.core_type = #tpu.core_type<tc>, window_params = [{transform_indices = @transform_0, window_bounds = array<i64: 1, 16, 16, 32>}, {transform_indices = @transform_1, window_bounds = array<i64: 1, 8, 8, 32>}, {pipeline_mode = #tpu.pipeline_mode<synchronous>, transform_indices = @transform_2, window_bounds = array<i64: 16, 8>}, {pipeline_mode = #tpu.pipeline_mode<synchronous>, transform_indices = @transform_3, window_bounds = array<i64: 1, 1, 32>}, {pipeline_mode = #tpu.pipeline_mode<synchronous>, transform_indices = @transform_4, window_bounds = array<i64: 1, 1, 32>}, {pipeline_mode = #tpu.pipeline_mode<synchronous>, transform_indices = @transform_5, window_bounds = array<i64: 1, 32, 16>}, {pipeline_mode = #tpu.pipeline_mode<synchronous>, transform_indices = @transform_6, window_bounds = array<i64: 1, 1, 16>}, {pipeline_mode = #tpu.pipeline_mode<synchronous>, transform_indices = @transform_7, window_bounds = array<i64: 1, 1, 16>}, {pipeline_mode = #tpu.pipeline_mode<synchronous>, transform_indices = @transform_8, window_bounds = array<i64: 1, 144, 16>}, {pipeline_mode = #tpu.pipeline_mode<synchronous>, transform_indices = @transform_9, window_bounds = array<i64: 1, 1, 16>}, {pipeline_mode = #tpu.pipeline_mode<synchronous>, transform_indices = @transform_10, window_bounds = array<i64: 1, 1, 16>}, {pipeline_mode = #tpu.pipeline_mode<synchronous>, transform_indices = @transform_11, window_bounds = array<i64: 1, 16, 32>}, {pipeline_mode = #tpu.pipeline_mode<synchronous>, transform_indices = @transform_12, window_bounds = array<i64: 1, 1, 32>}, {pipeline_mode = #tpu.pipeline_mode<synchronous>, transform_indices = @transform_13, window_bounds = array<i64: 1, 1, 32>}, {pipeline_mode = #tpu.pipeline_mode<synchronous>, transform_indices = @transform_14, window_bounds = array<i64: 1, 32, 16>}, {pipeline_mode = #tpu.pipeline_mode<synchronous>, transform_indices = @transform_15, window_bounds = array<i64: 1, 1, 16>}, {pipeline_mode = #tpu.pipeline_mode<synchronous>, transform_indices = @transform_16, window_bounds = array<i64: 1, 1, 16>}, {pipeline_mode = #tpu.pipeline_mode<synchronous>, transform_indices = @transform_17, window_bounds = array<i64: 1, 144, 16>}, {pipeline_mode = #tpu.pipeline_mode<synchronous>, transform_indices = @transform_18, window_bounds = array<i64: 1, 1, 16>}, {pipeline_mode = #tpu.pipeline_mode<synchronous>, transform_indices = @transform_19, window_bounds = array<i64: 1, 1, 16>}, {pipeline_mode = #tpu.pipeline_mode<synchronous>, transform_indices = @transform_20, window_bounds = array<i64: 1, 16, 32>}, {transform_indices = @transform_21, window_bounds = array<i64: 1, 16, 16, 32>}]} {
    %c0 = arith.constant 0 : index
    %c0_0 = arith.constant 0 : index
    %c0_1 = arith.constant 0 : index
    %c0_2 = arith.constant 0 : index
    %0 = vector.load %arg1[%c0, %c0_0, %c0_1, %c0_2] : memref<1x16x16x32xf32, #tpu.memory_space<vmem>>, vector<1x16x16x32xf32>
    %1 = vector.shape_cast %0 : vector<1x16x16x32xf32> to vector<16x16x32xf32>
    %2 = vector.shape_cast %1 : vector<16x16x32xf32> to vector<256x32xf32>
    %c0_3 = arith.constant 0 : index
    %c0_4 = arith.constant 0 : index
    %c0_5 = arith.constant 0 : index
    %3 = vector.load %arg4[%c0_3, %c0_4, %c0_5] : memref<1x1x32xf32, #tpu.memory_space<vmem>>, vector<1x1x32xf32>
    %4 = vector.shape_cast %3 : vector<1x1x32xf32> to vector<1x32xf32>
    %5 = vector.broadcast %4 : vector<1x32xf32> to vector<256x32xf32>
    %6 = arith.mulf %2, %5 : vector<256x32xf32>
    %c0_6 = arith.constant 0 : index
    %c0_7 = arith.constant 0 : index
    %c0_8 = arith.constant 0 : index
    %7 = vector.load %arg5[%c0_6, %c0_7, %c0_8] : memref<1x1x32xf32, #tpu.memory_space<vmem>>, vector<1x1x32xf32>
    %8 = vector.shape_cast %7 : vector<1x1x32xf32> to vector<1x32xf32>
    %9 = vector.broadcast %8 : vector<1x32xf32> to vector<256x32xf32>
    %10 = arith.addf %6, %9 : vector<256x32xf32>
    %cst = arith.constant 0.000000e+00 : f32
    %11 = vector.broadcast %cst : f32 to vector<256x32xf32>
    %12 = arith.maximumf %10, %11 : vector<256x32xf32>
    %13 = arith.truncf %12 : vector<256x32xf32> to vector<256x32xbf16>
    %c0_9 = arith.constant 0 : index
    %c0_10 = arith.constant 0 : index
    %c0_11 = arith.constant 0 : index
    %14 = vector.load %arg6[%c0_9, %c0_10, %c0_11] : memref<1x32x16xbf16, #tpu.memory_space<vmem>>, vector<1x32x16xbf16>
    %15 = vector.shape_cast %14 : vector<1x32x16xbf16> to vector<32x16xbf16>
    %cst_12 = arith.constant dense<0.000000e+00> : vector<256x16xf32>
    %16 = tpu.matmul %13, %15, %cst_12 {dimension_numbers = #tpu.dot_dimension_numbers<[1], [0], [0], [1], [0, 0, 1, 1], [], []>} : vector<256x32xbf16>, vector<32x16xbf16>, vector<256x16xf32> -> vector<256x16xf32>
    %c0_13 = arith.constant 0 : index
    %c0_14 = arith.constant 0 : index
    %c0_15 = arith.constant 0 : index
    %17 = vector.load %arg7[%c0_13, %c0_14, %c0_15] : memref<1x1x16xf32, #tpu.memory_space<vmem>>, vector<1x1x16xf32>
    %18 = vector.shape_cast %17 : vector<1x1x16xf32> to vector<1x16xf32>
    %19 = vector.broadcast %18 : vector<1x16xf32> to vector<256x16xf32>
    %20 = arith.mulf %16, %19 : vector<256x16xf32>
    %c0_16 = arith.constant 0 : index
    %c0_17 = arith.constant 0 : index
    %c0_18 = arith.constant 0 : index
    %21 = vector.load %arg8[%c0_16, %c0_17, %c0_18] : memref<1x1x16xf32, #tpu.memory_space<vmem>>, vector<1x1x16xf32>
    %22 = vector.shape_cast %21 : vector<1x1x16xf32> to vector<1x16xf32>
    %23 = vector.broadcast %22 : vector<1x16xf32> to vector<256x16xf32>
    %24 = arith.addf %20, %23 : vector<256x16xf32>
    %cst_19 = arith.constant 0.000000e+00 : f32
    %25 = vector.broadcast %cst_19 : f32 to vector<256x16xf32>
    %26 = arith.maximumf %24, %25 : vector<256x16xf32>
    %27 = arith.truncf %26 : vector<256x16xf32> to vector<256x16xbf16>
    %28 = vector.shape_cast %27 : vector<256x16xbf16> to vector<16x16x16xbf16>
    %cst_20 = arith.constant 0.000000e+00 : bf16
    %29 = vector.broadcast %cst_20 : bf16 to vector<16x1x16xbf16>
    %30 = vector.extract_strided_slice %28 {offsets = [0, 0, 0], sizes = [16, 15, 16], strides = [1, 1, 1]} : vector<16x16x16xbf16> to vector<16x15x16xbf16>
    %31 = tpu.concatenate %29, %30 in 1 : vector<16x1x16xbf16>, vector<16x15x16xbf16> -> vector<16x16x16xbf16>
    %32 = vector.extract_strided_slice %28 {offsets = [0, 1, 0], sizes = [16, 15, 16], strides = [1, 1, 1]} : vector<16x16x16xbf16> to vector<16x15x16xbf16>
    %33 = tpu.concatenate %32, %29 in 1 : vector<16x15x16xbf16>, vector<16x1x16xbf16> -> vector<16x16x16xbf16>
    %34 = tpu.concatenate %31, %28, %33 in 2 : vector<16x16x16xbf16>, vector<16x16x16xbf16>, vector<16x16x16xbf16> -> vector<16x16x48xbf16>
    %35 = vector.shape_cast %34 : vector<16x16x48xbf16> to vector<256x48xbf16>
    %c0_21 = arith.constant 0 : index
    %c0_22 = arith.constant 0 : index
    %c0_23 = arith.constant 0 : index
    %36 = vector.load %arg9[%c0_21, %c0_22, %c0_23] : memref<1x144x16xbf16, #tpu.memory_space<vmem>>, vector<1x144x16xbf16>
    %37 = vector.shape_cast %36 : vector<1x144x16xbf16> to vector<144x16xbf16>
    %38 = vector.extract_strided_slice %37 {offsets = [0, 0], sizes = [48, 16], strides = [1, 1]} : vector<144x16xbf16> to vector<48x16xbf16>
    %cst_24 = arith.constant dense<0.000000e+00> : vector<256x16xf32>
    %39 = tpu.matmul %35, %38, %cst_24 {dimension_numbers = #tpu.dot_dimension_numbers<[1], [0], [0], [1], [0, 0, 1, 1], [], []>} : vector<256x48xbf16>, vector<48x16xbf16>, vector<256x16xf32> -> vector<256x16xf32>
    %40 = vector.shape_cast %39 : vector<256x16xf32> to vector<16x16x16xf32>
    %41 = vector.extract_strided_slice %37 {offsets = [48, 0], sizes = [48, 16], strides = [1, 1]} : vector<144x16xbf16> to vector<48x16xbf16>
    %cst_25 = arith.constant dense<0.000000e+00> : vector<256x16xf32>
    %42 = tpu.matmul %35, %41, %cst_25 {dimension_numbers = #tpu.dot_dimension_numbers<[1], [0], [0], [1], [0, 0, 1, 1], [], []>} : vector<256x48xbf16>, vector<48x16xbf16>, vector<256x16xf32> -> vector<256x16xf32>
    %43 = vector.shape_cast %42 : vector<256x16xf32> to vector<16x16x16xf32>
    %44 = vector.extract_strided_slice %37 {offsets = [96, 0], sizes = [48, 16], strides = [1, 1]} : vector<144x16xbf16> to vector<48x16xbf16>
    %cst_26 = arith.constant dense<0.000000e+00> : vector<256x16xf32>
    %45 = tpu.matmul %35, %44, %cst_26 {dimension_numbers = #tpu.dot_dimension_numbers<[1], [0], [0], [1], [0, 0, 1, 1], [], []>} : vector<256x48xbf16>, vector<48x16xbf16>, vector<256x16xf32> -> vector<256x16xf32>
    %46 = vector.shape_cast %45 : vector<256x16xf32> to vector<16x16x16xf32>
    %cst_27 = arith.constant 0.000000e+00 : f32
    %47 = vector.broadcast %cst_27 : f32 to vector<1x16x16xf32>
    %48 = vector.extract_strided_slice %40 {offsets = [0, 0, 0], sizes = [15, 16, 16], strides = [1, 1, 1]} : vector<16x16x16xf32> to vector<15x16x16xf32>
    %49 = tpu.concatenate %47, %48 in 0 : vector<1x16x16xf32>, vector<15x16x16xf32> -> vector<16x16x16xf32>
    %50 = arith.addf %49, %43 : vector<16x16x16xf32>
    %51 = vector.extract_strided_slice %46 {offsets = [1, 0, 0], sizes = [15, 16, 16], strides = [1, 1, 1]} : vector<16x16x16xf32> to vector<15x16x16xf32>
    %52 = tpu.concatenate %51, %47 in 0 : vector<15x16x16xf32>, vector<1x16x16xf32> -> vector<16x16x16xf32>
    %53 = arith.addf %50, %52 : vector<16x16x16xf32>
    %54 = vector.shape_cast %53 : vector<16x16x16xf32> to vector<256x16xf32>
    %c0_28 = arith.constant 0 : index
    %c0_29 = arith.constant 0 : index
    %c0_30 = arith.constant 0 : index
    %55 = vector.load %arg10[%c0_28, %c0_29, %c0_30] : memref<1x1x16xf32, #tpu.memory_space<vmem>>, vector<1x1x16xf32>
    %56 = vector.shape_cast %55 : vector<1x1x16xf32> to vector<1x16xf32>
    %57 = vector.broadcast %56 : vector<1x16xf32> to vector<256x16xf32>
    %58 = arith.mulf %54, %57 : vector<256x16xf32>
    %c0_31 = arith.constant 0 : index
    %c0_32 = arith.constant 0 : index
    %c0_33 = arith.constant 0 : index
    %59 = vector.load %arg11[%c0_31, %c0_32, %c0_33] : memref<1x1x16xf32, #tpu.memory_space<vmem>>, vector<1x1x16xf32>
    %60 = vector.shape_cast %59 : vector<1x1x16xf32> to vector<1x16xf32>
    %61 = vector.broadcast %60 : vector<1x16xf32> to vector<256x16xf32>
    %62 = arith.addf %58, %61 : vector<256x16xf32>
    %cst_34 = arith.constant 0.000000e+00 : f32
    %63 = vector.broadcast %cst_34 : f32 to vector<256x16xf32>
    %64 = arith.maximumf %62, %63 : vector<256x16xf32>
    %65 = arith.truncf %64 : vector<256x16xf32> to vector<256x16xbf16>
    %c0_35 = arith.constant 0 : index
    %c0_36 = arith.constant 0 : index
    %c0_37 = arith.constant 0 : index
    %66 = vector.load %arg12[%c0_35, %c0_36, %c0_37] : memref<1x16x32xbf16, #tpu.memory_space<vmem>>, vector<1x16x32xbf16>
    %67 = vector.shape_cast %66 : vector<1x16x32xbf16> to vector<16x32xbf16>
    %cst_38 = arith.constant dense<0.000000e+00> : vector<256x32xf32>
    %68 = tpu.matmul %65, %67, %cst_38 {dimension_numbers = #tpu.dot_dimension_numbers<[1], [0], [0], [1], [0, 0, 1, 1], [], []>} : vector<256x16xbf16>, vector<16x32xbf16>, vector<256x32xf32> -> vector<256x32xf32>
    %69 = arith.addf %68, %2 : vector<256x32xf32>
    %cst_39 = arith.constant 0.000000e+00 : f32
    %70 = vector.broadcast %cst_39 : f32 to vector<256x32xf32>
    %71 = arith.maximumf %69, %70 : vector<256x32xf32>
    %c0_40 = arith.constant 0 : index
    %c0_41 = arith.constant 0 : index
    %c0_42 = arith.constant 0 : index
    %c0_43 = arith.constant 0 : index
    %72 = vector.load %arg2[%c0_40, %c0_41, %c0_42, %c0_43] : memref<1x8x8x32xbf16, #tpu.memory_space<vmem>>, vector<1x8x8x32xbf16>
    %73 = vector.shape_cast %72 : vector<1x8x8x32xbf16> to vector<8x8x32xbf16>
    %74 = arith.extf %73 : vector<8x8x32xbf16> to vector<8x8x32xf32>
    %75 = vector.shape_cast %74 : vector<8x8x32xf32> to vector<64x32xf32>
    %c0_44 = arith.constant 0 : index
    %c0_45 = arith.constant 0 : index
    %c0_46 = arith.constant 0 : index
    %76 = vector.load %arg13[%c0_44, %c0_45, %c0_46] : memref<1x1x32xf32, #tpu.memory_space<vmem>>, vector<1x1x32xf32>
    %77 = vector.shape_cast %76 : vector<1x1x32xf32> to vector<1x32xf32>
    %78 = vector.broadcast %77 : vector<1x32xf32> to vector<64x32xf32>
    %79 = arith.mulf %75, %78 : vector<64x32xf32>
    %c0_47 = arith.constant 0 : index
    %c0_48 = arith.constant 0 : index
    %c0_49 = arith.constant 0 : index
    %80 = vector.load %arg14[%c0_47, %c0_48, %c0_49] : memref<1x1x32xf32, #tpu.memory_space<vmem>>, vector<1x1x32xf32>
    %81 = vector.shape_cast %80 : vector<1x1x32xf32> to vector<1x32xf32>
    %82 = vector.broadcast %81 : vector<1x32xf32> to vector<64x32xf32>
    %83 = arith.addf %79, %82 : vector<64x32xf32>
    %cst_50 = arith.constant 0.000000e+00 : f32
    %84 = vector.broadcast %cst_50 : f32 to vector<64x32xf32>
    %85 = arith.maximumf %83, %84 : vector<64x32xf32>
    %86 = arith.truncf %85 : vector<64x32xf32> to vector<64x32xbf16>
    %c0_51 = arith.constant 0 : index
    %c0_52 = arith.constant 0 : index
    %c0_53 = arith.constant 0 : index
    %87 = vector.load %arg15[%c0_51, %c0_52, %c0_53] : memref<1x32x16xbf16, #tpu.memory_space<vmem>>, vector<1x32x16xbf16>
    %88 = vector.shape_cast %87 : vector<1x32x16xbf16> to vector<32x16xbf16>
    %cst_54 = arith.constant dense<0.000000e+00> : vector<64x16xf32>
    %89 = tpu.matmul %86, %88, %cst_54 {dimension_numbers = #tpu.dot_dimension_numbers<[1], [0], [0], [1], [0, 0, 1, 1], [], []>} : vector<64x32xbf16>, vector<32x16xbf16>, vector<64x16xf32> -> vector<64x16xf32>
    %c0_55 = arith.constant 0 : index
    %c0_56 = arith.constant 0 : index
    %c0_57 = arith.constant 0 : index
    %90 = vector.load %arg16[%c0_55, %c0_56, %c0_57] : memref<1x1x16xf32, #tpu.memory_space<vmem>>, vector<1x1x16xf32>
    %91 = vector.shape_cast %90 : vector<1x1x16xf32> to vector<1x16xf32>
    %92 = vector.broadcast %91 : vector<1x16xf32> to vector<64x16xf32>
    %93 = arith.mulf %89, %92 : vector<64x16xf32>
    %c0_58 = arith.constant 0 : index
    %c0_59 = arith.constant 0 : index
    %c0_60 = arith.constant 0 : index
    %94 = vector.load %arg17[%c0_58, %c0_59, %c0_60] : memref<1x1x16xf32, #tpu.memory_space<vmem>>, vector<1x1x16xf32>
    %95 = vector.shape_cast %94 : vector<1x1x16xf32> to vector<1x16xf32>
    %96 = vector.broadcast %95 : vector<1x16xf32> to vector<64x16xf32>
    %97 = arith.addf %93, %96 : vector<64x16xf32>
    %cst_61 = arith.constant 0.000000e+00 : f32
    %98 = vector.broadcast %cst_61 : f32 to vector<64x16xf32>
    %99 = arith.maximumf %97, %98 : vector<64x16xf32>
    %100 = arith.truncf %99 : vector<64x16xf32> to vector<64x16xbf16>
    %101 = vector.shape_cast %100 : vector<64x16xbf16> to vector<8x8x16xbf16>
    %cst_62 = arith.constant 0.000000e+00 : bf16
    %102 = vector.broadcast %cst_62 : bf16 to vector<8x1x16xbf16>
    %103 = vector.extract_strided_slice %101 {offsets = [0, 0, 0], sizes = [8, 7, 16], strides = [1, 1, 1]} : vector<8x8x16xbf16> to vector<8x7x16xbf16>
    %104 = tpu.concatenate %102, %103 in 1 : vector<8x1x16xbf16>, vector<8x7x16xbf16> -> vector<8x8x16xbf16>
    %105 = vector.extract_strided_slice %101 {offsets = [0, 1, 0], sizes = [8, 7, 16], strides = [1, 1, 1]} : vector<8x8x16xbf16> to vector<8x7x16xbf16>
    %106 = tpu.concatenate %105, %102 in 1 : vector<8x7x16xbf16>, vector<8x1x16xbf16> -> vector<8x8x16xbf16>
    %107 = tpu.concatenate %104, %101, %106 in 2 : vector<8x8x16xbf16>, vector<8x8x16xbf16>, vector<8x8x16xbf16> -> vector<8x8x48xbf16>
    %108 = vector.shape_cast %107 : vector<8x8x48xbf16> to vector<64x48xbf16>
    %c0_63 = arith.constant 0 : index
    %c0_64 = arith.constant 0 : index
    %c0_65 = arith.constant 0 : index
    %109 = vector.load %arg18[%c0_63, %c0_64, %c0_65] : memref<1x144x16xbf16, #tpu.memory_space<vmem>>, vector<1x144x16xbf16>
    %110 = vector.shape_cast %109 : vector<1x144x16xbf16> to vector<144x16xbf16>
    %111 = vector.extract_strided_slice %110 {offsets = [0, 0], sizes = [48, 16], strides = [1, 1]} : vector<144x16xbf16> to vector<48x16xbf16>
    %cst_66 = arith.constant dense<0.000000e+00> : vector<64x16xf32>
    %112 = tpu.matmul %108, %111, %cst_66 {dimension_numbers = #tpu.dot_dimension_numbers<[1], [0], [0], [1], [0, 0, 1, 1], [], []>} : vector<64x48xbf16>, vector<48x16xbf16>, vector<64x16xf32> -> vector<64x16xf32>
    %113 = vector.shape_cast %112 : vector<64x16xf32> to vector<8x8x16xf32>
    %114 = vector.extract_strided_slice %110 {offsets = [48, 0], sizes = [48, 16], strides = [1, 1]} : vector<144x16xbf16> to vector<48x16xbf16>
    %cst_67 = arith.constant dense<0.000000e+00> : vector<64x16xf32>
    %115 = tpu.matmul %108, %114, %cst_67 {dimension_numbers = #tpu.dot_dimension_numbers<[1], [0], [0], [1], [0, 0, 1, 1], [], []>} : vector<64x48xbf16>, vector<48x16xbf16>, vector<64x16xf32> -> vector<64x16xf32>
    %116 = vector.shape_cast %115 : vector<64x16xf32> to vector<8x8x16xf32>
    %117 = vector.extract_strided_slice %110 {offsets = [96, 0], sizes = [48, 16], strides = [1, 1]} : vector<144x16xbf16> to vector<48x16xbf16>
    %cst_68 = arith.constant dense<0.000000e+00> : vector<64x16xf32>
    %118 = tpu.matmul %108, %117, %cst_68 {dimension_numbers = #tpu.dot_dimension_numbers<[1], [0], [0], [1], [0, 0, 1, 1], [], []>} : vector<64x48xbf16>, vector<48x16xbf16>, vector<64x16xf32> -> vector<64x16xf32>
    %119 = vector.shape_cast %118 : vector<64x16xf32> to vector<8x8x16xf32>
    %cst_69 = arith.constant 0.000000e+00 : f32
    %120 = vector.broadcast %cst_69 : f32 to vector<1x8x16xf32>
    %121 = vector.extract_strided_slice %113 {offsets = [0, 0, 0], sizes = [7, 8, 16], strides = [1, 1, 1]} : vector<8x8x16xf32> to vector<7x8x16xf32>
    %122 = tpu.concatenate %120, %121 in 0 : vector<1x8x16xf32>, vector<7x8x16xf32> -> vector<8x8x16xf32>
    %123 = arith.addf %122, %116 : vector<8x8x16xf32>
    %124 = vector.extract_strided_slice %119 {offsets = [1, 0, 0], sizes = [7, 8, 16], strides = [1, 1, 1]} : vector<8x8x16xf32> to vector<7x8x16xf32>
    %125 = tpu.concatenate %124, %120 in 0 : vector<7x8x16xf32>, vector<1x8x16xf32> -> vector<8x8x16xf32>
    %126 = arith.addf %123, %125 : vector<8x8x16xf32>
    %127 = vector.shape_cast %126 : vector<8x8x16xf32> to vector<64x16xf32>
    %c0_70 = arith.constant 0 : index
    %c0_71 = arith.constant 0 : index
    %c0_72 = arith.constant 0 : index
    %128 = vector.load %arg19[%c0_70, %c0_71, %c0_72] : memref<1x1x16xf32, #tpu.memory_space<vmem>>, vector<1x1x16xf32>
    %129 = vector.shape_cast %128 : vector<1x1x16xf32> to vector<1x16xf32>
    %130 = vector.broadcast %129 : vector<1x16xf32> to vector<64x16xf32>
    %131 = arith.mulf %127, %130 : vector<64x16xf32>
    %c0_73 = arith.constant 0 : index
    %c0_74 = arith.constant 0 : index
    %c0_75 = arith.constant 0 : index
    %132 = vector.load %arg20[%c0_73, %c0_74, %c0_75] : memref<1x1x16xf32, #tpu.memory_space<vmem>>, vector<1x1x16xf32>
    %133 = vector.shape_cast %132 : vector<1x1x16xf32> to vector<1x16xf32>
    %134 = vector.broadcast %133 : vector<1x16xf32> to vector<64x16xf32>
    %135 = arith.addf %131, %134 : vector<64x16xf32>
    %cst_76 = arith.constant 0.000000e+00 : f32
    %136 = vector.broadcast %cst_76 : f32 to vector<64x16xf32>
    %137 = arith.maximumf %135, %136 : vector<64x16xf32>
    %138 = arith.truncf %137 : vector<64x16xf32> to vector<64x16xbf16>
    %c0_77 = arith.constant 0 : index
    %c0_78 = arith.constant 0 : index
    %c0_79 = arith.constant 0 : index
    %139 = vector.load %arg21[%c0_77, %c0_78, %c0_79] : memref<1x16x32xbf16, #tpu.memory_space<vmem>>, vector<1x16x32xbf16>
    %140 = vector.shape_cast %139 : vector<1x16x32xbf16> to vector<16x32xbf16>
    %cst_80 = arith.constant dense<0.000000e+00> : vector<64x32xf32>
    %141 = tpu.matmul %138, %140, %cst_80 {dimension_numbers = #tpu.dot_dimension_numbers<[1], [0], [0], [1], [0, 0, 1, 1], [], []>} : vector<64x16xbf16>, vector<16x32xbf16>, vector<64x32xf32> -> vector<64x32xf32>
    %142 = arith.addf %141, %75 : vector<64x32xf32>
    %cst_81 = arith.constant 0.000000e+00 : f32
    %143 = vector.broadcast %cst_81 : f32 to vector<64x32xf32>
    %144 = arith.maximumf %142, %143 : vector<64x32xf32>
    %145 = vector.shape_cast %144 : vector<64x32xf32> to vector<8x8x32xf32>
    %146 = arith.truncf %145 : vector<8x8x32xf32> to vector<8x8x32xbf16>
    %c0_82 = arith.constant 0 : index
    %c0_83 = arith.constant 0 : index
    %147 = vector.load %arg3[%c0_82, %c0_83] : memref<16x8xbf16, #tpu.memory_space<vmem>>, vector<16x8xbf16>
    %148 = vector.shape_cast %147 : vector<16x8xbf16> to vector<1x16x8xbf16>
    %149 = vector.broadcast %148 : vector<1x16x8xbf16> to vector<8x16x8xbf16>
    "tpu.trace_start"() <{level = 10 : i32, message = "hav,hvc->hac"}> : () -> ()
    %cst_84 = arith.constant dense<0.000000e+00> : vector<8x16x32xf32>
    %150 = tpu.matmul %149, %146, %cst_84 {dimension_numbers = #tpu.dot_dimension_numbers<[2], [1], [1], [2], [0, 0, 0, 1, 1, 2], [0], [0]>} : vector<8x16x8xbf16>, vector<8x8x32xbf16>, vector<8x16x32xf32> -> vector<8x16x32xf32>
    "tpu.trace_stop"() : () -> ()
    %151 = vector.shape_cast %71 : vector<256x32xf32> to vector<8x2x16x32xf32>
    %152 = vector.shape_cast %150 : vector<8x16x32xf32> to vector<8x1x16x32xf32>
    %153 = vector.broadcast %152 : vector<8x1x16x32xf32> to vector<8x2x16x32xf32>
    %154 = arith.addf %151, %153 : vector<8x2x16x32xf32>
    %155 = vector.shape_cast %154 : vector<8x2x16x32xf32> to vector<16x16x32xf32>
    %c0_85 = arith.constant 0 : index
    %c0_86 = arith.constant 0 : index
    %c0_87 = arith.constant 0 : index
    %c0_88 = arith.constant 0 : index
    %156 = vector.load %arg22[%c0_85, %c0_86, %c0_87, %c0_88] : memref<1x16x16x32xf32, #tpu.memory_space<vmem>>, vector<1x16x16x32xf32>
    %157 = vector.shape_cast %156 : vector<1x16x16x32xf32> to vector<16x16x32xf32>
    %158 = vector.shape_cast %155 : vector<16x16x32xf32> to vector<1x16x16x32xf32>
    tpu.vector_store %arg22[%c0_85, %c0_86, %c0_87, %c0_88], %158 {strides = array<i32>} : memref<1x16x16x32xf32, #tpu.memory_space<vmem>>, vector<1x16x16x32xf32>,
    return
  }
  func.func @transform_0(%arg0: i32) -> (i32, i32, i32, i32) {
    %c0_i32 = arith.constant 0 : i32
    %c0_i32_0 = arith.constant 0 : i32
    %c0_i32_1 = arith.constant 0 : i32
    %c0_i32_2 = arith.constant 0 : i32
    return %arg0, %c0_i32, %c0_i32_0, %c0_i32_1 : i32, i32, i32, i32
  }
  func.func @transform_1(%arg0: i32) -> (i32, i32, i32, i32) {
    %c0_i32 = arith.constant 0 : i32
    %c0_i32_0 = arith.constant 0 : i32
    %c0_i32_1 = arith.constant 0 : i32
    %c0_i32_2 = arith.constant 0 : i32
    return %arg0, %c0_i32, %c0_i32_0, %c0_i32_1 : i32, i32, i32, i32
  }
  func.func @transform_2(%arg0: i32) -> (i32, i32) {
    %c0_i32 = arith.constant 0 : i32
    %c0_i32_0 = arith.constant 0 : i32
    %c0_i32_1 = arith.constant 0 : i32
    return %c0_i32, %c0_i32_0 : i32, i32
  }
  func.func @transform_3(%arg0: i32) -> (i32, i32, i32) {
    %c0_i32 = arith.constant 0 : i32
    %c0_i32_0 = arith.constant 0 : i32
    %c0_i32_1 = arith.constant 0 : i32
    %c0_i32_2 = arith.constant 0 : i32
    return %c0_i32, %c0_i32_0, %c0_i32_1 : i32, i32, i32
  }
  func.func @transform_4(%arg0: i32) -> (i32, i32, i32) {
    %c0_i32 = arith.constant 0 : i32
    %c0_i32_0 = arith.constant 0 : i32
    %c0_i32_1 = arith.constant 0 : i32
    %c0_i32_2 = arith.constant 0 : i32
    return %c0_i32, %c0_i32_0, %c0_i32_1 : i32, i32, i32
  }
  func.func @transform_5(%arg0: i32) -> (i32, i32, i32) {
    %c0_i32 = arith.constant 0 : i32
    %c0_i32_0 = arith.constant 0 : i32
    %c0_i32_1 = arith.constant 0 : i32
    %c0_i32_2 = arith.constant 0 : i32
    return %c0_i32, %c0_i32_0, %c0_i32_1 : i32, i32, i32
  }
  func.func @transform_6(%arg0: i32) -> (i32, i32, i32) {
    %c0_i32 = arith.constant 0 : i32
    %c0_i32_0 = arith.constant 0 : i32
    %c0_i32_1 = arith.constant 0 : i32
    %c0_i32_2 = arith.constant 0 : i32
    return %c0_i32, %c0_i32_0, %c0_i32_1 : i32, i32, i32
  }
  func.func @transform_7(%arg0: i32) -> (i32, i32, i32) {
    %c0_i32 = arith.constant 0 : i32
    %c0_i32_0 = arith.constant 0 : i32
    %c0_i32_1 = arith.constant 0 : i32
    %c0_i32_2 = arith.constant 0 : i32
    return %c0_i32, %c0_i32_0, %c0_i32_1 : i32, i32, i32
  }
  func.func @transform_8(%arg0: i32) -> (i32, i32, i32) {
    %c0_i32 = arith.constant 0 : i32
    %c0_i32_0 = arith.constant 0 : i32
    %c0_i32_1 = arith.constant 0 : i32
    %c0_i32_2 = arith.constant 0 : i32
    return %c0_i32, %c0_i32_0, %c0_i32_1 : i32, i32, i32
  }
  func.func @transform_9(%arg0: i32) -> (i32, i32, i32) {
    %c0_i32 = arith.constant 0 : i32
    %c0_i32_0 = arith.constant 0 : i32
    %c0_i32_1 = arith.constant 0 : i32
    %c0_i32_2 = arith.constant 0 : i32
    return %c0_i32, %c0_i32_0, %c0_i32_1 : i32, i32, i32
  }
  func.func @transform_10(%arg0: i32) -> (i32, i32, i32) {
    %c0_i32 = arith.constant 0 : i32
    %c0_i32_0 = arith.constant 0 : i32
    %c0_i32_1 = arith.constant 0 : i32
    %c0_i32_2 = arith.constant 0 : i32
    return %c0_i32, %c0_i32_0, %c0_i32_1 : i32, i32, i32
  }
  func.func @transform_11(%arg0: i32) -> (i32, i32, i32) {
    %c0_i32 = arith.constant 0 : i32
    %c0_i32_0 = arith.constant 0 : i32
    %c0_i32_1 = arith.constant 0 : i32
    %c0_i32_2 = arith.constant 0 : i32
    return %c0_i32, %c0_i32_0, %c0_i32_1 : i32, i32, i32
  }
  func.func @transform_12(%arg0: i32) -> (i32, i32, i32) {
    %c0_i32 = arith.constant 0 : i32
    %c0_i32_0 = arith.constant 0 : i32
    %c0_i32_1 = arith.constant 0 : i32
    %c0_i32_2 = arith.constant 0 : i32
    return %c0_i32, %c0_i32_0, %c0_i32_1 : i32, i32, i32
  }
  func.func @transform_13(%arg0: i32) -> (i32, i32, i32) {
    %c0_i32 = arith.constant 0 : i32
    %c0_i32_0 = arith.constant 0 : i32
    %c0_i32_1 = arith.constant 0 : i32
    %c0_i32_2 = arith.constant 0 : i32
    return %c0_i32, %c0_i32_0, %c0_i32_1 : i32, i32, i32
  }
  func.func @transform_14(%arg0: i32) -> (i32, i32, i32) {
    %c0_i32 = arith.constant 0 : i32
    %c0_i32_0 = arith.constant 0 : i32
    %c0_i32_1 = arith.constant 0 : i32
    %c0_i32_2 = arith.constant 0 : i32
    return %c0_i32, %c0_i32_0, %c0_i32_1 : i32, i32, i32
  }
  func.func @transform_15(%arg0: i32) -> (i32, i32, i32) {
    %c0_i32 = arith.constant 0 : i32
    %c0_i32_0 = arith.constant 0 : i32
    %c0_i32_1 = arith.constant 0 : i32
    %c0_i32_2 = arith.constant 0 : i32
    return %c0_i32, %c0_i32_0, %c0_i32_1 : i32, i32, i32
  }
  func.func @transform_16(%arg0: i32) -> (i32, i32, i32) {
    %c0_i32 = arith.constant 0 : i32
    %c0_i32_0 = arith.constant 0 : i32
    %c0_i32_1 = arith.constant 0 : i32
    %c0_i32_2 = arith.constant 0 : i32
    return %c0_i32, %c0_i32_0, %c0_i32_1 : i32, i32, i32
  }
  func.func @transform_17(%arg0: i32) -> (i32, i32, i32) {
    %c0_i32 = arith.constant 0 : i32
    %c0_i32_0 = arith.constant 0 : i32
    %c0_i32_1 = arith.constant 0 : i32
    %c0_i32_2 = arith.constant 0 : i32
    return %c0_i32, %c0_i32_0, %c0_i32_1 : i32, i32, i32
  }
  func.func @transform_18(%arg0: i32) -> (i32, i32, i32) {
    %c0_i32 = arith.constant 0 : i32
    %c0_i32_0 = arith.constant 0 : i32
    %c0_i32_1 = arith.constant 0 : i32
    %c0_i32_2 = arith.constant 0 : i32
    return %c0_i32, %c0_i32_0, %c0_i32_1 : i32, i32, i32
  }
  func.func @transform_19(%arg0: i32) -> (i32, i32, i32) {
    %c0_i32 = arith.constant 0 : i32
    %c0_i32_0 = arith.constant 0 : i32
    %c0_i32_1 = arith.constant 0 : i32
    %c0_i32_2 = arith.constant 0 : i32
    return %c0_i32, %c0_i32_0, %c0_i32_1 : i32, i32, i32
  }
  func.func @transform_20(%arg0: i32) -> (i32, i32, i32) {
    %c0_i32 = arith.constant 0 : i32
    %c0_i32_0 = arith.constant 0 : i32
    %c0_i32_1 = arith.constant 0 : i32
    %c0_i32_2 = arith.constant 0 : i32
    return %c0_i32, %c0_i32_0, %c0_i32_1 : i32, i32, i32
  }
  func.func @transform_21(%arg0: i32) -> (i32, i32, i32, i32) {
    %c0_i32 = arith.constant 0 : i32
    %c0_i32_0 = arith.constant 0 : i32
    %c0_i32_1 = arith.constant 0 : i32
    %c0_i32_2 = arith.constant 0 : i32
    return %arg0, %c0_i32, %c0_i32_0, %c0_i32_1 : i32, i32, i32, i32
  }
}

</mosaic_0001>

<llo_original>
// kernel: tpu_custom_call.1
$region0: #{tpu_custom_call.1}
  #allocation0 [shape = 'u32[]', space=smem, size = 0x4, offset = 0x4, fixed_abs, tag = 'smem constant byte address 0x4 - core index']
  #allocation1 [shape = 'u32[72,128]{1,0:T(1,128)}', space=vmem, size = 0x9000, scoped, tag = 'internal scratch']
  %s0 = inlined_call_operand.hbm [shape: f32[8,128], index: 0, kind: input, shape index: {}]
  %s1 = inlined_call_operand.hbm [shape: f32[8,128], index: 1, kind: output, shape index: {}]
  %s2 = sld [smem:[#allocation0]]
  $region41: #{tpu_custom_call.1} parent=0
    _
  %s4 = ssub.s32 1, %s2
  %s5 = scalar_select 0, %s4, %s2
  $region1: #{tpu_custom_call.1} parent=0
    #allocation2 [shape = 'u8[4096]{0}', space=vmem, size = 0x1000, scoped, tag = 'input window, operand 0, single buffered']
    #allocation3 [shape = 's32[2]{0}', space=sflag, size = 0x8, scoped, tag = 'scoped memory for tpu_custom_call.1']
    #allocation4 [shape = 's32[2]{0}', space=sflag, size = 0x8, scoped, tag = 'scoped memory for tpu_custom_call.1']
    #allocation5 [shape = 'u8[4096]{0}', space=vmem, size = 0x1000, scoped, tag = 'output window, operand 0, single buffered']
    %6 = vsyncpa [#allocation3], 0
    %7 = vsyncpa [#allocation4], 0
    loop: start=0, step=1, limit=4
    $region2: #{tpu_custom_call.1} parent=1 // loop_pre_header
      _
    $region3: #{tpu_custom_call.1} parent=1 // loop_header
      %s9 = sphi 0, %s13
      %p10 = scmp.ge.s32.totalorder %s9, 4
      %s17 = sphi 0, %s17
      %s19 = sphi 0, %s17
      %s20 = sphi 0, %s19
      %s34 = sphi 0, %s20
      %s38 = sphi 0, %s38
      %s40 = sphi 0, %s38
      %s41 = sphi 0, %s40
      %s55 = sphi 0, %s41
    $region4: #{tpu_custom_call.1} parent=1 // loop_header_branch
      %12 = sbr.rel (%p10) target = $region8
    $region5: #{tpu_custom_call.1} parent=1 // loop_body
      %s14 = ssub.s32 %s9, 1
      %s15 = ssub.s32 %s9, 2
      %s16 = sadd.s32 %s9, 1
      %s18 = sadd.s32 %s17, 1
      %p21 = scmp.eq.s32.totalorder %s9, 1
      %p22 = scmp.ne.s32.totalorder %s17, %s19
      %p23 = scmp.eq.s32.totalorder %s9, 0
      %p24 = por %p22, %p23
      %p25 = scmp.ne.s32.totalorder %s17, %s19
      %p26 = scmp.eq.s32.totalorder %s14, 1
      %p27 = por %p25, %p26
      %p28 = scmp.ne.s32.totalorder %s19, %s20
      %p29 = scmp.eq.s32.totalorder %s14, 0
      %p30 = por %p28, %p29
      %p31 = scmp.ne.s32.totalorder %s19, %s20
      %p32 = scmp.eq.s32.totalorder %s15, 1
      %p33 = por %p31, %p32
      %p35 = scmp.ne.s32.totalorder %s20, %s34
      %p36 = scmp.eq.s32.totalorder %s15, 0
      %p37 = por %p35, %p36
      %s39 = sadd.s32 %s38, 1
      %p42 = scmp.eq.s32.totalorder %s9, 1
      %p43 = scmp.ne.s32.totalorder %s38, %s40
      %p44 = scmp.eq.s32.totalorder %s9, 0
      %p45 = por %p43, %p44
      %p46 = scmp.ne.s32.totalorder %s38, %s40
      %p47 = scmp.eq.s32.totalorder %s14, 1
      %p48 = por %p46, %p47
      %p49 = scmp.ne.s32.totalorder %s40, %s41
      %p50 = scmp.eq.s32.totalorder %s14, 0
      %p51 = por %p49, %p50
      %p52 = scmp.ne.s32.totalorder %s40, %s41
      %p53 = scmp.eq.s32.totalorder %s15, 1
      %p54 = por %p52, %p53
      %p56 = scmp.ne.s32.totalorder %s41, %s55
      %p57 = scmp.eq.s32.totalorder %s15, 0
      %p58 = por %p56, %p57
      %p59 = scmp.le.s32.totalorder 1, %s9
      %p60 = scmp.lt.s32.totalorder %s9, 3
      %p61 = pnand %p59, %p60
      %p62 = pneg %p61
      // Predicated region
      $region9: #{tpu_custom_call.1} parent=5 // pred_check
        _
      $region10: #{tpu_custom_call.1} parent=5 // pred_check_branch
        %64 = sbr.rel (%p61) target = $region12
      $region11: #{tpu_custom_call.1} parent=5 // pred_region
        %s65 = ssub.s32 %s9, 1
        // Predicated region
        $region13: #{tpu_custom_call.1} parent=11 // pred_check
          %p66 = pneg %p30
        $region14: #{tpu_custom_call.1} parent=11 // pred_check_branch
          %68 = sbr.rel (%p66) target = $region16
        $region15: #{tpu_custom_call.1} parent=11 // pred_region
          %70 = vsyncadd [#allocation3], 0
          %s72 = sshll.u32 %s0, 4
          %s73 = int_to_ptr.hbm [resolvable:$true] %s72
          %s74 = sshll.u32 [#allocation2], 4
          %s75 = int_to_ptr.vmem [resolvable:$true] %s74
          %77 = dma.hbm_to_vmem [thread:$0]  %s73, 128, %s75, [#allocation3]
        $region16: #{tpu_custom_call.1} parent=11 // pred_fallthru
          _
      $region12: #{tpu_custom_call.1} parent=5 // pred_fallthru
        _
      %p78 = scmp.lt.s32.totalorder %s9, 2
      // Predicated region
      $region17: #{tpu_custom_call.1} parent=5 // pred_check
        %p79 = pneg %p78
      $region18: #{tpu_custom_call.1} parent=5 // pred_check_branch
        %81 = sbr.rel (%p79) target = $region20
      $region19: #{tpu_custom_call.1} parent=5 // pred_region
        _
      $region20: #{tpu_custom_call.1} parent=5 // pred_fallthru
        _
      %p82 = scmp.le.s32.totalorder 1, %s9
      %p83 = scmp.lt.s32.totalorder %s9, 3
      %p84 = pnand %p82, %p83
      %p85 = pneg %p84
      // Predicated region
      $region21: #{tpu_custom_call.1} parent=5 // pred_check
        _
      $region22: #{tpu_custom_call.1} parent=5 // pred_check_branch
        %87 = sbr.rel (%p84) target = $region24
      $region23: #{tpu_custom_call.1} parent=5 // pred_region
        %s88 = ssub.s32 %s9, 1
        // Predicated region
        $region25: #{tpu_custom_call.1} parent=23 // pred_check
          %p89 = pneg %p30
        $region26: #{tpu_custom_call.1} parent=23 // pred_check_branch
          %91 = sbr.rel (%p89) target = $region28
        $region27: #{tpu_custom_call.1} parent=23 // pred_region
          %93 = dma.done [#allocation3], 128
        $region28: #{tpu_custom_call.1} parent=23 // pred_fallthru
          _
        %p94 = pneg %p30
        %p95 = pneg %p27
        %p96 = pneg %p51
        %p97 = pneg %p48
        %v98 = vld [vmem:[#allocation2] sm:$0xff]
        %v99 = vadd.f32 %v98, 1.0
        %100 = vst [vmem:[#allocation5] sm:$0xff] %v99
        // Predicated region
        $region29: #{tpu_custom_call.1} parent=23 // pred_check
          %p101 = pneg %p48
        $region30: #{tpu_custom_call.1} parent=23 // pred_check_branch
          %103 = sbr.rel (%p101) target = $region32
        $region31: #{tpu_custom_call.1} parent=23 // pred_region
          %105 = vsyncadd [#allocation4], 0
          %s107 = sshll.u32 [#allocation5], 4
          %s108 = int_to_ptr.vmem [resolvable:$true] %s107
          %s109 = sshll.u32 %s1, 4
          %s110 = int_to_ptr.hbm [resolvable:$true] %s109
          %112 = dma.vmem_to_hbm [thread:$0]  %s108, 128, %s110, [#allocation4]
        $region32: #{tpu_custom_call.1} parent=23 // pred_fallthru
          _
        // Predicated region
        $region33: #{tpu_custom_call.1} parent=23 // pred_check
          %p113 = pneg %p48
        $region34: #{tpu_custom_call.1} parent=23 // pred_check_branch
          %115 = sbr.rel (%p113) target = $region36
        $region35: #{tpu_custom_call.1} parent=23 // pred_region
          %117 = dma.done [#allocation4], 128
        $region36: #{tpu_custom_call.1} parent=23 // pred_fallthru
          _
      $region24: #{tpu_custom_call.1} parent=5 // pred_fallthru
        _
      %p118 = scmp.le.s32.totalorder 2, %s9
      // Predicated region
      $region37: #{tpu_custom_call.1} parent=5 // pred_check
        %p119 = pneg %p118
      $region38: #{tpu_custom_call.1} parent=5 // pred_check_branch
        %121 = sbr.rel (%p119) target = $region40
      $region39: #{tpu_custom_call.1} parent=5 // pred_region
        %s122 = ssub.s32 %s9, 2
      $region40: #{tpu_custom_call.1} parent=5 // pred_fallthru
        _
    $region6: #{tpu_custom_call.1} parent=1 // loop_footer
      %s13 = sadd.s32 1, %s9
    $region7: #{tpu_custom_call.1} parent=1 // loop_footer_branch
      %8 = sbr.rel target = $region3
    $region8: #{tpu_custom_call.1} parent=1 // loop_exit
      _
    %123 = vsyncpa [#allocation3], 1
    %s124 = scalar_lea.sflag [#allocation3], 1
    %125 = vsyncpa %s124, 1
    %126 = vsyncpa [#allocation4], 1
    %s127 = scalar_lea.sflag [#allocation4], 1
    %128 = vsyncpa %s127, 1

// kernel: model.4
$region0: #{model.4}
  #allocation0 [shape = 'u32[]', space=smem, size = 0x4, offset = 0x4, fixed_abs, tag = 'smem constant byte address 0x4 - core index']
  #allocation1 [shape = 'u32[72,128]{1,0:T(1,128)}', space=vmem, size = 0x9000, scoped, tag = 'internal scratch']
  %s0 = inlined_call_operand.hbm [shape: f32[2,16,16,32], index: 0, kind: input, shape index: {}]
  %s1 = inlined_call_operand.vmem [shape: bf16[8,16], index: 1, kind: input, shape index: {}]
  %s2 = inlined_call_operand.vmem [shape: f32[1,1,32], index: 2, kind: input, shape index: {}]
  %s3 = inlined_call_operand.vmem [shape: f32[1,1,32], index: 3, kind: input, shape index: {}]
  %s4 = inlined_call_operand.vmem [shape: bf16[1,32,16], index: 4, kind: input, shape index: {}]
  %s5 = inlined_call_operand.vmem [shape: f32[1,1,16], index: 5, kind: input, shape index: {}]
  %s6 = inlined_call_operand.vmem [shape: f32[1,1,16], index: 6, kind: input, shape index: {}]
  %s7 = inlined_call_operand.vmem [shape: bf16[1,144,16], index: 7, kind: input, shape index: {}]
  %s8 = inlined_call_operand.vmem [shape: f32[1,1,16], index: 8, kind: input, shape index: {}]
  %s9 = inlined_call_operand.vmem [shape: f32[1,1,16], index: 9, kind: input, shape index: {}]
  %s10 = inlined_call_operand.vmem [shape: bf16[1,16,32], index: 10, kind: input, shape index: {}]
  %s11 = inlined_call_operand.vmem [shape: bf16[2,8,8,32], index: 11, kind: output, shape index: {}]
  %s12 = sld [smem:[#allocation0]]
  $region81: #{model.4} parent=0
    _
  %s14 = ssub.s32 1, %s12
  %s15 = scalar_select 0, %s14, %s12
  $region1: #{model.4} parent=0
    #allocation2 [shape = 'u8[262144]{0}', space=vmem, size = 0x40000, scoped, tag = 'input window, operand 0']
    #allocation3 [shape = 's32[2]{0}', space=sflag, size = 0x8, scoped, tag = 'scoped memory for model.4']
    %16 = vsyncpa [#allocation3], 0
    %s17 = scalar_lea.sflag [#allocation3], 1
    %18 = vsyncpa %s17, 0
    loop: start=0, step=1, limit=4
    $region2: #{model.4} parent=1 // loop_pre_header
      _
    $region3: #{model.4} parent=1 // loop_header
      %s20 = sphi 0, %s24
      %p21 = scmp.ge.s32.totalorder %s20, 4
      %s30 = sphi 0, %s32
      %s33 = sphi 0, %s30
      %s34 = sphi 0, %s33
      %s50 = sphi 0, %s34
      %s54 = sphi 0, %s54
      %s56 = sphi 0, %s54
      %s57 = sphi 0, %s56
      %s71 = sphi 0, %s57
      %s75 = sphi 0, %s75
      %s77 = sphi 0, %s75
      %s78 = sphi 0, %s77
      %s92 = sphi 0, %s78
      %s96 = sphi 0, %s96
      %s98 = sphi 0, %s96
      %s99 = sphi 0, %s98
      %s113 = sphi 0, %s99
      %s117 = sphi 0, %s117
      %s119 = sphi 0, %s117
      %s120 = sphi 0, %s119
      %s134 = sphi 0, %s120
      %s138 = sphi 0, %s138
      %s140 = sphi 0, %s138
      %s141 = sphi 0, %s140
      %s155 = sphi 0, %s141
      %s159 = sphi 0, %s159
      %s161 = sphi 0, %s159
      %s162 = sphi 0, %s161
      %s176 = sphi 0, %s162
      %s180 = sphi 0, %s180
      %s182 = sphi 0, %s180
      %s183 = sphi 0, %s182
      %s197 = sphi 0, %s183
      %s201 = sphi 0, %s201
      %s203 = sphi 0, %s201
      %s204 = sphi 0, %s203
      %s218 = sphi 0, %s204
      %s222 = sphi 0, %s222
      %s224 = sphi 0, %s222
      %s225 = sphi 0, %s224
      %s239 = sphi 0, %s225
      %s243 = sphi 0, %s243
      %s245 = sphi 0, %s243
      %s246 = sphi 0, %s245
      %s260 = sphi 0, %s246
      %s266 = sphi 0, %s268
      %s269 = sphi 0, %s266
      %s270 = sphi 0, %s269
      %s286 = sphi 0, %s270
    $region4: #{model.4} parent=1 // loop_header_branch
      %23 = sbr.rel (%p21) target = $region8
    $region5: #{model.4} parent=1 // loop_body
      %s25 = ssub.s32 %s20, 1
      %s26 = ssub.s32 %s20, 2
      %s27 = sadd.s32 %s20, 1
      %s28 = ssub.s32 %s20, %s27
      %p29 = scmp.eq.s32.totalorder %s28, 0
      %s31 = sadd.s32 %s30, 1
      %s32 = scalar_select %p29, %s30, %s31
      %p35 = pneg %p29
      %p36 = scmp.eq.s32.totalorder %s20, 1
      %p37 = por %p35, %p36
      %p38 = scmp.ne.s32.totalorder %s30, %s33
      %p39 = scmp.eq.s32.totalorder %s20, 0
      %p40 = por %p38, %p39
      %p41 = scmp.ne.s32.totalorder %s30, %s33
      %p42 = scmp.eq.s32.totalorder %s25, 1
      %p43 = por %p41, %p42
      %p44 = scmp.ne.s32.totalorder %s33, %s34
      %p45 = scmp.eq.s32.totalorder %s25, 0
      %p46 = por %p44, %p45
      %p47 = scmp.ne.s32.totalorder %s33, %s34
      %p48 = scmp.eq.s32.totalorder %s26, 1
      %p49 = por %p47, %p48
      %p51 = scmp.ne.s32.totalorder %s34, %s50
      %p52 = scmp.eq.s32.totalorder %s26, 0
      %p53 = por %p51, %p52
      %s55 = sadd.s32 %s54, 1
      %p58 = scmp.eq.s32.totalorder %s20, 1
      %p59 = scmp.ne.s32.totalorder %s54, %s56
      %p60 = scmp.eq.s32.totalorder %s20, 0
      %p61 = por %p59, %p60
      %p62 = scmp.ne.s32.totalorder %s54, %s56
      %p63 = scmp.eq.s32.totalorder %s25, 1
      %p64 = por %p62, %p63
      %p65 = scmp.ne.s32.totalorder %s56, %s57
      %p66 = scmp.eq.s32.totalorder %s25, 0
      %p67 = por %p65, %p66
      %p68 = scmp.ne.s32.totalorder %s56, %s57
      %p69 = scmp.eq.s32.totalorder %s26, 1
      %p70 = por %p68, %p69
      %p72 = scmp.ne.s32.totalorder %s57, %s71
      %p73 = scmp.eq.s32.totalorder %s26, 0
      %p74 = por %p72, %p73
      %s76 = sadd.s32 %s75, 1
      %p79 = scmp.eq.s32.totalorder %s20, 1
      %p80 = scmp.ne.s32.totalorder %s75, %s77
      %p81 = scmp.eq.s32.totalorder %s20, 0
      %p82 = por %p80, %p81
      %p83 = scmp.ne.s32.totalorder %s75, %s77
      %p84 = scmp.eq.s32.totalorder %s25, 1
      %p85 = por %p83, %p84
      %p86 = scmp.ne.s32.totalorder %s77, %s78
      %p87 = scmp.eq.s32.totalorder %s25, 0
      %p88 = por %p86, %p87
      %p89 = scmp.ne.s32.totalorder %s77, %s78
      %p90 = scmp.eq.s32.totalorder %s26, 1
      %p91 = por %p89, %p90
      %p93 = scmp.ne.s32.totalorder %s78, %s92
      %p94 = scmp.eq.s32.totalorder %s26, 0
      %p95 = por %p93, %p94
      %s97 = sadd.s32 %s96, 1
      %p100 = scmp.eq.s32.totalorder %s20, 1
      %p101 = scmp.ne.s32.totalorder %s96, %s98
      %p102 = scmp.eq.s32.totalorder %s20, 0
      %p103 = por %p101, %p102
      %p104 = scmp.ne.s32.totalorder %s96, %s98
      %p105 = scmp.eq.s32.totalorder %s25, 1
      %p106 = por %p104, %p105
      %p107 = scmp.ne.s32.totalorder %s98, %s99
      %p108 = scmp.eq.s32.totalorder %s25, 0
      %p109 = por %p107, %p108
      %p110 = scmp.ne.s32.totalorder %s98, %s99
      %p111 = scmp.eq.s32.totalorder %s26, 1
      %p112 = por %p110, %p111
      %p114 = scmp.ne.s32.totalorder %s99, %s113
      %p115 = scmp.eq.s32.totalorder %s26, 0
      %p116 = por %p114, %p115
      %s118 = sadd.s32 %s117, 1
      %p121 = scmp.eq.s32.totalorder %s20, 1
      %p122 = scmp.ne.s32.totalorder %s117, %s119
      %p123 = scmp.eq.s32.totalorder %s20, 0
      %p124 = por %p122, %p123
      %p125 = scmp.ne.s32.totalorder %s117, %s119
      %p126 = scmp.eq.s32.totalorder %s25, 1
      %p127 = por %p125, %p126
      %p128 = scmp.ne.s32.totalorder %s119, %s120
      %p129 = scmp.eq.s32.totalorder %s25, 0
      %p130 = por %p128, %p129
      %p131 = scmp.ne.s32.totalorder %s119, %s120
      %p132 = scmp.eq.s32.totalorder %s26, 1
      %p133 = por %p131, %p132
      %p135 = scmp.ne.s32.totalorder %s120, %s134
      %p136 = scmp.eq.s32.totalorder %s26, 0
      %p137 = por %p135, %p136
      %s139 = sadd.s32 %s138, 1
      %p142 = scmp.eq.s32.totalorder %s20, 1
      %p143 = scmp.ne.s32.totalorder %s138, %s140
      %p144 = scmp.eq.s32.totalorder %s20, 0
      %p145 = por %p143, %p144
      %p146 = scmp.ne.s32.totalorder %s138, %s140
      %p147 = scmp.eq.s32.totalorder %s25, 1
      %p148 = por %p146, %p147
      %p149 = scmp.ne.s32.totalorder %s140, %s141
      %p150 = scmp.eq.s32.totalorder %s25, 0
      %p151 = por %p149, %p150
      %p152 = scmp.ne.s32.totalorder %s140, %s141
      %p153 = scmp.eq.s32.totalorder %s26, 1
      %p154 = por %p152, %p153
      %p156 = scmp.ne.s32.totalorder %s141, %s155
      %p157 = scmp.eq.s32.totalorder %s26, 0
      %p158 = por %p156, %p157
      %s160 = sadd.s32 %s159, 1
      %p163 = scmp.eq.s32.totalorder %s20, 1
      %p164 = scmp.ne.s32.totalorder %s159, %s161
      %p165 = scmp.eq.s32.totalorder %s20, 0
      %p166 = por %p164, %p165
      %p167 = scmp.ne.s32.totalorder %s159, %s161
      %p168 = scmp.eq.s32.totalorder %s25, 1
      %p169 = por %p167, %p168
      %p170 = scmp.ne.s32.totalorder %s161, %s162
      %p171 = scmp.eq.s32.totalorder %s25, 0
      %p172 = por %p170, %p171
      %p173 = scmp.ne.s32.totalorder %s161, %s162
      %p174 = scmp.eq.s32.totalorder %s26, 1
      %p175 = por %p173, %p174
      %p177 = scmp.ne.s32.totalorder %s162, %s176
      %p178 = scmp.eq.s32.totalorder %s26, 0
      %p179 = por %p177, %p178
      %s181 = sadd.s32 %s180, 1
      %p184 = scmp.eq.s32.totalorder %s20, 1
      %p185 = scmp.ne.s32.totalorder %s180, %s182
      %p186 = scmp.eq.s32.totalorder %s20, 0
      %p187 = por %p185, %p186
      %p188 = scmp.ne.s32.totalorder %s180, %s182
      %p189 = scmp.eq.s32.totalorder %s25, 1
      %p190 = por %p188, %p189
      %p191 = scmp.ne.s32.totalorder %s182, %s183
      %p192 = scmp.eq.s32.totalorder %s25, 0
      %p193 = por %p191, %p192
      %p194 = scmp.ne.s32.totalorder %s182, %s183
      %p195 = scmp.eq.s32.totalorder %s26, 1
      %p196 = por %p194, %p195
      %p198 = scmp.ne.s32.totalorder %s183, %s197
      %p199 = scmp.eq.s32.totalorder %s26, 0
      %p200 = por %p198, %p199
      %s202 = sadd.s32 %s201, 1
      %p205 = scmp.eq.s32.totalorder %s20, 1
      %p206 = scmp.ne.s32.totalorder %s201, %s203
      %p207 = scmp.eq.s32.totalorder %s20, 0
      %p208 = por %p206, %p207
      %p209 = scmp.ne.s32.totalorder %s201, %s203
      %p210 = scmp.eq.s32.totalorder %s25, 1
      %p211 = por %p209, %p210
      %p212 = scmp.ne.s32.totalorder %s203, %s204
      %p213 = scmp.eq.s32.totalorder %s25, 0
      %p214 = por %p212, %p213
      %p215 = scmp.ne.s32.totalorder %s203, %s204
      %p216 = scmp.eq.s32.totalorder %s26, 1
      %p217 = por %p215, %p216
      %p219 = scmp.ne.s32.totalorder %s204, %s218
      %p220 = scmp.eq.s32.totalorder %s26, 0
      %p221 = por %p219, %p220
      %s223 = sadd.s32 %s222, 1
      %p226 = scmp.eq.s32.totalorder %s20, 1
      %p227 = scmp.ne.s32.totalorder %s222, %s224
      %p228 = scmp.eq.s32.totalorder %s20, 0
      %p229 = por %p227, %p228
      %p230 = scmp.ne.s32.totalorder %s222, %s224
      %p231 = scmp.eq.s32.totalorder %s25, 1
      %p232 = por %p230, %p231
      %p233 = scmp.ne.s32.totalorder %s224, %s225
      %p234 = scmp.eq.s32.totalorder %s25, 0
      %p235 = por %p233, %p234
      %p236 = scmp.ne.s32.totalorder %s224, %s225
      %p237 = scmp.eq.s32.totalorder %s26, 1
      %p238 = por %p236, %p237
      %p240 = scmp.ne.s32.totalorder %s225, %s239
      %p241 = scmp.eq.s32.totalorder %s26, 0
      %p242 = por %p240, %p241
      %s244 = sadd.s32 %s243, 1
      %p247 = scmp.eq.s32.totalorder %s20, 1
      %p248 = scmp.ne.s32.totalorder %s243, %s245
      %p249 = scmp.eq.s32.totalorder %s20, 0
      %p250 = por %p248, %p249
      %p251 = scmp.ne.s32.totalorder %s243, %s245
      %p252 = scmp.eq.s32.totalorder %s25, 1
      %p253 = por %p251, %p252
      %p254 = scmp.ne.s32.totalorder %s245, %s246
      %p255 = scmp.eq.s32.totalorder %s25, 0
      %p256 = por %p254, %p255
      %p257 = scmp.ne.s32.totalorder %s245, %s246
      %p258 = scmp.eq.s32.totalorder %s26, 1
      %p259 = por %p257, %p258
      %p261 = scmp.ne.s32.totalorder %s246, %s260
      %p262 = scmp.eq.s32.totalorder %s26, 0
      %p263 = por %p261, %p262
      %s264 = ssub.s32 %s20, %s27
      %p265 = scmp.eq.s32.totalorder %s264, 0
      %s267 = sadd.s32 %s266, 1
      %s268 = scalar_select %p265, %s266, %s267
      %p271 = pneg %p265
      %p272 = scmp.eq.s32.totalorder %s20, 1
      %p273 = por %p271, %p272
      %p274 = scmp.ne.s32.totalorder %s266, %s269
      %p275 = scmp.eq.s32.totalorder %s20, 0
      %p276 = por %p274, %p275
      %p277 = scmp.ne.s32.totalorder %s266, %s269
      %p278 = scmp.eq.s32.totalorder %s25, 1
      %p279 = por %p277, %p278
      %p280 = scmp.ne.s32.totalorder %s269, %s270
      %p281 = scmp.eq.s32.totalorder %s25, 0
      %p282 = por %p280, %p281
      %p283 = scmp.ne.s32.totalorder %s269, %s270
      %p284 = scmp.eq.s32.totalorder %s26, 1
      %p285 = por %p283, %p284
      %p287 = scmp.ne.s32.totalorder %s270, %s286
      %p288 = scmp.eq.s32.totalorder %s26, 0
      %p289 = por %p287, %p288
      %p290 = scmp.le.s32.totalorder 1, %s20
      %p291 = scmp.lt.s32.totalorder %s20, 3
      %p292 = pnand %p290, %p291
      %p293 = pneg %p292
      // Predicated region
      $region9: #{model.4} parent=5 // pred_check
        _
      $region10: #{model.4} parent=5 // pred_check_branch
        %295 = sbr.rel (%p292) target = $region12
      $region11: #{model.4} parent=5 // pred_region
        %s296 = ssub.s32 %s20, 1
        // Predicated region
        $region13: #{model.4} parent=11 // pred_check
          %p297 = pneg %p67
        $region14: #{model.4} parent=11 // pred_check_branch
          %299 = sbr.rel (%p297) target = $region16
        $region15: #{model.4} parent=11 // pred_region
          _
        $region16: #{model.4} parent=11 // pred_fallthru
          _
        // Predicated region
        $region17: #{model.4} parent=11 // pred_check
          %p300 = pneg %p88
        $region18: #{model.4} parent=11 // pred_check_branch
          %302 = sbr.rel (%p300) target = $region20
        $region19: #{model.4} parent=11 // pred_region
          _
        $region20: #{model.4} parent=11 // pred_fallthru
          _
        // Predicated region
        $region21: #{model.4} parent=11 // pred_check
          %p303 = pneg %p109
        $region22: #{model.4} parent=11 // pred_check_branch
          %305 = sbr.rel (%p303) target = $region24
        $region23: #{model.4} parent=11 // pred_region
          _
        $region24: #{model.4} parent=11 // pred_fallthru
          _
        // Predicated region
        $region25: #{model.4} parent=11 // pred_check
          %p306 = pneg %p130
        $region26: #{model.4} parent=11 // pred_check_branch
          %308 = sbr.rel (%p306) target = $region28
        $region27: #{model.4} parent=11 // pred_region
          _
        $region28: #{model.4} parent=11 // pred_fallthru
          _
        // Predicated region
        $region29: #{model.4} parent=11 // pred_check
          %p309 = pneg %p151
        $region30: #{model.4} parent=11 // pred_check_branch
          %311 = sbr.rel (%p309) target = $region32
        $region31: #{model.4} parent=11 // pred_region
          _
        $region32: #{model.4} parent=11 // pred_fallthru
          _
        // Predicated region
        $region33: #{model.4} parent=11 // pred_check
          %p312 = pneg %p172
        $region34: #{model.4} parent=11 // pred_check_branch
          %314 = sbr.rel (%p312) target = $region36
        $region35: #{model.4} parent=11 // pred_region
          _
        $region36: #{model.4} parent=11 // pred_fallthru
          _
        // Predicated region
        $region37: #{model.4} parent=11 // pred_check
          %p315 = pneg %p193
        $region38: #{model.4} parent=11 // pred_check_branch
          %317 = sbr.rel (%p315) target = $region40
        $region39: #{model.4} parent=11 // pred_region
          _
        $region40: #{model.4} parent=11 // pred_fallthru
          _
        // Predicated region
        $region41: #{model.4} parent=11 // pred_check
          %p318 = pneg %p214
        $region42: #{model.4} parent=11 // pred_check_branch
          %320 = sbr.rel (%p318) target = $region44
        $region43: #{model.4} parent=11 // pred_region
          _
        $region44: #{model.4} parent=11 // pred_fallthru
          _
        // Predicated region
        $region45: #{model.4} parent=11 // pred_check
          %p321 = pneg %p235
        $region46: #{model.4} parent=11 // pred_check_branch
          %323 = sbr.rel (%p321) target = $region48
        $region47: #{model.4} parent=11 // pred_region
          _
        $region48: #{model.4} parent=11 // pred_fallthru
          _
        // Predicated region
        $region49: #{model.4} parent=11 // pred_check
          %p324 = pneg %p256
        $region50: #{model.4} parent=11 // pred_check_branch
          %326 = sbr.rel (%p324) target = $region52
        $region51: #{model.4} parent=11 // pred_region
          _
        $region52: #{model.4} parent=11 // pred_fallthru
          _
      $region12: #{model.4} parent=5 // pred_fallthru
        _
      %p327 = scmp.lt.s32.totalorder %s20, 2
      // Predicated region
      $region53: #{model.4} parent=5 // pred_check
        %p328 = pneg %p327
      $region54: #{model.4} parent=5 // pred_check_branch
        %330 = sbr.rel (%p328) target = $region56
      $region55: #{model.4} parent=5 // pred_region
        // Predicated region
        $region57: #{model.4} parent=55 // pred_check
          %p331 = pneg %p40
        $region58: #{model.4} parent=55 // pred_check_branch
          %333 = sbr.rel (%p331) target = $region60
        $region59: #{model.4} parent=55 // pred_region
          %s334 = sand.u32 %s30, 1
          %s335 = scalar_lea.sflag [#allocation3], %s334
          %s336 = sand.u32 %s30, 1
          %s337 = smul.addr %s336, 256
          %s338 = scalar_lea.vmem [#allocation2], %s337
          %340 = vsyncadd %s335, 0
          %s341 = smul.addr %s20, 32
          %s342 = smul.addr %s341, 8
          %s343 = scalar_lea.hbm %s0, %s342
          %s344 = sshll.u32 %s343, 4
          %s345 = int_to_ptr.hbm [resolvable:$true] %s344
          %s346 = sshll.u32 %s338, 4
          %s347 = int_to_ptr.vmem [resolvable:$true] %s346
          %352 = dma.hbm_to_vmem [thread:$0]  %s345, 4096, %s347, %s335, 128, 128, 8
        $region60: #{model.4} parent=55 // pred_fallthru
          _
      $region56: #{model.4} parent=5 // pred_fallthru
        _
      %p353 = scmp.le.s32.totalorder 1, %s20
      %p354 = scmp.lt.s32.totalorder %s20, 3
      %p355 = pnand %p353, %p354
      %p356 = pneg %p355
      // Predicated region
      $region61: #{model.4} parent=5 // pred_check
        _
      $region62: #{model.4} parent=5 // pred_check_branch
        %358 = sbr.rel (%p355) target = $region64
      $region63: #{model.4} parent=5 // pred_region
        %s359 = ssub.s32 %s20, 1
        %s360 = sand.u32 %s33, 1
        %s361 = scalar_lea.sflag [#allocation3], %s360
        %s362 = sand.u32 %s33, 1
        %s363 = smul.addr %s362, 256
        %s364 = scalar_lea.vmem [#allocation2], %s363
        // Predicated region
        $region65: #{model.4} parent=63 // pred_check
          %p365 = pneg %p46
        $region66: #{model.4} parent=63 // pred_check_branch
          %367 = sbr.rel (%p365) target = $region68
        $region67: #{model.4} parent=63 // pred_region
          %369 = dma.done %s361, 4096
        $region68: #{model.4} parent=63 // pred_fallthru
          _
        %s370 = sand.u32 %s33, 1
        %s371 = scalar_lea.sflag [#allocation3], %s370
        %s372 = sand.u32 %s33, 1
        %s373 = smul.addr %s372, 256
        %s374 = scalar_lea.vmem [#allocation2], %s373
        %p375 = pneg %p46
        %p376 = pneg %p43
        %p377 = pneg %p67
        %p378 = pneg %p64
        %p379 = pneg %p88
        %p380 = pneg %p85
        %p381 = pneg %p109
        %p382 = pneg %p106
        %p383 = pneg %p130
        %p384 = pneg %p127
        %p385 = pneg %p151
        %p386 = pneg %p148
        %p387 = pneg %p172
        %p388 = pneg %p169
        %p389 = pneg %p193
        %p390 = pneg %p190
        %p391 = pneg %p214
        %p392 = pneg %p211
        %p393 = pneg %p235
        %p394 = pneg %p232
        %p395 = pneg %p256
        %p396 = pneg %p253
        %p397 = pneg %p282
        %p398 = pneg %p279
        %p399 = scmp.lt.s32.totalorder %s25, 1
        %s400 = scalar_select %p399, %s25, 1
        %s401 = smul.addr %s400, 8
        %s402 = smul.addr %s401, 4
        %s403 = scalar_lea.vmem %s11, %s402
        %p404 = scmp.lt.s32.totalorder %s25, 1
        %s405 = scalar_select %p404, %s25, 1
        %s406 = smul.addr %s405, 8
        %s407 = smul.addr %s406, 4
        %s408 = scalar_lea.vmem %s11, %s407
        %v410 = vld [vmem:[%s364] sm:$0xff]
        %v411 = vld [vmem:[%s364 + $0x8] sm:$0xff]
        %v412 = vld [vmem:[%s364 + $0x10] sm:$0xff]
        %v413 = vld [vmem:[%s364 + $0x18] sm:$0xff]
        %v414 = vld [vmem:[%s364 + $0x20] sm:$0xff]
        %v415 = vld [vmem:[%s364 + $0x28] sm:$0xff]
        %v416 = vld [vmem:[%s364 + $0x30] sm:$0xff]
        %v417 = vld [vmem:[%s364 + $0x38] sm:$0xff]
        %v418 = vld [vmem:[%s364 + $0x40] sm:$0xff]
        %v419 = vld [vmem:[%s364 + $0x48] sm:$0xff]
        %v420 = vld [vmem:[%s364 + $0x50] sm:$0xff]
        %v421 = vld [vmem:[%s364 + $0x58] sm:$0xff]
        %v422 = vld [vmem:[%s364 + $0x60] sm:$0xff]
        %v423 = vld [vmem:[%s364 + $0x68] sm:$0xff]
        %v424 = vld [vmem:[%s364 + $0x70] sm:$0xff]
        %v425 = vld [vmem:[%s364 + $0x78] sm:$0xff]
        %v426 = vld [vmem:[%s364 + $0x80] sm:$0xff]
        %v427 = vld [vmem:[%s364 + $0x88] sm:$0xff]
        %v428 = vld [vmem:[%s364 + $0x90] sm:$0xff]
        %v429 = vld [vmem:[%s364 + $0x98] sm:$0xff]
        %v430 = vld [vmem:[%s364 + $0xa0] sm:$0xff]
        %v431 = vld [vmem:[%s364 + $0xa8] sm:$0xff]
        %v432 = vld [vmem:[%s364 + $0xb0] sm:$0xff]
        %v433 = vld [vmem:[%s364 + $0xb8] sm:$0xff]
        %v434 = vld [vmem:[%s364 + $0xc0] sm:$0xff]
        %v435 = vld [vmem:[%s364 + $0xc8] sm:$0xff]
        %v436 = vld [vmem:[%s364 + $0xd0] sm:$0xff]
        %v437 = vld [vmem:[%s364 + $0xd8] sm:$0xff]
        %v438 = vld [vmem:[%s364 + $0xe0] sm:$0xff]
        %v439 = vld [vmem:[%s364 + $0xe8] sm:$0xff]
        %v440 = vld [vmem:[%s364 + $0xf0] sm:$0xff]
        %v441 = vld [vmem:[%s364 + $0xf8] sm:$0xff]
        %v442 = vmax.f32 %v410, %v412
        %v443 = vmax.f32 %v411, %v413
        %v444 = vmax.f32 %v414, %v416
        %v445 = vmax.f32 %v415, %v417
        %v446 = vmax.f32 %v418, %v420
        %v447 = vmax.f32 %v419, %v421
        %v448 = vmax.f32 %v422, %v424
        %v449 = vmax.f32 %v423, %v425
        %v450 = vmax.f32 %v426, %v428
        %v451 = vmax.f32 %v427, %v429
        %v452 = vmax.f32 %v430, %v432
        %v453 = vmax.f32 %v431, %v433
        %v454 = vmax.f32 %v434, %v436
        %v455 = vmax.f32 %v435, %v437
        %v456 = vmax.f32 %v438, %v440
        %v457 = vmax.f32 %v439, %v441
        %vm474 = vcmask 1046528
        %v475 = vrot.slane %v442, 1
        %v476 = vrot.slane %v443, 1
        %v477 = vsel %vm474, %v475, %v476
        %v478 = vrot.slane %v444, 1
        %v479 = vrot.slane %v445, 1
        %v480 = vsel %vm474, %v478, %v479
        %v481 = vrot.slane %v446, 1
        %v482 = vrot.slane %v447, 1
        %v483 = vsel %vm474, %v481, %v482
        %v484 = vrot.slane %v448, 1
        %v485 = vrot.slane %v449, 1
        %v486 = vsel %vm474, %v484, %v485
        %v487 = vrot.slane %v450, 1
        %v488 = vrot.slane %v451, 1
        %v489 = vsel %vm474, %v487, %v488
        %v490 = vrot.slane %v452, 1
        %v491 = vrot.slane %v453, 1
        %v492 = vsel %vm474, %v490, %v491
        %v493 = vrot.slane %v454, 1
        %v494 = vrot.slane %v455, 1
        %v495 = vsel %vm474, %v493, %v494
        %v496 = vrot.slane %v456, 1
        %v497 = vrot.slane %v457, 1
        %v498 = vsel %vm474, %v496, %v497
        %v523 = vsel %vm474, %v476, %v475
        %v524 = vsel %vm474, %v479, %v478
        %v525 = vsel %vm474, %v482, %v481
        %v526 = vsel %vm474, %v485, %v484
        %v527 = vsel %vm474, %v488, %v487
        %v528 = vsel %vm474, %v491, %v490
        %v529 = vsel %vm474, %v494, %v493
        %v530 = vsel %vm474, %v497, %v496
        %v531 = vmax.f32 %v442, %v477
        %v532 = vmax.f32 %v443, %v523
        %v533 = vmax.f32 %v444, %v480
        %v534 = vmax.f32 %v445, %v524
        %v535 = vmax.f32 %v446, %v483
        %v536 = vmax.f32 %v447, %v525
        %v537 = vmax.f32 %v448, %v486
        %v538 = vmax.f32 %v449, %v526
        %v539 = vmax.f32 %v450, %v489
        %v540 = vmax.f32 %v451, %v527
        %v541 = vmax.f32 %v452, %v492
        %v542 = vmax.f32 %v453, %v528
        %v543 = vmax.f32 %v454, %v495
        %v544 = vmax.f32 %v455, %v529
        %v545 = vmax.f32 %v456, %v498
        %v546 = vmax.f32 %v457, %v530
        %v547 = vpack.c.bf16 %v531, %v531
        %v548 = vpack.c.bf16 %v532, %v532
        %v549 = vpack.c.bf16 %v533, %v533
        %v550 = vpack.c.bf16 %v534, %v534
        %v551 = vpack.c.bf16 %v535, %v535
        %v552 = vpack.c.bf16 %v536, %v536
        %v553 = vpack.c.bf16 %v537, %v537
        %v554 = vpack.c.bf16 %v538, %v538
        %v555 = vpack.c.bf16 %v539, %v539
        %v556 = vpack.c.bf16 %v540, %v540
        %v557 = vpack.c.bf16 %v541, %v541
        %v558 = vpack.c.bf16 %v542, %v542
        %v559 = vpack.c.bf16 %v543, %v543
        %v560 = vpack.c.bf16 %v544, %v544
        %v561 = vpack.c.bf16 %v545, %v545
        %v562 = vpack.c.bf16 %v546, %v546
        %v563 = vld [vmem:[%s1] sm:$0xf]
        %v566 = vunpack.c.l.b16 %v547
        %v567 = vunpack.c.l.b16 %v548
        %v568 = vpack.c.b16 %v567, %v566
        %vm570 = vcmask 130048
        %v572 = vsel %vm570, %v563, 0
        %574 = vmatpush.bf16.msra.mxu0 0
        %575 = vmatpush.bf16.msra.mxu0 0
        %576 = vmatpush.bf16.msra.mxu0 0
        %577 = vmatpush.bf16.msra.mxu0 0
        %578 = vmatpush.bf16.msra.mxu0 0
        %579 = vmatpush.bf16.msra.mxu0 0
        %580 = vmatpush.bf16.msra.mxu0 0
        %581 = vmatpush.bf16.msra.mxu0 %v568
        %582 = vmatmul.bf16.gmra.mxu0 %v572
        %v583 = vpop.f32.mrf.mxu0
        %v584 = vadd.f32 0.0, %v583
        %v585 = vpop.f32.mrf.mxu0
        %586 = vdwg.mxu0
        %v589 = vunpack.c.l.b16 %v549
        %v590 = vunpack.c.l.b16 %v550
        %v591 = vpack.c.b16 %v590, %v589
        %593 = vmatpush.bf16.msra.mxu0 0
        %594 = vmatpush.bf16.msra.mxu0 0
        %595 = vmatpush.bf16.msra.mxu0 0
        %596 = vmatpush.bf16.msra.mxu0 0
        %597 = vmatpush.bf16.msra.mxu0 0
        %598 = vmatpush.bf16.msra.mxu0 0
        %599 = vmatpush.bf16.msra.mxu0 0
        %600 = vmatpush.bf16.msra.mxu0 %v591
        %601 = vmatmul.bf16.gmra.mxu0 %v572
        %v602 = vpop.f32.mrf.mxu0
        %v603 = vadd.f32 0.0, %v602
        %v604 = vpop.f32.mrf.mxu0
        %605 = vdwg.mxu0
        %v608 = vunpack.c.l.b16 %v551
        %v609 = vunpack.c.l.b16 %v552
        %v610 = vpack.c.b16 %v609, %v608
        %612 = vmatpush.bf16.msra.mxu0 0
        %613 = vmatpush.bf16.msra.mxu0 0
        %614 = vmatpush.bf16.msra.mxu0 0
        %615 = vmatpush.bf16.msra.mxu0 0
        %616 = vmatpush.bf16.msra.mxu0 0
        %617 = vmatpush.bf16.msra.mxu0 0
        %618 = vmatpush.bf16.msra.mxu0 0
        %619 = vmatpush.bf16.msra.mxu0 %v610
        %620 = vmatmul.bf16.gmra.mxu0 %v572
        %v621 = vpop.f32.mrf.mxu0
        %v622 = vadd.f32 0.0, %v621
        %v623 = vpop.f32.mrf.mxu0
        %624 = vdwg.mxu0
        %v627 = vunpack.c.l.b16 %v553
        %v628 = vunpack.c.l.b16 %v554
        %v629 = vpack.c.b16 %v628, %v627
        %631 = vmatpush.bf16.msra.mxu0 0
        %632 = vmatpush.bf16.msra.mxu0 0
        %633 = vmatpush.bf16.msra.mxu0 0
        %634 = vmatpush.bf16.msra.mxu0 0
        %635 = vmatpush.bf16.msra.mxu0 0
        %636 = vmatpush.bf16.msra.mxu0 0
        %637 = vmatpush.bf16.msra.mxu0 0
        %638 = vmatpush.bf16.msra.mxu0 %v629
        %639 = vmatmul.bf16.gmra.mxu0 %v572
        %v640 = vpop.f32.mrf.mxu0
        %v641 = vadd.f32 0.0, %v640
        %v642 = vpop.f32.mrf.mxu0
        %643 = vdwg.mxu0
        %v646 = vunpack.c.l.b16 %v555
        %v647 = vunpack.c.l.b16 %v556
        %v648 = vpack.c.b16 %v647, %v646
        %650 = vmatpush.bf16.msra.mxu0 0
        %651 = vmatpush.bf16.msra.mxu0 0
        %652 = vmatpush.bf16.msra.mxu0 0
        %653 = vmatpush.bf16.msra.mxu0 0
        %654 = vmatpush.bf16.msra.mxu0 0
        %655 = vmatpush.bf16.msra.mxu0 0
        %656 = vmatpush.bf16.msra.mxu0 0
        %657 = vmatpush.bf16.msra.mxu0 %v648
        %658 = vmatmul.bf16.gmra.mxu0 %v572
        %v659 = vpop.f32.mrf.mxu0
        %v660 = vadd.f32 0.0, %v659
        %v661 = vpop.f32.mrf.mxu0
        %662 = vdwg.mxu0
        %v665 = vunpack.c.l.b16 %v557
        %v666 = vunpack.c.l.b16 %v558
        %v667 = vpack.c.b16 %v666, %v665
        %669 = vmatpush.bf16.msra.mxu0 0
        %670 = vmatpush.bf16.msra.mxu0 0
        %671 = vmatpush.bf16.msra.mxu0 0
        %672 = vmatpush.bf16.msra.mxu0 0
        %673 = vmatpush.bf16.msra.mxu0 0
        %674 = vmatpush.bf16.msra.mxu0 0
        %675 = vmatpush.bf16.msra.mxu0 0
        %676 = vmatpush.bf16.msra.mxu0 %v667
        %677 = vmatmul.bf16.gmra.mxu0 %v572
        %v678 = vpop.f32.mrf.mxu0
        %v679 = vadd.f32 0.0, %v678
        %v680 = vpop.f32.mrf.mxu0
        %681 = vdwg.mxu0
        %v684 = vunpack.c.l.b16 %v559
        %v685 = vunpack.c.l.b16 %v560
        %v686 = vpack.c.b16 %v685, %v684
        %688 = vmatpush.bf16.msra.mxu0 0
        %689 = vmatpush.bf16.msra.mxu0 0
        %690 = vmatpush.bf16.msra.mxu0 0
        %691 = vmatpush.bf16.msra.mxu0 0
        %692 = vmatpush.bf16.msra.mxu0 0
        %693 = vmatpush.bf16.msra.mxu0 0
        %694 = vmatpush.bf16.msra.mxu0 0
        %695 = vmatpush.bf16.msra.mxu0 %v686
        %696 = vmatmul.bf16.gmra.mxu0 %v572
        %v697 = vpop.f32.mrf.mxu0
        %v698 = vadd.f32 0.0, %v697
        %v699 = vpop.f32.mrf.mxu0
        %700 = vdwg.mxu0
        %v703 = vunpack.c.l.b16 %v561
        %v704 = vunpack.c.l.b16 %v562
        %v705 = vpack.c.b16 %v704, %v703
        %707 = vmatpush.bf16.msra.mxu0 0
        %708 = vmatpush.bf16.msra.mxu0 0
        %709 = vmatpush.bf16.msra.mxu0 0
        %710 = vmatpush.bf16.msra.mxu0 0
        %711 = vmatpush.bf16.msra.mxu0 0
        %712 = vmatpush.bf16.msra.mxu0 0
        %713 = vmatpush.bf16.msra.mxu0 0
        %714 = vmatpush.bf16.msra.mxu0 %v705
        %715 = vmatmul.bf16.gmra.mxu0 %v572
        %v716 = vpop.f32.mrf.mxu0
        %v717 = vadd.f32 0.0, %v716
        %v718 = vpop.f32.mrf.mxu0
        %719 = vdwg.mxu0
        %v720 = vld [vmem:[%s2] sm:$0x1]
        %v722 = vperm.slane %v720, 0
        %v724 = vmul.f32 %v584, %v722
        %v725 = vmul.f32 %v603, %v722
        %v726 = vmul.f32 %v622, %v722
        %v727 = vmul.f32 %v641, %v722
        %v728 = vmul.f32 %v660, %v722
        %v729 = vmul.f32 %v679, %v722
        %v730 = vmul.f32 %v698, %v722
        %v731 = vmul.f32 %v717, %v722
        %v732 = vld [vmem:[%s3] sm:$0x1]
        %v734 = vperm.slane %v732, 0
        %v736 = vadd.f32 %v724, %v734
        %v737 = vadd.f32 %v725, %v734
        %v738 = vadd.f32 %v726, %v734
        %v739 = vadd.f32 %v727, %v734
        %v740 = vadd.f32 %v728, %v734
        %v741 = vadd.f32 %v729, %v734
        %v742 = vadd.f32 %v730, %v734
        %v743 = vadd.f32 %v731, %v734
        %v744 = vmax.f32 %v736, 0.0
        %v745 = vmax.f32 %v737, 0.0
        %v746 = vmax.f32 %v738, 0.0
        %v747 = vmax.f32 %v739, 0.0
        %v748 = vmax.f32 %v740, 0.0
        %v749 = vmax.f32 %v741, 0.0
        %v750 = vmax.f32 %v742, 0.0
        %v751 = vmax.f32 %v743, 0.0
        %v752 = vpack.c.bf16 %v745, %v744
        %v753 = vpack.c.bf16 %v747, %v746
        %v754 = vpack.c.bf16 %v749, %v748
        %v755 = vpack.c.bf16 %v751, %v750
        %v756 = vld [vmem:[%s4] sm:$0xf]
        %v757 = vld [vmem:[%s4 + $0x4] sm:$0xf]
        %v758 = vld [vmem:[%s4 + $0x8] sm:$0xf]
        %v759 = vld [vmem:[%s4 + $0xc] sm:$0xf]
        %v764 = vunpack.c.l.b16 %v756
        %v765 = vunpack.c.l.b16 %v757
        %v766 = vunpack.c.l.b16 %v758
        %v767 = vunpack.c.l.b16 %v759
        %v768 = vpack.c.b16 %v765, %v764
        %v769 = vpack.c.b16 %v767, %v766
        %vm772 = vcmask 261120
        %v774 = vsel %vm772, %v752, 0
        %v777 = vsel %vm772, %v753, 0
        %v780 = vsel %vm772, %v754, 0
        %v783 = vsel %vm772, %v755, 0
        %785 = vmatpush.bf16.msra.mxu0 0
        %786 = vmatpush.bf16.msra.mxu0 0
        %787 = vmatpush.bf16.msra.mxu0 0
        %788 = vmatpush.bf16.msra.mxu0 0
        %789 = vmatpush.bf16.msra.mxu0 0
        %790 = vmatpush.bf16.msra.mxu0 0
        %791 = vmatpush.bf16.msra.mxu0 %v769
        %792 = vmatpush.bf16.msra.mxu0 %v768
        %793 = vmatmul.bf16.gmra.mxu0 %v774
        %v794 = vpop.f32.mrf.mxu0
        %v795 = vadd.f32 0.0, %v794
        %v796 = vpop.f32.mrf.mxu0
        %v797 = vadd.f32 0.0, %v796
        %798 = vmatmul.bf16.gmra.mxu0 %v777
        %v799 = vpop.f32.mrf.mxu0
        %v800 = vadd.f32 0.0, %v799
        %v801 = vpop.f32.mrf.mxu0
        %v802 = vadd.f32 0.0, %v801
        %803 = vmatmul.bf16.gmra.mxu0 %v780
        %v804 = vpop.f32.mrf.mxu0
        %v805 = vadd.f32 0.0, %v804
        %v806 = vpop.f32.mrf.mxu0
        %v807 = vadd.f32 0.0, %v806
        %808 = vmatmul.bf16.gmra.mxu0 %v783
        %v809 = vpop.f32.mrf.mxu0
        %v810 = vadd.f32 0.0, %v809
        %v811 = vpop.f32.mrf.mxu0
        %v812 = vadd.f32 0.0, %v811
        %813 = vdwg.mxu0
        %v814 = vld [vmem:[%s5] sm:$0x1]
        %v816 = vperm.slane %v814, 0
        %v818 = vmul.f32 %v795, %v816
        %v819 = vmul.f32 %v797, %v816
        %v820 = vmul.f32 %v800, %v816
        %v821 = vmul.f32 %v802, %v816
        %v822 = vmul.f32 %v805, %v816
        %v823 = vmul.f32 %v807, %v816
        %v824 = vmul.f32 %v810, %v816
        %v825 = vmul.f32 %v812, %v816
        %v826 = vld [vmem:[%s6] sm:$0x1]
        %v828 = vperm.slane %v826, 0
        %v830 = vadd.f32 %v818, %v828
        %v831 = vadd.f32 %v819, %v828
        %v832 = vadd.f32 %v820, %v828
        %v833 = vadd.f32 %v821, %v828
        %v834 = vadd.f32 %v822, %v828
        %v835 = vadd.f32 %v823, %v828
        %v836 = vadd.f32 %v824, %v828
        %v837 = vadd.f32 %v825, %v828
        %v838 = vmax.f32 %v830, 0.0
        %v839 = vmax.f32 %v831, 0.0
        %v840 = vmax.f32 %v832, 0.0
        %v841 = vmax.f32 %v833, 0.0
        %v842 = vmax.f32 %v834, 0.0
        %v843 = vmax.f32 %v835, 0.0
        %v844 = vmax.f32 %v836, 0.0
        %v845 = vmax.f32 %v837, 0.0
        %v846 = vpack.c.bf16 %v838, %v838
        %v847 = vpack.c.bf16 %v839, %v839
        %v848 = vpack.c.bf16 %v840, %v840
        %v849 = vpack.c.bf16 %v841, %v841
        %v850 = vpack.c.bf16 %v842, %v842
        %v851 = vpack.c.bf16 %v843, %v843
        %v852 = vpack.c.bf16 %v844, %v844
        %v853 = vpack.c.bf16 %v845, %v845
        %v862 = vunpack.c.l.b16 %v846
        %v863 = vunpack.c.l.b16 %v847
        %v864 = vunpack.c.l.b16 %v848
        %v865 = vunpack.c.l.b16 %v849
        %v866 = vunpack.c.l.b16 %v850
        %v867 = vunpack.c.l.b16 %v851
        %v868 = vunpack.c.l.b16 %v852
        %v869 = vunpack.c.l.b16 %v853
        %v870 = vpack.c.b16 %v862, %v862
        %v871 = vpack.c.b16 %v863, %v863
        %v872 = vpack.c.b16 %v864, %v864
        %v873 = vpack.c.b16 %v865, %v865
        %v874 = vpack.c.b16 %v866, %v866
        %v875 = vpack.c.b16 %v867, %v867
        %v876 = vpack.c.b16 %v868, %v868
        %v877 = vpack.c.b16 %v869, %v869
        %v879 = vshrl.u32 %v870, 16
        %v881 = vrot.slane %v879, 7
        %v882 = vshll.u32 %v870, 16
        %v884 = vor.u32 %v881, %v882
        %v886 = vshrl.u32 %v871, 16
        %v888 = vrot.slane %v886, 7
        %v889 = vshll.u32 %v871, 16
        %v891 = vor.u32 %v888, %v889
        %v893 = vshrl.u32 %v872, 16
        %v895 = vrot.slane %v893, 7
        %v896 = vshll.u32 %v872, 16
        %v898 = vor.u32 %v895, %v896
        %v900 = vshrl.u32 %v873, 16
        %v902 = vrot.slane %v900, 7
        %v903 = vshll.u32 %v873, 16
        %v905 = vor.u32 %v902, %v903
        %v907 = vshrl.u32 %v874, 16
        %v909 = vrot.slane %v907, 7
        %v910 = vshll.u32 %v874, 16
        %v912 = vor.u32 %v909, %v910
        %v914 = vshrl.u32 %v875, 16
        %v916 = vrot.slane %v914, 7
        %v917 = vshll.u32 %v875, 16
        %v919 = vor.u32 %v916, %v917
        %v921 = vshrl.u32 %v876, 16
        %v923 = vrot.slane %v921, 7
        %v924 = vshll.u32 %v876, 16
        %v926 = vor.u32 %v923, %v924
        %v928 = vshrl.u32 %v877, 16
        %v930 = vrot.slane %v928, 7
        %v931 = vshll.u32 %v877, 16
        %v933 = vor.u32 %v930, %v931
        %vm942 = vcmask 1040384
        %vm943 = vsmask.f32 256
        %vm944 = vmand %vm942, %vm943
        %v945 = vsel %vm944, 0, %v884
        %v946 = vsel %vm944, 0, %v891
        %v947 = vsel %vm944, 0, %v898
        %v948 = vsel %vm944, 0, %v905
        %v949 = vsel %vm944, 0, %v912
        %v950 = vsel %vm944, 0, %v919
        %v951 = vsel %vm944, 0, %v926
        %v952 = vsel %vm944, 0, %v933
        %v953 = vrot.slane %v882, 1
        %v954 = vor.u32 %v879, %v953
        %v955 = vrot.slane %v889, 1
        %v956 = vor.u32 %v886, %v955
        %v957 = vrot.slane %v896, 1
        %v958 = vor.u32 %v893, %v957
        %v959 = vrot.slane %v903, 1
        %v960 = vor.u32 %v900, %v959
        %v961 = vrot.slane %v910, 1
        %v962 = vor.u32 %v907, %v961
        %v963 = vrot.slane %v917, 1
        %v964 = vor.u32 %v914, %v963
        %v965 = vrot.slane %v924, 1
        %v966 = vor.u32 %v921, %v965
        %v967 = vrot.slane %v931, 1
        %v968 = vor.u32 %v928, %v967
        %vm977 = vcmask 1043456
        %vm978 = vsmask.f32 3328
        %vm979 = vmand %vm977, %vm978
        %v980 = vsel %vm979, %v954, 0
        %v981 = vsel %vm979, %v956, 0
        %v982 = vsel %vm979, %v958, 0
        %v983 = vsel %vm979, %v960, 0
        %v984 = vsel %vm979, %v962, 0
        %v985 = vsel %vm979, %v964, 0
        %v986 = vsel %vm979, %v966, 0
        %v987 = vsel %vm979, %v968, 0
        %988 = vrot.lane.b32.xlu0 %v870, 16
        %v989 = vpop.permute.xlu0 %988
        %990 = vrot.lane.b32.xlu0 %v871, 16
        %v991 = vpop.permute.xlu0 %990
        %992 = vrot.lane.b32.xlu0 %v872, 16
        %v993 = vpop.permute.xlu0 %992
        %994 = vrot.lane.b32.xlu0 %v873, 16
        %v995 = vpop.permute.xlu0 %994
        %996 = vrot.lane.b32.xlu0 %v874, 16
        %v997 = vpop.permute.xlu0 %996
        %998 = vrot.lane.b32.xlu0 %v875, 16
        %v999 = vpop.permute.xlu0 %998
        %1000 = vrot.lane.b32.xlu0 %v876, 16
        %v1001 = vpop.permute.xlu0 %1000
        %1002 = vrot.lane.b32.xlu0 %v877, 16
        %v1003 = vpop.permute.xlu0 %1002
        %1012 = vrot.lane.b32.xlu0 %v980, 32
        %v1013 = vpop.permute.xlu0 %1012
        %1014 = vrot.lane.b32.xlu0 %v981, 32
        %v1015 = vpop.permute.xlu0 %1014
        %1016 = vrot.lane.b32.xlu0 %v982, 32
        %v1017 = vpop.permute.xlu0 %1016
        %1018 = vrot.lane.b32.xlu0 %v983, 32
        %v1019 = vpop.permute.xlu0 %1018
        %1020 = vrot.lane.b32.xlu0 %v984, 32
        %v1021 = vpop.permute.xlu0 %1020
        %1022 = vrot.lane.b32.xlu0 %v985, 32
        %v1023 = vpop.permute.xlu0 %1022
        %1024 = vrot.lane.b32.xlu0 %v986, 32
        %v1025 = vpop.permute.xlu0 %1024
        %1026 = vrot.lane.b32.xlu0 %v987, 32
        %v1027 = vpop.permute.xlu0 %1026
        %v1030 = vsel %vm570, %v945, %v989
        %v1033 = vsel %vm570, %v946, %v991
        %v1036 = vsel %vm570, %v947, %v993
        %v1039 = vsel %vm570, %v948, %v995
        %v1042 = vsel %vm570, %v949, %v997
        %v1045 = vsel %vm570, %v950, %v999
        %v1048 = vsel %vm570, %v951, %v1001
        %v1051 = vsel %vm570, %v952, %v1003
        %v1053 = vsel %vm772, %v1030, %v1013
        %v1055 = vsel %vm772, %v1033, %v1015
        %v1057 = vsel %vm772, %v1036, %v1017
        %v1059 = vsel %vm772, %v1039, %v1019
        %v1061 = vsel %vm772, %v1042, %v1021
        %v1063 = vsel %vm772, %v1045, %v1023
        %v1065 = vsel %vm772, %v1048, %v1025
        %v1067 = vsel %vm772, %v1051, %v1027
        %v1068 = vld [vmem:[%s7] sm:$0xf]
        %v1069 = vld [vmem:[%s7 + $0x4] sm:$0xf]
        %v1070 = vld [vmem:[%s7 + $0x8] sm:$0xf]
        %v1071 = vld [vmem:[%s7 + $0xc] sm:$0xf]
        %v1072 = vld [vmem:[%s7 + $0x10] sm:$0xf]
        %v1073 = vld [vmem:[%s7 + $0x14] sm:$0xf]
        %v1074 = vld [vmem:[%s7 + $0x18] sm:$0xf]
        %v1075 = vld [vmem:[%s7 + $0x1c] sm:$0xf]
        %v1076 = vld [vmem:[%s7 + $0x20] sm:$0xf]
        %v1077 = vld [vmem:[%s7 + $0x24] sm:$0xf]
        %v1078 = vld [vmem:[%s7 + $0x28] sm:$0xf]
        %v1079 = vld [vmem:[%s7 + $0x2c] sm:$0xf]
        %v1080 = vld [vmem:[%s7 + $0x30] sm:$0xf]
        %v1081 = vld [vmem:[%s7 + $0x34] sm:$0xf]
        %v1082 = vld [vmem:[%s7 + $0x38] sm:$0xf]
        %v1083 = vld [vmem:[%s7 + $0x3c] sm:$0xf]
        %v1084 = vld [vmem:[%s7 + $0x40] sm:$0xf]
        %v1085 = vld [vmem:[%s7 + $0x44] sm:$0xf]
        %v1094 = vunpack.c.l.b16 %v1053
        %v1095 = vunpack.c.l.b16 %v1055
        %v1096 = vunpack.c.l.b16 %v1057
        %v1097 = vunpack.c.l.b16 %v1059
        %v1098 = vunpack.c.l.b16 %v1061
        %v1099 = vunpack.c.l.b16 %v1063
        %v1100 = vunpack.c.l.b16 %v1065
        %v1101 = vunpack.c.l.b16 %v1067
        %v1102 = vpack.c.b16 %v1095, %v1094
        %v1103 = vpack.c.b16 %v1097, %v1096
        %v1104 = vpack.c.b16 %v1099, %v1098
        %v1105 = vpack.c.b16 %v1101, %v1100
        %v1112 = vunpack.c.l.b16 %v1068
        %v1113 = vunpack.c.l.b16 %v1069
        %v1114 = vunpack.c.l.b16 %v1070
        %v1115 = vunpack.c.l.b16 %v1071
        %v1116 = vunpack.c.l.b16 %v1072
        %v1117 = vunpack.c.l.b16 %v1073
        %v1118 = vpack.c.b16 %v1113, %v1112
        %v1119 = vpack.c.b16 %v1115, %v1114
        %v1120 = vpack.c.b16 %v1117, %v1116
        %vm1124 = vcmask 392192
        %v1126 = vsel %vm1124, %v1102, 0
        %v1129 = vsel %vm1124, %v1103, 0
        %v1132 = vsel %vm1124, %v1104, 0
        %v1135 = vsel %vm1124, %v1105, 0
        %1137 = vmatpush.bf16.msra.mxu0 0
        %1138 = vmatpush.bf16.msra.mxu0 0
        %1139 = vmatpush.bf16.msra.mxu0 0
        %1140 = vmatpush.bf16.msra.mxu0 0
        %1141 = vmatpush.bf16.msra.mxu0 0
        %1142 = vmatpush.bf16.msra.mxu0 %v1120
        %1143 = vmatpush.bf16.msra.mxu0 %v1119
        %1144 = vmatpush.bf16.msra.mxu0 %v1118
        %1145 = vmatmul.bf16.gmra.mxu0 %v1126
        %v1146 = vpop.f32.mrf.mxu0
        %v1147 = vadd.f32 0.0, %v1146
        %v1148 = vpop.f32.mrf.mxu0
        %v1149 = vadd.f32 0.0, %v1148
        %1150 = vmatmul.bf16.gmra.mxu0 %v1129
        %v1151 = vpop.f32.mrf.mxu0
        %v1152 = vadd.f32 0.0, %v1151
        %v1153 = vpop.f32.mrf.mxu0
        %v1154 = vadd.f32 0.0, %v1153
        %1155 = vmatmul.bf16.gmra.mxu0 %v1132
        %v1156 = vpop.f32.mrf.mxu0
        %v1157 = vadd.f32 0.0, %v1156
        %v1158 = vpop.f32.mrf.mxu0
        %v1159 = vadd.f32 0.0, %v1158
        %1160 = vmatmul.bf16.gmra.mxu0 %v1135
        %v1161 = vpop.f32.mrf.mxu0
        %v1162 = vadd.f32 0.0, %v1161
        %v1163 = vpop.f32.mrf.mxu0
        %1164 = vdwg.mxu0
        %v1171 = vunpack.c.l.b16 %v1074
        %v1172 = vunpack.c.l.b16 %v1075
        %v1173 = vunpack.c.l.b16 %v1076
        %v1174 = vunpack.c.l.b16 %v1077
        %v1175 = vunpack.c.l.b16 %v1078
        %v1176 = vunpack.c.l.b16 %v1079
        %v1177 = vpack.c.b16 %v1172, %v1171
        %v1178 = vpack.c.b16 %v1174, %v1173
        %v1179 = vpack.c.b16 %v1176, %v1175
        %1183 = vmatpush.bf16.msra.mxu0 0
        %1184 = vmatpush.bf16.msra.mxu0 0
        %1185 = vmatpush.bf16.msra.mxu0 0
        %1186 = vmatpush.bf16.msra.mxu0 0
        %1187 = vmatpush.bf16.msra.mxu0 0
        %1188 = vmatpush.bf16.msra.mxu0 %v1179
        %1189 = vmatpush.bf16.msra.mxu0 %v1178
        %1190 = vmatpush.bf16.msra.mxu0 %v1177
        %1191 = vmatmul.bf16.gmra.mxu0 %v1126
        %v1192 = vpop.f32.mrf.mxu0
        %v1193 = vadd.f32 0.0, %v1192
        %v1194 = vpop.f32.mrf.mxu0
        %v1195 = vadd.f32 0.0, %v1194
        %1196 = vmatmul.bf16.gmra.mxu0 %v1129
        %v1197 = vpop.f32.mrf.mxu0
        %v1198 = vadd.f32 0.0, %v1197
        %v1199 = vpop.f32.mrf.mxu0
        %v1200 = vadd.f32 0.0, %v1199
        %1201 = vmatmul.bf16.gmra.mxu0 %v1132
        %v1202 = vpop.f32.mrf.mxu0
        %v1203 = vadd.f32 0.0, %v1202
        %v1204 = vpop.f32.mrf.mxu0
        %v1205 = vadd.f32 0.0, %v1204
        %1206 = vmatmul.bf16.gmra.mxu0 %v1135
        %v1207 = vpop.f32.mrf.mxu0
        %v1208 = vadd.f32 0.0, %v1207
        %v1209 = vpop.f32.mrf.mxu0
        %v1210 = vadd.f32 0.0, %v1209
        %1211 = vdwg.mxu0
        %v1218 = vunpack.c.l.b16 %v1080
        %v1219 = vunpack.c.l.b16 %v1081
        %v1220 = vunpack.c.l.b16 %v1082
        %v1221 = vunpack.c.l.b16 %v1083
        %v1222 = vunpack.c.l.b16 %v1084
        %v1223 = vunpack.c.l.b16 %v1085
        %v1224 = vpack.c.b16 %v1219, %v1218
        %v1225 = vpack.c.b16 %v1221, %v1220
        %v1226 = vpack.c.b16 %v1223, %v1222
        %1230 = vmatpush.bf16.msra.mxu0 0
        %1231 = vmatpush.bf16.msra.mxu0 0
        %1232 = vmatpush.bf16.msra.mxu0 0
        %1233 = vmatpush.bf16.msra.mxu0 0
        %1234 = vmatpush.bf16.msra.mxu0 0
        %1235 = vmatpush.bf16.msra.mxu0 %v1226
        %1236 = vmatpush.bf16.msra.mxu0 %v1225
        %1237 = vmatpush.bf16.msra.mxu0 %v1224
        %1238 = vmatmul.bf16.gmra.mxu0 %v1126
        %v1239 = vpop.f32.mrf.mxu0
        %v1240 = vpop.f32.mrf.mxu0
        %v1241 = vadd.f32 0.0, %v1240
        %1242 = vmatmul.bf16.gmra.mxu0 %v1129
        %v1243 = vpop.f32.mrf.mxu0
        %v1244 = vadd.f32 0.0, %v1243
        %v1245 = vpop.f32.mrf.mxu0
        %v1246 = vadd.f32 0.0, %v1245
        %1247 = vmatmul.bf16.gmra.mxu0 %v1132
        %v1248 = vpop.f32.mrf.mxu0
        %v1249 = vadd.f32 0.0, %v1248
        %v1250 = vpop.f32.mrf.mxu0
        %v1251 = vadd.f32 0.0, %v1250
        %1252 = vmatmul.bf16.gmra.mxu0 %v1135
        %v1253 = vpop.f32.mrf.mxu0
        %v1254 = vadd.f32 0.0, %v1253
        %v1255 = vpop.f32.mrf.mxu0
        %v1256 = vadd.f32 0.0, %v1255
        %1257 = vdwg.mxu0
        %v1258 = vadd.f32 %v1193, 0.0
        %v1259 = vadd.f32 %v1147, %v1195
        %v1260 = vadd.f32 %v1149, %v1198
        %v1261 = vadd.f32 %v1152, %v1200
        %v1262 = vadd.f32 %v1154, %v1203
        %v1263 = vadd.f32 %v1157, %v1205
        %v1264 = vadd.f32 %v1159, %v1208
        %v1265 = vadd.f32 %v1162, %v1210
        %v1266 = vadd.f32 %v1258, %v1241
        %v1267 = vadd.f32 %v1259, %v1244
        %v1268 = vadd.f32 %v1260, %v1246
        %v1269 = vadd.f32 %v1261, %v1249
        %v1270 = vadd.f32 %v1262, %v1251
        %v1271 = vadd.f32 %v1263, %v1254
        %v1272 = vadd.f32 %v1264, %v1256
        %v1273 = vadd.f32 %v1265, 0.0
        %v1274 = vld [vmem:[%s8] sm:$0x1]
        %v1276 = vperm.slane %v1274, 0
        %v1278 = vmul.f32 %v1266, %v1276
        %v1279 = vmul.f32 %v1267, %v1276
        %v1280 = vmul.f32 %v1268, %v1276
        %v1281 = vmul.f32 %v1269, %v1276
        %v1282 = vmul.f32 %v1270, %v1276
        %v1283 = vmul.f32 %v1271, %v1276
        %v1284 = vmul.f32 %v1272, %v1276
        %v1285 = vmul.f32 %v1273, %v1276
        %v1286 = vld [vmem:[%s9] sm:$0x1]
        %v1288 = vperm.slane %v1286, 0
        %v1290 = vadd.f32 %v1278, %v1288
        %v1291 = vadd.f32 %v1279, %v1288
        %v1292 = vadd.f32 %v1280, %v1288
        %v1293 = vadd.f32 %v1281, %v1288
        %v1294 = vadd.f32 %v1282, %v1288
        %v1295 = vadd.f32 %v1283, %v1288
        %v1296 = vadd.f32 %v1284, %v1288
        %v1297 = vadd.f32 %v1285, %v1288
        %v1298 = vmax.f32 %v1290, 0.0
        %v1299 = vmax.f32 %v1291, 0.0
        %v1300 = vmax.f32 %v1292, 0.0
        %v1301 = vmax.f32 %v1293, 0.0
        %v1302 = vmax.f32 %v1294, 0.0
        %v1303 = vmax.f32 %v1295, 0.0
        %v1304 = vmax.f32 %v1296, 0.0
        %v1305 = vmax.f32 %v1297, 0.0
        %v1306 = vpack.c.bf16 %v1299, %v1298
        %v1307 = vpack.c.bf16 %v1301, %v1300
        %v1308 = vpack.c.bf16 %v1303, %v1302
        %v1309 = vpack.c.bf16 %v1305, %v1304
        %v1310 = vld [vmem:[%s10] sm:$0xf]
        %v1311 = vld [vmem:[%s10 + $0x4] sm:$0xf]
        %v1314 = vunpack.c.l.b16 %v1310
        %v1315 = vunpack.c.l.b16 %v1311
        %v1316 = vpack.c.b16 %v1315, %v1314
        %v1319 = vsel %vm570, %v1306, 0
        %v1322 = vsel %vm570, %v1307, 0
        %v1325 = vsel %vm570, %v1308, 0
        %v1328 = vsel %vm570, %v1309, 0
        %1330 = vmatpush.bf16.msra.mxu0 0
        %1331 = vmatpush.bf16.msra.mxu0 0
        %1332 = vmatpush.bf16.msra.mxu0 0
        %1333 = vmatpush.bf16.msra.mxu0 0
        %1334 = vmatpush.bf16.msra.mxu0 0
        %1335 = vmatpush.bf16.msra.mxu0 0
        %1336 = vmatpush.bf16.msra.mxu0 0
        %1337 = vmatpush.bf16.msra.mxu0 %v1316
        %1338 = vmatmul.bf16.gmra.mxu0 %v1319
        %v1339 = vpop.f32.mrf.mxu0
        %v1340 = vadd.f32 %v584, %v1339
        %v1341 = vpop.f32.mrf.mxu0
        %v1342 = vadd.f32 %v603, %v1341
        %1343 = vmatmul.bf16.gmra.mxu0 %v1322
        %v1344 = vpop.f32.mrf.mxu0
        %v1345 = vadd.f32 %v622, %v1344
        %v1346 = vpop.f32.mrf.mxu0
        %v1347 = vadd.f32 %v641, %v1346
        %1348 = vmatmul.bf16.gmra.mxu0 %v1325
        %v1349 = vpop.f32.mrf.mxu0
        %v1350 = vadd.f32 %v660, %v1349
        %v1351 = vpop.f32.mrf.mxu0
        %v1352 = vadd.f32 %v679, %v1351
        %1353 = vmatmul.bf16.gmra.mxu0 %v1328
        %v1354 = vpop.f32.mrf.mxu0
        %v1355 = vadd.f32 %v698, %v1354
        %v1356 = vpop.f32.mrf.mxu0
        %v1357 = vadd.f32 %v717, %v1356
        %1358 = vdwg.mxu0
        %v1359 = vmax.f32 %v1340, 0.0
        %v1360 = vmax.f32 %v1342, 0.0
        %v1361 = vmax.f32 %v1345, 0.0
        %v1362 = vmax.f32 %v1347, 0.0
        %v1363 = vmax.f32 %v1350, 0.0
        %v1364 = vmax.f32 %v1352, 0.0
        %v1365 = vmax.f32 %v1355, 0.0
        %v1366 = vmax.f32 %v1357, 0.0
        %v1367 = vpack.c.bf16 %v1359, %v1359
        %v1368 = vpack.c.bf16 %v1360, %v1360
        %v1369 = vpack.c.bf16 %v1361, %v1361
        %v1370 = vpack.c.bf16 %v1362, %v1362
        %v1371 = vpack.c.bf16 %v1363, %v1363
        %v1372 = vpack.c.bf16 %v1364, %v1364
        %v1373 = vpack.c.bf16 %v1365, %v1365
        %v1374 = vpack.c.bf16 %v1366, %v1366
        %vm1375 = vcmask 257024
        %1376 = vst.msk [vmem:[%s408] sm:$0xf] %vm1375, %v1367
        %1377 = vst.msk [vmem:[%s408 + $0x4] sm:$0xf] %vm1375, %v1368
        %1378 = vst.msk [vmem:[%s408 + $0x8] sm:$0xf] %vm1375, %v1369
        %1379 = vst.msk [vmem:[%s408 + $0xc] sm:$0xf] %vm1375, %v1370
        %1380 = vst.msk [vmem:[%s408 + $0x10] sm:$0xf] %vm1375, %v1371
        %1381 = vst.msk [vmem:[%s408 + $0x14] sm:$0xf] %vm1375, %v1372
        %1382 = vst.msk [vmem:[%s408 + $0x18] sm:$0xf] %vm1375, %v1373
        %1383 = vst.msk [vmem:[%s408 + $0x1c] sm:$0xf] %vm1375, %v1374
        %p1384 = scmp.lt.s32.totalorder %s25, 1
        %s1385 = scalar_select %p1384, %s25, 1
        %s1386 = smul.addr %s1385, 8
        %s1387 = smul.addr %s1386, 4
        %s1388 = scalar_lea.vmem %s11, %s1387
        // Predicated region
        $region69: #{model.4} parent=63 // pred_check
          %p1389 = pneg %p279
        $region70: #{model.4} parent=63 // pred_check_branch
          %1391 = sbr.rel (%p1389) target = $region72
        $region71: #{model.4} parent=63 // pred_region
          _
        $region72: #{model.4} parent=63 // pred_fallthru
          _
      $region64: #{model.4} parent=5 // pred_fallthru
        _
      %p1392 = scmp.le.s32.totalorder 2, %s20
      // Predicated region
      $region73: #{model.4} parent=5 // pred_check
        %p1393 = pneg %p1392
      $region74: #{model.4} parent=5 // pred_check_branch
        %1395 = sbr.rel (%p1393) target = $region76
      $region75: #{model.4} parent=5 // pred_region
        %s1396 = ssub.s32 %s20, 2
        // Predicated region
        $region77: #{model.4} parent=75 // pred_check
          %p1397 = pneg %p285
        $region78: #{model.4} parent=75 // pred_check_branch
          %1399 = sbr.rel (%p1397) target = $region80
        $region79: #{model.4} parent=75 // pred_region
          %p1400 = scmp.lt.s32.totalorder %s26, 1
          %s1401 = scalar_select %p1400, %s26, 1
          %s1402 = smul.addr %s1401, 8
          %s1403 = smul.addr %s1402, 4
          %s1404 = scalar_lea.vmem %s11, %s1403
        $region80: #{model.4} parent=75 // pred_fallthru
          _
      $region76: #{model.4} parent=5 // pred_fallthru
        _
    $region6: #{model.4} parent=1 // loop_footer
      %s24 = sadd.s32 1, %s20
    $region7: #{model.4} parent=1 // loop_footer_branch
      %19 = sbr.rel target = $region3
    $region8: #{model.4} parent=1 // loop_exit
      _
    %1405 = vsyncpa [#allocation3], 1
    %s1406 = scalar_lea.sflag [#allocation3], 1
    %1407 = vsyncpa %s1406, 1

// kernel: model.5
$region0: #{model.5}
  #allocation0 [shape = 'u32[]', space=smem, size = 0x4, offset = 0x4, fixed_abs, tag = 'smem constant byte address 0x4 - core index']
  #allocation1 [shape = 'u32[72,128]{1,0:T(1,128)}', space=vmem, size = 0x9000, scoped, tag = 'internal scratch']
  %s0 = inlined_call_operand.vmem [shape: bf16[2,8,8,32], index: 0, kind: input, shape index: {}]
  %s1 = inlined_call_operand.vmem [shape: bf16[4,8], index: 1, kind: input, shape index: {}]
  %s2 = inlined_call_operand.vmem [shape: f32[1,1,32], index: 2, kind: input, shape index: {}]
  %s3 = inlined_call_operand.vmem [shape: f32[1,1,32], index: 3, kind: input, shape index: {}]
  %s4 = inlined_call_operand.vmem [shape: bf16[1,32,16], index: 4, kind: input, shape index: {}]
  %s5 = inlined_call_operand.vmem [shape: f32[1,1,16], index: 5, kind: input, shape index: {}]
  %s6 = inlined_call_operand.vmem [shape: f32[1,1,16], index: 6, kind: input, shape index: {}]
  %s7 = inlined_call_operand.vmem [shape: bf16[1,144,16], index: 7, kind: input, shape index: {}]
  %s8 = inlined_call_operand.vmem [shape: f32[1,1,16], index: 8, kind: input, shape index: {}]
  %s9 = inlined_call_operand.vmem [shape: f32[1,1,16], index: 9, kind: input, shape index: {}]
  %s10 = inlined_call_operand.vmem [shape: bf16[1,16,32], index: 10, kind: input, shape index: {}]
  %s11 = inlined_call_operand.vmem [shape: bf16[2,4,4,32], index: 11, kind: output, shape index: {}]
  %s12 = sld [smem:[#allocation0]]
  $region77: #{model.5} parent=0
    _
  %s14 = ssub.s32 1, %s12
  %s15 = scalar_select 0, %s14, %s12
  loop: start=0, step=1, limit=4
  $region2: #{model.5} parent=0 // loop_pre_header
    _
  $region3: #{model.5} parent=0 // loop_header
    %s17 = sphi 0, %s21
    %p18 = scmp.ge.s32.totalorder %s17, 4
    %s27 = sphi 0, %s29
    %s30 = sphi 0, %s27
    %s31 = sphi 0, %s30
    %s47 = sphi 0, %s31
    %s51 = sphi 0, %s51
    %s53 = sphi 0, %s51
    %s54 = sphi 0, %s53
    %s68 = sphi 0, %s54
    %s72 = sphi 0, %s72
    %s74 = sphi 0, %s72
    %s75 = sphi 0, %s74
    %s89 = sphi 0, %s75
    %s93 = sphi 0, %s93
    %s95 = sphi 0, %s93
    %s96 = sphi 0, %s95
    %s110 = sphi 0, %s96
    %s114 = sphi 0, %s114
    %s116 = sphi 0, %s114
    %s117 = sphi 0, %s116
    %s131 = sphi 0, %s117
    %s135 = sphi 0, %s135
    %s137 = sphi 0, %s135
    %s138 = sphi 0, %s137
    %s152 = sphi 0, %s138
    %s156 = sphi 0, %s156
    %s158 = sphi 0, %s156
    %s159 = sphi 0, %s158
    %s173 = sphi 0, %s159
    %s177 = sphi 0, %s177
    %s179 = sphi 0, %s177
    %s180 = sphi 0, %s179
    %s194 = sphi 0, %s180
    %s198 = sphi 0, %s198
    %s200 = sphi 0, %s198
    %s201 = sphi 0, %s200
    %s215 = sphi 0, %s201
    %s219 = sphi 0, %s219
    %s221 = sphi 0, %s219
    %s222 = sphi 0, %s221
    %s236 = sphi 0, %s222
    %s240 = sphi 0, %s240
    %s242 = sphi 0, %s240
    %s243 = sphi 0, %s242
    %s257 = sphi 0, %s243
    %s263 = sphi 0, %s265
    %s266 = sphi 0, %s263
    %s267 = sphi 0, %s266
    %s283 = sphi 0, %s267
  $region4: #{model.5} parent=0 // loop_header_branch
    %20 = sbr.rel (%p18) target = $region8
  $region5: #{model.5} parent=0 // loop_body
    %s22 = ssub.s32 %s17, 1
    %s23 = ssub.s32 %s17, 2
    %s24 = sadd.s32 %s17, 1
    %s25 = ssub.s32 %s17, %s24
    %p26 = scmp.eq.s32.totalorder %s25, 0
    %s28 = sadd.s32 %s27, 1
    %s29 = scalar_select %p26, %s27, %s28
    %p32 = pneg %p26
    %p33 = scmp.eq.s32.totalorder %s17, 1
    %p34 = por %p32, %p33
    %p35 = scmp.ne.s32.totalorder %s27, %s30
    %p36 = scmp.eq.s32.totalorder %s17, 0
    %p37 = por %p35, %p36
    %p38 = scmp.ne.s32.totalorder %s27, %s30
    %p39 = scmp.eq.s32.totalorder %s22, 1
    %p40 = por %p38, %p39
    %p41 = scmp.ne.s32.totalorder %s30, %s31
    %p42 = scmp.eq.s32.totalorder %s22, 0
    %p43 = por %p41, %p42
    %p44 = scmp.ne.s32.totalorder %s30, %s31
    %p45 = scmp.eq.s32.totalorder %s23, 1
    %p46 = por %p44, %p45
    %p48 = scmp.ne.s32.totalorder %s31, %s47
    %p49 = scmp.eq.s32.totalorder %s23, 0
    %p50 = por %p48, %p49
    %s52 = sadd.s32 %s51, 1
    %p55 = scmp.eq.s32.totalorder %s17, 1
    %p56 = scmp.ne.s32.totalorder %s51, %s53
    %p57 = scmp.eq.s32.totalorder %s17, 0
    %p58 = por %p56, %p57
    %p59 = scmp.ne.s32.totalorder %s51, %s53
    %p60 = scmp.eq.s32.totalorder %s22, 1
    %p61 = por %p59, %p60
    %p62 = scmp.ne.s32.totalorder %s53, %s54
    %p63 = scmp.eq.s32.totalorder %s22, 0
    %p64 = por %p62, %p63
    %p65 = scmp.ne.s32.totalorder %s53, %s54
    %p66 = scmp.eq.s32.totalorder %s23, 1
    %p67 = por %p65, %p66
    %p69 = scmp.ne.s32.totalorder %s54, %s68
    %p70 = scmp.eq.s32.totalorder %s23, 0
    %p71 = por %p69, %p70
    %s73 = sadd.s32 %s72, 1
    %p76 = scmp.eq.s32.totalorder %s17, 1
    %p77 = scmp.ne.s32.totalorder %s72, %s74
    %p78 = scmp.eq.s32.totalorder %s17, 0
    %p79 = por %p77, %p78
    %p80 = scmp.ne.s32.totalorder %s72, %s74
    %p81 = scmp.eq.s32.totalorder %s22, 1
    %p82 = por %p80, %p81
    %p83 = scmp.ne.s32.totalorder %s74, %s75
    %p84 = scmp.eq.s32.totalorder %s22, 0
    %p85 = por %p83, %p84
    %p86 = scmp.ne.s32.totalorder %s74, %s75
    %p87 = scmp.eq.s32.totalorder %s23, 1
    %p88 = por %p86, %p87
    %p90 = scmp.ne.s32.totalorder %s75, %s89
    %p91 = scmp.eq.s32.totalorder %s23, 0
    %p92 = por %p90, %p91
    %s94 = sadd.s32 %s93, 1
    %p97 = scmp.eq.s32.totalorder %s17, 1
    %p98 = scmp.ne.s32.totalorder %s93, %s95
    %p99 = scmp.eq.s32.totalorder %s17, 0
    %p100 = por %p98, %p99
    %p101 = scmp.ne.s32.totalorder %s93, %s95
    %p102 = scmp.eq.s32.totalorder %s22, 1
    %p103 = por %p101, %p102
    %p104 = scmp.ne.s32.totalorder %s95, %s96
    %p105 = scmp.eq.s32.totalorder %s22, 0
    %p106 = por %p104, %p105
    %p107 = scmp.ne.s32.totalorder %s95, %s96
    %p108 = scmp.eq.s32.totalorder %s23, 1
    %p109 = por %p107, %p108
    %p111 = scmp.ne.s32.totalorder %s96, %s110
    %p112 = scmp.eq.s32.totalorder %s23, 0
    %p113 = por %p111, %p112
    %s115 = sadd.s32 %s114, 1
    %p118 = scmp.eq.s32.totalorder %s17, 1
    %p119 = scmp.ne.s32.totalorder %s114, %s116
    %p120 = scmp.eq.s32.totalorder %s17, 0
    %p121 = por %p119, %p120
    %p122 = scmp.ne.s32.totalorder %s114, %s116
    %p123 = scmp.eq.s32.totalorder %s22, 1
    %p124 = por %p122, %p123
    %p125 = scmp.ne.s32.totalorder %s116, %s117
    %p126 = scmp.eq.s32.totalorder %s22, 0
    %p127 = por %p125, %p126
    %p128 = scmp.ne.s32.totalorder %s116, %s117
    %p129 = scmp.eq.s32.totalorder %s23, 1
    %p130 = por %p128, %p129
    %p132 = scmp.ne.s32.totalorder %s117, %s131
    %p133 = scmp.eq.s32.totalorder %s23, 0
    %p134 = por %p132, %p133
    %s136 = sadd.s32 %s135, 1
    %p139 = scmp.eq.s32.totalorder %s17, 1
    %p140 = scmp.ne.s32.totalorder %s135, %s137
    %p141 = scmp.eq.s32.totalorder %s17, 0
    %p142 = por %p140, %p141
    %p143 = scmp.ne.s32.totalorder %s135, %s137
    %p144 = scmp.eq.s32.totalorder %s22, 1
    %p145 = por %p143, %p144
    %p146 = scmp.ne.s32.totalorder %s137, %s138
    %p147 = scmp.eq.s32.totalorder %s22, 0
    %p148 = por %p146, %p147
    %p149 = scmp.ne.s32.totalorder %s137, %s138
    %p150 = scmp.eq.s32.totalorder %s23, 1
    %p151 = por %p149, %p150
    %p153 = scmp.ne.s32.totalorder %s138, %s152
    %p154 = scmp.eq.s32.totalorder %s23, 0
    %p155 = por %p153, %p154
    %s157 = sadd.s32 %s156, 1
    %p160 = scmp.eq.s32.totalorder %s17, 1
    %p161 = scmp.ne.s32.totalorder %s156, %s158
    %p162 = scmp.eq.s32.totalorder %s17, 0
    %p163 = por %p161, %p162
    %p164 = scmp.ne.s32.totalorder %s156, %s158
    %p165 = scmp.eq.s32.totalorder %s22, 1
    %p166 = por %p164, %p165
    %p167 = scmp.ne.s32.totalorder %s158, %s159
    %p168 = scmp.eq.s32.totalorder %s22, 0
    %p169 = por %p167, %p168
    %p170 = scmp.ne.s32.totalorder %s158, %s159
    %p171 = scmp.eq.s32.totalorder %s23, 1
    %p172 = por %p170, %p171
    %p174 = scmp.ne.s32.totalorder %s159, %s173
    %p175 = scmp.eq.s32.totalorder %s23, 0
    %p176 = por %p174, %p175
    %s178 = sadd.s32 %s177, 1
    %p181 = scmp.eq.s32.totalorder %s17, 1
    %p182 = scmp.ne.s32.totalorder %s177, %s179
    %p183 = scmp.eq.s32.totalorder %s17, 0
    %p184 = por %p182, %p183
    %p185 = scmp.ne.s32.totalorder %s177, %s179
    %p186 = scmp.eq.s32.totalorder %s22, 1
    %p187 = por %p185, %p186
    %p188 = scmp.ne.s32.totalorder %s179, %s180
    %p189 = scmp.eq.s32.totalorder %s22, 0
    %p190 = por %p188, %p189
    %p191 = scmp.ne.s32.totalorder %s179, %s180
    %p192 = scmp.eq.s32.totalorder %s23, 1
    %p193 = por %p191, %p192
    %p195 = scmp.ne.s32.totalorder %s180, %s194
    %p196 = scmp.eq.s32.totalorder %s23, 0
    %p197 = por %p195, %p196
    %s199 = sadd.s32 %s198, 1
    %p202 = scmp.eq.s32.totalorder %s17, 1
    %p203 = scmp.ne.s32.totalorder %s198, %s200
    %p204 = scmp.eq.s32.totalorder %s17, 0
    %p205 = por %p203, %p204
    %p206 = scmp.ne.s32.totalorder %s198, %s200
    %p207 = scmp.eq.s32.totalorder %s22, 1
    %p208 = por %p206, %p207
    %p209 = scmp.ne.s32.totalorder %s200, %s201
    %p210 = scmp.eq.s32.totalorder %s22, 0
    %p211 = por %p209, %p210
    %p212 = scmp.ne.s32.totalorder %s200, %s201
    %p213 = scmp.eq.s32.totalorder %s23, 1
    %p214 = por %p212, %p213
    %p216 = scmp.ne.s32.totalorder %s201, %s215
    %p217 = scmp.eq.s32.totalorder %s23, 0
    %p218 = por %p216, %p217
    %s220 = sadd.s32 %s219, 1
    %p223 = scmp.eq.s32.totalorder %s17, 1
    %p224 = scmp.ne.s32.totalorder %s219, %s221
    %p225 = scmp.eq.s32.totalorder %s17, 0
    %p226 = por %p224, %p225
    %p227 = scmp.ne.s32.totalorder %s219, %s221
    %p228 = scmp.eq.s32.totalorder %s22, 1
    %p229 = por %p227, %p228
    %p230 = scmp.ne.s32.totalorder %s221, %s222
    %p231 = scmp.eq.s32.totalorder %s22, 0
    %p232 = por %p230, %p231
    %p233 = scmp.ne.s32.totalorder %s221, %s222
    %p234 = scmp.eq.s32.totalorder %s23, 1
    %p235 = por %p233, %p234
    %p237 = scmp.ne.s32.totalorder %s222, %s236
    %p238 = scmp.eq.s32.totalorder %s23, 0
    %p239 = por %p237, %p238
    %s241 = sadd.s32 %s240, 1
    %p244 = scmp.eq.s32.totalorder %s17, 1
    %p245 = scmp.ne.s32.totalorder %s240, %s242
    %p246 = scmp.eq.s32.totalorder %s17, 0
    %p247 = por %p245, %p246
    %p248 = scmp.ne.s32.totalorder %s240, %s242
    %p249 = scmp.eq.s32.totalorder %s22, 1
    %p250 = por %p248, %p249
    %p251 = scmp.ne.s32.totalorder %s242, %s243
    %p252 = scmp.eq.s32.totalorder %s22, 0
    %p253 = por %p251, %p252
    %p254 = scmp.ne.s32.totalorder %s242, %s243
    %p255 = scmp.eq.s32.totalorder %s23, 1
    %p256 = por %p254, %p255
    %p258 = scmp.ne.s32.totalorder %s243, %s257
    %p259 = scmp.eq.s32.totalorder %s23, 0
    %p260 = por %p258, %p259
    %s261 = ssub.s32 %s17, %s24
    %p262 = scmp.eq.s32.totalorder %s261, 0
    %s264 = sadd.s32 %s263, 1
    %s265 = scalar_select %p262, %s263, %s264
    %p268 = pneg %p262
    %p269 = scmp.eq.s32.totalorder %s17, 1
    %p270 = por %p268, %p269
    %p271 = scmp.ne.s32.totalorder %s263, %s266
    %p272 = scmp.eq.s32.totalorder %s17, 0
    %p273 = por %p271, %p272
    %p274 = scmp.ne.s32.totalorder %s263, %s266
    %p275 = scmp.eq.s32.totalorder %s22, 1
    %p276 = por %p274, %p275
    %p277 = scmp.ne.s32.totalorder %s266, %s267
    %p278 = scmp.eq.s32.totalorder %s22, 0
    %p279 = por %p277, %p278
    %p280 = scmp.ne.s32.totalorder %s266, %s267
    %p281 = scmp.eq.s32.totalorder %s23, 1
    %p282 = por %p280, %p281
    %p284 = scmp.ne.s32.totalorder %s267, %s283
    %p285 = scmp.eq.s32.totalorder %s23, 0
    %p286 = por %p284, %p285
    %p287 = scmp.le.s32.totalorder 1, %s17
    %p288 = scmp.lt.s32.totalorder %s17, 3
    %p289 = pnand %p287, %p288
    %p290 = pneg %p289
    // Predicated region
    $region9: #{model.5} parent=5 // pred_check
      _
    $region10: #{model.5} parent=5 // pred_check_branch
      %292 = sbr.rel (%p289) target = $region12
    $region11: #{model.5} parent=5 // pred_region
      %s293 = ssub.s32 %s17, 1
      // Predicated region
      $region13: #{model.5} parent=11 // pred_check
        %p294 = pneg %p64
      $region14: #{model.5} parent=11 // pred_check_branch
        %296 = sbr.rel (%p294) target = $region16
      $region15: #{model.5} parent=11 // pred_region
        _
      $region16: #{model.5} parent=11 // pred_fallthru
        _
      // Predicated region
      $region17: #{model.5} parent=11 // pred_check
        %p297 = pneg %p85
      $region18: #{model.5} parent=11 // pred_check_branch
        %299 = sbr.rel (%p297) target = $region20
      $region19: #{model.5} parent=11 // pred_region
        _
      $region20: #{model.5} parent=11 // pred_fallthru
        _
      // Predicated region
      $region21: #{model.5} parent=11 // pred_check
        %p300 = pneg %p106
      $region22: #{model.5} parent=11 // pred_check_branch
        %302 = sbr.rel (%p300) target = $region24
      $region23: #{model.5} parent=11 // pred_region
        _
      $region24: #{model.5} parent=11 // pred_fallthru
        _
      // Predicated region
      $region25: #{model.5} parent=11 // pred_check
        %p303 = pneg %p127
      $region26: #{model.5} parent=11 // pred_check_branch
        %305 = sbr.rel (%p303) target = $region28
      $region27: #{model.5} parent=11 // pred_region
        _
      $region28: #{model.5} parent=11 // pred_fallthru
        _
      // Predicated region
      $region29: #{model.5} parent=11 // pred_check
        %p306 = pneg %p148
      $region30: #{model.5} parent=11 // pred_check_branch
        %308 = sbr.rel (%p306) target = $region32
      $region31: #{model.5} parent=11 // pred_region
        _
      $region32: #{model.5} parent=11 // pred_fallthru
        _
      // Predicated region
      $region33: #{model.5} parent=11 // pred_check
        %p309 = pneg %p169
      $region34: #{model.5} parent=11 // pred_check_branch
        %311 = sbr.rel (%p309) target = $region36
      $region35: #{model.5} parent=11 // pred_region
        _
      $region36: #{model.5} parent=11 // pred_fallthru
        _
      // Predicated region
      $region37: #{model.5} parent=11 // pred_check
        %p312 = pneg %p190
      $region38: #{model.5} parent=11 // pred_check_branch
        %314 = sbr.rel (%p312) target = $region40
      $region39: #{model.5} parent=11 // pred_region
        _
      $region40: #{model.5} parent=11 // pred_fallthru
        _
      // Predicated region
      $region41: #{model.5} parent=11 // pred_check
        %p315 = pneg %p211
      $region42: #{model.5} parent=11 // pred_check_branch
        %317 = sbr.rel (%p315) target = $region44
      $region43: #{model.5} parent=11 // pred_region
        _
      $region44: #{model.5} parent=11 // pred_fallthru
        _
      // Predicated region
      $region45: #{model.5} parent=11 // pred_check
        %p318 = pneg %p232
      $region46: #{model.5} parent=11 // pred_check_branch
        %320 = sbr.rel (%p318) target = $region48
      $region47: #{model.5} parent=11 // pred_region
        _
      $region48: #{model.5} parent=11 // pred_fallthru
        _
      // Predicated region
      $region49: #{model.5} parent=11 // pred_check
        %p321 = pneg %p253
      $region50: #{model.5} parent=11 // pred_check_branch
        %323 = sbr.rel (%p321) target = $region52
      $region51: #{model.5} parent=11 // pred_region
        _
      $region52: #{model.5} parent=11 // pred_fallthru
        _
    $region12: #{model.5} parent=5 // pred_fallthru
      _
    %p324 = scmp.lt.s32.totalorder %s17, 2
    // Predicated region
    $region53: #{model.5} parent=5 // pred_check
      %p325 = pneg %p324
    $region54: #{model.5} parent=5 // pred_check_branch
      %327 = sbr.rel (%p325) target = $region56
    $region55: #{model.5} parent=5 // pred_region
      // Predicated region
      $region57: #{model.5} parent=55 // pred_check
        %p328 = pneg %p37
      $region58: #{model.5} parent=55 // pred_check_branch
        %330 = sbr.rel (%p328) target = $region60
      $region59: #{model.5} parent=55 // pred_region
        %p331 = scmp.lt.s32.totalorder %s17, 1
        %s332 = scalar_select %p331, %s17, 1
        %s333 = smul.addr %s332, 8
        %s334 = smul.addr %s333, 4
        %s335 = scalar_lea.vmem %s0, %s334
      $region60: #{model.5} parent=55 // pred_fallthru
        _
    $region56: #{model.5} parent=5 // pred_fallthru
      _
    %p336 = scmp.le.s32.totalorder 1, %s17
    %p337 = scmp.lt.s32.totalorder %s17, 3
    %p338 = pnand %p336, %p337
    %p339 = pneg %p338
    // Predicated region
    $region61: #{model.5} parent=5 // pred_check
      _
    $region62: #{model.5} parent=5 // pred_check_branch
      %341 = sbr.rel (%p338) target = $region64
    $region63: #{model.5} parent=5 // pred_region
      %s342 = ssub.s32 %s17, 1
      %p343 = scmp.lt.s32.totalorder %s22, 1
      %s344 = scalar_select %p343, %s22, 1
      %s345 = smul.addr %s344, 8
      %s346 = smul.addr %s345, 4
      %s347 = scalar_lea.vmem %s0, %s346
      %p348 = pneg %p43
      %p349 = pneg %p40
      %p350 = pneg %p64
      %p351 = pneg %p61
      %p352 = pneg %p85
      %p353 = pneg %p82
      %p354 = pneg %p106
      %p355 = pneg %p103
      %p356 = pneg %p127
      %p357 = pneg %p124
      %p358 = pneg %p148
      %p359 = pneg %p145
      %p360 = pneg %p169
      %p361 = pneg %p166
      %p362 = pneg %p190
      %p363 = pneg %p187
      %p364 = pneg %p211
      %p365 = pneg %p208
      %p366 = pneg %p232
      %p367 = pneg %p229
      %p368 = pneg %p253
      %p369 = pneg %p250
      %p370 = pneg %p279
      %p371 = pneg %p276
      %p372 = scmp.lt.s32.totalorder %s22, 1
      %s373 = scalar_select %p372, %s22, 1
      %s374 = smul.addr %s373, 4
      %s375 = smul.addr %s374, 2
      %s376 = scalar_lea.vmem %s11, %s375
      %p377 = scmp.lt.s32.totalorder %s22, 1
      %s378 = scalar_select %p377, %s22, 1
      %s379 = smul.addr %s378, 8
      %s380 = smul.addr %s379, 4
      %s381 = scalar_lea.vmem %s0, %s380
      %p382 = scmp.lt.s32.totalorder %s22, 1
      %s383 = scalar_select %p382, %s22, 1
      %s384 = smul.addr %s383, 4
      %s385 = smul.addr %s384, 2
      %s386 = scalar_lea.vmem %s11, %s385
      %v388 = vld [vmem:[%s381] sm:$0xf]
      %v389 = vld [vmem:[%s381 + $0x4] sm:$0xf]
      %v390 = vld [vmem:[%s381 + $0x8] sm:$0xf]
      %v391 = vld [vmem:[%s381 + $0xc] sm:$0xf]
      %v392 = vld [vmem:[%s381 + $0x10] sm:$0xf]
      %v393 = vld [vmem:[%s381 + $0x14] sm:$0xf]
      %v394 = vld [vmem:[%s381 + $0x18] sm:$0xf]
      %v395 = vld [vmem:[%s381 + $0x1c] sm:$0xf]
      %v396 = vunpack.c.l.bf16 %v388
      %v397 = vunpack.c.l.bf16 %v389
      %v398 = vunpack.c.l.bf16 %v390
      %v399 = vunpack.c.l.bf16 %v391
      %v400 = vunpack.c.l.bf16 %v392
      %v401 = vunpack.c.l.bf16 %v393
      %v402 = vunpack.c.l.bf16 %v394
      %v403 = vunpack.c.l.bf16 %v395
      %v404 = vmax.f32 %v396, %v397
      %v405 = vmax.f32 %v398, %v399
      %v406 = vmax.f32 %v400, %v401
      %v407 = vmax.f32 %v402, %v403
      %v412 = vrot.slane %v404, 1
      %v413 = vrot.slane %v405, 1
      %v414 = vrot.slane %v406, 1
      %v415 = vrot.slane %v407, 1
      %vm420 = vcmask 1046528
      %v421 = vsel %vm420, %v412, %v412
      %v422 = vsel %vm420, %v413, %v413
      %v423 = vsel %vm420, %v414, %v414
      %v424 = vsel %vm420, %v415, %v415
      %v425 = vmax.f32 %v404, %v421
      %v426 = vmax.f32 %v405, %v422
      %v427 = vmax.f32 %v406, %v423
      %v428 = vmax.f32 %v407, %v424
      %v429 = vpack.c.bf16 %v425, %v425
      %v430 = vpack.c.bf16 %v426, %v426
      %v431 = vpack.c.bf16 %v427, %v427
      %v432 = vpack.c.bf16 %v428, %v428
      %v433 = vld [vmem:[%s1] sm:$0x3]
      %vm434 = vcmask 64512
      %v436 = vsel %vm434, %v433, 0
      %vm438 = vcmask 1043456
      %v440 = vsel %vm438, %v429, 0
      %442 = vmatpush.bf16.msra.mxu0 0
      %443 = vmatpush.bf16.msra.mxu0 0
      %444 = vmatpush.bf16.msra.mxu0 0
      %445 = vmatpush.bf16.msra.mxu0 0
      %446 = vmatpush.bf16.msra.mxu0 0
      %447 = vmatpush.bf16.msra.mxu0 0
      %448 = vmatpush.bf16.msra.mxu0 0
      %449 = vmatpush.bf16.msra.mxu0 %v440
      %450 = vmatmul.bf16.gmra.mxu0 %v436
      %v451 = vpop.f32.mrf.mxu0
      %v452 = vadd.f32 0.0, %v451
      %v453 = vpop.f32.mrf.mxu0
      %454 = vdwg.mxu0
      %v456 = vsel %vm438, %v430, 0
      %458 = vmatpush.bf16.msra.mxu0 0
      %459 = vmatpush.bf16.msra.mxu0 0
      %460 = vmatpush.bf16.msra.mxu0 0
      %461 = vmatpush.bf16.msra.mxu0 0
      %462 = vmatpush.bf16.msra.mxu0 0
      %463 = vmatpush.bf16.msra.mxu0 0
      %464 = vmatpush.bf16.msra.mxu0 0
      %465 = vmatpush.bf16.msra.mxu0 %v456
      %466 = vmatmul.bf16.gmra.mxu0 %v436
      %v467 = vpop.f32.mrf.mxu0
      %v468 = vadd.f32 0.0, %v467
      %v469 = vpop.f32.mrf.mxu0
      %470 = vdwg.mxu0
      %v472 = vsel %vm438, %v431, 0
      %474 = vmatpush.bf16.msra.mxu0 0
      %475 = vmatpush.bf16.msra.mxu0 0
      %476 = vmatpush.bf16.msra.mxu0 0
      %477 = vmatpush.bf16.msra.mxu0 0
      %478 = vmatpush.bf16.msra.mxu0 0
      %479 = vmatpush.bf16.msra.mxu0 0
      %480 = vmatpush.bf16.msra.mxu0 0
      %481 = vmatpush.bf16.msra.mxu0 %v472
      %482 = vmatmul.bf16.gmra.mxu0 %v436
      %v483 = vpop.f32.mrf.mxu0
      %v484 = vadd.f32 0.0, %v483
      %v485 = vpop.f32.mrf.mxu0
      %486 = vdwg.mxu0
      %v488 = vsel %vm438, %v432, 0
      %490 = vmatpush.bf16.msra.mxu0 0
      %491 = vmatpush.bf16.msra.mxu0 0
      %492 = vmatpush.bf16.msra.mxu0 0
      %493 = vmatpush.bf16.msra.mxu0 0
      %494 = vmatpush.bf16.msra.mxu0 0
      %495 = vmatpush.bf16.msra.mxu0 0
      %496 = vmatpush.bf16.msra.mxu0 0
      %497 = vmatpush.bf16.msra.mxu0 %v488
      %498 = vmatmul.bf16.gmra.mxu0 %v436
      %v499 = vpop.f32.mrf.mxu0
      %v500 = vadd.f32 0.0, %v499
      %v501 = vpop.f32.mrf.mxu0
      %502 = vdwg.mxu0
      %v503 = vld [vmem:[%s2] sm:$0x1]
      %v505 = vperm.slane %v503, 0
      %v507 = vrot.slane %v505, 4
      %v509 = vmul.f32 %v452, %v505
      %v510 = vmul.f32 %v468, %v507
      %v511 = vmul.f32 %v484, %v505
      %v512 = vmul.f32 %v500, %v507
      %v513 = vld [vmem:[%s3] sm:$0x1]
      %v515 = vperm.slane %v513, 0
      %v517 = vrot.slane %v515, 4
      %v519 = vadd.f32 %v509, %v515
      %v520 = vadd.f32 %v510, %v517
      %v521 = vadd.f32 %v511, %v515
      %v522 = vadd.f32 %v512, %v517
      %v523 = vmax.f32 %v519, 0.0
      %v524 = vmax.f32 %v520, 0.0
      %v525 = vmax.f32 %v521, 0.0
      %v526 = vmax.f32 %v522, 0.0
      %531 = vst [vmem:[#allocation1] ss:$2 sm:$0xff] %v523
      %s532 = scalar_lea.vmem [#allocation1], 1
      %533 = vst [vmem:[%s532] ss:$2 sm:$0xff] %v524
      %s534 = scalar_lea.vmem [#allocation1], 16
      %535 = vst [vmem:[%s534] ss:$2 sm:$0xff] %v525
      %s536 = scalar_lea.vmem [#allocation1], 17
      %537 = vst [vmem:[%s536] ss:$2 sm:$0xff] %v526
      %v538 = vld.sshfl [vmem:[#allocation1] sm:$0xff pattern:$0x75316420]
      %v539 = vld.sshfl [vmem:[#allocation1 + $0x10] sm:$0xff pattern:$0x75316420]
      %v542 = vpack.c.bf16 %v539, %v538
      %v543 = vld [vmem:[%s4] sm:$0xf]
      %v544 = vld [vmem:[%s4 + $0x4] sm:$0xf]
      %v545 = vld [vmem:[%s4 + $0x8] sm:$0xf]
      %v546 = vld [vmem:[%s4 + $0xc] sm:$0xf]
      %v551 = vunpack.c.l.b16 %v543
      %v552 = vunpack.c.l.b16 %v544
      %v553 = vunpack.c.l.b16 %v545
      %v554 = vunpack.c.l.b16 %v546
      %v555 = vpack.c.b16 %v552, %v551
      %v556 = vpack.c.b16 %v554, %v553
      %vm559 = vcmask 261120
      %v561 = vsel %vm559, %v542, 0
      %563 = vmatpush.bf16.msra.mxu0 0
      %564 = vmatpush.bf16.msra.mxu0 0
      %565 = vmatpush.bf16.msra.mxu0 0
      %566 = vmatpush.bf16.msra.mxu0 0
      %567 = vmatpush.bf16.msra.mxu0 0
      %568 = vmatpush.bf16.msra.mxu0 0
      %569 = vmatpush.bf16.msra.mxu0 %v556
      %570 = vmatpush.bf16.msra.mxu0 %v555
      %571 = vmatmul.bf16.gmra.mxu0 %v561
      %v572 = vpop.f32.mrf.mxu0
      %v573 = vadd.f32 0.0, %v572
      %v574 = vpop.f32.mrf.mxu0
      %v575 = vadd.f32 0.0, %v574
      %576 = vdwg.mxu0
      %v577 = vld [vmem:[%s5] sm:$0x1]
      %v579 = vperm.slane %v577, 0
      %v581 = vmul.f32 %v573, %v579
      %v582 = vmul.f32 %v575, %v579
      %v583 = vld [vmem:[%s6] sm:$0x1]
      %v585 = vperm.slane %v583, 0
      %v587 = vadd.f32 %v581, %v585
      %v588 = vadd.f32 %v582, %v585
      %v589 = vmax.f32 %v587, 0.0
      %v590 = vmax.f32 %v588, 0.0
      %v591 = vpack.c.bf16 %v589, %v589
      %v592 = vpack.c.bf16 %v590, %v590
      %v595 = vrot.slane %v591, 2
      %v596 = vrot.slane %v592, 2
      %vm597 = vcmask 1041408
      %v600 = vsel %vm597, %v591, %v595
      %vm601 = vcmask 1043458
      %v602 = vsel %vm601, %v591, %v595
      %v604 = vrot.slane %v602, 2
      %v607 = vsel %vm597, %v592, %v596
      %v608 = vsel %vm601, %v592, %v596
      %v610 = vrot.slane %v608, 2
      %611 = vst [vmem:[#allocation1] ss:$4 sm:$0xff] %v600
      %v612 = vld.sshfl [vmem:[#allocation1] sm:$0xff pattern:$0x73625140]
      %s614 = scalar_lea.vmem [#allocation1], 32
      %615 = vst [vmem:[%s614] ss:$4 sm:$0xff] %v604
      %v616 = vld.sshfl [vmem:[#allocation1 + $0x20] sm:$0xff pattern:$0x73625140]
      %617 = vst [vmem:[#allocation1] ss:$4 sm:$0xff] %v607
      %v618 = vld.sshfl [vmem:[#allocation1] sm:$0xff pattern:$0x73625140]
      %620 = vst [vmem:[%s614] ss:$4 sm:$0xff] %v610
      %v621 = vld.sshfl [vmem:[#allocation1 + $0x20] sm:$0xff pattern:$0x73625140]
      %v622 = vshrl.u32 %v612, 16
      %v624 = vrot.slane %v622, 7
      %v625 = vshll.u32 %v612, 16
      %v627 = vor.u32 %v624, %v625
      %v628 = vshrl.u32 %v616, 16
      %v630 = vrot.slane %v628, 7
      %v631 = vshll.u32 %v616, 16
      %v633 = vor.u32 %v630, %v631
      %v634 = vshrl.u32 %v618, 16
      %v636 = vrot.slane %v634, 7
      %v637 = vshll.u32 %v618, 16
      %v639 = vor.u32 %v636, %v637
      %v640 = vshrl.u32 %v621, 16
      %v642 = vrot.slane %v640, 7
      %v643 = vshll.u32 %v621, 16
      %v645 = vor.u32 %v642, %v643
      %vm650 = vcmask 1040384
      %vm651 = vsmask.f32 256
      %vm652 = vmand %vm650, %vm651
      %v653 = vsel %vm652, 0, %v627
      %v654 = vsel %vm652, 0, %v633
      %v655 = vsel %vm652, 0, %v639
      %v656 = vsel %vm652, 0, %v645
      %657 = vst [vmem:[#allocation1] ss:$4 sm:$0xff] %v600
      %v658 = vld.sshfl [vmem:[#allocation1] sm:$0xff pattern:$0x73625140]
      %s659 = scalar_lea.vmem [#allocation1], 32
      %660 = vst [vmem:[%s659] ss:$4 sm:$0xff] %v604
      %v661 = vld.sshfl [vmem:[#allocation1 + $0x20] sm:$0xff pattern:$0x73625140]
      %662 = vst [vmem:[#allocation1] ss:$4 sm:$0xff] %v607
      %v663 = vld.sshfl [vmem:[#allocation1] sm:$0xff pattern:$0x73625140]
      %664 = vst [vmem:[%s659] ss:$4 sm:$0xff] %v610
      %v665 = vld.sshfl [vmem:[#allocation1 + $0x20] sm:$0xff pattern:$0x73625140]
      %v666 = vshrl.u32 %v658, 16
      %v668 = vshll.u32 %v658, 16
      %v670 = vrot.slane %v668, 1
      %v671 = vor.u32 %v666, %v670
      %v672 = vshrl.u32 %v661, 16
      %v674 = vshll.u32 %v661, 16
      %v676 = vrot.slane %v674, 1
      %v677 = vor.u32 %v672, %v676
      %v678 = vshrl.u32 %v663, 16
      %v680 = vshll.u32 %v663, 16
      %v682 = vrot.slane %v680, 1
      %v683 = vor.u32 %v678, %v682
      %v684 = vshrl.u32 %v665, 16
      %v686 = vshll.u32 %v665, 16
      %v688 = vrot.slane %v686, 1
      %v689 = vor.u32 %v684, %v688
      %vm694 = vcmask 1041408
      %vm695 = vsmask.f32 1280
      %vm696 = vmand %vm694, %vm695
      %v697 = vsel %vm696, %v671, 0
      %v698 = vsel %vm696, %v677, 0
      %v699 = vsel %vm696, %v683, 0
      %v700 = vsel %vm696, %v689, 0
      %701 = vst [vmem:[#allocation1] ss:$4 sm:$0xff] %v600
      %v702 = vld.sshfl [vmem:[#allocation1] sm:$0xff pattern:$0x73625140]
      %s704 = scalar_lea.vmem [#allocation1], 32
      %705 = vst [vmem:[%s704] ss:$4 sm:$0xff] %v604
      %v706 = vld.sshfl [vmem:[#allocation1 + $0x20] sm:$0xff pattern:$0x73625140]
      %708 = vst [vmem:[#allocation1] ss:$4 sm:$0xff] %v607
      %v709 = vld.sshfl [vmem:[#allocation1] sm:$0xff pattern:$0x73625140]
      %711 = vst [vmem:[%s704] ss:$4 sm:$0xff] %v610
      %v712 = vld.sshfl [vmem:[#allocation1 + $0x20] sm:$0xff pattern:$0x73625140]
      %714 = vrot.lane.b32.xlu0 %v702, 16
      %v715 = vpop.permute.xlu0 %714
      %716 = vrot.lane.b32.xlu0 %v706, 16
      %v717 = vpop.permute.xlu0 %716
      %718 = vrot.lane.b32.xlu0 %v709, 16
      %v719 = vpop.permute.xlu0 %718
      %720 = vrot.lane.b32.xlu0 %v712, 16
      %v721 = vpop.permute.xlu0 %720
      %726 = vrot.lane.b32.xlu0 %v697, 32
      %v727 = vpop.permute.xlu0 %726
      %728 = vrot.lane.b32.xlu0 %v698, 32
      %v729 = vpop.permute.xlu0 %728
      %730 = vrot.lane.b32.xlu0 %v699, 32
      %v731 = vpop.permute.xlu0 %730
      %732 = vrot.lane.b32.xlu0 %v700, 32
      %v733 = vpop.permute.xlu0 %732
      %vm734 = vcmask 130048
      %v737 = vsel %vm734, %v653, %v715
      %v740 = vsel %vm734, %v654, %v717
      %v743 = vsel %vm734, %v655, %v719
      %v746 = vsel %vm734, %v656, %v721
      %v748 = vsel %vm559, %v737, %v727
      %v750 = vsel %vm559, %v740, %v729
      %v752 = vsel %vm559, %v743, %v731
      %v754 = vsel %vm559, %v746, %v733
      %v755 = vld [vmem:[%s7] sm:$0xf]
      %v756 = vld [vmem:[%s7 + $0x4] sm:$0xf]
      %v757 = vld [vmem:[%s7 + $0x8] sm:$0xf]
      %v758 = vld [vmem:[%s7 + $0xc] sm:$0xf]
      %v759 = vld [vmem:[%s7 + $0x10] sm:$0xf]
      %v760 = vld [vmem:[%s7 + $0x14] sm:$0xf]
      %v761 = vld [vmem:[%s7 + $0x18] sm:$0xf]
      %v762 = vld [vmem:[%s7 + $0x1c] sm:$0xf]
      %v763 = vld [vmem:[%s7 + $0x20] sm:$0xf]
      %v764 = vld [vmem:[%s7 + $0x24] sm:$0xf]
      %v765 = vld [vmem:[%s7 + $0x28] sm:$0xf]
      %v766 = vld [vmem:[%s7 + $0x2c] sm:$0xf]
      %v767 = vld [vmem:[%s7 + $0x30] sm:$0xf]
      %v768 = vld [vmem:[%s7 + $0x34] sm:$0xf]
      %v769 = vld [vmem:[%s7 + $0x38] sm:$0xf]
      %v770 = vld [vmem:[%s7 + $0x3c] sm:$0xf]
      %v771 = vld [vmem:[%s7 + $0x40] sm:$0xf]
      %v772 = vld [vmem:[%s7 + $0x44] sm:$0xf]
      %773 = vst [vmem:[#allocation1] ss:$4 sm:$0xff] %v748
      %s774 = scalar_lea.vmem [#allocation1], 1
      %775 = vst [vmem:[%s774] ss:$4 sm:$0xff] %v750
      %s776 = scalar_lea.vmem [#allocation1], 2
      %777 = vst [vmem:[%s776] ss:$4 sm:$0xff] %v752
      %s778 = scalar_lea.vmem [#allocation1], 3
      %779 = vst [vmem:[%s778] ss:$4 sm:$0xff] %v754
      %v780 = vld.sshfl [vmem:[#allocation1] sm:$0xff pattern:$0x73625140]
      %v787 = vunpack.c.l.b16 %v755
      %v788 = vunpack.c.l.b16 %v756
      %v789 = vunpack.c.l.b16 %v757
      %v790 = vunpack.c.l.b16 %v758
      %v791 = vunpack.c.l.b16 %v759
      %v792 = vunpack.c.l.b16 %v760
      %v793 = vpack.c.b16 %v788, %v787
      %v794 = vpack.c.b16 %v790, %v789
      %v795 = vpack.c.b16 %v792, %v791
      %vm799 = vcmask 392192
      %v800 = vsel %vm799, %v780, 0
      %802 = vmatpush.bf16.msra.mxu0 0
      %803 = vmatpush.bf16.msra.mxu0 0
      %804 = vmatpush.bf16.msra.mxu0 0
      %805 = vmatpush.bf16.msra.mxu0 0
      %806 = vmatpush.bf16.msra.mxu0 0
      %807 = vmatpush.bf16.msra.mxu0 %v795
      %808 = vmatpush.bf16.msra.mxu0 %v794
      %809 = vmatpush.bf16.msra.mxu0 %v793
      %810 = vmatmul.bf16.gmra.mxu0 %v800
      %v811 = vpop.f32.mrf.mxu0
      %v812 = vadd.f32 0.0, %v811
      %v813 = vpop.f32.mrf.mxu0
      %v814 = vadd.f32 0.0, %v813
      %815 = vdwg.mxu0
      %v817 = vrot.slane %v812, 4
      %819 = vst [vmem:[#allocation1] ss:$4 sm:$0xff] %v748
      %s820 = scalar_lea.vmem [#allocation1], 1
      %821 = vst [vmem:[%s820] ss:$4 sm:$0xff] %v750
      %s822 = scalar_lea.vmem [#allocation1], 2
      %823 = vst [vmem:[%s822] ss:$4 sm:$0xff] %v752
      %s824 = scalar_lea.vmem [#allocation1], 3
      %825 = vst [vmem:[%s824] ss:$4 sm:$0xff] %v754
      %v826 = vld.sshfl [vmem:[#allocation1] sm:$0xff pattern:$0x73625140]
      %v833 = vunpack.c.l.b16 %v761
      %v834 = vunpack.c.l.b16 %v762
      %v835 = vunpack.c.l.b16 %v763
      %v836 = vunpack.c.l.b16 %v764
      %v837 = vunpack.c.l.b16 %v765
      %v838 = vunpack.c.l.b16 %v766
      %v839 = vpack.c.b16 %v834, %v833
      %v840 = vpack.c.b16 %v836, %v835
      %v841 = vpack.c.b16 %v838, %v837
      %v845 = vsel %vm799, %v826, 0
      %847 = vmatpush.bf16.msra.mxu0 0
      %848 = vmatpush.bf16.msra.mxu0 0
      %849 = vmatpush.bf16.msra.mxu0 0
      %850 = vmatpush.bf16.msra.mxu0 0
      %851 = vmatpush.bf16.msra.mxu0 0
      %852 = vmatpush.bf16.msra.mxu0 %v841
      %853 = vmatpush.bf16.msra.mxu0 %v840
      %854 = vmatpush.bf16.msra.mxu0 %v839
      %855 = vmatmul.bf16.gmra.mxu0 %v845
      %v856 = vpop.f32.mrf.mxu0
      %v857 = vadd.f32 0.0, %v856
      %v858 = vpop.f32.mrf.mxu0
      %v859 = vadd.f32 0.0, %v858
      %860 = vdwg.mxu0
      %v863 = vrot.slane %v857, 4
      %v864 = vrot.slane %v859, 4
      %867 = vst [vmem:[#allocation1] ss:$4 sm:$0xff] %v748
      %s868 = scalar_lea.vmem [#allocation1], 1
      %869 = vst [vmem:[%s868] ss:$4 sm:$0xff] %v750
      %s870 = scalar_lea.vmem [#allocation1], 2
      %871 = vst [vmem:[%s870] ss:$4 sm:$0xff] %v752
      %s872 = scalar_lea.vmem [#allocation1], 3
      %873 = vst [vmem:[%s872] ss:$4 sm:$0xff] %v754
      %v874 = vld.sshfl [vmem:[#allocation1] sm:$0xff pattern:$0x73625140]
      %v881 = vunpack.c.l.b16 %v767
      %v882 = vunpack.c.l.b16 %v768
      %v883 = vunpack.c.l.b16 %v769
      %v884 = vunpack.c.l.b16 %v770
      %v885 = vunpack.c.l.b16 %v771
      %v886 = vunpack.c.l.b16 %v772
      %v887 = vpack.c.b16 %v882, %v881
      %v888 = vpack.c.b16 %v884, %v883
      %v889 = vpack.c.b16 %v886, %v885
      %v893 = vsel %vm799, %v874, 0
      %895 = vmatpush.bf16.msra.mxu0 0
      %896 = vmatpush.bf16.msra.mxu0 0
      %897 = vmatpush.bf16.msra.mxu0 0
      %898 = vmatpush.bf16.msra.mxu0 0
      %899 = vmatpush.bf16.msra.mxu0 0
      %900 = vmatpush.bf16.msra.mxu0 %v889
      %901 = vmatpush.bf16.msra.mxu0 %v888
      %902 = vmatpush.bf16.msra.mxu0 %v887
      %903 = vmatmul.bf16.gmra.mxu0 %v893
      %v904 = vpop.f32.mrf.mxu0
      %v905 = vadd.f32 0.0, %v904
      %v906 = vpop.f32.mrf.mxu0
      %v907 = vadd.f32 0.0, %v906
      %908 = vdwg.mxu0
      %v911 = vrot.slane %v905, 4
      %v912 = vrot.slane %v907, 4
      %v915 = vadd.f32 %v857, 0.0
      %v916 = vadd.f32 %v812, %v863
      %v917 = vadd.f32 %v817, %v859
      %v918 = vadd.f32 %v814, %v864
      %v919 = vadd.f32 %v915, %v911
      %v920 = vadd.f32 %v916, %v907
      %v921 = vadd.f32 %v917, %v912
      %v922 = vadd.f32 %v918, 0.0
      %v923 = vld [vmem:[%s8] sm:$0x1]
      %v925 = vperm.slane %v923, 0
      %v927 = vrot.slane %v925, 4
      %v929 = vmul.f32 %v919, %v925
      %v930 = vmul.f32 %v920, %v927
      %v931 = vmul.f32 %v921, %v925
      %v932 = vmul.f32 %v922, %v927
      %v933 = vld [vmem:[%s9] sm:$0x1]
      %v935 = vperm.slane %v933, 0
      %v937 = vrot.slane %v935, 4
      %v939 = vadd.f32 %v929, %v935
      %v940 = vadd.f32 %v930, %v937
      %v941 = vadd.f32 %v931, %v935
      %v942 = vadd.f32 %v932, %v937
      %v943 = vmax.f32 %v939, 0.0
      %v944 = vmax.f32 %v940, 0.0
      %v945 = vmax.f32 %v941, 0.0
      %v946 = vmax.f32 %v942, 0.0
      %951 = vst [vmem:[#allocation1] ss:$2 sm:$0xff] %v943
      %s952 = scalar_lea.vmem [#allocation1], 1
      %953 = vst [vmem:[%s952] ss:$2 sm:$0xff] %v944
      %s954 = scalar_lea.vmem [#allocation1], 16
      %955 = vst [vmem:[%s954] ss:$2 sm:$0xff] %v945
      %s956 = scalar_lea.vmem [#allocation1], 17
      %957 = vst [vmem:[%s956] ss:$2 sm:$0xff] %v946
      %v958 = vld.sshfl [vmem:[#allocation1] sm:$0xff pattern:$0x75316420]
      %v959 = vld.sshfl [vmem:[#allocation1 + $0x10] sm:$0xff pattern:$0x75316420]
      %v962 = vpack.c.bf16 %v959, %v958
      %v963 = vld [vmem:[%s10] sm:$0xf]
      %v964 = vld [vmem:[%s10 + $0x4] sm:$0xf]
      %v967 = vunpack.c.l.b16 %v963
      %v968 = vunpack.c.l.b16 %v964
      %v969 = vpack.c.b16 %v968, %v967
      %975 = vst [vmem:[#allocation1] ss:$2 sm:$0xff] %v452
      %s976 = scalar_lea.vmem [#allocation1], 1
      %977 = vst [vmem:[%s976] ss:$2 sm:$0xff] %v468
      %s978 = scalar_lea.vmem [#allocation1], 16
      %979 = vst [vmem:[%s978] ss:$2 sm:$0xff] %v484
      %s980 = scalar_lea.vmem [#allocation1], 17
      %981 = vst [vmem:[%s980] ss:$2 sm:$0xff] %v500
      %v982 = vld.sshfl [vmem:[#allocation1] sm:$0xff pattern:$0x75316420]
      %v983 = vld.sshfl [vmem:[#allocation1 + $0x10] sm:$0xff pattern:$0x75316420]
      %v987 = vsel %vm734, %v962, 0
      %989 = vmatpush.bf16.msra.mxu0 0
      %990 = vmatpush.bf16.msra.mxu0 0
      %991 = vmatpush.bf16.msra.mxu0 0
      %992 = vmatpush.bf16.msra.mxu0 0
      %993 = vmatpush.bf16.msra.mxu0 0
      %994 = vmatpush.bf16.msra.mxu0 0
      %995 = vmatpush.bf16.msra.mxu0 0
      %996 = vmatpush.bf16.msra.mxu0 %v969
      %997 = vmatmul.bf16.gmra.mxu0 %v987
      %v998 = vpop.f32.mrf.mxu0
      %v999 = vadd.f32 %v982, %v998
      %v1000 = vpop.f32.mrf.mxu0
      %v1001 = vadd.f32 %v983, %v1000
      %1002 = vdwg.mxu0
      %v1003 = vmax.f32 %v999, 0.0
      %v1004 = vmax.f32 %v1001, 0.0
      %v1007 = vrot.slane %v1003, 4
      %v1008 = vrot.slane %v1004, 4
      %v1011 = vpack.c.bf16 %v1003, %v1003
      %v1012 = vpack.c.bf16 %v1007, %v1007
      %v1013 = vpack.c.bf16 %v1004, %v1004
      %v1014 = vpack.c.bf16 %v1008, %v1008
      %vm1015 = vcmask 254976
      %1016 = vst.msk [vmem:[%s386] sm:$0x3] %vm1015, %v1011
      %1017 = vst.msk [vmem:[%s386 + $0x2] sm:$0x3] %vm1015, %v1012
      %1018 = vst.msk [vmem:[%s386 + $0x4] sm:$0x3] %vm1015, %v1013
      %1019 = vst.msk [vmem:[%s386 + $0x6] sm:$0x3] %vm1015, %v1014
      %p1020 = scmp.lt.s32.totalorder %s22, 1
      %s1021 = scalar_select %p1020, %s22, 1
      %s1022 = smul.addr %s1021, 4
      %s1023 = smul.addr %s1022, 2
      %s1024 = scalar_lea.vmem %s11, %s1023
      // Predicated region
      $region65: #{model.5} parent=63 // pred_check
        %p1025 = pneg %p276
      $region66: #{model.5} parent=63 // pred_check_branch
        %1027 = sbr.rel (%p1025) target = $region68
      $region67: #{model.5} parent=63 // pred_region
        _
      $region68: #{model.5} parent=63 // pred_fallthru
        _
    $region64: #{model.5} parent=5 // pred_fallthru
      _
    %p1028 = scmp.le.s32.totalorder 2, %s17
    // Predicated region
    $region69: #{model.5} parent=5 // pred_check
      %p1029 = pneg %p1028
    $region70: #{model.5} parent=5 // pred_check_branch
      %1031 = sbr.rel (%p1029) target = $region72
    $region71: #{model.5} parent=5 // pred_region
      %s1032 = ssub.s32 %s17, 2
      // Predicated region
      $region73: #{model.5} parent=71 // pred_check
        %p1033 = pneg %p282
      $region74: #{model.5} parent=71 // pred_check_branch
        %1035 = sbr.rel (%p1033) target = $region76
      $region75: #{model.5} parent=71 // pred_region
        %p1036 = scmp.lt.s32.totalorder %s23, 1
        %s1037 = scalar_select %p1036, %s23, 1
        %s1038 = smul.addr %s1037, 4
        %s1039 = smul.addr %s1038, 2
        %s1040 = scalar_lea.vmem %s11, %s1039
      $region76: #{model.5} parent=71 // pred_fallthru
        _
    $region72: #{model.5} parent=5 // pred_fallthru
      _
  $region6: #{model.5} parent=0 // loop_footer
    %s21 = sadd.s32 1, %s17
  $region7: #{model.5} parent=0 // loop_footer_branch
    %16 = sbr.rel target = $region3
  $region8: #{model.5} parent=0 // loop_exit
    _

// kernel: model.6
$region0: #{model.6}
  #allocation0 [shape = 'u32[]', space=smem, size = 0x4, offset = 0x4, fixed_abs, tag = 'smem constant byte address 0x4 - core index']
  #allocation1 [shape = 'u32[72,128]{1,0:T(1,128)}', space=vmem, size = 0x9000, scoped, tag = 'internal scratch']
  %s0 = inlined_call_operand.vmem [shape: bf16[2,8,8,32], index: 0, kind: input, shape index: {}]
  %s1 = inlined_call_operand.vmem [shape: bf16[2,4,4,32], index: 1, kind: input, shape index: {}]
  %s2 = inlined_call_operand.vmem [shape: bf16[8,4], index: 2, kind: input, shape index: {}]
  %s3 = inlined_call_operand.vmem [shape: f32[1,1,32], index: 3, kind: input, shape index: {}]
  %s4 = inlined_call_operand.vmem [shape: f32[1,1,32], index: 4, kind: input, shape index: {}]
  %s5 = inlined_call_operand.vmem [shape: bf16[1,32,16], index: 5, kind: input, shape index: {}]
  %s6 = inlined_call_operand.vmem [shape: f32[1,1,16], index: 6, kind: input, shape index: {}]
  %s7 = inlined_call_operand.vmem [shape: f32[1,1,16], index: 7, kind: input, shape index: {}]
  %s8 = inlined_call_operand.vmem [shape: bf16[1,144,16], index: 8, kind: input, shape index: {}]
  %s9 = inlined_call_operand.vmem [shape: f32[1,1,16], index: 9, kind: input, shape index: {}]
  %s10 = inlined_call_operand.vmem [shape: f32[1,1,16], index: 10, kind: input, shape index: {}]
  %s11 = inlined_call_operand.vmem [shape: bf16[1,16,32], index: 11, kind: input, shape index: {}]
  %s12 = inlined_call_operand.vmem [shape: f32[2,1,32], index: 12, kind: input, shape index: {}]
  %s13 = inlined_call_operand.vmem [shape: f32[2,1,32], index: 13, kind: input, shape index: {}]
  %s14 = inlined_call_operand.vmem [shape: bf16[2,32,16], index: 14, kind: input, shape index: {}]
  %s15 = inlined_call_operand.vmem [shape: f32[2,1,16], index: 15, kind: input, shape index: {}]
  %s16 = inlined_call_operand.vmem [shape: f32[2,1,16], index: 16, kind: input, shape index: {}]
  %s17 = inlined_call_operand.vmem [shape: bf16[2,144,16], index: 17, kind: input, shape index: {}]
  %s18 = inlined_call_operand.vmem [shape: f32[2,1,16], index: 18, kind: input, shape index: {}]
  %s19 = inlined_call_operand.vmem [shape: f32[2,1,16], index: 19, kind: input, shape index: {}]
  %s20 = inlined_call_operand.vmem [shape: bf16[2,16,32], index: 20, kind: input, shape index: {}]
  %s21 = inlined_call_operand.vmem [shape: bf16[2,8,8,32], index: 21, kind: output, shape index: {}]
  %s22 = sld [smem:[#allocation0]]
  $region124: #{model.6} parent=0
    _
  %s24 = ssub.s32 1, %s22
  %s25 = scalar_select 0, %s24, %s22
  loop: start=0, step=1, limit=4
  $region2: #{model.6} parent=0 // loop_pre_header
    _
  $region3: #{model.6} parent=0 // loop_header
    %s27 = sphi 0, %s31
    %p28 = scmp.ge.s32.totalorder %s27, 4
    %s37 = sphi 0, %s39
    %s40 = sphi 0, %s37
    %s41 = sphi 0, %s40
    %s57 = sphi 0, %s41
    %s63 = sphi 0, %s65
    %s66 = sphi 0, %s63
    %s67 = sphi 0, %s66
    %s83 = sphi 0, %s67
    %s87 = sphi 0, %s87
    %s89 = sphi 0, %s87
    %s90 = sphi 0, %s89
    %s104 = sphi 0, %s90
    %s108 = sphi 0, %s108
    %s110 = sphi 0, %s108
    %s111 = sphi 0, %s110
    %s125 = sphi 0, %s111
    %s129 = sphi 0, %s129
    %s131 = sphi 0, %s129
    %s132 = sphi 0, %s131
    %s146 = sphi 0, %s132
    %s150 = sphi 0, %s150
    %s152 = sphi 0, %s150
    %s153 = sphi 0, %s152
    %s167 = sphi 0, %s153
    %s171 = sphi 0, %s171
    %s173 = sphi 0, %s171
    %s174 = sphi 0, %s173
    %s188 = sphi 0, %s174
    %s192 = sphi 0, %s192
    %s194 = sphi 0, %s192
    %s195 = sphi 0, %s194
    %s209 = sphi 0, %s195
    %s213 = sphi 0, %s213
    %s215 = sphi 0, %s213
    %s216 = sphi 0, %s215
    %s230 = sphi 0, %s216
    %s234 = sphi 0, %s234
    %s236 = sphi 0, %s234
    %s237 = sphi 0, %s236
    %s251 = sphi 0, %s237
    %s255 = sphi 0, %s255
    %s257 = sphi 0, %s255
    %s258 = sphi 0, %s257
    %s272 = sphi 0, %s258
    %s276 = sphi 0, %s276
    %s278 = sphi 0, %s276
    %s279 = sphi 0, %s278
    %s293 = sphi 0, %s279
    %s297 = sphi 0, %s297
    %s299 = sphi 0, %s297
    %s300 = sphi 0, %s299
    %s314 = sphi 0, %s300
    %s318 = sphi 0, %s318
    %s320 = sphi 0, %s318
    %s321 = sphi 0, %s320
    %s335 = sphi 0, %s321
    %s339 = sphi 0, %s339
    %s341 = sphi 0, %s339
    %s342 = sphi 0, %s341
    %s356 = sphi 0, %s342
    %s360 = sphi 0, %s360
    %s362 = sphi 0, %s360
    %s363 = sphi 0, %s362
    %s377 = sphi 0, %s363
    %s381 = sphi 0, %s381
    %s383 = sphi 0, %s381
    %s384 = sphi 0, %s383
    %s398 = sphi 0, %s384
    %s402 = sphi 0, %s402
    %s404 = sphi 0, %s402
    %s405 = sphi 0, %s404
    %s419 = sphi 0, %s405
    %s423 = sphi 0, %s423
    %s425 = sphi 0, %s423
    %s426 = sphi 0, %s425
    %s440 = sphi 0, %s426
    %s444 = sphi 0, %s444
    %s446 = sphi 0, %s444
    %s447 = sphi 0, %s446
    %s461 = sphi 0, %s447
    %s465 = sphi 0, %s465
    %s467 = sphi 0, %s465
    %s468 = sphi 0, %s467
    %s482 = sphi 0, %s468
    %s488 = sphi 0, %s490
    %s491 = sphi 0, %s488
    %s492 = sphi 0, %s491
    %s508 = sphi 0, %s492
  $region4: #{model.6} parent=0 // loop_header_branch
    %30 = sbr.rel (%p28) target = $region8
  $region5: #{model.6} parent=0 // loop_body
    %s32 = ssub.s32 %s27, 1
    %s33 = ssub.s32 %s27, 2
    %s34 = sadd.s32 %s27, 1
    %s35 = ssub.s32 %s27, %s34
    %p36 = scmp.eq.s32.totalorder %s35, 0
    %s38 = sadd.s32 %s37, 1
    %s39 = scalar_select %p36, %s37, %s38
    %p42 = pneg %p36
    %p43 = scmp.eq.s32.totalorder %s27, 1
    %p44 = por %p42, %p43
    %p45 = scmp.ne.s32.totalorder %s37, %s40
    %p46 = scmp.eq.s32.totalorder %s27, 0
    %p47 = por %p45, %p46
    %p48 = scmp.ne.s32.totalorder %s37, %s40
    %p49 = scmp.eq.s32.totalorder %s32, 1
    %p50 = por %p48, %p49
    %p51 = scmp.ne.s32.totalorder %s40, %s41
    %p52 = scmp.eq.s32.totalorder %s32, 0
    %p53 = por %p51, %p52
    %p54 = scmp.ne.s32.totalorder %s40, %s41
    %p55 = scmp.eq.s32.totalorder %s33, 1
    %p56 = por %p54, %p55
    %p58 = scmp.ne.s32.totalorder %s41, %s57
    %p59 = scmp.eq.s32.totalorder %s33, 0
    %p60 = por %p58, %p59
    %s61 = ssub.s32 %s27, %s34
    %p62 = scmp.eq.s32.totalorder %s61, 0
    %s64 = sadd.s32 %s63, 1
    %s65 = scalar_select %p62, %s63, %s64
    %p68 = pneg %p62
    %p69 = scmp.eq.s32.totalorder %s27, 1
    %p70 = por %p68, %p69
    %p71 = scmp.ne.s32.totalorder %s63, %s66
    %p72 = scmp.eq.s32.totalorder %s27, 0
    %p73 = por %p71, %p72
    %p74 = scmp.ne.s32.totalorder %s63, %s66
    %p75 = scmp.eq.s32.totalorder %s32, 1
    %p76 = por %p74, %p75
    %p77 = scmp.ne.s32.totalorder %s66, %s67
    %p78 = scmp.eq.s32.totalorder %s32, 0
    %p79 = por %p77, %p78
    %p80 = scmp.ne.s32.totalorder %s66, %s67
    %p81 = scmp.eq.s32.totalorder %s33, 1
    %p82 = por %p80, %p81
    %p84 = scmp.ne.s32.totalorder %s67, %s83
    %p85 = scmp.eq.s32.totalorder %s33, 0
    %p86 = por %p84, %p85
    %s88 = sadd.s32 %s87, 1
    %p91 = scmp.eq.s32.totalorder %s27, 1
    %p92 = scmp.ne.s32.totalorder %s87, %s89
    %p93 = scmp.eq.s32.totalorder %s27, 0
    %p94 = por %p92, %p93
    %p95 = scmp.ne.s32.totalorder %s87, %s89
    %p96 = scmp.eq.s32.totalorder %s32, 1
    %p97 = por %p95, %p96
    %p98 = scmp.ne.s32.totalorder %s89, %s90
    %p99 = scmp.eq.s32.totalorder %s32, 0
    %p100 = por %p98, %p99
    %p101 = scmp.ne.s32.totalorder %s89, %s90
    %p102 = scmp.eq.s32.totalorder %s33, 1
    %p103 = por %p101, %p102
    %p105 = scmp.ne.s32.totalorder %s90, %s104
    %p106 = scmp.eq.s32.totalorder %s33, 0
    %p107 = por %p105, %p106
    %s109 = sadd.s32 %s108, 1
    %p112 = scmp.eq.s32.totalorder %s27, 1
    %p113 = scmp.ne.s32.totalorder %s108, %s110
    %p114 = scmp.eq.s32.totalorder %s27, 0
    %p115 = por %p113, %p114
    %p116 = scmp.ne.s32.totalorder %s108, %s110
    %p117 = scmp.eq.s32.totalorder %s32, 1
    %p118 = por %p116, %p117
    %p119 = scmp.ne.s32.totalorder %s110, %s111
    %p120 = scmp.eq.s32.totalorder %s32, 0
    %p121 = por %p119, %p120
    %p122 = scmp.ne.s32.totalorder %s110, %s111
    %p123 = scmp.eq.s32.totalorder %s33, 1
    %p124 = por %p122, %p123
    %p126 = scmp.ne.s32.totalorder %s111, %s125
    %p127 = scmp.eq.s32.totalorder %s33, 0
    %p128 = por %p126, %p127
    %s130 = sadd.s32 %s129, 1
    %p133 = scmp.eq.s32.totalorder %s27, 1
    %p134 = scmp.ne.s32.totalorder %s129, %s131
    %p135 = scmp.eq.s32.totalorder %s27, 0
    %p136 = por %p134, %p135
    %p137 = scmp.ne.s32.totalorder %s129, %s131
    %p138 = scmp.eq.s32.totalorder %s32, 1
    %p139 = por %p137, %p138
    %p140 = scmp.ne.s32.totalorder %s131, %s132
    %p141 = scmp.eq.s32.totalorder %s32, 0
    %p142 = por %p140, %p141
    %p143 = scmp.ne.s32.totalorder %s131, %s132
    %p144 = scmp.eq.s32.totalorder %s33, 1
    %p145 = por %p143, %p144
    %p147 = scmp.ne.s32.totalorder %s132, %s146
    %p148 = scmp.eq.s32.totalorder %s33, 0
    %p149 = por %p147, %p148
    %s151 = sadd.s32 %s150, 1
    %p154 = scmp.eq.s32.totalorder %s27, 1
    %p155 = scmp.ne.s32.totalorder %s150, %s152
    %p156 = scmp.eq.s32.totalorder %s27, 0
    %p157 = por %p155, %p156
    %p158 = scmp.ne.s32.totalorder %s150, %s152
    %p159 = scmp.eq.s32.totalorder %s32, 1
    %p160 = por %p158, %p159
    %p161 = scmp.ne.s32.totalorder %s152, %s153
    %p162 = scmp.eq.s32.totalorder %s32, 0
    %p163 = por %p161, %p162
    %p164 = scmp.ne.s32.totalorder %s152, %s153
    %p165 = scmp.eq.s32.totalorder %s33, 1
    %p166 = por %p164, %p165
    %p168 = scmp.ne.s32.totalorder %s153, %s167
    %p169 = scmp.eq.s32.totalorder %s33, 0
    %p170 = por %p168, %p169
    %s172 = sadd.s32 %s171, 1
    %p175 = scmp.eq.s32.totalorder %s27, 1
    %p176 = scmp.ne.s32.totalorder %s171, %s173
    %p177 = scmp.eq.s32.totalorder %s27, 0
    %p178 = por %p176, %p177
    %p179 = scmp.ne.s32.totalorder %s171, %s173
    %p180 = scmp.eq.s32.totalorder %s32, 1
    %p181 = por %p179, %p180
    %p182 = scmp.ne.s32.totalorder %s173, %s174
    %p183 = scmp.eq.s32.totalorder %s32, 0
    %p184 = por %p182, %p183
    %p185 = scmp.ne.s32.totalorder %s173, %s174
    %p186 = scmp.eq.s32.totalorder %s33, 1
    %p187 = por %p185, %p186
    %p189 = scmp.ne.s32.totalorder %s174, %s188
    %p190 = scmp.eq.s32.totalorder %s33, 0
    %p191 = por %p189, %p190
    %s193 = sadd.s32 %s192, 1
    %p196 = scmp.eq.s32.totalorder %s27, 1
    %p197 = scmp.ne.s32.totalorder %s192, %s194
    %p198 = scmp.eq.s32.totalorder %s27, 0
    %p199 = por %p197, %p198
    %p200 = scmp.ne.s32.totalorder %s192, %s194
    %p201 = scmp.eq.s32.totalorder %s32, 1
    %p202 = por %p200, %p201
    %p203 = scmp.ne.s32.totalorder %s194, %s195
    %p204 = scmp.eq.s32.totalorder %s32, 0
    %p205 = por %p203, %p204
    %p206 = scmp.ne.s32.totalorder %s194, %s195
    %p207 = scmp.eq.s32.totalorder %s33, 1
    %p208 = por %p206, %p207
    %p210 = scmp.ne.s32.totalorder %s195, %s209
    %p211 = scmp.eq.s32.totalorder %s33, 0
    %p212 = por %p210, %p211
    %s214 = sadd.s32 %s213, 1
    %p217 = scmp.eq.s32.totalorder %s27, 1
    %p218 = scmp.ne.s32.totalorder %s213, %s215
    %p219 = scmp.eq.s32.totalorder %s27, 0
    %p220 = por %p218, %p219
    %p221 = scmp.ne.s32.totalorder %s213, %s215
    %p222 = scmp.eq.s32.totalorder %s32, 1
    %p223 = por %p221, %p222
    %p224 = scmp.ne.s32.totalorder %s215, %s216
    %p225 = scmp.eq.s32.totalorder %s32, 0
    %p226 = por %p224, %p225
    %p227 = scmp.ne.s32.totalorder %s215, %s216
    %p228 = scmp.eq.s32.totalorder %s33, 1
    %p229 = por %p227, %p228
    %p231 = scmp.ne.s32.totalorder %s216, %s230
    %p232 = scmp.eq.s32.totalorder %s33, 0
    %p233 = por %p231, %p232
    %s235 = sadd.s32 %s234, 1
    %p238 = scmp.eq.s32.totalorder %s27, 1
    %p239 = scmp.ne.s32.totalorder %s234, %s236
    %p240 = scmp.eq.s32.totalorder %s27, 0
    %p241 = por %p239, %p240
    %p242 = scmp.ne.s32.totalorder %s234, %s236
    %p243 = scmp.eq.s32.totalorder %s32, 1
    %p244 = por %p242, %p243
    %p245 = scmp.ne.s32.totalorder %s236, %s237
    %p246 = scmp.eq.s32.totalorder %s32, 0
    %p247 = por %p245, %p246
    %p248 = scmp.ne.s32.totalorder %s236, %s237
    %p249 = scmp.eq.s32.totalorder %s33, 1
    %p250 = por %p248, %p249
    %p252 = scmp.ne.s32.totalorder %s237, %s251
    %p253 = scmp.eq.s32.totalorder %s33, 0
    %p254 = por %p252, %p253
    %s256 = sadd.s32 %s255, 1
    %p259 = scmp.eq.s32.totalorder %s27, 1
    %p260 = scmp.ne.s32.totalorder %s255, %s257
    %p261 = scmp.eq.s32.totalorder %s27, 0
    %p262 = por %p260, %p261
    %p263 = scmp.ne.s32.totalorder %s255, %s257
    %p264 = scmp.eq.s32.totalorder %s32, 1
    %p265 = por %p263, %p264
    %p266 = scmp.ne.s32.totalorder %s257, %s258
    %p267 = scmp.eq.s32.totalorder %s32, 0
    %p268 = por %p266, %p267
    %p269 = scmp.ne.s32.totalorder %s257, %s258
    %p270 = scmp.eq.s32.totalorder %s33, 1
    %p271 = por %p269, %p270
    %p273 = scmp.ne.s32.totalorder %s258, %s272
    %p274 = scmp.eq.s32.totalorder %s33, 0
    %p275 = por %p273, %p274
    %s277 = sadd.s32 %s276, 1
    %p280 = scmp.eq.s32.totalorder %s27, 1
    %p281 = scmp.ne.s32.totalorder %s276, %s278
    %p282 = scmp.eq.s32.totalorder %s27, 0
    %p283 = por %p281, %p282
    %p284 = scmp.ne.s32.totalorder %s276, %s278
    %p285 = scmp.eq.s32.totalorder %s32, 1
    %p286 = por %p284, %p285
    %p287 = scmp.ne.s32.totalorder %s278, %s279
    %p288 = scmp.eq.s32.totalorder %s32, 0
    %p289 = por %p287, %p288
    %p290 = scmp.ne.s32.totalorder %s278, %s279
    %p291 = scmp.eq.s32.totalorder %s33, 1
    %p292 = por %p290, %p291
    %p294 = scmp.ne.s32.totalorder %s279, %s293
    %p295 = scmp.eq.s32.totalorder %s33, 0
    %p296 = por %p294, %p295
    %s298 = sadd.s32 %s297, 1
    %p301 = scmp.eq.s32.totalorder %s27, 1
    %p302 = scmp.ne.s32.totalorder %s297, %s299
    %p303 = scmp.eq.s32.totalorder %s27, 0
    %p304 = por %p302, %p303
    %p305 = scmp.ne.s32.totalorder %s297, %s299
    %p306 = scmp.eq.s32.totalorder %s32, 1
    %p307 = por %p305, %p306
    %p308 = scmp.ne.s32.totalorder %s299, %s300
    %p309 = scmp.eq.s32.totalorder %s32, 0
    %p310 = por %p308, %p309
    %p311 = scmp.ne.s32.totalorder %s299, %s300
    %p312 = scmp.eq.s32.totalorder %s33, 1
    %p313 = por %p311, %p312
    %p315 = scmp.ne.s32.totalorder %s300, %s314
    %p316 = scmp.eq.s32.totalorder %s33, 0
    %p317 = por %p315, %p316
    %s319 = sadd.s32 %s318, 1
    %p322 = scmp.eq.s32.totalorder %s27, 1
    %p323 = scmp.ne.s32.totalorder %s318, %s320
    %p324 = scmp.eq.s32.totalorder %s27, 0
    %p325 = por %p323, %p324
    %p326 = scmp.ne.s32.totalorder %s318, %s320
    %p327 = scmp.eq.s32.totalorder %s32, 1
    %p328 = por %p326, %p327
    %p329 = scmp.ne.s32.totalorder %s320, %s321
    %p330 = scmp.eq.s32.totalorder %s32, 0
    %p331 = por %p329, %p330
    %p332 = scmp.ne.s32.totalorder %s320, %s321
    %p333 = scmp.eq.s32.totalorder %s33, 1
    %p334 = por %p332, %p333
    %p336 = scmp.ne.s32.totalorder %s321, %s335
    %p337 = scmp.eq.s32.totalorder %s33, 0
    %p338 = por %p336, %p337
    %s340 = sadd.s32 %s339, 1
    %p343 = scmp.eq.s32.totalorder %s27, 1
    %p344 = scmp.ne.s32.totalorder %s339, %s341
    %p345 = scmp.eq.s32.totalorder %s27, 0
    %p346 = por %p344, %p345
    %p347 = scmp.ne.s32.totalorder %s339, %s341
    %p348 = scmp.eq.s32.totalorder %s32, 1
    %p349 = por %p347, %p348
    %p350 = scmp.ne.s32.totalorder %s341, %s342
    %p351 = scmp.eq.s32.totalorder %s32, 0
    %p352 = por %p350, %p351
    %p353 = scmp.ne.s32.totalorder %s341, %s342
    %p354 = scmp.eq.s32.totalorder %s33, 1
    %p355 = por %p353, %p354
    %p357 = scmp.ne.s32.totalorder %s342, %s356
    %p358 = scmp.eq.s32.totalorder %s33, 0
    %p359 = por %p357, %p358
    %s361 = sadd.s32 %s360, 1
    %p364 = scmp.eq.s32.totalorder %s27, 1
    %p365 = scmp.ne.s32.totalorder %s360, %s362
    %p366 = scmp.eq.s32.totalorder %s27, 0
    %p367 = por %p365, %p366
    %p368 = scmp.ne.s32.totalorder %s360, %s362
    %p369 = scmp.eq.s32.totalorder %s32, 1
    %p370 = por %p368, %p369
    %p371 = scmp.ne.s32.totalorder %s362, %s363
    %p372 = scmp.eq.s32.totalorder %s32, 0
    %p373 = por %p371, %p372
    %p374 = scmp.ne.s32.totalorder %s362, %s363
    %p375 = scmp.eq.s32.totalorder %s33, 1
    %p376 = por %p374, %p375
    %p378 = scmp.ne.s32.totalorder %s363, %s377
    %p379 = scmp.eq.s32.totalorder %s33, 0
    %p380 = por %p378, %p379
    %s382 = sadd.s32 %s381, 1
    %p385 = scmp.eq.s32.totalorder %s27, 1
    %p386 = scmp.ne.s32.totalorder %s381, %s383
    %p387 = scmp.eq.s32.totalorder %s27, 0
    %p388 = por %p386, %p387
    %p389 = scmp.ne.s32.totalorder %s381, %s383
    %p390 = scmp.eq.s32.totalorder %s32, 1
    %p391 = por %p389, %p390
    %p392 = scmp.ne.s32.totalorder %s383, %s384
    %p393 = scmp.eq.s32.totalorder %s32, 0
    %p394 = por %p392, %p393
    %p395 = scmp.ne.s32.totalorder %s383, %s384
    %p396 = scmp.eq.s32.totalorder %s33, 1
    %p397 = por %p395, %p396
    %p399 = scmp.ne.s32.totalorder %s384, %s398
    %p400 = scmp.eq.s32.totalorder %s33, 0
    %p401 = por %p399, %p400
    %s403 = sadd.s32 %s402, 1
    %p406 = scmp.eq.s32.totalorder %s27, 1
    %p407 = scmp.ne.s32.totalorder %s402, %s404
    %p408 = scmp.eq.s32.totalorder %s27, 0
    %p409 = por %p407, %p408
    %p410 = scmp.ne.s32.totalorder %s402, %s404
    %p411 = scmp.eq.s32.totalorder %s32, 1
    %p412 = por %p410, %p411
    %p413 = scmp.ne.s32.totalorder %s404, %s405
    %p414 = scmp.eq.s32.totalorder %s32, 0
    %p415 = por %p413, %p414
    %p416 = scmp.ne.s32.totalorder %s404, %s405
    %p417 = scmp.eq.s32.totalorder %s33, 1
    %p418 = por %p416, %p417
    %p420 = scmp.ne.s32.totalorder %s405, %s419
    %p421 = scmp.eq.s32.totalorder %s33, 0
    %p422 = por %p420, %p421
    %s424 = sadd.s32 %s423, 1
    %p427 = scmp.eq.s32.totalorder %s27, 1
    %p428 = scmp.ne.s32.totalorder %s423, %s425
    %p429 = scmp.eq.s32.totalorder %s27, 0
    %p430 = por %p428, %p429
    %p431 = scmp.ne.s32.totalorder %s423, %s425
    %p432 = scmp.eq.s32.totalorder %s32, 1
    %p433 = por %p431, %p432
    %p434 = scmp.ne.s32.totalorder %s425, %s426
    %p435 = scmp.eq.s32.totalorder %s32, 0
    %p436 = por %p434, %p435
    %p437 = scmp.ne.s32.totalorder %s425, %s426
    %p438 = scmp.eq.s32.totalorder %s33, 1
    %p439 = por %p437, %p438
    %p441 = scmp.ne.s32.totalorder %s426, %s440
    %p442 = scmp.eq.s32.totalorder %s33, 0
    %p443 = por %p441, %p442
    %s445 = sadd.s32 %s444, 1
    %p448 = scmp.eq.s32.totalorder %s27, 1
    %p449 = scmp.ne.s32.totalorder %s444, %s446
    %p450 = scmp.eq.s32.totalorder %s27, 0
    %p451 = por %p449, %p450
    %p452 = scmp.ne.s32.totalorder %s444, %s446
    %p453 = scmp.eq.s32.totalorder %s32, 1
    %p454 = por %p452, %p453
    %p455 = scmp.ne.s32.totalorder %s446, %s447
    %p456 = scmp.eq.s32.totalorder %s32, 0
    %p457 = por %p455, %p456
    %p458 = scmp.ne.s32.totalorder %s446, %s447
    %p459 = scmp.eq.s32.totalorder %s33, 1
    %p460 = por %p458, %p459
    %p462 = scmp.ne.s32.totalorder %s447, %s461
    %p463 = scmp.eq.s32.totalorder %s33, 0
    %p464 = por %p462, %p463
    %s466 = sadd.s32 %s465, 1
    %p469 = scmp.eq.s32.totalorder %s27, 1
    %p470 = scmp.ne.s32.totalorder %s465, %s467
    %p471 = scmp.eq.s32.totalorder %s27, 0
    %p472 = por %p470, %p471
    %p473 = scmp.ne.s32.totalorder %s465, %s467
    %p474 = scmp.eq.s32.totalorder %s32, 1
    %p475 = por %p473, %p474
    %p476 = scmp.ne.s32.totalorder %s467, %s468
    %p477 = scmp.eq.s32.totalorder %s32, 0
    %p478 = por %p476, %p477
    %p479 = scmp.ne.s32.totalorder %s467, %s468
    %p480 = scmp.eq.s32.totalorder %s33, 1
    %p481 = por %p479, %p480
    %p483 = scmp.ne.s32.totalorder %s468, %s482
    %p484 = scmp.eq.s32.totalorder %s33, 0
    %p485 = por %p483, %p484
    %s486 = ssub.s32 %s27, %s34
    %p487 = scmp.eq.s32.totalorder %s486, 0
    %s489 = sadd.s32 %s488, 1
    %s490 = scalar_select %p487, %s488, %s489
    %p493 = pneg %p487
    %p494 = scmp.eq.s32.totalorder %s27, 1
    %p495 = por %p493, %p494
    %p496 = scmp.ne.s32.totalorder %s488, %s491
    %p497 = scmp.eq.s32.totalorder %s27, 0
    %p498 = por %p496, %p497
    %p499 = scmp.ne.s32.totalorder %s488, %s491
    %p500 = scmp.eq.s32.totalorder %s32, 1
    %p501 = por %p499, %p500
    %p502 = scmp.ne.s32.totalorder %s491, %s492
    %p503 = scmp.eq.s32.totalorder %s32, 0
    %p504 = por %p502, %p503
    %p505 = scmp.ne.s32.totalorder %s491, %s492
    %p506 = scmp.eq.s32.totalorder %s33, 1
    %p507 = por %p505, %p506
    %p509 = scmp.ne.s32.totalorder %s492, %s508
    %p510 = scmp.eq.s32.totalorder %s33, 0
    %p511 = por %p509, %p510
    %p512 = scmp.le.s32.totalorder 1, %s27
    %p513 = scmp.lt.s32.totalorder %s27, 3
    %p514 = pnand %p512, %p513
    %p515 = pneg %p514
    // Predicated region
    $region9: #{model.6} parent=5 // pred_check
      _
    $region10: #{model.6} parent=5 // pred_check_branch
      %517 = sbr.rel (%p514) target = $region12
    $region11: #{model.6} parent=5 // pred_region
      %s518 = ssub.s32 %s27, 1
      // Predicated region
      $region13: #{model.6} parent=11 // pred_check
        %p519 = pneg %p100
      $region14: #{model.6} parent=11 // pred_check_branch
        %521 = sbr.rel (%p519) target = $region16
      $region15: #{model.6} parent=11 // pred_region
        _
      $region16: #{model.6} parent=11 // pred_fallthru
        _
      // Predicated region
      $region17: #{model.6} parent=11 // pred_check
        %p522 = pneg %p121
      $region18: #{model.6} parent=11 // pred_check_branch
        %524 = sbr.rel (%p522) target = $region20
      $region19: #{model.6} parent=11 // pred_region
        _
      $region20: #{model.6} parent=11 // pred_fallthru
        _
      // Predicated region
      $region21: #{model.6} parent=11 // pred_check
        %p525 = pneg %p142
      $region22: #{model.6} parent=11 // pred_check_branch
        %527 = sbr.rel (%p525) target = $region24
      $region23: #{model.6} parent=11 // pred_region
        _
      $region24: #{model.6} parent=11 // pred_fallthru
        _
      // Predicated region
      $region25: #{model.6} parent=11 // pred_check
        %p528 = pneg %p163
      $region26: #{model.6} parent=11 // pred_check_branch
        %530 = sbr.rel (%p528) target = $region28
      $region27: #{model.6} parent=11 // pred_region
        _
      $region28: #{model.6} parent=11 // pred_fallthru
        _
      // Predicated region
      $region29: #{model.6} parent=11 // pred_check
        %p531 = pneg %p184
      $region30: #{model.6} parent=11 // pred_check_branch
        %533 = sbr.rel (%p531) target = $region32
      $region31: #{model.6} parent=11 // pred_region
        _
      $region32: #{model.6} parent=11 // pred_fallthru
        _
      // Predicated region
      $region33: #{model.6} parent=11 // pred_check
        %p534 = pneg %p205
      $region34: #{model.6} parent=11 // pred_check_branch
        %536 = sbr.rel (%p534) target = $region36
      $region35: #{model.6} parent=11 // pred_region
        _
      $region36: #{model.6} parent=11 // pred_fallthru
        _
      // Predicated region
      $region37: #{model.6} parent=11 // pred_check
        %p537 = pneg %p226
      $region38: #{model.6} parent=11 // pred_check_branch
        %539 = sbr.rel (%p537) target = $region40
      $region39: #{model.6} parent=11 // pred_region
        _
      $region40: #{model.6} parent=11 // pred_fallthru
        _
      // Predicated region
      $region41: #{model.6} parent=11 // pred_check
        %p540 = pneg %p247
      $region42: #{model.6} parent=11 // pred_check_branch
        %542 = sbr.rel (%p540) target = $region44
      $region43: #{model.6} parent=11 // pred_region
        _
      $region44: #{model.6} parent=11 // pred_fallthru
        _
      // Predicated region
      $region45: #{model.6} parent=11 // pred_check
        %p543 = pneg %p268
      $region46: #{model.6} parent=11 // pred_check_branch
        %545 = sbr.rel (%p543) target = $region48
      $region47: #{model.6} parent=11 // pred_region
        _
      $region48: #{model.6} parent=11 // pred_fallthru
        _
      // Predicated region
      $region49: #{model.6} parent=11 // pred_check
        %p546 = pneg %p289
      $region50: #{model.6} parent=11 // pred_check_branch
        %548 = sbr.rel (%p546) target = $region52
      $region51: #{model.6} parent=11 // pred_region
        _
      $region52: #{model.6} parent=11 // pred_fallthru
        _
      // Predicated region
      $region53: #{model.6} parent=11 // pred_check
        %p549 = pneg %p310
      $region54: #{model.6} parent=11 // pred_check_branch
        %551 = sbr.rel (%p549) target = $region56
      $region55: #{model.6} parent=11 // pred_region
        _
      $region56: #{model.6} parent=11 // pred_fallthru
        _
      // Predicated region
      $region57: #{model.6} parent=11 // pred_check
        %p552 = pneg %p331
      $region58: #{model.6} parent=11 // pred_check_branch
        %554 = sbr.rel (%p552) target = $region60
      $region59: #{model.6} parent=11 // pred_region
        _
      $region60: #{model.6} parent=11 // pred_fallthru
        _
      // Predicated region
      $region61: #{model.6} parent=11 // pred_check
        %p555 = pneg %p352
      $region62: #{model.6} parent=11 // pred_check_branch
        %557 = sbr.rel (%p555) target = $region64
      $region63: #{model.6} parent=11 // pred_region
        _
      $region64: #{model.6} parent=11 // pred_fallthru
        _
      // Predicated region
      $region65: #{model.6} parent=11 // pred_check
        %p558 = pneg %p373
      $region66: #{model.6} parent=11 // pred_check_branch
        %560 = sbr.rel (%p558) target = $region68
      $region67: #{model.6} parent=11 // pred_region
        _
      $region68: #{model.6} parent=11 // pred_fallthru
        _
      // Predicated region
      $region69: #{model.6} parent=11 // pred_check
        %p561 = pneg %p394
      $region70: #{model.6} parent=11 // pred_check_branch
        %563 = sbr.rel (%p561) target = $region72
      $region71: #{model.6} parent=11 // pred_region
        _
      $region72: #{model.6} parent=11 // pred_fallthru
        _
      // Predicated region
      $region73: #{model.6} parent=11 // pred_check
        %p564 = pneg %p415
      $region74: #{model.6} parent=11 // pred_check_branch
        %566 = sbr.rel (%p564) target = $region76
      $region75: #{model.6} parent=11 // pred_region
        _
      $region76: #{model.6} parent=11 // pred_fallthru
        _
      // Predicated region
      $region77: #{model.6} parent=11 // pred_check
        %p567 = pneg %p436
      $region78: #{model.6} parent=11 // pred_check_branch
        %569 = sbr.rel (%p567) target = $region80
      $region79: #{model.6} parent=11 // pred_region
        _
      $region80: #{model.6} parent=11 // pred_fallthru
        _
      // Predicated region
      $region81: #{model.6} parent=11 // pred_check
        %p570 = pneg %p457
      $region82: #{model.6} parent=11 // pred_check_branch
        %572 = sbr.rel (%p570) target = $region84
      $region83: #{model.6} parent=11 // pred_region
        _
      $region84: #{model.6} parent=11 // pred_fallthru
        _
      // Predicated region
      $region85: #{model.6} parent=11 // pred_check
        %p573 = pneg %p478
      $region86: #{model.6} parent=11 // pred_check_branch
        %575 = sbr.rel (%p573) target = $region88
      $region87: #{model.6} parent=11 // pred_region
        _
      $region88: #{model.6} parent=11 // pred_fallthru
        _
    $region12: #{model.6} parent=5 // pred_fallthru
      _
    %p576 = scmp.lt.s32.totalorder %s27, 2
    // Predicated region
    $region89: #{model.6} parent=5 // pred_check
      %p577 = pneg %p576
    $region90: #{model.6} parent=5 // pred_check_branch
      %579 = sbr.rel (%p577) target = $region92
    $region91: #{model.6} parent=5 // pred_region
      // Predicated region
      $region93: #{model.6} parent=91 // pred_check
        %p580 = pneg %p47
      $region94: #{model.6} parent=91 // pred_check_branch
        %582 = sbr.rel (%p580) target = $region96
      $region95: #{model.6} parent=91 // pred_region
        %p583 = scmp.lt.s32.totalorder %s27, 1
        %s584 = scalar_select %p583, %s27, 1
        %s585 = smul.addr %s584, 8
        %s586 = smul.addr %s585, 4
        %s587 = scalar_lea.vmem %s0, %s586
      $region96: #{model.6} parent=91 // pred_fallthru
        _
      // Predicated region
      $region97: #{model.6} parent=91 // pred_check
        %p588 = pneg %p73
      $region98: #{model.6} parent=91 // pred_check_branch
        %590 = sbr.rel (%p588) target = $region100
      $region99: #{model.6} parent=91 // pred_region
        %p591 = scmp.lt.s32.totalorder %s27, 1
        %s592 = scalar_select %p591, %s27, 1
        %s593 = smul.addr %s592, 4
        %s594 = smul.addr %s593, 2
        %s595 = scalar_lea.vmem %s1, %s594
      $region100: #{model.6} parent=91 // pred_fallthru
        _
    $region92: #{model.6} parent=5 // pred_fallthru
      _
    %p596 = scmp.le.s32.totalorder 1, %s27
    %p597 = scmp.lt.s32.totalorder %s27, 3
    %p598 = pnand %p596, %p597
    %p599 = pneg %p598
    // Predicated region
    $region101: #{model.6} parent=5 // pred_check
      _
    $region102: #{model.6} parent=5 // pred_check_branch
      %601 = sbr.rel (%p598) target = $region104
    $region103: #{model.6} parent=5 // pred_region
      %s602 = ssub.s32 %s27, 1
      %p603 = scmp.lt.s32.totalorder %s32, 1
      %s604 = scalar_select %p603, %s32, 1
      %s605 = smul.addr %s604, 8
      %s606 = smul.addr %s605, 4
      %s607 = scalar_lea.vmem %s0, %s606
      %p608 = pneg %p53
      %p609 = pneg %p50
      %p610 = scmp.lt.s32.totalorder %s32, 1
      %s611 = scalar_select %p610, %s32, 1
      %s612 = smul.addr %s611, 4
      %s613 = smul.addr %s612, 2
      %s614 = scalar_lea.vmem %s1, %s613
      %p615 = pneg %p79
      %p616 = pneg %p76
      %p617 = pneg %p100
      %p618 = pneg %p97
      %p619 = pneg %p121
      %p620 = pneg %p118
      %p621 = pneg %p142
      %p622 = pneg %p139
      %p623 = pneg %p163
      %p624 = pneg %p160
      %p625 = pneg %p184
      %p626 = pneg %p181
      %p627 = pneg %p205
      %p628 = pneg %p202
      %p629 = pneg %p226
      %p630 = pneg %p223
      %p631 = pneg %p247
      %p632 = pneg %p244
      %p633 = pneg %p268
      %p634 = pneg %p265
      %p635 = pneg %p289
      %p636 = pneg %p286
      %p637 = pneg %p310
      %p638 = pneg %p307
      %p639 = pneg %p331
      %p640 = pneg %p328
      %p641 = pneg %p352
      %p642 = pneg %p349
      %p643 = pneg %p373
      %p644 = pneg %p370
      %p645 = pneg %p394
      %p646 = pneg %p391
      %p647 = pneg %p415
      %p648 = pneg %p412
      %p649 = pneg %p436
      %p650 = pneg %p433
      %p651 = pneg %p457
      %p652 = pneg %p454
      %p653 = pneg %p478
      %p654 = pneg %p475
      %p655 = pneg %p504
      %p656 = pneg %p501
      %p657 = scmp.lt.s32.totalorder %s32, 1
      %s658 = scalar_select %p657, %s32, 1
      %s659 = smul.addr %s658, 8
      %s660 = smul.addr %s659, 4
      %s661 = scalar_lea.vmem %s21, %s660
      %p662 = scmp.lt.s32.totalorder %s32, 1
      %s663 = scalar_select %p662, %s32, 1
      %s664 = smul.addr %s663, 8
      %s665 = smul.addr %s664, 4
      %s666 = scalar_lea.vmem %s0, %s665
      %p667 = scmp.lt.s32.totalorder %s32, 1
      %s668 = scalar_select %p667, %s32, 1
      %s669 = smul.addr %s668, 4
      %s670 = smul.addr %s669, 2
      %s671 = scalar_lea.vmem %s1, %s670
      %p672 = scmp.lt.s32.totalorder %s32, 1
      %s673 = scalar_select %p672, %s32, 1
      %s674 = smul.addr %s673, 8
      %s675 = smul.addr %s674, 4
      %s676 = scalar_lea.vmem %s21, %s675
      %v678 = vld [vmem:[%s666] sm:$0xf]
      %v679 = vld [vmem:[%s666 + $0x4] sm:$0xf]
      %v680 = vld [vmem:[%s666 + $0x8] sm:$0xf]
      %v681 = vld [vmem:[%s666 + $0xc] sm:$0xf]
      %v682 = vld [vmem:[%s666 + $0x10] sm:$0xf]
      %v683 = vld [vmem:[%s666 + $0x14] sm:$0xf]
      %v684 = vld [vmem:[%s666 + $0x18] sm:$0xf]
      %v685 = vld [vmem:[%s666 + $0x1c] sm:$0xf]
      %v686 = vunpack.c.l.bf16 %v678
      %v687 = vunpack.c.l.bf16 %v679
      %v688 = vunpack.c.l.bf16 %v680
      %v689 = vunpack.c.l.bf16 %v681
      %v690 = vunpack.c.l.bf16 %v682
      %v691 = vunpack.c.l.bf16 %v683
      %v692 = vunpack.c.l.bf16 %v684
      %v693 = vunpack.c.l.bf16 %v685
      %v694 = vld [vmem:[%s3] sm:$0x1]
      %v696 = vperm.slane %v694, 0
      %v698 = vmul.f32 %v686, %v696
      %v699 = vmul.f32 %v687, %v696
      %v700 = vmul.f32 %v688, %v696
      %v701 = vmul.f32 %v689, %v696
      %v702 = vmul.f32 %v690, %v696
      %v703 = vmul.f32 %v691, %v696
      %v704 = vmul.f32 %v692, %v696
      %v705 = vmul.f32 %v693, %v696
      %v706 = vld [vmem:[%s4] sm:$0x1]
      %v708 = vperm.slane %v706, 0
      %v710 = vadd.f32 %v698, %v708
      %v711 = vadd.f32 %v699, %v708
      %v712 = vadd.f32 %v700, %v708
      %v713 = vadd.f32 %v701, %v708
      %v714 = vadd.f32 %v702, %v708
      %v715 = vadd.f32 %v703, %v708
      %v716 = vadd.f32 %v704, %v708
      %v717 = vadd.f32 %v705, %v708
      %v718 = vmax.f32 %v710, 0.0
      %v719 = vmax.f32 %v711, 0.0
      %v720 = vmax.f32 %v712, 0.0
      %v721 = vmax.f32 %v713, 0.0
      %v722 = vmax.f32 %v714, 0.0
      %v723 = vmax.f32 %v715, 0.0
      %v724 = vmax.f32 %v716, 0.0
      %v725 = vmax.f32 %v717, 0.0
      %v726 = vpack.c.bf16 %v719, %v718
      %v727 = vpack.c.bf16 %v721, %v720
      %v728 = vpack.c.bf16 %v723, %v722
      %v729 = vpack.c.bf16 %v725, %v724
      %v730 = vld [vmem:[%s5] sm:$0xf]
      %v731 = vld [vmem:[%s5 + $0x4] sm:$0xf]
      %v732 = vld [vmem:[%s5 + $0x8] sm:$0xf]
      %v733 = vld [vmem:[%s5 + $0xc] sm:$0xf]
      %v738 = vunpack.c.l.b16 %v730
      %v739 = vunpack.c.l.b16 %v731
      %v740 = vunpack.c.l.b16 %v732
      %v741 = vunpack.c.l.b16 %v733
      %v742 = vpack.c.b16 %v739, %v738
      %v743 = vpack.c.b16 %v741, %v740
      %vm746 = vcmask 261120
      %v748 = vsel %vm746, %v726, 0
      %v751 = vsel %vm746, %v727, 0
      %v754 = vsel %vm746, %v728, 0
      %v757 = vsel %vm746, %v729, 0
      %759 = vmatpush.bf16.msra.mxu0 0
      %760 = vmatpush.bf16.msra.mxu0 0
      %761 = vmatpush.bf16.msra.mxu0 0
      %762 = vmatpush.bf16.msra.mxu0 0
      %763 = vmatpush.bf16.msra.mxu0 0
      %764 = vmatpush.bf16.msra.mxu0 0
      %765 = vmatpush.bf16.msra.mxu0 %v743
      %766 = vmatpush.bf16.msra.mxu0 %v742
      %767 = vmatmul.bf16.gmra.mxu0 %v748
      %v768 = vpop.f32.mrf.mxu0
      %v769 = vadd.f32 0.0, %v768
      %v770 = vpop.f32.mrf.mxu0
      %v771 = vadd.f32 0.0, %v770
      %772 = vmatmul.bf16.gmra.mxu0 %v751
      %v773 = vpop.f32.mrf.mxu0
      %v774 = vadd.f32 0.0, %v773
      %v775 = vpop.f32.mrf.mxu0
      %v776 = vadd.f32 0.0, %v775
      %777 = vmatmul.bf16.gmra.mxu0 %v754
      %v778 = vpop.f32.mrf.mxu0
      %v779 = vadd.f32 0.0, %v778
      %v780 = vpop.f32.mrf.mxu0
      %v781 = vadd.f32 0.0, %v780
      %782 = vmatmul.bf16.gmra.mxu0 %v757
      %v783 = vpop.f32.mrf.mxu0
      %v784 = vadd.f32 0.0, %v783
      %v785 = vpop.f32.mrf.mxu0
      %v786 = vadd.f32 0.0, %v785
      %787 = vdwg.mxu0
      %v788 = vld [vmem:[%s6] sm:$0x1]
      %v790 = vperm.slane %v788, 0
      %v792 = vmul.f32 %v769, %v790
      %v793 = vmul.f32 %v771, %v790
      %v794 = vmul.f32 %v774, %v790
      %v795 = vmul.f32 %v776, %v790
      %v796 = vmul.f32 %v779, %v790
      %v797 = vmul.f32 %v781, %v790
      %v798 = vmul.f32 %v784, %v790
      %v799 = vmul.f32 %v786, %v790
      %v800 = vld [vmem:[%s7] sm:$0x1]
      %v802 = vperm.slane %v800, 0
      %v804 = vadd.f32 %v792, %v802
      %v805 = vadd.f32 %v793, %v802
      %v806 = vadd.f32 %v794, %v802
      %v807 = vadd.f32 %v795, %v802
      %v808 = vadd.f32 %v796, %v802
      %v809 = vadd.f32 %v797, %v802
      %v810 = vadd.f32 %v798, %v802
      %v811 = vadd.f32 %v799, %v802
      %v812 = vmax.f32 %v804, 0.0
      %v813 = vmax.f32 %v805, 0.0
      %v814 = vmax.f32 %v806, 0.0
      %v815 = vmax.f32 %v807, 0.0
      %v816 = vmax.f32 %v808, 0.0
      %v817 = vmax.f32 %v809, 0.0
      %v818 = vmax.f32 %v810, 0.0
      %v819 = vmax.f32 %v811, 0.0
      %v820 = vpack.c.bf16 %v812, %v812
      %v821 = vpack.c.bf16 %v813, %v813
      %v822 = vpack.c.bf16 %v814, %v814
      %v823 = vpack.c.bf16 %v815, %v815
      %v824 = vpack.c.bf16 %v816, %v816
      %v825 = vpack.c.bf16 %v817, %v817
      %v826 = vpack.c.bf16 %v818, %v818
      %v827 = vpack.c.bf16 %v819, %v819
      %v836 = vunpack.c.l.b16 %v820
      %v837 = vunpack.c.l.b16 %v821
      %v838 = vunpack.c.l.b16 %v822
      %v839 = vunpack.c.l.b16 %v823
      %v840 = vunpack.c.l.b16 %v824
      %v841 = vunpack.c.l.b16 %v825
      %v842 = vunpack.c.l.b16 %v826
      %v843 = vunpack.c.l.b16 %v827
      %v844 = vpack.c.b16 %v836, %v836
      %v845 = vpack.c.b16 %v837, %v837
      %v846 = vpack.c.b16 %v838, %v838
      %v847 = vpack.c.b16 %v839, %v839
      %v848 = vpack.c.b16 %v840, %v840
      %v849 = vpack.c.b16 %v841, %v841
      %v850 = vpack.c.b16 %v842, %v842
      %v851 = vpack.c.b16 %v843, %v843
      %v853 = vshrl.u32 %v844, 16
      %v855 = vrot.slane %v853, 7
      %v856 = vshll.u32 %v844, 16
      %v858 = vor.u32 %v855, %v856
      %v860 = vshrl.u32 %v845, 16
      %v862 = vrot.slane %v860, 7
      %v863 = vshll.u32 %v845, 16
      %v865 = vor.u32 %v862, %v863
      %v867 = vshrl.u32 %v846, 16
      %v869 = vrot.slane %v867, 7
      %v870 = vshll.u32 %v846, 16
      %v872 = vor.u32 %v869, %v870
      %v874 = vshrl.u32 %v847, 16
      %v876 = vrot.slane %v874, 7
      %v877 = vshll.u32 %v847, 16
      %v879 = vor.u32 %v876, %v877
      %v881 = vshrl.u32 %v848, 16
      %v883 = vrot.slane %v881, 7
      %v884 = vshll.u32 %v848, 16
      %v886 = vor.u32 %v883, %v884
      %v888 = vshrl.u32 %v849, 16
      %v890 = vrot.slane %v888, 7
      %v891 = vshll.u32 %v849, 16
      %v893 = vor.u32 %v890, %v891
      %v895 = vshrl.u32 %v850, 16
      %v897 = vrot.slane %v895, 7
      %v898 = vshll.u32 %v850, 16
      %v900 = vor.u32 %v897, %v898
      %v902 = vshrl.u32 %v851, 16
      %v904 = vrot.slane %v902, 7
      %v905 = vshll.u32 %v851, 16
      %v907 = vor.u32 %v904, %v905
      %vm916 = vcmask 1040384
      %vm917 = vsmask.f32 256
      %vm918 = vmand %vm916, %vm917
      %v919 = vsel %vm918, 0, %v858
      %v920 = vsel %vm918, 0, %v865
      %v921 = vsel %vm918, 0, %v872
      %v922 = vsel %vm918, 0, %v879
      %v923 = vsel %vm918, 0, %v886
      %v924 = vsel %vm918, 0, %v893
      %v925 = vsel %vm918, 0, %v900
      %v926 = vsel %vm918, 0, %v907
      %v927 = vrot.slane %v856, 1
      %v928 = vor.u32 %v853, %v927
      %v929 = vrot.slane %v863, 1
      %v930 = vor.u32 %v860, %v929
      %v931 = vrot.slane %v870, 1
      %v932 = vor.u32 %v867, %v931
      %v933 = vrot.slane %v877, 1
      %v934 = vor.u32 %v874, %v933
      %v935 = vrot.slane %v884, 1
      %v936 = vor.u32 %v881, %v935
      %v937 = vrot.slane %v891, 1
      %v938 = vor.u32 %v888, %v937
      %v939 = vrot.slane %v898, 1
      %v940 = vor.u32 %v895, %v939
      %v941 = vrot.slane %v905, 1
      %v942 = vor.u32 %v902, %v941
      %vm951 = vcmask 1043456
      %vm952 = vsmask.f32 3328
      %vm953 = vmand %vm951, %vm952
      %v954 = vsel %vm953, %v928, 0
      %v955 = vsel %vm953, %v930, 0
      %v956 = vsel %vm953, %v932, 0
      %v957 = vsel %vm953, %v934, 0
      %v958 = vsel %vm953, %v936, 0
      %v959 = vsel %vm953, %v938, 0
      %v960 = vsel %vm953, %v940, 0
      %v961 = vsel %vm953, %v942, 0
      %962 = vrot.lane.b32.xlu0 %v844, 16
      %v963 = vpop.permute.xlu0 %962
      %964 = vrot.lane.b32.xlu0 %v845, 16
      %v965 = vpop.permute.xlu0 %964
      %966 = vrot.lane.b32.xlu0 %v846, 16
      %v967 = vpop.permute.xlu0 %966
      %968 = vrot.lane.b32.xlu0 %v847, 16
      %v969 = vpop.permute.xlu0 %968
      %970 = vrot.lane.b32.xlu0 %v848, 16
      %v971 = vpop.permute.xlu0 %970
      %972 = vrot.lane.b32.xlu0 %v849, 16
      %v973 = vpop.permute.xlu0 %972
      %974 = vrot.lane.b32.xlu0 %v850, 16
      %v975 = vpop.permute.xlu0 %974
      %976 = vrot.lane.b32.xlu0 %v851, 16
      %v977 = vpop.permute.xlu0 %976
      %986 = vrot.lane.b32.xlu0 %v954, 32
      %v987 = vpop.permute.xlu0 %986
      %988 = vrot.lane.b32.xlu0 %v955, 32
      %v989 = vpop.permute.xlu0 %988
      %990 = vrot.lane.b32.xlu0 %v956, 32
      %v991 = vpop.permute.xlu0 %990
      %992 = vrot.lane.b32.xlu0 %v957, 32
      %v993 = vpop.permute.xlu0 %992
      %994 = vrot.lane.b32.xlu0 %v958, 32
      %v995 = vpop.permute.xlu0 %994
      %996 = vrot.lane.b32.xlu0 %v959, 32
      %v997 = vpop.permute.xlu0 %996
      %998 = vrot.lane.b32.xlu0 %v960, 32
      %v999 = vpop.permute.xlu0 %998
      %1000 = vrot.lane.b32.xlu0 %v961, 32
      %v1001 = vpop.permute.xlu0 %1000
      %vm1002 = vcmask 130048
      %v1005 = vsel %vm1002, %v919, %v963
      %v1008 = vsel %vm1002, %v920, %v965
      %v1011 = vsel %vm1002, %v921, %v967
      %v1014 = vsel %vm1002, %v922, %v969
      %v1017 = vsel %vm1002, %v923, %v971
      %v1020 = vsel %vm1002, %v924, %v973
      %v1023 = vsel %vm1002, %v925, %v975
      %v1026 = vsel %vm1002, %v926, %v977
      %v1028 = vsel %vm746, %v1005, %v987
      %v1030 = vsel %vm746, %v1008, %v989
      %v1032 = vsel %vm746, %v1011, %v991
      %v1034 = vsel %vm746, %v1014, %v993
      %v1036 = vsel %vm746, %v1017, %v995
      %v1038 = vsel %vm746, %v1020, %v997
      %v1040 = vsel %vm746, %v1023, %v999
      %v1042 = vsel %vm746, %v1026, %v1001
      %v1043 = vld [vmem:[%s8] sm:$0xf]
      %v1044 = vld [vmem:[%s8 + $0x4] sm:$0xf]
      %v1045 = vld [vmem:[%s8 + $0x8] sm:$0xf]
      %v1046 = vld [vmem:[%s8 + $0xc] sm:$0xf]
      %v1047 = vld [vmem:[%s8 + $0x10] sm:$0xf]
      %v1048 = vld [vmem:[%s8 + $0x14] sm:$0xf]
      %v1049 = vld [vmem:[%s8 + $0x18] sm:$0xf]
      %v1050 = vld [vmem:[%s8 + $0x1c] sm:$0xf]
      %v1051 = vld [vmem:[%s8 + $0x20] sm:$0xf]
      %v1052 = vld [vmem:[%s8 + $0x24] sm:$0xf]
      %v1053 = vld [vmem:[%s8 + $0x28] sm:$0xf]
      %v1054 = vld [vmem:[%s8 + $0x2c] sm:$0xf]
      %v1055 = vld [vmem:[%s8 + $0x30] sm:$0xf]
      %v1056 = vld [vmem:[%s8 + $0x34] sm:$0xf]
      %v1057 = vld [vmem:[%s8 + $0x38] sm:$0xf]
      %v1058 = vld [vmem:[%s8 + $0x3c] sm:$0xf]
      %v1059 = vld [vmem:[%s8 + $0x40] sm:$0xf]
      %v1060 = vld [vmem:[%s8 + $0x44] sm:$0xf]
      %v1069 = vunpack.c.l.b16 %v1028
      %v1070 = vunpack.c.l.b16 %v1030
      %v1071 = vunpack.c.l.b16 %v1032
      %v1072 = vunpack.c.l.b16 %v1034
      %v1073 = vunpack.c.l.b16 %v1036
      %v1074 = vunpack.c.l.b16 %v1038
      %v1075 = vunpack.c.l.b16 %v1040
      %v1076 = vunpack.c.l.b16 %v1042
      %v1077 = vpack.c.b16 %v1070, %v1069
      %v1078 = vpack.c.b16 %v1072, %v1071
      %v1079 = vpack.c.b16 %v1074, %v1073
      %v1080 = vpack.c.b16 %v1076, %v1075
      %v1087 = vunpack.c.l.b16 %v1043
      %v1088 = vunpack.c.l.b16 %v1044
      %v1089 = vunpack.c.l.b16 %v1045
      %v1090 = vunpack.c.l.b16 %v1046
      %v1091 = vunpack.c.l.b16 %v1047
      %v1092 = vunpack.c.l.b16 %v1048
      %v1093 = vpack.c.b16 %v1088, %v1087
      %v1094 = vpack.c.b16 %v1090, %v1089
      %v1095 = vpack.c.b16 %v1092, %v1091
      %vm1099 = vcmask 392192
      %v1101 = vsel %vm1099, %v1077, 0
      %v1104 = vsel %vm1099, %v1078, 0
      %v1107 = vsel %vm1099, %v1079, 0
      %v1110 = vsel %vm1099, %v1080, 0
      %1112 = vmatpush.bf16.msra.mxu0 0
      %1113 = vmatpush.bf16.msra.mxu0 0
      %1114 = vmatpush.bf16.msra.mxu0 0
      %1115 = vmatpush.bf16.msra.mxu0 0
      %1116 = vmatpush.bf16.msra.mxu0 0
      %1117 = vmatpush.bf16.msra.mxu0 %v1095
      %1118 = vmatpush.bf16.msra.mxu0 %v1094
      %1119 = vmatpush.bf16.msra.mxu0 %v1093
      %1120 = vmatmul.bf16.gmra.mxu0 %v1101
      %v1121 = vpop.f32.mrf.mxu0
      %v1122 = vadd.f32 0.0, %v1121
      %v1123 = vpop.f32.mrf.mxu0
      %v1124 = vadd.f32 0.0, %v1123
      %1125 = vmatmul.bf16.gmra.mxu0 %v1104
      %v1126 = vpop.f32.mrf.mxu0
      %v1127 = vadd.f32 0.0, %v1126
      %v1128 = vpop.f32.mrf.mxu0
      %v1129 = vadd.f32 0.0, %v1128
      %1130 = vmatmul.bf16.gmra.mxu0 %v1107
      %v1131 = vpop.f32.mrf.mxu0
      %v1132 = vadd.f32 0.0, %v1131
      %v1133 = vpop.f32.mrf.mxu0
      %v1134 = vadd.f32 0.0, %v1133
      %1135 = vmatmul.bf16.gmra.mxu0 %v1110
      %v1136 = vpop.f32.mrf.mxu0
      %v1137 = vadd.f32 0.0, %v1136
      %v1138 = vpop.f32.mrf.mxu0
      %1139 = vdwg.mxu0
      %v1146 = vunpack.c.l.b16 %v1049
      %v1147 = vunpack.c.l.b16 %v1050
      %v1148 = vunpack.c.l.b16 %v1051
      %v1149 = vunpack.c.l.b16 %v1052
      %v1150 = vunpack.c.l.b16 %v1053
      %v1151 = vunpack.c.l.b16 %v1054
      %v1152 = vpack.c.b16 %v1147, %v1146
      %v1153 = vpack.c.b16 %v1149, %v1148
      %v1154 = vpack.c.b16 %v1151, %v1150
      %1158 = vmatpush.bf16.msra.mxu0 0
      %1159 = vmatpush.bf16.msra.mxu0 0
      %1160 = vmatpush.bf16.msra.mxu0 0
      %1161 = vmatpush.bf16.msra.mxu0 0
      %1162 = vmatpush.bf16.msra.mxu0 0
      %1163 = vmatpush.bf16.msra.mxu0 %v1154
      %1164 = vmatpush.bf16.msra.mxu0 %v1153
      %1165 = vmatpush.bf16.msra.mxu0 %v1152
      %1166 = vmatmul.bf16.gmra.mxu0 %v1101
      %v1167 = vpop.f32.mrf.mxu0
      %v1168 = vadd.f32 0.0, %v1167
      %v1169 = vpop.f32.mrf.mxu0
      %v1170 = vadd.f32 0.0, %v1169
      %1171 = vmatmul.bf16.gmra.mxu0 %v1104
      %v1172 = vpop.f32.mrf.mxu0
      %v1173 = vadd.f32 0.0, %v1172
      %v1174 = vpop.f32.mrf.mxu0
      %v1175 = vadd.f32 0.0, %v1174
      %1176 = vmatmul.bf16.gmra.mxu0 %v1107
      %v1177 = vpop.f32.mrf.mxu0
      %v1178 = vadd.f32 0.0, %v1177
      %v1179 = vpop.f32.mrf.mxu0
      %v1180 = vadd.f32 0.0, %v1179
      %1181 = vmatmul.bf16.gmra.mxu0 %v1110
      %v1182 = vpop.f32.mrf.mxu0
      %v1183 = vadd.f32 0.0, %v1182
      %v1184 = vpop.f32.mrf.mxu0
      %v1185 = vadd.f32 0.0, %v1184
      %1186 = vdwg.mxu0
      %v1193 = vunpack.c.l.b16 %v1055
      %v1194 = vunpack.c.l.b16 %v1056
      %v1195 = vunpack.c.l.b16 %v1057
      %v1196 = vunpack.c.l.b16 %v1058
      %v1197 = vunpack.c.l.b16 %v1059
      %v1198 = vunpack.c.l.b16 %v1060
      %v1199 = vpack.c.b16 %v1194, %v1193
      %v1200 = vpack.c.b16 %v1196, %v1195
      %v1201 = vpack.c.b16 %v1198, %v1197
      %1205 = vmatpush.bf16.msra.mxu0 0
      %1206 = vmatpush.bf16.msra.mxu0 0
      %1207 = vmatpush.bf16.msra.mxu0 0
      %1208 = vmatpush.bf16.msra.mxu0 0
      %1209 = vmatpush.bf16.msra.mxu0 0
      %1210 = vmatpush.bf16.msra.mxu0 %v1201
      %1211 = vmatpush.bf16.msra.mxu0 %v1200
      %1212 = vmatpush.bf16.msra.mxu0 %v1199
      %1213 = vmatmul.bf16.gmra.mxu0 %v1101
      %v1214 = vpop.f32.mrf.mxu0
      %v1215 = vpop.f32.mrf.mxu0
      %v1216 = vadd.f32 0.0, %v1215
      %1217 = vmatmul.bf16.gmra.mxu0 %v1104
      %v1218 = vpop.f32.mrf.mxu0
      %v1219 = vadd.f32 0.0, %v1218
      %v1220 = vpop.f32.mrf.mxu0
      %v1221 = vadd.f32 0.0, %v1220
      %1222 = vmatmul.bf16.gmra.mxu0 %v1107
      %v1223 = vpop.f32.mrf.mxu0
      %v1224 = vadd.f32 0.0, %v1223
      %v1225 = vpop.f32.mrf.mxu0
      %v1226 = vadd.f32 0.0, %v1225
      %1227 = vmatmul.bf16.gmra.mxu0 %v1110
      %v1228 = vpop.f32.mrf.mxu0
      %v1229 = vadd.f32 0.0, %v1228
      %v1230 = vpop.f32.mrf.mxu0
      %v1231 = vadd.f32 0.0, %v1230
      %1232 = vdwg.mxu0
      %v1233 = vadd.f32 %v1168, 0.0
      %v1234 = vadd.f32 %v1122, %v1170
      %v1235 = vadd.f32 %v1124, %v1173
      %v1236 = vadd.f32 %v1127, %v1175
      %v1237 = vadd.f32 %v1129, %v1178
      %v1238 = vadd.f32 %v1132, %v1180
      %v1239 = vadd.f32 %v1134, %v1183
      %v1240 = vadd.f32 %v1137, %v1185
      %v1241 = vadd.f32 %v1233, %v1216
      %v1242 = vadd.f32 %v1234, %v1219
      %v1243 = vadd.f32 %v1235, %v1221
      %v1244 = vadd.f32 %v1236, %v1224
      %v1245 = vadd.f32 %v1237, %v1226
      %v1246 = vadd.f32 %v1238, %v1229
      %v1247 = vadd.f32 %v1239, %v1231
      %v1248 = vadd.f32 %v1240, 0.0
      %v1249 = vld [vmem:[%s9] sm:$0x1]
      %v1251 = vperm.slane %v1249, 0
      %v1253 = vmul.f32 %v1241, %v1251
      %v1254 = vmul.f32 %v1242, %v1251
      %v1255 = vmul.f32 %v1243, %v1251
      %v1256 = vmul.f32 %v1244, %v1251
      %v1257 = vmul.f32 %v1245, %v1251
      %v1258 = vmul.f32 %v1246, %v1251
      %v1259 = vmul.f32 %v1247, %v1251
      %v1260 = vmul.f32 %v1248, %v1251
      %v1261 = vld [vmem:[%s10] sm:$0x1]
      %v1263 = vperm.slane %v1261, 0
      %v1265 = vadd.f32 %v1253, %v1263
      %v1266 = vadd.f32 %v1254, %v1263
      %v1267 = vadd.f32 %v1255, %v1263
      %v1268 = vadd.f32 %v1256, %v1263
      %v1269 = vadd.f32 %v1257, %v1263
      %v1270 = vadd.f32 %v1258, %v1263
      %v1271 = vadd.f32 %v1259, %v1263
      %v1272 = vadd.f32 %v1260, %v1263
      %v1273 = vmax.f32 %v1265, 0.0
      %v1274 = vmax.f32 %v1266, 0.0
      %v1275 = vmax.f32 %v1267, 0.0
      %v1276 = vmax.f32 %v1268, 0.0
      %v1277 = vmax.f32 %v1269, 0.0
      %v1278 = vmax.f32 %v1270, 0.0
      %v1279 = vmax.f32 %v1271, 0.0
      %v1280 = vmax.f32 %v1272, 0.0
      %v1281 = vpack.c.bf16 %v1274, %v1273
      %v1282 = vpack.c.bf16 %v1276, %v1275
      %v1283 = vpack.c.bf16 %v1278, %v1277
      %v1284 = vpack.c.bf16 %v1280, %v1279
      %v1285 = vld [vmem:[%s11] sm:$0xf]
      %v1286 = vld [vmem:[%s11 + $0x4] sm:$0xf]
      %v1289 = vunpack.c.l.b16 %v1285
      %v1290 = vunpack.c.l.b16 %v1286
      %v1291 = vpack.c.b16 %v1290, %v1289
      %v1294 = vsel %vm1002, %v1281, 0
      %v1297 = vsel %vm1002, %v1282, 0
      %v1300 = vsel %vm1002, %v1283, 0
      %v1303 = vsel %vm1002, %v1284, 0
      %1305 = vmatpush.bf16.msra.mxu0 0
      %1306 = vmatpush.bf16.msra.mxu0 0
      %1307 = vmatpush.bf16.msra.mxu0 0
      %1308 = vmatpush.bf16.msra.mxu0 0
      %1309 = vmatpush.bf16.msra.mxu0 0
      %1310 = vmatpush.bf16.msra.mxu0 0
      %1311 = vmatpush.bf16.msra.mxu0 0
      %1312 = vmatpush.bf16.msra.mxu0 %v1291
      %1313 = vmatmul.bf16.gmra.mxu0 %v1294
      %v1314 = vpop.f32.mrf.mxu0
      %v1315 = vadd.f32 %v686, %v1314
      %v1316 = vpop.f32.mrf.mxu0
      %v1317 = vadd.f32 %v687, %v1316
      %1318 = vmatmul.bf16.gmra.mxu0 %v1297
      %v1319 = vpop.f32.mrf.mxu0
      %v1320 = vadd.f32 %v688, %v1319
      %v1321 = vpop.f32.mrf.mxu0
      %v1322 = vadd.f32 %v689, %v1321
      %1323 = vmatmul.bf16.gmra.mxu0 %v1300
      %v1324 = vpop.f32.mrf.mxu0
      %v1325 = vadd.f32 %v690, %v1324
      %v1326 = vpop.f32.mrf.mxu0
      %v1327 = vadd.f32 %v691, %v1326
      %1328 = vmatmul.bf16.gmra.mxu0 %v1303
      %v1329 = vpop.f32.mrf.mxu0
      %v1330 = vadd.f32 %v692, %v1329
      %v1331 = vpop.f32.mrf.mxu0
      %v1332 = vadd.f32 %v693, %v1331
      %1333 = vdwg.mxu0
      %v1334 = vmax.f32 %v1315, 0.0
      %v1335 = vmax.f32 %v1317, 0.0
      %v1336 = vmax.f32 %v1320, 0.0
      %v1337 = vmax.f32 %v1322, 0.0
      %v1338 = vmax.f32 %v1325, 0.0
      %v1339 = vmax.f32 %v1327, 0.0
      %v1340 = vmax.f32 %v1330, 0.0
      %v1341 = vmax.f32 %v1332, 0.0
      %v1342 = vld [vmem:[%s671] sm:$0x3]
      %v1343 = vld [vmem:[%s671 + $0x2] sm:$0x3]
      %v1344 = vld [vmem:[%s671 + $0x4] sm:$0x3]
      %v1345 = vld [vmem:[%s671 + $0x6] sm:$0x3]
      %v1346 = vunpack.c.l.bf16 %v1342
      %v1347 = vunpack.c.l.bf16 %v1343
      %v1348 = vunpack.c.l.bf16 %v1344
      %v1349 = vunpack.c.l.bf16 %v1345
      %1354 = vst [vmem:[#allocation1] ss:$2 sm:$0xff] %v1346
      %s1355 = scalar_lea.vmem [#allocation1], 1
      %1356 = vst [vmem:[%s1355] ss:$2 sm:$0xff] %v1347
      %s1357 = scalar_lea.vmem [#allocation1], 16
      %1358 = vst [vmem:[%s1357] ss:$2 sm:$0xff] %v1348
      %s1359 = scalar_lea.vmem [#allocation1], 17
      %1360 = vst [vmem:[%s1359] ss:$2 sm:$0xff] %v1349
      %v1361 = vld.sshfl [vmem:[#allocation1] sm:$0xff pattern:$0x75316420]
      %v1362 = vld.sshfl [vmem:[#allocation1 + $0x10] sm:$0xff pattern:$0x75316420]
      loop: start=0, step=1, limit=2
      $region105: #{model.6} parent=103 // loop_pre_header
        _
      $region106: #{model.6} parent=103 // loop_header
        %s1366 = sphi 0, %s1370
        %p1367 = scmp.ge.s32.totalorder %s1366, 2
        %v1371 = vphi %v1361, %v1842
        %v1372 = vphi %v1362, %v1843
      $region107: #{model.6} parent=103 // loop_header_branch
        %1369 = sbr.rel (%p1367) target = $region111
      $region108: #{model.6} parent=103 // loop_body
        %s1373 = scalar_lea.vmem %s12, %s1366
        %v1374 = vld [vmem:[%s1373] sm:$0x1]
        %v1376 = vperm.slane %v1374, 0
        %v1378 = vmul.f32 %v1371, %v1376
        %v1379 = vmul.f32 %v1372, %v1376
        %s1380 = scalar_lea.vmem %s13, %s1366
        %v1381 = vld [vmem:[%s1380] sm:$0x1]
        %v1383 = vperm.slane %v1381, 0
        %v1385 = vadd.f32 %v1378, %v1383
        %v1386 = vadd.f32 %v1379, %v1383
        %v1387 = vmax.f32 %v1385, 0.0
        %v1388 = vmax.f32 %v1386, 0.0
        %v1389 = vpack.c.bf16 %v1388, %v1387
        %s1390 = smul.u32 %s1366, 4
        %s1391 = smul.addr %s1390, 4
        %s1392 = scalar_lea.vmem %s14, %s1391
        %v1393 = vld [vmem:[%s1392] sm:$0xf]
        %v1394 = vld [vmem:[%s1392 + $0x4] sm:$0xf]
        %v1395 = vld [vmem:[%s1392 + $0x8] sm:$0xf]
        %v1396 = vld [vmem:[%s1392 + $0xc] sm:$0xf]
        %v1401 = vunpack.c.l.b16 %v1393
        %v1402 = vunpack.c.l.b16 %v1394
        %v1403 = vunpack.c.l.b16 %v1395
        %v1404 = vunpack.c.l.b16 %v1396
        %v1405 = vpack.c.b16 %v1402, %v1401
        %v1406 = vpack.c.b16 %v1404, %v1403
        %v1410 = vsel %vm746, %v1389, 0
        %1412 = vmatpush.bf16.msra.mxu0 0
        %1413 = vmatpush.bf16.msra.mxu0 0
        %1414 = vmatpush.bf16.msra.mxu0 0
        %1415 = vmatpush.bf16.msra.mxu0 0
        %1416 = vmatpush.bf16.msra.mxu0 0
        %1417 = vmatpush.bf16.msra.mxu0 0
        %1418 = vmatpush.bf16.msra.mxu0 %v1406
        %1419 = vmatpush.bf16.msra.mxu0 %v1405
        %1420 = vmatmul.bf16.gmra.mxu0 %v1410
        %v1421 = vpop.f32.mrf.mxu0
        %v1422 = vadd.f32 0.0, %v1421
        %v1423 = vpop.f32.mrf.mxu0
        %v1424 = vadd.f32 0.0, %v1423
        %1425 = vdwg.mxu0
        %s1426 = scalar_lea.vmem %s15, %s1366
        %v1427 = vld [vmem:[%s1426] sm:$0x1]
        %v1429 = vperm.slane %v1427, 0
        %v1431 = vmul.f32 %v1422, %v1429
        %v1432 = vmul.f32 %v1424, %v1429
        %s1433 = scalar_lea.vmem %s16, %s1366
        %v1434 = vld [vmem:[%s1433] sm:$0x1]
        %v1436 = vperm.slane %v1434, 0
        %v1438 = vadd.f32 %v1431, %v1436
        %v1439 = vadd.f32 %v1432, %v1436
        %v1440 = vmax.f32 %v1438, 0.0
        %v1441 = vmax.f32 %v1439, 0.0
        %v1442 = vpack.c.bf16 %v1440, %v1440
        %v1443 = vpack.c.bf16 %v1441, %v1441
        %v1446 = vrot.slane %v1442, 2
        %v1447 = vrot.slane %v1443, 2
        %vm1448 = vcmask 1041408
        %v1451 = vsel %vm1448, %v1442, %v1446
        %vm1452 = vcmask 1043458
        %v1453 = vsel %vm1452, %v1442, %v1446
        %v1455 = vrot.slane %v1453, 2
        %v1458 = vsel %vm1448, %v1443, %v1447
        %v1459 = vsel %vm1452, %v1443, %v1447
        %v1461 = vrot.slane %v1459, 2
        %1462 = vst [vmem:[#allocation1] ss:$4 sm:$0xff] %v1451
        %v1463 = vld.sshfl [vmem:[#allocation1] sm:$0xff pattern:$0x73625140]
        %s1465 = scalar_lea.vmem [#allocation1], 32
        %1466 = vst [vmem:[%s1465] ss:$4 sm:$0xff] %v1455
        %v1467 = vld.sshfl [vmem:[#allocation1 + $0x20] sm:$0xff pattern:$0x73625140]
        %1468 = vst [vmem:[#allocation1] ss:$4 sm:$0xff] %v1458
        %v1469 = vld.sshfl [vmem:[#allocation1] sm:$0xff pattern:$0x73625140]
        %1471 = vst [vmem:[%s1465] ss:$4 sm:$0xff] %v1461
        %v1472 = vld.sshfl [vmem:[#allocation1 + $0x20] sm:$0xff pattern:$0x73625140]
        %v1473 = vshrl.u32 %v1463, 16
        %v1475 = vrot.slane %v1473, 7
        %v1476 = vshll.u32 %v1463, 16
        %v1478 = vor.u32 %v1475, %v1476
        %v1479 = vshrl.u32 %v1467, 16
        %v1481 = vrot.slane %v1479, 7
        %v1482 = vshll.u32 %v1467, 16
        %v1484 = vor.u32 %v1481, %v1482
        %v1485 = vshrl.u32 %v1469, 16
        %v1487 = vrot.slane %v1485, 7
        %v1488 = vshll.u32 %v1469, 16
        %v1490 = vor.u32 %v1487, %v1488
        %v1491 = vshrl.u32 %v1472, 16
        %v1493 = vrot.slane %v1491, 7
        %v1494 = vshll.u32 %v1472, 16
        %v1496 = vor.u32 %v1493, %v1494
        %v1501 = vsel %vm918, 0, %v1478
        %v1502 = vsel %vm918, 0, %v1484
        %v1503 = vsel %vm918, 0, %v1490
        %v1504 = vsel %vm918, 0, %v1496
        %1505 = vst [vmem:[#allocation1] ss:$4 sm:$0xff] %v1451
        %v1506 = vld.sshfl [vmem:[#allocation1] sm:$0xff pattern:$0x73625140]
        %s1507 = scalar_lea.vmem [#allocation1], 32
        %1508 = vst [vmem:[%s1507] ss:$4 sm:$0xff] %v1455
        %v1509 = vld.sshfl [vmem:[#allocation1 + $0x20] sm:$0xff pattern:$0x73625140]
        %1510 = vst [vmem:[#allocation1] ss:$4 sm:$0xff] %v1458
        %v1511 = vld.sshfl [vmem:[#allocation1] sm:$0xff pattern:$0x73625140]
        %1512 = vst [vmem:[%s1507] ss:$4 sm:$0xff] %v1461
        %v1513 = vld.sshfl [vmem:[#allocation1 + $0x20] sm:$0xff pattern:$0x73625140]
        %v1514 = vshrl.u32 %v1506, 16
        %v1516 = vshll.u32 %v1506, 16
        %v1518 = vrot.slane %v1516, 1
        %v1519 = vor.u32 %v1514, %v1518
        %v1520 = vshrl.u32 %v1509, 16
        %v1522 = vshll.u32 %v1509, 16
        %v1524 = vrot.slane %v1522, 1
        %v1525 = vor.u32 %v1520, %v1524
        %v1526 = vshrl.u32 %v1511, 16
        %v1528 = vshll.u32 %v1511, 16
        %v1530 = vrot.slane %v1528, 1
        %v1531 = vor.u32 %v1526, %v1530
        %v1532 = vshrl.u32 %v1513, 16
        %v1534 = vshll.u32 %v1513, 16
        %v1536 = vrot.slane %v1534, 1
        %v1537 = vor.u32 %v1532, %v1536
        %vm1542 = vcmask 1041408
        %vm1543 = vsmask.f32 1280
        %vm1544 = vmand %vm1542, %vm1543
        %v1545 = vsel %vm1544, %v1519, 0
        %v1546 = vsel %vm1544, %v1525, 0
        %v1547 = vsel %vm1544, %v1531, 0
        %v1548 = vsel %vm1544, %v1537, 0
        %1549 = vst [vmem:[#allocation1] ss:$4 sm:$0xff] %v1451
        %v1550 = vld.sshfl [vmem:[#allocation1] sm:$0xff pattern:$0x73625140]
        %s1552 = scalar_lea.vmem [#allocation1], 32
        %1553 = vst [vmem:[%s1552] ss:$4 sm:$0xff] %v1455
        %v1554 = vld.sshfl [vmem:[#allocation1 + $0x20] sm:$0xff pattern:$0x73625140]
        %1556 = vst [vmem:[#allocation1] ss:$4 sm:$0xff] %v1458
        %v1557 = vld.sshfl [vmem:[#allocation1] sm:$0xff pattern:$0x73625140]
        %1559 = vst [vmem:[%s1552] ss:$4 sm:$0xff] %v1461
        %v1560 = vld.sshfl [vmem:[#allocation1 + $0x20] sm:$0xff pattern:$0x73625140]
        %1562 = vrot.lane.b32.xlu0 %v1550, 16
        %v1563 = vpop.permute.xlu0 %1562
        %1564 = vrot.lane.b32.xlu0 %v1554, 16
        %v1565 = vpop.permute.xlu0 %1564
        %1566 = vrot.lane.b32.xlu0 %v1557, 16
        %v1567 = vpop.permute.xlu0 %1566
        %1568 = vrot.lane.b32.xlu0 %v1560, 16
        %v1569 = vpop.permute.xlu0 %1568
        %1574 = vrot.lane.b32.xlu0 %v1545, 32
        %v1575 = vpop.permute.xlu0 %1574
        %1576 = vrot.lane.b32.xlu0 %v1546, 32
        %v1577 = vpop.permute.xlu0 %1576
        %1578 = vrot.lane.b32.xlu0 %v1547, 32
        %v1579 = vpop.permute.xlu0 %1578
        %1580 = vrot.lane.b32.xlu0 %v1548, 32
        %v1581 = vpop.permute.xlu0 %1580
        %v1584 = vsel %vm1002, %v1501, %v1563
        %v1587 = vsel %vm1002, %v1502, %v1565
        %v1590 = vsel %vm1002, %v1503, %v1567
        %v1593 = vsel %vm1002, %v1504, %v1569
        %v1595 = vsel %vm746, %v1584, %v1575
        %v1597 = vsel %vm746, %v1587, %v1577
        %v1599 = vsel %vm746, %v1590, %v1579
        %v1601 = vsel %vm746, %v1593, %v1581
        %s1602 = smul.u32 %s1366, 18
        %s1603 = smul.addr %s1602, 4
        %s1604 = scalar_lea.vmem %s17, %s1603
        %v1605 = vld [vmem:[%s1604] sm:$0xf]
        %v1606 = vld [vmem:[%s1604 + $0x4] sm:$0xf]
        %v1607 = vld [vmem:[%s1604 + $0x8] sm:$0xf]
        %v1608 = vld [vmem:[%s1604 + $0xc] sm:$0xf]
        %v1609 = vld [vmem:[%s1604 + $0x10] sm:$0xf]
        %v1610 = vld [vmem:[%s1604 + $0x14] sm:$0xf]
        %v1611 = vld [vmem:[%s1604 + $0x18] sm:$0xf]
        %v1612 = vld [vmem:[%s1604 + $0x1c] sm:$0xf]
        %v1613 = vld [vmem:[%s1604 + $0x20] sm:$0xf]
        %v1614 = vld [vmem:[%s1604 + $0x24] sm:$0xf]
        %v1615 = vld [vmem:[%s1604 + $0x28] sm:$0xf]
        %v1616 = vld [vmem:[%s1604 + $0x2c] sm:$0xf]
        %v1617 = vld [vmem:[%s1604 + $0x30] sm:$0xf]
        %v1618 = vld [vmem:[%s1604 + $0x34] sm:$0xf]
        %v1619 = vld [vmem:[%s1604 + $0x38] sm:$0xf]
        %v1620 = vld [vmem:[%s1604 + $0x3c] sm:$0xf]
        %v1621 = vld [vmem:[%s1604 + $0x40] sm:$0xf]
        %v1622 = vld [vmem:[%s1604 + $0x44] sm:$0xf]
        %1623 = vst [vmem:[#allocation1] ss:$4 sm:$0xff] %v1595
        %s1624 = scalar_lea.vmem [#allocation1], 1
        %1625 = vst [vmem:[%s1624] ss:$4 sm:$0xff] %v1597
        %s1626 = scalar_lea.vmem [#allocation1], 2
        %1627 = vst [vmem:[%s1626] ss:$4 sm:$0xff] %v1599
        %s1628 = scalar_lea.vmem [#allocation1], 3
        %1629 = vst [vmem:[%s1628] ss:$4 sm:$0xff] %v1601
        %v1630 = vld.sshfl [vmem:[#allocation1] sm:$0xff pattern:$0x73625140]
        %v1637 = vunpack.c.l.b16 %v1605
        %v1638 = vunpack.c.l.b16 %v1606
        %v1639 = vunpack.c.l.b16 %v1607
        %v1640 = vunpack.c.l.b16 %v1608
        %v1641 = vunpack.c.l.b16 %v1609
        %v1642 = vunpack.c.l.b16 %v1610
        %v1643 = vpack.c.b16 %v1638, %v1637
        %v1644 = vpack.c.b16 %v1640, %v1639
        %v1645 = vpack.c.b16 %v1642, %v1641
        %v1649 = vsel %vm1099, %v1630, 0
        %1651 = vmatpush.bf16.msra.mxu0 0
        %1652 = vmatpush.bf16.msra.mxu0 0
        %1653 = vmatpush.bf16.msra.mxu0 0
        %1654 = vmatpush.bf16.msra.mxu0 0
        %1655 = vmatpush.bf16.msra.mxu0 0
        %1656 = vmatpush.bf16.msra.mxu0 %v1645
        %1657 = vmatpush.bf16.msra.mxu0 %v1644
        %1658 = vmatpush.bf16.msra.mxu0 %v1643
        %1659 = vmatmul.bf16.gmra.mxu0 %v1649
        %v1660 = vpop.f32.mrf.mxu0
        %v1661 = vadd.f32 0.0, %v1660
        %v1662 = vpop.f32.mrf.mxu0
        %v1663 = vadd.f32 0.0, %v1662
        %1664 = vdwg.mxu0
        %v1666 = vrot.slane %v1661, 4
        %1668 = vst [vmem:[#allocation1] ss:$4 sm:$0xff] %v1595
        %s1669 = scalar_lea.vmem [#allocation1], 1
        %1670 = vst [vmem:[%s1669] ss:$4 sm:$0xff] %v1597
        %s1671 = scalar_lea.vmem [#allocation1], 2
        %1672 = vst [vmem:[%s1671] ss:$4 sm:$0xff] %v1599
        %s1673 = scalar_lea.vmem [#allocation1], 3
        %1674 = vst [vmem:[%s1673] ss:$4 sm:$0xff] %v1601
        %v1675 = vld.sshfl [vmem:[#allocation1] sm:$0xff pattern:$0x73625140]
        %v1682 = vunpack.c.l.b16 %v1611
        %v1683 = vunpack.c.l.b16 %v1612
        %v1684 = vunpack.c.l.b16 %v1613
        %v1685 = vunpack.c.l.b16 %v1614
        %v1686 = vunpack.c.l.b16 %v1615
        %v1687 = vunpack.c.l.b16 %v1616
        %v1688 = vpack.c.b16 %v1683, %v1682
        %v1689 = vpack.c.b16 %v1685, %v1684
        %v1690 = vpack.c.b16 %v1687, %v1686
        %v1694 = vsel %vm1099, %v1675, 0
        %1696 = vmatpush.bf16.msra.mxu0 0
        %1697 = vmatpush.bf16.msra.mxu0 0
        %1698 = vmatpush.bf16.msra.mxu0 0
        %1699 = vmatpush.bf16.msra.mxu0 0
        %1700 = vmatpush.bf16.msra.mxu0 0
        %1701 = vmatpush.bf16.msra.mxu0 %v1690
        %1702 = vmatpush.bf16.msra.mxu0 %v1689
        %1703 = vmatpush.bf16.msra.mxu0 %v1688
        %1704 = vmatmul.bf16.gmra.mxu0 %v1694
        %v1705 = vpop.f32.mrf.mxu0
        %v1706 = vadd.f32 0.0, %v1705
        %v1707 = vpop.f32.mrf.mxu0
        %v1708 = vadd.f32 0.0, %v1707
        %1709 = vdwg.mxu0
        %v1712 = vrot.slane %v1706, 4
        %v1713 = vrot.slane %v1708, 4
        %1716 = vst [vmem:[#allocation1] ss:$4 sm:$0xff] %v1595
        %s1717 = scalar_lea.vmem [#allocation1], 1
        %1718 = vst [vmem:[%s1717] ss:$4 sm:$0xff] %v1597
        %s1719 = scalar_lea.vmem [#allocation1], 2
        %1720 = vst [vmem:[%s1719] ss:$4 sm:$0xff] %v1599
        %s1721 = scalar_lea.vmem [#allocation1], 3
        %1722 = vst [vmem:[%s1721] ss:$4 sm:$0xff] %v1601
        %v1723 = vld.sshfl [vmem:[#allocation1] sm:$0xff pattern:$0x73625140]
        %v1730 = vunpack.c.l.b16 %v1617
        %v1731 = vunpack.c.l.b16 %v1618
        %v1732 = vunpack.c.l.b16 %v1619
        %v1733 = vunpack.c.l.b16 %v1620
        %v1734 = vunpack.c.l.b16 %v1621
        %v1735 = vunpack.c.l.b16 %v1622
        %v1736 = vpack.c.b16 %v1731, %v1730
        %v1737 = vpack.c.b16 %v1733, %v1732
        %v1738 = vpack.c.b16 %v1735, %v1734
        %v1742 = vsel %vm1099, %v1723, 0
        %1744 = vmatpush.bf16.msra.mxu0 0
        %1745 = vmatpush.bf16.msra.mxu0 0
        %1746 = vmatpush.bf16.msra.mxu0 0
        %1747 = vmatpush.bf16.msra.mxu0 0
        %1748 = vmatpush.bf16.msra.mxu0 0
        %1749 = vmatpush.bf16.msra.mxu0 %v1738
        %1750 = vmatpush.bf16.msra.mxu0 %v1737
        %1751 = vmatpush.bf16.msra.mxu0 %v1736
        %1752 = vmatmul.bf16.gmra.mxu0 %v1742
        %v1753 = vpop.f32.mrf.mxu0
        %v1754 = vadd.f32 0.0, %v1753
        %v1755 = vpop.f32.mrf.mxu0
        %v1756 = vadd.f32 0.0, %v1755
        %1757 = vdwg.mxu0
        %v1760 = vrot.slane %v1754, 4
        %v1761 = vrot.slane %v1756, 4
        %v1764 = vadd.f32 %v1706, 0.0
        %v1765 = vadd.f32 %v1661, %v1712
        %v1766 = vadd.f32 %v1666, %v1708
        %v1767 = vadd.f32 %v1663, %v1713
        %v1768 = vadd.f32 %v1764, %v1760
        %v1769 = vadd.f32 %v1765, %v1756
        %v1770 = vadd.f32 %v1766, %v1761
        %v1771 = vadd.f32 %v1767, 0.0
        %s1772 = scalar_lea.vmem %s18, %s1366
        %v1773 = vld [vmem:[%s1772] sm:$0x1]
        %v1775 = vperm.slane %v1773, 0
        %v1777 = vrot.slane %v1775, 4
        %v1779 = vmul.f32 %v1768, %v1775
        %v1780 = vmul.f32 %v1769, %v1777
        %v1781 = vmul.f32 %v1770, %v1775
        %v1782 = vmul.f32 %v1771, %v1777
        %s1783 = scalar_lea.vmem %s19, %s1366
        %v1784 = vld [vmem:[%s1783] sm:$0x1]
        %v1786 = vperm.slane %v1784, 0
        %v1788 = vrot.slane %v1786, 4
        %v1790 = vadd.f32 %v1779, %v1786
        %v1791 = vadd.f32 %v1780, %v1788
        %v1792 = vadd.f32 %v1781, %v1786
        %v1793 = vadd.f32 %v1782, %v1788
        %v1794 = vmax.f32 %v1790, 0.0
        %v1795 = vmax.f32 %v1791, 0.0
        %v1796 = vmax.f32 %v1792, 0.0
        %v1797 = vmax.f32 %v1793, 0.0
        %1802 = vst [vmem:[#allocation1] ss:$2 sm:$0xff] %v1794
        %s1803 = scalar_lea.vmem [#allocation1], 1
        %1804 = vst [vmem:[%s1803] ss:$2 sm:$0xff] %v1795
        %s1805 = scalar_lea.vmem [#allocation1], 16
        %1806 = vst [vmem:[%s1805] ss:$2 sm:$0xff] %v1796
        %s1807 = scalar_lea.vmem [#allocation1], 17
        %1808 = vst [vmem:[%s1807] ss:$2 sm:$0xff] %v1797
        %v1809 = vld.sshfl [vmem:[#allocation1] sm:$0xff pattern:$0x75316420]
        %v1810 = vld.sshfl [vmem:[#allocation1 + $0x10] sm:$0xff pattern:$0x75316420]
        %v1813 = vpack.c.bf16 %v1810, %v1809
        %s1814 = smul.u32 %s1366, 2
        %s1815 = smul.addr %s1814, 4
        %s1816 = scalar_lea.vmem %s20, %s1815
        %v1817 = vld [vmem:[%s1816] sm:$0xf]
        %v1818 = vld [vmem:[%s1816 + $0x4] sm:$0xf]
        %v1821 = vunpack.c.l.b16 %v1817
        %v1822 = vunpack.c.l.b16 %v1818
        %v1823 = vpack.c.b16 %v1822, %v1821
        %v1826 = vsel %vm1002, %v1813, 0
        %1828 = vmatpush.bf16.msra.mxu0 0
        %1829 = vmatpush.bf16.msra.mxu0 0
        %1830 = vmatpush.bf16.msra.mxu0 0
        %1831 = vmatpush.bf16.msra.mxu0 0
        %1832 = vmatpush.bf16.msra.mxu0 0
        %1833 = vmatpush.bf16.msra.mxu0 0
        %1834 = vmatpush.bf16.msra.mxu0 0
        %1835 = vmatpush.bf16.msra.mxu0 %v1823
        %1836 = vmatmul.bf16.gmra.mxu0 %v1826
        %v1837 = vpop.f32.mrf.mxu0
        %v1838 = vadd.f32 %v1371, %v1837
        %v1839 = vpop.f32.mrf.mxu0
        %v1840 = vadd.f32 %v1372, %v1839
        %1841 = vdwg.mxu0
        %v1842 = vmax.f32 %v1838, 0.0
        %v1843 = vmax.f32 %v1840, 0.0
      $region109: #{model.6} parent=103 // loop_footer
        %s1370 = sadd.s32 1, %s1366
      $region110: #{model.6} parent=103 // loop_footer_branch
        %1365 = sbr.rel target = $region106
      $region111: #{model.6} parent=103 // loop_exit
        _
      %v1846 = vrot.slane %v1371, 4
      %v1847 = vrot.slane %v1372, 4
      %v1850 = vpack.c.bf16 %v1371, %v1371
      %v1851 = vpack.c.bf16 %v1846, %v1846
      %v1852 = vpack.c.bf16 %v1372, %v1372
      %v1853 = vpack.c.bf16 %v1847, %v1847
      %v1854 = vld [vmem:[%s2] sm:$0xf]
      %vm1855 = vcmask 31744
      %v1857 = vsel %vm1855, %v1854, 0
      %vm1859 = vcmask 1041408
      %v1861 = vsel %vm1859, %v1850, 0
      %1863 = vmatpush.bf16.msra.mxu0 0
      %1864 = vmatpush.bf16.msra.mxu0 0
      %1865 = vmatpush.bf16.msra.mxu0 0
      %1866 = vmatpush.bf16.msra.mxu0 0
      %1867 = vmatpush.bf16.msra.mxu0 0
      %1868 = vmatpush.bf16.msra.mxu0 0
      %1869 = vmatpush.bf16.msra.mxu0 0
      %1870 = vmatpush.bf16.msra.mxu0 %v1861
      %1871 = vmatmul.bf16.gmra.mxu0 %v1857
      %v1872 = vpop.f32.mrf.mxu0
      %v1873 = vadd.f32 0.0, %v1872
      %v1874 = vpop.f32.mrf.mxu0
      %1875 = vdwg.mxu0
      %v1877 = vsel %vm1859, %v1851, 0
      %1879 = vmatpush.bf16.msra.mxu0 0
      %1880 = vmatpush.bf16.msra.mxu0 0
      %1881 = vmatpush.bf16.msra.mxu0 0
      %1882 = vmatpush.bf16.msra.mxu0 0
      %1883 = vmatpush.bf16.msra.mxu0 0
      %1884 = vmatpush.bf16.msra.mxu0 0
      %1885 = vmatpush.bf16.msra.mxu0 0
      %1886 = vmatpush.bf16.msra.mxu0 %v1877
      %1887 = vmatmul.bf16.gmra.mxu0 %v1857
      %v1888 = vpop.f32.mrf.mxu0
      %v1889 = vadd.f32 0.0, %v1888
      %v1890 = vpop.f32.mrf.mxu0
      %1891 = vdwg.mxu0
      %v1893 = vsel %vm1859, %v1852, 0
      %1895 = vmatpush.bf16.msra.mxu0 0
      %1896 = vmatpush.bf16.msra.mxu0 0
      %1897 = vmatpush.bf16.msra.mxu0 0
      %1898 = vmatpush.bf16.msra.mxu0 0
      %1899 = vmatpush.bf16.msra.mxu0 0
      %1900 = vmatpush.bf16.msra.mxu0 0
      %1901 = vmatpush.bf16.msra.mxu0 0
      %1902 = vmatpush.bf16.msra.mxu0 %v1893
      %1903 = vmatmul.bf16.gmra.mxu0 %v1857
      %v1904 = vpop.f32.mrf.mxu0
      %v1905 = vadd.f32 0.0, %v1904
      %v1906 = vpop.f32.mrf.mxu0
      %1907 = vdwg.mxu0
      %v1909 = vsel %vm1859, %v1853, 0
      %1911 = vmatpush.bf16.msra.mxu0 0
      %1912 = vmatpush.bf16.msra.mxu0 0
      %1913 = vmatpush.bf16.msra.mxu0 0
      %1914 = vmatpush.bf16.msra.mxu0 0
      %1915 = vmatpush.bf16.msra.mxu0 0
      %1916 = vmatpush.bf16.msra.mxu0 0
      %1917 = vmatpush.bf16.msra.mxu0 0
      %1918 = vmatpush.bf16.msra.mxu0 %v1909
      %1919 = vmatmul.bf16.gmra.mxu0 %v1857
      %v1920 = vpop.f32.mrf.mxu0
      %v1921 = vadd.f32 0.0, %v1920
      %v1922 = vpop.f32.mrf.mxu0
      %1923 = vdwg.mxu0
      %v1924 = vadd.f32 %v1334, %v1873
      %v1925 = vadd.f32 %v1335, %v1873
      %v1926 = vadd.f32 %v1336, %v1889
      %v1927 = vadd.f32 %v1337, %v1889
      %v1928 = vadd.f32 %v1338, %v1905
      %v1929 = vadd.f32 %v1339, %v1905
      %v1930 = vadd.f32 %v1340, %v1921
      %v1931 = vadd.f32 %v1341, %v1921
      %v1932 = vpack.c.bf16 %v1924, %v1924
      %v1933 = vpack.c.bf16 %v1925, %v1925
      %v1934 = vpack.c.bf16 %v1926, %v1926
      %v1935 = vpack.c.bf16 %v1927, %v1927
      %v1936 = vpack.c.bf16 %v1928, %v1928
      %v1937 = vpack.c.bf16 %v1929, %v1929
      %v1938 = vpack.c.bf16 %v1930, %v1930
      %v1939 = vpack.c.bf16 %v1931, %v1931
      %vm1940 = vcmask 257024
      %1941 = vst.msk [vmem:[%s676] sm:$0xf] %vm1940, %v1932
      %1942 = vst.msk [vmem:[%s676 + $0x4] sm:$0xf] %vm1940, %v1933
      %1943 = vst.msk [vmem:[%s676 + $0x8] sm:$0xf] %vm1940, %v1934
      %1944 = vst.msk [vmem:[%s676 + $0xc] sm:$0xf] %vm1940, %v1935
      %1945 = vst.msk [vmem:[%s676 + $0x10] sm:$0xf] %vm1940, %v1936
      %1946 = vst.msk [vmem:[%s676 + $0x14] sm:$0xf] %vm1940, %v1937
      %1947 = vst.msk [vmem:[%s676 + $0x18] sm:$0xf] %vm1940, %v1938
      %1948 = vst.msk [vmem:[%s676 + $0x1c] sm:$0xf] %vm1940, %v1939
      %p1949 = scmp.lt.s32.totalorder %s32, 1
      %s1950 = scalar_select %p1949, %s32, 1
      %s1951 = smul.addr %s1950, 8
      %s1952 = smul.addr %s1951, 4
      %s1953 = scalar_lea.vmem %s21, %s1952
      // Predicated region
      $region112: #{model.6} parent=103 // pred_check
        %p1954 = pneg %p501
      $region113: #{model.6} parent=103 // pred_check_branch
        %1956 = sbr.rel (%p1954) target = $region115
      $region114: #{model.6} parent=103 // pred_region
        _
      $region115: #{model.6} parent=103 // pred_fallthru
        _
    $region104: #{model.6} parent=5 // pred_fallthru
      _
    %p1957 = scmp.le.s32.totalorder 2, %s27
    // Predicated region
    $region116: #{model.6} parent=5 // pred_check
      %p1958 = pneg %p1957
    $region117: #{model.6} parent=5 // pred_check_branch
      %1960 = sbr.rel (%p1958) target = $region119
    $region118: #{model.6} parent=5 // pred_region
      %s1961 = ssub.s32 %s27, 2
      // Predicated region
      $region120: #{model.6} parent=118 // pred_check
        %p1962 = pneg %p507
      $region121: #{model.6} parent=118 // pred_check_branch
        %1964 = sbr.rel (%p1962) target = $region123
      $region122: #{model.6} parent=118 // pred_region
        %p1965 = scmp.lt.s32.totalorder %s33, 1
        %s1966 = scalar_select %p1965, %s33, 1
        %s1967 = smul.addr %s1966, 8
        %s1968 = smul.addr %s1967, 4
        %s1969 = scalar_lea.vmem %s21, %s1968
      $region123: #{model.6} parent=118 // pred_fallthru
        _
    $region119: #{model.6} parent=5 // pred_fallthru
      _
  $region6: #{model.6} parent=0 // loop_footer
    %s31 = sadd.s32 1, %s27
  $region7: #{model.6} parent=0 // loop_footer_branch
    %26 = sbr.rel target = $region3
  $region8: #{model.6} parent=0 // loop_exit
    _

// kernel: model.7
$region0: #{model.7}
  #allocation0 [shape = 'u32[]', space=smem, size = 0x4, offset = 0x4, fixed_abs, tag = 'smem constant byte address 0x4 - core index']
  #allocation1 [shape = 'u32[72,128]{1,0:T(1,128)}', space=vmem, size = 0x9000, scoped, tag = 'internal scratch']
  %s0 = inlined_call_operand.hbm [shape: f32[2,16,16,32], index: 0, kind: input, shape index: {}]
  %s1 = inlined_call_operand.vmem [shape: bf16[2,8,8,32], index: 1, kind: input, shape index: {}]
  %s2 = inlined_call_operand.vmem [shape: bf16[16,8], index: 2, kind: input, shape index: {}]
  %s3 = inlined_call_operand.vmem [shape: f32[1,1,32], index: 3, kind: input, shape index: {}]
  %s4 = inlined_call_operand.vmem [shape: f32[1,1,32], index: 4, kind: input, shape index: {}]
  %s5 = inlined_call_operand.vmem [shape: bf16[1,32,16], index: 5, kind: input, shape index: {}]
  %s6 = inlined_call_operand.vmem [shape: f32[1,1,16], index: 6, kind: input, shape index: {}]
  %s7 = inlined_call_operand.vmem [shape: f32[1,1,16], index: 7, kind: input, shape index: {}]
  %s8 = inlined_call_operand.vmem [shape: bf16[1,144,16], index: 8, kind: input, shape index: {}]
  %s9 = inlined_call_operand.vmem [shape: f32[1,1,16], index: 9, kind: input, shape index: {}]
  %s10 = inlined_call_operand.vmem [shape: f32[1,1,16], index: 10, kind: input, shape index: {}]
  %s11 = inlined_call_operand.vmem [shape: bf16[1,16,32], index: 11, kind: input, shape index: {}]
  %s12 = inlined_call_operand.vmem [shape: f32[1,1,32], index: 12, kind: input, shape index: {}]
  %s13 = inlined_call_operand.vmem [shape: f32[1,1,32], index: 13, kind: input, shape index: {}]
  %s14 = inlined_call_operand.vmem [shape: bf16[1,32,16], index: 14, kind: input, shape index: {}]
  %s15 = inlined_call_operand.vmem [shape: f32[1,1,16], index: 15, kind: input, shape index: {}]
  %s16 = inlined_call_operand.vmem [shape: f32[1,1,16], index: 16, kind: input, shape index: {}]
  %s17 = inlined_call_operand.vmem [shape: bf16[1,144,16], index: 17, kind: input, shape index: {}]
  %s18 = inlined_call_operand.vmem [shape: f32[1,1,16], index: 18, kind: input, shape index: {}]
  %s19 = inlined_call_operand.vmem [shape: f32[1,1,16], index: 19, kind: input, shape index: {}]
  %s20 = inlined_call_operand.vmem [shape: bf16[1,16,32], index: 20, kind: input, shape index: {}]
  %s21 = inlined_call_operand.hbm [shape: f32[2,16,16,32], index: 21, kind: output, shape index: {}]
  %s22 = sld [smem:[#allocation0]]
  $region121: #{model.7} parent=0
    _
  %s24 = ssub.s32 1, %s22
  %s25 = scalar_select 0, %s24, %s22
  $region1: #{model.7} parent=0
    #allocation2 [shape = 'u8[262144]{0}', space=vmem, size = 0x40000, scoped, tag = 'input window, operand 0']
    #allocation3 [shape = 's32[2]{0}', space=sflag, size = 0x8, scoped, tag = 'scoped memory for model.7']
    #allocation4 [shape = 's32[2]{0}', space=sflag, size = 0x8, scoped, tag = 'scoped memory for model.7']
    #allocation5 [shape = 'u8[262144]{0}', space=vmem, size = 0x40000, scoped, tag = 'output window, operand 0']
    %26 = vsyncpa [#allocation3], 0
    %s27 = scalar_lea.sflag [#allocation3], 1
    %28 = vsyncpa %s27, 0
    %29 = vsyncpa [#allocation4], 0
    %s30 = scalar_lea.sflag [#allocation4], 1
    %31 = vsyncpa %s30, 0
    loop: start=0, step=1, limit=4
    $region2: #{model.7} parent=1 // loop_pre_header
      _
    $region3: #{model.7} parent=1 // loop_header
      %s33 = sphi 0, %s37
      %p34 = scmp.ge.s32.totalorder %s33, 4
      %s43 = sphi 0, %s45
      %s46 = sphi 0, %s43
      %s47 = sphi 0, %s46
      %s63 = sphi 0, %s47
      %s69 = sphi 0, %s71
      %s72 = sphi 0, %s69
      %s73 = sphi 0, %s72
      %s89 = sphi 0, %s73
      %s93 = sphi 0, %s93
      %s95 = sphi 0, %s93
      %s96 = sphi 0, %s95
      %s110 = sphi 0, %s96
      %s114 = sphi 0, %s114
      %s116 = sphi 0, %s114
      %s117 = sphi 0, %s116
      %s131 = sphi 0, %s117
      %s135 = sphi 0, %s135
      %s137 = sphi 0, %s135
      %s138 = sphi 0, %s137
      %s152 = sphi 0, %s138
      %s156 = sphi 0, %s156
      %s158 = sphi 0, %s156
      %s159 = sphi 0, %s158
      %s173 = sphi 0, %s159
      %s177 = sphi 0, %s177
      %s179 = sphi 0, %s177
      %s180 = sphi 0, %s179
      %s194 = sphi 0, %s180
      %s198 = sphi 0, %s198
      %s200 = sphi 0, %s198
      %s201 = sphi 0, %s200
      %s215 = sphi 0, %s201
      %s219 = sphi 0, %s219
      %s221 = sphi 0, %s219
      %s222 = sphi 0, %s221
      %s236 = sphi 0, %s222
      %s240 = sphi 0, %s240
      %s242 = sphi 0, %s240
      %s243 = sphi 0, %s242
      %s257 = sphi 0, %s243
      %s261 = sphi 0, %s261
      %s263 = sphi 0, %s261
      %s264 = sphi 0, %s263
      %s278 = sphi 0, %s264
      %s282 = sphi 0, %s282
      %s284 = sphi 0, %s282
      %s285 = sphi 0, %s284
      %s299 = sphi 0, %s285
      %s303 = sphi 0, %s303
      %s305 = sphi 0, %s303
      %s306 = sphi 0, %s305
      %s320 = sphi 0, %s306
      %s324 = sphi 0, %s324
      %s326 = sphi 0, %s324
      %s327 = sphi 0, %s326
      %s341 = sphi 0, %s327
      %s345 = sphi 0, %s345
      %s347 = sphi 0, %s345
      %s348 = sphi 0, %s347
      %s362 = sphi 0, %s348
      %s366 = sphi 0, %s366
      %s368 = sphi 0, %s366
      %s369 = sphi 0, %s368
      %s383 = sphi 0, %s369
      %s387 = sphi 0, %s387
      %s389 = sphi 0, %s387
      %s390 = sphi 0, %s389
      %s404 = sphi 0, %s390
      %s408 = sphi 0, %s408
      %s410 = sphi 0, %s408
      %s411 = sphi 0, %s410
      %s425 = sphi 0, %s411
      %s429 = sphi 0, %s429
      %s431 = sphi 0, %s429
      %s432 = sphi 0, %s431
      %s446 = sphi 0, %s432
      %s450 = sphi 0, %s450
      %s452 = sphi 0, %s450
      %s453 = sphi 0, %s452
      %s467 = sphi 0, %s453
      %s471 = sphi 0, %s471
      %s473 = sphi 0, %s471
      %s474 = sphi 0, %s473
      %s488 = sphi 0, %s474
      %s494 = sphi 0, %s496
      %s497 = sphi 0, %s494
      %s498 = sphi 0, %s497
      %s514 = sphi 0, %s498
    $region4: #{model.7} parent=1 // loop_header_branch
      %36 = sbr.rel (%p34) target = $region8
    $region5: #{model.7} parent=1 // loop_body
      %s38 = ssub.s32 %s33, 1
      %s39 = ssub.s32 %s33, 2
      %s40 = sadd.s32 %s33, 1
      %s41 = ssub.s32 %s33, %s40
      %p42 = scmp.eq.s32.totalorder %s41, 0
      %s44 = sadd.s32 %s43, 1
      %s45 = scalar_select %p42, %s43, %s44
      %p48 = pneg %p42
      %p49 = scmp.eq.s32.totalorder %s33, 1
      %p50 = por %p48, %p49
      %p51 = scmp.ne.s32.totalorder %s43, %s46
      %p52 = scmp.eq.s32.totalorder %s33, 0
      %p53 = por %p51, %p52
      %p54 = scmp.ne.s32.totalorder %s43, %s46
      %p55 = scmp.eq.s32.totalorder %s38, 1
      %p56 = por %p54, %p55
      %p57 = scmp.ne.s32.totalorder %s46, %s47
      %p58 = scmp.eq.s32.totalorder %s38, 0
      %p59 = por %p57, %p58
      %p60 = scmp.ne.s32.totalorder %s46, %s47
      %p61 = scmp.eq.s32.totalorder %s39, 1
      %p62 = por %p60, %p61
      %p64 = scmp.ne.s32.totalorder %s47, %s63
      %p65 = scmp.eq.s32.totalorder %s39, 0
      %p66 = por %p64, %p65
      %s67 = ssub.s32 %s33, %s40
      %p68 = scmp.eq.s32.totalorder %s67, 0
      %s70 = sadd.s32 %s69, 1
      %s71 = scalar_select %p68, %s69, %s70
      %p74 = pneg %p68
      %p75 = scmp.eq.s32.totalorder %s33, 1
      %p76 = por %p74, %p75
      %p77 = scmp.ne.s32.totalorder %s69, %s72
      %p78 = scmp.eq.s32.totalorder %s33, 0
      %p79 = por %p77, %p78
      %p80 = scmp.ne.s32.totalorder %s69, %s72
      %p81 = scmp.eq.s32.totalorder %s38, 1
      %p82 = por %p80, %p81
      %p83 = scmp.ne.s32.totalorder %s72, %s73
      %p84 = scmp.eq.s32.totalorder %s38, 0
      %p85 = por %p83, %p84
      %p86 = scmp.ne.s32.totalorder %s72, %s73
      %p87 = scmp.eq.s32.totalorder %s39, 1
      %p88 = por %p86, %p87
      %p90 = scmp.ne.s32.totalorder %s73, %s89
      %p91 = scmp.eq.s32.totalorder %s39, 0
      %p92 = por %p90, %p91
      %s94 = sadd.s32 %s93, 1
      %p97 = scmp.eq.s32.totalorder %s33, 1
      %p98 = scmp.ne.s32.totalorder %s93, %s95
      %p99 = scmp.eq.s32.totalorder %s33, 0
      %p100 = por %p98, %p99
      %p101 = scmp.ne.s32.totalorder %s93, %s95
      %p102 = scmp.eq.s32.totalorder %s38, 1
      %p103 = por %p101, %p102
      %p104 = scmp.ne.s32.totalorder %s95, %s96
      %p105 = scmp.eq.s32.totalorder %s38, 0
      %p106 = por %p104, %p105
      %p107 = scmp.ne.s32.totalorder %s95, %s96
      %p108 = scmp.eq.s32.totalorder %s39, 1
      %p109 = por %p107, %p108
      %p111 = scmp.ne.s32.totalorder %s96, %s110
      %p112 = scmp.eq.s32.totalorder %s39, 0
      %p113 = por %p111, %p112
      %s115 = sadd.s32 %s114, 1
      %p118 = scmp.eq.s32.totalorder %s33, 1
      %p119 = scmp.ne.s32.totalorder %s114, %s116
      %p120 = scmp.eq.s32.totalorder %s33, 0
      %p121 = por %p119, %p120
      %p122 = scmp.ne.s32.totalorder %s114, %s116
      %p123 = scmp.eq.s32.totalorder %s38, 1
      %p124 = por %p122, %p123
      %p125 = scmp.ne.s32.totalorder %s116, %s117
      %p126 = scmp.eq.s32.totalorder %s38, 0
      %p127 = por %p125, %p126
      %p128 = scmp.ne.s32.totalorder %s116, %s117
      %p129 = scmp.eq.s32.totalorder %s39, 1
      %p130 = por %p128, %p129
      %p132 = scmp.ne.s32.totalorder %s117, %s131
      %p133 = scmp.eq.s32.totalorder %s39, 0
      %p134 = por %p132, %p133
      %s136 = sadd.s32 %s135, 1
      %p139 = scmp.eq.s32.totalorder %s33, 1
      %p140 = scmp.ne.s32.totalorder %s135, %s137
      %p141 = scmp.eq.s32.totalorder %s33, 0
      %p142 = por %p140, %p141
      %p143 = scmp.ne.s32.totalorder %s135, %s137
      %p144 = scmp.eq.s32.totalorder %s38, 1
      %p145 = por %p143, %p144
      %p146 = scmp.ne.s32.totalorder %s137, %s138
      %p147 = scmp.eq.s32.totalorder %s38, 0
      %p148 = por %p146, %p147
      %p149 = scmp.ne.s32.totalorder %s137, %s138
      %p150 = scmp.eq.s32.totalorder %s39, 1
      %p151 = por %p149, %p150
      %p153 = scmp.ne.s32.totalorder %s138, %s152
      %p154 = scmp.eq.s32.totalorder %s39, 0
      %p155 = por %p153, %p154
      %s157 = sadd.s32 %s156, 1
      %p160 = scmp.eq.s32.totalorder %s33, 1
      %p161 = scmp.ne.s32.totalorder %s156, %s158
      %p162 = scmp.eq.s32.totalorder %s33, 0
      %p163 = por %p161, %p162
      %p164 = scmp.ne.s32.totalorder %s156, %s158
      %p165 = scmp.eq.s32.totalorder %s38, 1
      %p166 = por %p164, %p165
      %p167 = scmp.ne.s32.totalorder %s158, %s159
      %p168 = scmp.eq.s32.totalorder %s38, 0
      %p169 = por %p167, %p168
      %p170 = scmp.ne.s32.totalorder %s158, %s159
      %p171 = scmp.eq.s32.totalorder %s39, 1
      %p172 = por %p170, %p171
      %p174 = scmp.ne.s32.totalorder %s159, %s173
      %p175 = scmp.eq.s32.totalorder %s39, 0
      %p176 = por %p174, %p175
      %s178 = sadd.s32 %s177, 1
      %p181 = scmp.eq.s32.totalorder %s33, 1
      %p182 = scmp.ne.s32.totalorder %s177, %s179
      %p183 = scmp.eq.s32.totalorder %s33, 0
      %p184 = por %p182, %p183
      %p185 = scmp.ne.s32.totalorder %s177, %s179
      %p186 = scmp.eq.s32.totalorder %s38, 1
      %p187 = por %p185, %p186
      %p188 = scmp.ne.s32.totalorder %s179, %s180
      %p189 = scmp.eq.s32.totalorder %s38, 0
      %p190 = por %p188, %p189
      %p191 = scmp.ne.s32.totalorder %s179, %s180
      %p192 = scmp.eq.s32.totalorder %s39, 1
      %p193 = por %p191, %p192
      %p195 = scmp.ne.s32.totalorder %s180, %s194
      %p196 = scmp.eq.s32.totalorder %s39, 0
      %p197 = por %p195, %p196
      %s199 = sadd.s32 %s198, 1
      %p202 = scmp.eq.s32.totalorder %s33, 1
      %p203 = scmp.ne.s32.totalorder %s198, %s200
      %p204 = scmp.eq.s32.totalorder %s33, 0
      %p205 = por %p203, %p204
      %p206 = scmp.ne.s32.totalorder %s198, %s200
      %p207 = scmp.eq.s32.totalorder %s38, 1
      %p208 = por %p206, %p207
      %p209 = scmp.ne.s32.totalorder %s200, %s201
      %p210 = scmp.eq.s32.totalorder %s38, 0
      %p211 = por %p209, %p210
      %p212 = scmp.ne.s32.totalorder %s200, %s201
      %p213 = scmp.eq.s32.totalorder %s39, 1
      %p214 = por %p212, %p213
      %p216 = scmp.ne.s32.totalorder %s201, %s215
      %p217 = scmp.eq.s32.totalorder %s39, 0
      %p218 = por %p216, %p217
      %s220 = sadd.s32 %s219, 1
      %p223 = scmp.eq.s32.totalorder %s33, 1
      %p224 = scmp.ne.s32.totalorder %s219, %s221
      %p225 = scmp.eq.s32.totalorder %s33, 0
      %p226 = por %p224, %p225
      %p227 = scmp.ne.s32.totalorder %s219, %s221
      %p228 = scmp.eq.s32.totalorder %s38, 1
      %p229 = por %p227, %p228
      %p230 = scmp.ne.s32.totalorder %s221, %s222
      %p231 = scmp.eq.s32.totalorder %s38, 0
      %p232 = por %p230, %p231
      %p233 = scmp.ne.s32.totalorder %s221, %s222
      %p234 = scmp.eq.s32.totalorder %s39, 1
      %p235 = por %p233, %p234
      %p237 = scmp.ne.s32.totalorder %s222, %s236
      %p238 = scmp.eq.s32.totalorder %s39, 0
      %p239 = por %p237, %p238
      %s241 = sadd.s32 %s240, 1
      %p244 = scmp.eq.s32.totalorder %s33, 1
      %p245 = scmp.ne.s32.totalorder %s240, %s242
      %p246 = scmp.eq.s32.totalorder %s33, 0
      %p247 = por %p245, %p246
      %p248 = scmp.ne.s32.totalorder %s240, %s242
      %p249 = scmp.eq.s32.totalorder %s38, 1
      %p250 = por %p248, %p249
      %p251 = scmp.ne.s32.totalorder %s242, %s243
      %p252 = scmp.eq.s32.totalorder %s38, 0
      %p253 = por %p251, %p252
      %p254 = scmp.ne.s32.totalorder %s242, %s243
      %p255 = scmp.eq.s32.totalorder %s39, 1
      %p256 = por %p254, %p255
      %p258 = scmp.ne.s32.totalorder %s243, %s257
      %p259 = scmp.eq.s32.totalorder %s39, 0
      %p260 = por %p258, %p259
      %s262 = sadd.s32 %s261, 1
      %p265 = scmp.eq.s32.totalorder %s33, 1
      %p266 = scmp.ne.s32.totalorder %s261, %s263
      %p267 = scmp.eq.s32.totalorder %s33, 0
      %p268 = por %p266, %p267
      %p269 = scmp.ne.s32.totalorder %s261, %s263
      %p270 = scmp.eq.s32.totalorder %s38, 1
      %p271 = por %p269, %p270
      %p272 = scmp.ne.s32.totalorder %s263, %s264
      %p273 = scmp.eq.s32.totalorder %s38, 0
      %p274 = por %p272, %p273
      %p275 = scmp.ne.s32.totalorder %s263, %s264
      %p276 = scmp.eq.s32.totalorder %s39, 1
      %p277 = por %p275, %p276
      %p279 = scmp.ne.s32.totalorder %s264, %s278
      %p280 = scmp.eq.s32.totalorder %s39, 0
      %p281 = por %p279, %p280
      %s283 = sadd.s32 %s282, 1
      %p286 = scmp.eq.s32.totalorder %s33, 1
      %p287 = scmp.ne.s32.totalorder %s282, %s284
      %p288 = scmp.eq.s32.totalorder %s33, 0
      %p289 = por %p287, %p288
      %p290 = scmp.ne.s32.totalorder %s282, %s284
      %p291 = scmp.eq.s32.totalorder %s38, 1
      %p292 = por %p290, %p291
      %p293 = scmp.ne.s32.totalorder %s284, %s285
      %p294 = scmp.eq.s32.totalorder %s38, 0
      %p295 = por %p293, %p294
      %p296 = scmp.ne.s32.totalorder %s284, %s285
      %p297 = scmp.eq.s32.totalorder %s39, 1
      %p298 = por %p296, %p297
      %p300 = scmp.ne.s32.totalorder %s285, %s299
      %p301 = scmp.eq.s32.totalorder %s39, 0
      %p302 = por %p300, %p301
      %s304 = sadd.s32 %s303, 1
      %p307 = scmp.eq.s32.totalorder %s33, 1
      %p308 = scmp.ne.s32.totalorder %s303, %s305
      %p309 = scmp.eq.s32.totalorder %s33, 0
      %p310 = por %p308, %p309
      %p311 = scmp.ne.s32.totalorder %s303, %s305
      %p312 = scmp.eq.s32.totalorder %s38, 1
      %p313 = por %p311, %p312
      %p314 = scmp.ne.s32.totalorder %s305, %s306
      %p315 = scmp.eq.s32.totalorder %s38, 0
      %p316 = por %p314, %p315
      %p317 = scmp.ne.s32.totalorder %s305, %s306
      %p318 = scmp.eq.s32.totalorder %s39, 1
      %p319 = por %p317, %p318
      %p321 = scmp.ne.s32.totalorder %s306, %s320
      %p322 = scmp.eq.s32.totalorder %s39, 0
      %p323 = por %p321, %p322
      %s325 = sadd.s32 %s324, 1
      %p328 = scmp.eq.s32.totalorder %s33, 1
      %p329 = scmp.ne.s32.totalorder %s324, %s326
      %p330 = scmp.eq.s32.totalorder %s33, 0
      %p331 = por %p329, %p330
      %p332 = scmp.ne.s32.totalorder %s324, %s326
      %p333 = scmp.eq.s32.totalorder %s38, 1
      %p334 = por %p332, %p333
      %p335 = scmp.ne.s32.totalorder %s326, %s327
      %p336 = scmp.eq.s32.totalorder %s38, 0
      %p337 = por %p335, %p336
      %p338 = scmp.ne.s32.totalorder %s326, %s327
      %p339 = scmp.eq.s32.totalorder %s39, 1
      %p340 = por %p338, %p339
      %p342 = scmp.ne.s32.totalorder %s327, %s341
      %p343 = scmp.eq.s32.totalorder %s39, 0
      %p344 = por %p342, %p343
      %s346 = sadd.s32 %s345, 1
      %p349 = scmp.eq.s32.totalorder %s33, 1
      %p350 = scmp.ne.s32.totalorder %s345, %s347
      %p351 = scmp.eq.s32.totalorder %s33, 0
      %p352 = por %p350, %p351
      %p353 = scmp.ne.s32.totalorder %s345, %s347
      %p354 = scmp.eq.s32.totalorder %s38, 1
      %p355 = por %p353, %p354
      %p356 = scmp.ne.s32.totalorder %s347, %s348
      %p357 = scmp.eq.s32.totalorder %s38, 0
      %p358 = por %p356, %p357
      %p359 = scmp.ne.s32.totalorder %s347, %s348
      %p360 = scmp.eq.s32.totalorder %s39, 1
      %p361 = por %p359, %p360
      %p363 = scmp.ne.s32.totalorder %s348, %s362
      %p364 = scmp.eq.s32.totalorder %s39, 0
      %p365 = por %p363, %p364
      %s367 = sadd.s32 %s366, 1
      %p370 = scmp.eq.s32.totalorder %s33, 1
      %p371 = scmp.ne.s32.totalorder %s366, %s368
      %p372 = scmp.eq.s32.totalorder %s33, 0
      %p373 = por %p371, %p372
      %p374 = scmp.ne.s32.totalorder %s366, %s368
      %p375 = scmp.eq.s32.totalorder %s38, 1
      %p376 = por %p374, %p375
      %p377 = scmp.ne.s32.totalorder %s368, %s369
      %p378 = scmp.eq.s32.totalorder %s38, 0
      %p379 = por %p377, %p378
      %p380 = scmp.ne.s32.totalorder %s368, %s369
      %p381 = scmp.eq.s32.totalorder %s39, 1
      %p382 = por %p380, %p381
      %p384 = scmp.ne.s32.totalorder %s369, %s383
      %p385 = scmp.eq.s32.totalorder %s39, 0
      %p386 = por %p384, %p385
      %s388 = sadd.s32 %s387, 1
      %p391 = scmp.eq.s32.totalorder %s33, 1
      %p392 = scmp.ne.s32.totalorder %s387, %s389
      %p393 = scmp.eq.s32.totalorder %s33, 0
      %p394 = por %p392, %p393
      %p395 = scmp.ne.s32.totalorder %s387, %s389
      %p396 = scmp.eq.s32.totalorder %s38, 1
      %p397 = por %p395, %p396
      %p398 = scmp.ne.s32.totalorder %s389, %s390
      %p399 = scmp.eq.s32.totalorder %s38, 0
      %p400 = por %p398, %p399
      %p401 = scmp.ne.s32.totalorder %s389, %s390
      %p402 = scmp.eq.s32.totalorder %s39, 1
      %p403 = por %p401, %p402
      %p405 = scmp.ne.s32.totalorder %s390, %s404
      %p406 = scmp.eq.s32.totalorder %s39, 0
      %p407 = por %p405, %p406
      %s409 = sadd.s32 %s408, 1
      %p412 = scmp.eq.s32.totalorder %s33, 1
      %p413 = scmp.ne.s32.totalorder %s408, %s410
      %p414 = scmp.eq.s32.totalorder %s33, 0
      %p415 = por %p413, %p414
      %p416 = scmp.ne.s32.totalorder %s408, %s410
      %p417 = scmp.eq.s32.totalorder %s38, 1
      %p418 = por %p416, %p417
      %p419 = scmp.ne.s32.totalorder %s410, %s411
      %p420 = scmp.eq.s32.totalorder %s38, 0
      %p421 = por %p419, %p420
      %p422 = scmp.ne.s32.totalorder %s410, %s411
      %p423 = scmp.eq.s32.totalorder %s39, 1
      %p424 = por %p422, %p423
      %p426 = scmp.ne.s32.totalorder %s411, %s425
      %p427 = scmp.eq.s32.totalorder %s39, 0
      %p428 = por %p426, %p427
      %s430 = sadd.s32 %s429, 1
      %p433 = scmp.eq.s32.totalorder %s33, 1
      %p434 = scmp.ne.s32.totalorder %s429, %s431
      %p435 = scmp.eq.s32.totalorder %s33, 0
      %p436 = por %p434, %p435
      %p437 = scmp.ne.s32.totalorder %s429, %s431
      %p438 = scmp.eq.s32.totalorder %s38, 1
      %p439 = por %p437, %p438
      %p440 = scmp.ne.s32.totalorder %s431, %s432
      %p441 = scmp.eq.s32.totalorder %s38, 0
      %p442 = por %p440, %p441
      %p443 = scmp.ne.s32.totalorder %s431, %s432
      %p444 = scmp.eq.s32.totalorder %s39, 1
      %p445 = por %p443, %p444
      %p447 = scmp.ne.s32.totalorder %s432, %s446
      %p448 = scmp.eq.s32.totalorder %s39, 0
      %p449 = por %p447, %p448
      %s451 = sadd.s32 %s450, 1
      %p454 = scmp.eq.s32.totalorder %s33, 1
      %p455 = scmp.ne.s32.totalorder %s450, %s452
      %p456 = scmp.eq.s32.totalorder %s33, 0
      %p457 = por %p455, %p456
      %p458 = scmp.ne.s32.totalorder %s450, %s452
      %p459 = scmp.eq.s32.totalorder %s38, 1
      %p460 = por %p458, %p459
      %p461 = scmp.ne.s32.totalorder %s452, %s453
      %p462 = scmp.eq.s32.totalorder %s38, 0
      %p463 = por %p461, %p462
      %p464 = scmp.ne.s32.totalorder %s452, %s453
      %p465 = scmp.eq.s32.totalorder %s39, 1
      %p466 = por %p464, %p465
      %p468 = scmp.ne.s32.totalorder %s453, %s467
      %p469 = scmp.eq.s32.totalorder %s39, 0
      %p470 = por %p468, %p469
      %s472 = sadd.s32 %s471, 1
      %p475 = scmp.eq.s32.totalorder %s33, 1
      %p476 = scmp.ne.s32.totalorder %s471, %s473
      %p477 = scmp.eq.s32.totalorder %s33, 0
      %p478 = por %p476, %p477
      %p479 = scmp.ne.s32.totalorder %s471, %s473
      %p480 = scmp.eq.s32.totalorder %s38, 1
      %p481 = por %p479, %p480
      %p482 = scmp.ne.s32.totalorder %s473, %s474
      %p483 = scmp.eq.s32.totalorder %s38, 0
      %p484 = por %p482, %p483
      %p485 = scmp.ne.s32.totalorder %s473, %s474
      %p486 = scmp.eq.s32.totalorder %s39, 1
      %p487 = por %p485, %p486
      %p489 = scmp.ne.s32.totalorder %s474, %s488
      %p490 = scmp.eq.s32.totalorder %s39, 0
      %p491 = por %p489, %p490
      %s492 = ssub.s32 %s33, %s40
      %p493 = scmp.eq.s32.totalorder %s492, 0
      %s495 = sadd.s32 %s494, 1
      %s496 = scalar_select %p493, %s494, %s495
      %p499 = pneg %p493
      %p500 = scmp.eq.s32.totalorder %s33, 1
      %p501 = por %p499, %p500
      %p502 = scmp.ne.s32.totalorder %s494, %s497
      %p503 = scmp.eq.s32.totalorder %s33, 0
      %p504 = por %p502, %p503
      %p505 = scmp.ne.s32.totalorder %s494, %s497
      %p506 = scmp.eq.s32.totalorder %s38, 1
      %p507 = por %p505, %p506
      %p508 = scmp.ne.s32.totalorder %s497, %s498
      %p509 = scmp.eq.s32.totalorder %s38, 0
      %p510 = por %p508, %p509
      %p511 = scmp.ne.s32.totalorder %s497, %s498
      %p512 = scmp.eq.s32.totalorder %s39, 1
      %p513 = por %p511, %p512
      %p515 = scmp.ne.s32.totalorder %s498, %s514
      %p516 = scmp.eq.s32.totalorder %s39, 0
      %p517 = por %p515, %p516
      %p518 = scmp.le.s32.totalorder 1, %s33
      %p519 = scmp.lt.s32.totalorder %s33, 3
      %p520 = pnand %p518, %p519
      %p521 = pneg %p520
      // Predicated region
      $region9: #{model.7} parent=5 // pred_check
        _
      $region10: #{model.7} parent=5 // pred_check_branch
        %523 = sbr.rel (%p520) target = $region12
      $region11: #{model.7} parent=5 // pred_region
        %s524 = ssub.s32 %s33, 1
        // Predicated region
        $region13: #{model.7} parent=11 // pred_check
          %p525 = pneg %p106
        $region14: #{model.7} parent=11 // pred_check_branch
          %527 = sbr.rel (%p525) target = $region16
        $region15: #{model.7} parent=11 // pred_region
          _
        $region16: #{model.7} parent=11 // pred_fallthru
          _
        // Predicated region
        $region17: #{model.7} parent=11 // pred_check
          %p528 = pneg %p127
        $region18: #{model.7} parent=11 // pred_check_branch
          %530 = sbr.rel (%p528) target = $region20
        $region19: #{model.7} parent=11 // pred_region
          _
        $region20: #{model.7} parent=11 // pred_fallthru
          _
        // Predicated region
        $region21: #{model.7} parent=11 // pred_check
          %p531 = pneg %p148
        $region22: #{model.7} parent=11 // pred_check_branch
          %533 = sbr.rel (%p531) target = $region24
        $region23: #{model.7} parent=11 // pred_region
          _
        $region24: #{model.7} parent=11 // pred_fallthru
          _
        // Predicated region
        $region25: #{model.7} parent=11 // pred_check
          %p534 = pneg %p169
        $region26: #{model.7} parent=11 // pred_check_branch
          %536 = sbr.rel (%p534) target = $region28
        $region27: #{model.7} parent=11 // pred_region
          _
        $region28: #{model.7} parent=11 // pred_fallthru
          _
        // Predicated region
        $region29: #{model.7} parent=11 // pred_check
          %p537 = pneg %p190
        $region30: #{model.7} parent=11 // pred_check_branch
          %539 = sbr.rel (%p537) target = $region32
        $region31: #{model.7} parent=11 // pred_region
          _
        $region32: #{model.7} parent=11 // pred_fallthru
          _
        // Predicated region
        $region33: #{model.7} parent=11 // pred_check
          %p540 = pneg %p211
        $region34: #{model.7} parent=11 // pred_check_branch
          %542 = sbr.rel (%p540) target = $region36
        $region35: #{model.7} parent=11 // pred_region
          _
        $region36: #{model.7} parent=11 // pred_fallthru
          _
        // Predicated region
        $region37: #{model.7} parent=11 // pred_check
          %p543 = pneg %p232
        $region38: #{model.7} parent=11 // pred_check_branch
          %545 = sbr.rel (%p543) target = $region40
        $region39: #{model.7} parent=11 // pred_region
          _
        $region40: #{model.7} parent=11 // pred_fallthru
          _
        // Predicated region
        $region41: #{model.7} parent=11 // pred_check
          %p546 = pneg %p253
        $region42: #{model.7} parent=11 // pred_check_branch
          %548 = sbr.rel (%p546) target = $region44
        $region43: #{model.7} parent=11 // pred_region
          _
        $region44: #{model.7} parent=11 // pred_fallthru
          _
        // Predicated region
        $region45: #{model.7} parent=11 // pred_check
          %p549 = pneg %p274
        $region46: #{model.7} parent=11 // pred_check_branch
          %551 = sbr.rel (%p549) target = $region48
        $region47: #{model.7} parent=11 // pred_region
          _
        $region48: #{model.7} parent=11 // pred_fallthru
          _
        // Predicated region
        $region49: #{model.7} parent=11 // pred_check
          %p552 = pneg %p295
        $region50: #{model.7} parent=11 // pred_check_branch
          %554 = sbr.rel (%p552) target = $region52
        $region51: #{model.7} parent=11 // pred_region
          _
        $region52: #{model.7} parent=11 // pred_fallthru
          _
        // Predicated region
        $region53: #{model.7} parent=11 // pred_check
          %p555 = pneg %p316
        $region54: #{model.7} parent=11 // pred_check_branch
          %557 = sbr.rel (%p555) target = $region56
        $region55: #{model.7} parent=11 // pred_region
          _
        $region56: #{model.7} parent=11 // pred_fallthru
          _
        // Predicated region
        $region57: #{model.7} parent=11 // pred_check
          %p558 = pneg %p337
        $region58: #{model.7} parent=11 // pred_check_branch
          %560 = sbr.rel (%p558) target = $region60
        $region59: #{model.7} parent=11 // pred_region
          _
        $region60: #{model.7} parent=11 // pred_fallthru
          _
        // Predicated region
        $region61: #{model.7} parent=11 // pred_check
          %p561 = pneg %p358
        $region62: #{model.7} parent=11 // pred_check_branch
          %563 = sbr.rel (%p561) target = $region64
        $region63: #{model.7} parent=11 // pred_region
          _
        $region64: #{model.7} parent=11 // pred_fallthru
          _
        // Predicated region
        $region65: #{model.7} parent=11 // pred_check
          %p564 = pneg %p379
        $region66: #{model.7} parent=11 // pred_check_branch
          %566 = sbr.rel (%p564) target = $region68
        $region67: #{model.7} parent=11 // pred_region
          _
        $region68: #{model.7} parent=11 // pred_fallthru
          _
        // Predicated region
        $region69: #{model.7} parent=11 // pred_check
          %p567 = pneg %p400
        $region70: #{model.7} parent=11 // pred_check_branch
          %569 = sbr.rel (%p567) target = $region72
        $region71: #{model.7} parent=11 // pred_region
          _
        $region72: #{model.7} parent=11 // pred_fallthru
          _
        // Predicated region
        $region73: #{model.7} parent=11 // pred_check
          %p570 = pneg %p421
        $region74: #{model.7} parent=11 // pred_check_branch
          %572 = sbr.rel (%p570) target = $region76
        $region75: #{model.7} parent=11 // pred_region
          _
        $region76: #{model.7} parent=11 // pred_fallthru
          _
        // Predicated region
        $region77: #{model.7} parent=11 // pred_check
          %p573 = pneg %p442
        $region78: #{model.7} parent=11 // pred_check_branch
          %575 = sbr.rel (%p573) target = $region80
        $region79: #{model.7} parent=11 // pred_region
          _
        $region80: #{model.7} parent=11 // pred_fallthru
          _
        // Predicated region
        $region81: #{model.7} parent=11 // pred_check
          %p576 = pneg %p463
        $region82: #{model.7} parent=11 // pred_check_branch
          %578 = sbr.rel (%p576) target = $region84
        $region83: #{model.7} parent=11 // pred_region
          _
        $region84: #{model.7} parent=11 // pred_fallthru
          _
        // Predicated region
        $region85: #{model.7} parent=11 // pred_check
          %p579 = pneg %p484
        $region86: #{model.7} parent=11 // pred_check_branch
          %581 = sbr.rel (%p579) target = $region88
        $region87: #{model.7} parent=11 // pred_region
          _
        $region88: #{model.7} parent=11 // pred_fallthru
          _
      $region12: #{model.7} parent=5 // pred_fallthru
        _
      %p582 = scmp.lt.s32.totalorder %s33, 2
      // Predicated region
      $region89: #{model.7} parent=5 // pred_check
        %p583 = pneg %p582
      $region90: #{model.7} parent=5 // pred_check_branch
        %585 = sbr.rel (%p583) target = $region92
      $region91: #{model.7} parent=5 // pred_region
        // Predicated region
        $region93: #{model.7} parent=91 // pred_check
          %p586 = pneg %p53
        $region94: #{model.7} parent=91 // pred_check_branch
          %588 = sbr.rel (%p586) target = $region96
        $region95: #{model.7} parent=91 // pred_region
          %s589 = sand.u32 %s43, 1
          %s590 = scalar_lea.sflag [#allocation3], %s589
          %s591 = sand.u32 %s43, 1
          %s592 = smul.addr %s591, 256
          %s593 = scalar_lea.vmem [#allocation2], %s592
          %595 = vsyncadd %s590, 0
          %s596 = smul.addr %s33, 32
          %s597 = smul.addr %s596, 8
          %s598 = scalar_lea.hbm %s0, %s597
          %s599 = sshll.u32 %s598, 4
          %s600 = int_to_ptr.hbm [resolvable:$true] %s599
          %s601 = sshll.u32 %s593, 4
          %s602 = int_to_ptr.vmem [resolvable:$true] %s601
          %607 = dma.hbm_to_vmem [thread:$0]  %s600, 4096, %s602, %s590, 128, 128, 8
        $region96: #{model.7} parent=91 // pred_fallthru
          _
        // Predicated region
        $region97: #{model.7} parent=91 // pred_check
          %p608 = pneg %p79
        $region98: #{model.7} parent=91 // pred_check_branch
          %610 = sbr.rel (%p608) target = $region100
        $region99: #{model.7} parent=91 // pred_region
          %p611 = scmp.lt.s32.totalorder %s33, 1
          %s612 = scalar_select %p611, %s33, 1
          %s613 = smul.addr %s612, 8
          %s614 = smul.addr %s613, 4
          %s615 = scalar_lea.vmem %s1, %s614
        $region100: #{model.7} parent=91 // pred_fallthru
          _
      $region92: #{model.7} parent=5 // pred_fallthru
        _
      %p616 = scmp.le.s32.totalorder 1, %s33
      %p617 = scmp.lt.s32.totalorder %s33, 3
      %p618 = pnand %p616, %p617
      %p619 = pneg %p618
      // Predicated region
      $region101: #{model.7} parent=5 // pred_check
        _
      $region102: #{model.7} parent=5 // pred_check_branch
        %621 = sbr.rel (%p618) target = $region104
      $region103: #{model.7} parent=5 // pred_region
        %s622 = ssub.s32 %s33, 1
        %s623 = sand.u32 %s46, 1
        %s624 = scalar_lea.sflag [#allocation3], %s623
        %s625 = sand.u32 %s46, 1
        %s626 = smul.addr %s625, 256
        %s627 = scalar_lea.vmem [#allocation2], %s626
        // Predicated region
        $region105: #{model.7} parent=103 // pred_check
          %p628 = pneg %p59
        $region106: #{model.7} parent=103 // pred_check_branch
          %630 = sbr.rel (%p628) target = $region108
        $region107: #{model.7} parent=103 // pred_region
          %632 = dma.done %s624, 4096
        $region108: #{model.7} parent=103 // pred_fallthru
          _
        %s633 = sand.u32 %s46, 1
        %s634 = scalar_lea.sflag [#allocation3], %s633
        %s635 = sand.u32 %s46, 1
        %s636 = smul.addr %s635, 256
        %s637 = scalar_lea.vmem [#allocation2], %s636
        %p638 = pneg %p59
        %p639 = pneg %p56
        %p640 = scmp.lt.s32.totalorder %s38, 1
        %s641 = scalar_select %p640, %s38, 1
        %s642 = smul.addr %s641, 8
        %s643 = smul.addr %s642, 4
        %s644 = scalar_lea.vmem %s1, %s643
        %p645 = pneg %p85
        %p646 = pneg %p82
        %p647 = pneg %p106
        %p648 = pneg %p103
        %p649 = pneg %p127
        %p650 = pneg %p124
        %p651 = pneg %p148
        %p652 = pneg %p145
        %p653 = pneg %p169
        %p654 = pneg %p166
        %p655 = pneg %p190
        %p656 = pneg %p187
        %p657 = pneg %p211
        %p658 = pneg %p208
        %p659 = pneg %p232
        %p660 = pneg %p229
        %p661 = pneg %p253
        %p662 = pneg %p250
        %p663 = pneg %p274
        %p664 = pneg %p271
        %p665 = pneg %p295
        %p666 = pneg %p292
        %p667 = pneg %p316
        %p668 = pneg %p313
        %p669 = pneg %p337
        %p670 = pneg %p334
        %p671 = pneg %p358
        %p672 = pneg %p355
        %p673 = pneg %p379
        %p674 = pneg %p376
        %p675 = pneg %p400
        %p676 = pneg %p397
        %p677 = pneg %p421
        %p678 = pneg %p418
        %p679 = pneg %p442
        %p680 = pneg %p439
        %p681 = pneg %p463
        %p682 = pneg %p460
        %p683 = pneg %p484
        %p684 = pneg %p481
        %p685 = pneg %p510
        %p686 = pneg %p507
        %s687 = sand.u32 %s497, 1
        %s688 = scalar_lea.sflag [#allocation4], %s687
        %s689 = sand.u32 %s497, 1
        %s690 = smul.addr %s689, 256
        %s691 = scalar_lea.vmem [#allocation5], %s690
        %p692 = scmp.lt.s32.totalorder %s38, 1
        %s693 = scalar_select %p692, %s38, 1
        %s694 = smul.addr %s693, 8
        %s695 = smul.addr %s694, 4
        %s696 = scalar_lea.vmem %s1, %s695
        %v698 = vld [vmem:[%s627] sm:$0xff]
        %v699 = vld [vmem:[%s627 + $0x8] sm:$0xff]
        %v700 = vld [vmem:[%s627 + $0x10] sm:$0xff]
        %v701 = vld [vmem:[%s627 + $0x18] sm:$0xff]
        %v702 = vld [vmem:[%s627 + $0x20] sm:$0xff]
        %v703 = vld [vmem:[%s627 + $0x28] sm:$0xff]
        %v704 = vld [vmem:[%s627 + $0x30] sm:$0xff]
        %v705 = vld [vmem:[%s627 + $0x38] sm:$0xff]
        %v706 = vld [vmem:[%s627 + $0x40] sm:$0xff]
        %v707 = vld [vmem:[%s627 + $0x48] sm:$0xff]
        %v708 = vld [vmem:[%s627 + $0x50] sm:$0xff]
        %v709 = vld [vmem:[%s627 + $0x58] sm:$0xff]
        %v710 = vld [vmem:[%s627 + $0x60] sm:$0xff]
        %v711 = vld [vmem:[%s627 + $0x68] sm:$0xff]
        %v712 = vld [vmem:[%s627 + $0x70] sm:$0xff]
        %v713 = vld [vmem:[%s627 + $0x78] sm:$0xff]
        %v714 = vld [vmem:[%s627 + $0x80] sm:$0xff]
        %v715 = vld [vmem:[%s627 + $0x88] sm:$0xff]
        %v716 = vld [vmem:[%s627 + $0x90] sm:$0xff]
        %v717 = vld [vmem:[%s627 + $0x98] sm:$0xff]
        %v718 = vld [vmem:[%s627 + $0xa0] sm:$0xff]
        %v719 = vld [vmem:[%s627 + $0xa8] sm:$0xff]
        %v720 = vld [vmem:[%s627 + $0xb0] sm:$0xff]
        %v721 = vld [vmem:[%s627 + $0xb8] sm:$0xff]
        %v722 = vld [vmem:[%s627 + $0xc0] sm:$0xff]
        %v723 = vld [vmem:[%s627 + $0xc8] sm:$0xff]
        %v724 = vld [vmem:[%s627 + $0xd0] sm:$0xff]
        %v725 = vld [vmem:[%s627 + $0xd8] sm:$0xff]
        %v726 = vld [vmem:[%s627 + $0xe0] sm:$0xff]
        %v727 = vld [vmem:[%s627 + $0xe8] sm:$0xff]
        %v728 = vld [vmem:[%s627 + $0xf0] sm:$0xff]
        %v729 = vld [vmem:[%s627 + $0xf8] sm:$0xff]
        %v730 = vld [vmem:[%s3] sm:$0x1]
        %v732 = vperm.slane %v730, 0
        %v734 = vmul.f32 %v698, %v732
        %v735 = vmul.f32 %v699, %v732
        %v736 = vmul.f32 %v700, %v732
        %v737 = vmul.f32 %v701, %v732
        %v738 = vmul.f32 %v702, %v732
        %v739 = vmul.f32 %v703, %v732
        %v740 = vmul.f32 %v704, %v732
        %v741 = vmul.f32 %v705, %v732
        %v742 = vmul.f32 %v706, %v732
        %v743 = vmul.f32 %v707, %v732
        %v744 = vmul.f32 %v708, %v732
        %v745 = vmul.f32 %v709, %v732
        %v746 = vmul.f32 %v710, %v732
        %v747 = vmul.f32 %v711, %v732
        %v748 = vmul.f32 %v712, %v732
        %v749 = vmul.f32 %v713, %v732
        %v750 = vmul.f32 %v714, %v732
        %v751 = vmul.f32 %v715, %v732
        %v752 = vmul.f32 %v716, %v732
        %v753 = vmul.f32 %v717, %v732
        %v754 = vmul.f32 %v718, %v732
        %v755 = vmul.f32 %v719, %v732
        %v756 = vmul.f32 %v720, %v732
        %v757 = vmul.f32 %v721, %v732
        %v758 = vmul.f32 %v722, %v732
        %v759 = vmul.f32 %v723, %v732
        %v760 = vmul.f32 %v724, %v732
        %v761 = vmul.f32 %v725, %v732
        %v762 = vmul.f32 %v726, %v732
        %v763 = vmul.f32 %v727, %v732
        %v764 = vmul.f32 %v728, %v732
        %v765 = vmul.f32 %v729, %v732
        %v766 = vld [vmem:[%s4] sm:$0x1]
        %v768 = vperm.slane %v766, 0
        %v770 = vadd.f32 %v734, %v768
        %v771 = vadd.f32 %v735, %v768
        %v772 = vadd.f32 %v736, %v768
        %v773 = vadd.f32 %v737, %v768
        %v774 = vadd.f32 %v738, %v768
        %v775 = vadd.f32 %v739, %v768
        %v776 = vadd.f32 %v740, %v768
        %v777 = vadd.f32 %v741, %v768
        %v778 = vadd.f32 %v742, %v768
        %v779 = vadd.f32 %v743, %v768
        %v780 = vadd.f32 %v744, %v768
        %v781 = vadd.f32 %v745, %v768
        %v782 = vadd.f32 %v746, %v768
        %v783 = vadd.f32 %v747, %v768
        %v784 = vadd.f32 %v748, %v768
        %v785 = vadd.f32 %v749, %v768
        %v786 = vadd.f32 %v750, %v768
        %v787 = vadd.f32 %v751, %v768
        %v788 = vadd.f32 %v752, %v768
        %v789 = vadd.f32 %v753, %v768
        %v790 = vadd.f32 %v754, %v768
        %v791 = vadd.f32 %v755, %v768
        %v792 = vadd.f32 %v756, %v768
        %v793 = vadd.f32 %v757, %v768
        %v794 = vadd.f32 %v758, %v768
        %v795 = vadd.f32 %v759, %v768
        %v796 = vadd.f32 %v760, %v768
        %v797 = vadd.f32 %v761, %v768
        %v798 = vadd.f32 %v762, %v768
        %v799 = vadd.f32 %v763, %v768
        %v800 = vadd.f32 %v764, %v768
        %v801 = vadd.f32 %v765, %v768
        %v802 = vmax.f32 %v770, 0.0
        %v803 = vmax.f32 %v771, 0.0
        %v804 = vmax.f32 %v772, 0.0
        %v805 = vmax.f32 %v773, 0.0
        %v806 = vmax.f32 %v774, 0.0
        %v807 = vmax.f32 %v775, 0.0
        %v808 = vmax.f32 %v776, 0.0
        %v809 = vmax.f32 %v777, 0.0
        %v810 = vmax.f32 %v778, 0.0
        %v811 = vmax.f32 %v779, 0.0
        %v812 = vmax.f32 %v780, 0.0
        %v813 = vmax.f32 %v781, 0.0
        %v814 = vmax.f32 %v782, 0.0
        %v815 = vmax.f32 %v783, 0.0
        %v816 = vmax.f32 %v784, 0.0
        %v817 = vmax.f32 %v785, 0.0
        %v818 = vmax.f32 %v786, 0.0
        %v819 = vmax.f32 %v787, 0.0
        %v820 = vmax.f32 %v788, 0.0
        %v821 = vmax.f32 %v789, 0.0
        %v822 = vmax.f32 %v790, 0.0
        %v823 = vmax.f32 %v791, 0.0
        %v824 = vmax.f32 %v792, 0.0
        %v825 = vmax.f32 %v793, 0.0
        %v826 = vmax.f32 %v794, 0.0
        %v827 = vmax.f32 %v795, 0.0
        %v828 = vmax.f32 %v796, 0.0
        %v829 = vmax.f32 %v797, 0.0
        %v830 = vmax.f32 %v798, 0.0
        %v831 = vmax.f32 %v799, 0.0
        %v832 = vmax.f32 %v800, 0.0
        %v833 = vmax.f32 %v801, 0.0
        %v834 = vpack.c.bf16 %v803, %v802
        %v835 = vpack.c.bf16 %v805, %v804
        %v836 = vpack.c.bf16 %v807, %v806
        %v837 = vpack.c.bf16 %v809, %v808
        %v838 = vpack.c.bf16 %v811, %v810
        %v839 = vpack.c.bf16 %v813, %v812
        %v840 = vpack.c.bf16 %v815, %v814
        %v841 = vpack.c.bf16 %v817, %v816
        %v842 = vpack.c.bf16 %v819, %v818
        %v843 = vpack.c.bf16 %v821, %v820
        %v844 = vpack.c.bf16 %v823, %v822
        %v845 = vpack.c.bf16 %v825, %v824
        %v846 = vpack.c.bf16 %v827, %v826
        %v847 = vpack.c.bf16 %v829, %v828
        %v848 = vpack.c.bf16 %v831, %v830
        %v849 = vpack.c.bf16 %v833, %v832
        %v850 = vld [vmem:[%s5] sm:$0xf]
        %v851 = vld [vmem:[%s5 + $0x4] sm:$0xf]
        %v852 = vld [vmem:[%s5 + $0x8] sm:$0xf]
        %v853 = vld [vmem:[%s5 + $0xc] sm:$0xf]
        %v858 = vunpack.c.l.b16 %v850
        %v859 = vunpack.c.l.b16 %v851
        %v860 = vunpack.c.l.b16 %v852
        %v861 = vunpack.c.l.b16 %v853
        %v862 = vpack.c.b16 %v859, %v858
        %v863 = vpack.c.b16 %v861, %v860
        %vm866 = vcmask 261120
        %v868 = vsel %vm866, %v834, 0
        %v871 = vsel %vm866, %v835, 0
        %v874 = vsel %vm866, %v836, 0
        %v877 = vsel %vm866, %v837, 0
        %v880 = vsel %vm866, %v838, 0
        %v883 = vsel %vm866, %v839, 0
        %v886 = vsel %vm866, %v840, 0
        %v889 = vsel %vm866, %v841, 0
        %v892 = vsel %vm866, %v842, 0
        %v895 = vsel %vm866, %v843, 0
        %v898 = vsel %vm866, %v844, 0
        %v901 = vsel %vm866, %v845, 0
        %v904 = vsel %vm866, %v846, 0
        %v907 = vsel %vm866, %v847, 0
        %v910 = vsel %vm866, %v848, 0
        %v913 = vsel %vm866, %v849, 0
        %915 = vmatpush.bf16.msra.mxu0 0
        %916 = vmatpush.bf16.msra.mxu0 0
        %917 = vmatpush.bf16.msra.mxu0 0
        %918 = vmatpush.bf16.msra.mxu0 0
        %919 = vmatpush.bf16.msra.mxu0 0
        %920 = vmatpush.bf16.msra.mxu0 0
        %921 = vmatpush.bf16.msra.mxu0 %v863
        %922 = vmatpush.bf16.msra.mxu0 %v862
        %923 = vmatmul.bf16.gmra.mxu0 %v868
        %v924 = vpop.f32.mrf.mxu0
        %v925 = vadd.f32 0.0, %v924
        %v926 = vpop.f32.mrf.mxu0
        %v927 = vadd.f32 0.0, %v926
        %928 = vmatmul.bf16.gmra.mxu0 %v871
        %v929 = vpop.f32.mrf.mxu0
        %v930 = vadd.f32 0.0, %v929
        %v931 = vpop.f32.mrf.mxu0
        %v932 = vadd.f32 0.0, %v931
        %933 = vmatmul.bf16.gmra.mxu0 %v874
        %v934 = vpop.f32.mrf.mxu0
        %v935 = vadd.f32 0.0, %v934
        %v936 = vpop.f32.mrf.mxu0
        %v937 = vadd.f32 0.0, %v936
        %938 = vmatmul.bf16.gmra.mxu0 %v877
        %v939 = vpop.f32.mrf.mxu0
        %v940 = vadd.f32 0.0, %v939
        %v941 = vpop.f32.mrf.mxu0
        %v942 = vadd.f32 0.0, %v941
        %943 = vmatmul.bf16.gmra.mxu0 %v880
        %v944 = vpop.f32.mrf.mxu0
        %v945 = vadd.f32 0.0, %v944
        %v946 = vpop.f32.mrf.mxu0
        %v947 = vadd.f32 0.0, %v946
        %948 = vmatmul.bf16.gmra.mxu0 %v883
        %v949 = vpop.f32.mrf.mxu0
        %v950 = vadd.f32 0.0, %v949
        %v951 = vpop.f32.mrf.mxu0
        %v952 = vadd.f32 0.0, %v951
        %953 = vmatmul.bf16.gmra.mxu0 %v886
        %v954 = vpop.f32.mrf.mxu0
        %v955 = vadd.f32 0.0, %v954
        %v956 = vpop.f32.mrf.mxu0
        %v957 = vadd.f32 0.0, %v956
        %958 = vmatmul.bf16.gmra.mxu0 %v889
        %v959 = vpop.f32.mrf.mxu0
        %v960 = vadd.f32 0.0, %v959
        %v961 = vpop.f32.mrf.mxu0
        %v962 = vadd.f32 0.0, %v961
        %963 = vmatmul.bf16.gmra.mxu0 %v892
        %v964 = vpop.f32.mrf.mxu0
        %v965 = vadd.f32 0.0, %v964
        %v966 = vpop.f32.mrf.mxu0
        %v967 = vadd.f32 0.0, %v966
        %968 = vmatmul.bf16.gmra.mxu0 %v895
        %v969 = vpop.f32.mrf.mxu0
        %v970 = vadd.f32 0.0, %v969
        %v971 = vpop.f32.mrf.mxu0
        %v972 = vadd.f32 0.0, %v971
        %973 = vmatmul.bf16.gmra.mxu0 %v898
        %v974 = vpop.f32.mrf.mxu0
        %v975 = vadd.f32 0.0, %v974
        %v976 = vpop.f32.mrf.mxu0
        %v977 = vadd.f32 0.0, %v976
        %978 = vmatmul.bf16.gmra.mxu0 %v901
        %v979 = vpop.f32.mrf.mxu0
        %v980 = vadd.f32 0.0, %v979
        %v981 = vpop.f32.mrf.mxu0
        %v982 = vadd.f32 0.0, %v981
        %983 = vmatmul.bf16.gmra.mxu0 %v904
        %v984 = vpop.f32.mrf.mxu0
        %v985 = vadd.f32 0.0, %v984
        %v986 = vpop.f32.mrf.mxu0
        %v987 = vadd.f32 0.0, %v986
        %988 = vmatmul.bf16.gmra.mxu0 %v907
        %v989 = vpop.f32.mrf.mxu0
        %v990 = vadd.f32 0.0, %v989
        %v991 = vpop.f32.mrf.mxu0
        %v992 = vadd.f32 0.0, %v991
        %993 = vmatmul.bf16.gmra.mxu0 %v910
        %v994 = vpop.f32.mrf.mxu0
        %v995 = vadd.f32 0.0, %v994
        %v996 = vpop.f32.mrf.mxu0
        %v997 = vadd.f32 0.0, %v996
        %998 = vmatmul.bf16.gmra.mxu0 %v913
        %v999 = vpop.f32.mrf.mxu0
        %v1000 = vadd.f32 0.0, %v999
        %v1001 = vpop.f32.mrf.mxu0
        %v1002 = vadd.f32 0.0, %v1001
        %1003 = vdwg.mxu0
        %v1004 = vld [vmem:[%s6] sm:$0x1]
        %v1006 = vperm.slane %v1004, 0
        %v1008 = vmul.f32 %v925, %v1006
        %v1009 = vmul.f32 %v927, %v1006
        %v1010 = vmul.f32 %v930, %v1006
        %v1011 = vmul.f32 %v932, %v1006
        %v1012 = vmul.f32 %v935, %v1006
        %v1013 = vmul.f32 %v937, %v1006
        %v1014 = vmul.f32 %v940, %v1006
        %v1015 = vmul.f32 %v942, %v1006
        %v1016 = vmul.f32 %v945, %v1006
        %v1017 = vmul.f32 %v947, %v1006
        %v1018 = vmul.f32 %v950, %v1006
        %v1019 = vmul.f32 %v952, %v1006
        %v1020 = vmul.f32 %v955, %v1006
        %v1021 = vmul.f32 %v957, %v1006
        %v1022 = vmul.f32 %v960, %v1006
        %v1023 = vmul.f32 %v962, %v1006
        %v1024 = vmul.f32 %v965, %v1006
        %v1025 = vmul.f32 %v967, %v1006
        %v1026 = vmul.f32 %v970, %v1006
        %v1027 = vmul.f32 %v972, %v1006
        %v1028 = vmul.f32 %v975, %v1006
        %v1029 = vmul.f32 %v977, %v1006
        %v1030 = vmul.f32 %v980, %v1006
        %v1031 = vmul.f32 %v982, %v1006
        %v1032 = vmul.f32 %v985, %v1006
        %v1033 = vmul.f32 %v987, %v1006
        %v1034 = vmul.f32 %v990, %v1006
        %v1035 = vmul.f32 %v992, %v1006
        %v1036 = vmul.f32 %v995, %v1006
        %v1037 = vmul.f32 %v997, %v1006
        %v1038 = vmul.f32 %v1000, %v1006
        %v1039 = vmul.f32 %v1002, %v1006
        %v1040 = vld [vmem:[%s7] sm:$0x1]
        %v1042 = vperm.slane %v1040, 0
        %v1044 = vadd.f32 %v1008, %v1042
        %v1045 = vadd.f32 %v1009, %v1042
        %v1046 = vadd.f32 %v1010, %v1042
        %v1047 = vadd.f32 %v1011, %v1042
        %v1048 = vadd.f32 %v1012, %v1042
        %v1049 = vadd.f32 %v1013, %v1042
        %v1050 = vadd.f32 %v1014, %v1042
        %v1051 = vadd.f32 %v1015, %v1042
        %v1052 = vadd.f32 %v1016, %v1042
        %v1053 = vadd.f32 %v1017, %v1042
        %v1054 = vadd.f32 %v1018, %v1042
        %v1055 = vadd.f32 %v1019, %v1042
        %v1056 = vadd.f32 %v1020, %v1042
        %v1057 = vadd.f32 %v1021, %v1042
        %v1058 = vadd.f32 %v1022, %v1042
        %v1059 = vadd.f32 %v1023, %v1042
        %v1060 = vadd.f32 %v1024, %v1042
        %v1061 = vadd.f32 %v1025, %v1042
        %v1062 = vadd.f32 %v1026, %v1042
        %v1063 = vadd.f32 %v1027, %v1042
        %v1064 = vadd.f32 %v1028, %v1042
        %v1065 = vadd.f32 %v1029, %v1042
        %v1066 = vadd.f32 %v1030, %v1042
        %v1067 = vadd.f32 %v1031, %v1042
        %v1068 = vadd.f32 %v1032, %v1042
        %v1069 = vadd.f32 %v1033, %v1042
        %v1070 = vadd.f32 %v1034, %v1042
        %v1071 = vadd.f32 %v1035, %v1042
        %v1072 = vadd.f32 %v1036, %v1042
        %v1073 = vadd.f32 %v1037, %v1042
        %v1074 = vadd.f32 %v1038, %v1042
        %v1075 = vadd.f32 %v1039, %v1042
        %v1076 = vmax.f32 %v1044, 0.0
        %v1077 = vmax.f32 %v1045, 0.0
        %v1078 = vmax.f32 %v1046, 0.0
        %v1079 = vmax.f32 %v1047, 0.0
        %v1080 = vmax.f32 %v1048, 0.0
        %v1081 = vmax.f32 %v1049, 0.0
        %v1082 = vmax.f32 %v1050, 0.0
        %v1083 = vmax.f32 %v1051, 0.0
        %v1084 = vmax.f32 %v1052, 0.0
        %v1085 = vmax.f32 %v1053, 0.0
        %v1086 = vmax.f32 %v1054, 0.0
        %v1087 = vmax.f32 %v1055, 0.0
        %v1088 = vmax.f32 %v1056, 0.0
        %v1089 = vmax.f32 %v1057, 0.0
        %v1090 = vmax.f32 %v1058, 0.0
        %v1091 = vmax.f32 %v1059, 0.0
        %v1092 = vmax.f32 %v1060, 0.0
        %v1093 = vmax.f32 %v1061, 0.0
        %v1094 = vmax.f32 %v1062, 0.0
        %v1095 = vmax.f32 %v1063, 0.0
        %v1096 = vmax.f32 %v1064, 0.0
        %v1097 = vmax.f32 %v1065, 0.0
        %v1098 = vmax.f32 %v1066, 0.0
        %v1099 = vmax.f32 %v1067, 0.0
        %v1100 = vmax.f32 %v1068, 0.0
        %v1101 = vmax.f32 %v1069, 0.0
        %v1102 = vmax.f32 %v1070, 0.0
        %v1103 = vmax.f32 %v1071, 0.0
        %v1104 = vmax.f32 %v1072, 0.0
        %v1105 = vmax.f32 %v1073, 0.0
        %v1106 = vmax.f32 %v1074, 0.0
        %v1107 = vmax.f32 %v1075, 0.0
        %v1108 = vpack.c.bf16 %v1076, %v1076
        %v1109 = vpack.c.bf16 %v1077, %v1077
        %v1110 = vpack.c.bf16 %v1078, %v1078
        %v1111 = vpack.c.bf16 %v1079, %v1079
        %v1112 = vpack.c.bf16 %v1080, %v1080
        %v1113 = vpack.c.bf16 %v1081, %v1081
        %v1114 = vpack.c.bf16 %v1082, %v1082
        %v1115 = vpack.c.bf16 %v1083, %v1083
        %v1116 = vpack.c.bf16 %v1084, %v1084
        %v1117 = vpack.c.bf16 %v1085, %v1085
        %v1118 = vpack.c.bf16 %v1086, %v1086
        %v1119 = vpack.c.bf16 %v1087, %v1087
        %v1120 = vpack.c.bf16 %v1088, %v1088
        %v1121 = vpack.c.bf16 %v1089, %v1089
        %v1122 = vpack.c.bf16 %v1090, %v1090
        %v1123 = vpack.c.bf16 %v1091, %v1091
        %v1124 = vpack.c.bf16 %v1092, %v1092
        %v1125 = vpack.c.bf16 %v1093, %v1093
        %v1126 = vpack.c.bf16 %v1094, %v1094
        %v1127 = vpack.c.bf16 %v1095, %v1095
        %v1128 = vpack.c.bf16 %v1096, %v1096
        %v1129 = vpack.c.bf16 %v1097, %v1097
        %v1130 = vpack.c.bf16 %v1098, %v1098
        %v1131 = vpack.c.bf16 %v1099, %v1099
        %v1132 = vpack.c.bf16 %v1100, %v1100
        %v1133 = vpack.c.bf16 %v1101, %v1101
        %v1134 = vpack.c.bf16 %v1102, %v1102
        %v1135 = vpack.c.bf16 %v1103, %v1103
        %v1136 = vpack.c.bf16 %v1104, %v1104
        %v1137 = vpack.c.bf16 %v1105, %v1105
        %v1138 = vpack.c.bf16 %v1106, %v1106
        %v1139 = vpack.c.bf16 %v1107, %v1107
        %v1172 = vunpack.c.l.b16 %v1108
        %v1173 = vunpack.c.l.b16 %v1109
        %v1174 = vunpack.c.l.b16 %v1110
        %v1175 = vunpack.c.l.b16 %v1111
        %v1176 = vunpack.c.l.b16 %v1112
        %v1177 = vunpack.c.l.b16 %v1113
        %v1178 = vunpack.c.l.b16 %v1114
        %v1179 = vunpack.c.l.b16 %v1115
        %v1180 = vunpack.c.l.b16 %v1116
        %v1181 = vunpack.c.l.b16 %v1117
        %v1182 = vunpack.c.l.b16 %v1118
        %v1183 = vunpack.c.l.b16 %v1119
        %v1184 = vunpack.c.l.b16 %v1120
        %v1185 = vunpack.c.l.b16 %v1121
        %v1186 = vunpack.c.l.b16 %v1122
        %v1187 = vunpack.c.l.b16 %v1123
        %v1188 = vunpack.c.l.b16 %v1124
        %v1189 = vunpack.c.l.b16 %v1125
        %v1190 = vunpack.c.l.b16 %v1126
        %v1191 = vunpack.c.l.b16 %v1127
        %v1192 = vunpack.c.l.b16 %v1128
        %v1193 = vunpack.c.l.b16 %v1129
        %v1194 = vunpack.c.l.b16 %v1130
        %v1195 = vunpack.c.l.b16 %v1131
        %v1196 = vunpack.c.l.b16 %v1132
        %v1197 = vunpack.c.l.b16 %v1133
        %v1198 = vunpack.c.l.b16 %v1134
        %v1199 = vunpack.c.l.b16 %v1135
        %v1200 = vunpack.c.l.b16 %v1136
        %v1201 = vunpack.c.l.b16 %v1137
        %v1202 = vunpack.c.l.b16 %v1138
        %v1203 = vunpack.c.l.b16 %v1139
        %v1204 = vpack.c.b16 %v1173, %v1172
        %v1205 = vpack.c.b16 %v1175, %v1174
        %v1206 = vpack.c.b16 %v1177, %v1176
        %v1207 = vpack.c.b16 %v1179, %v1178
        %v1208 = vpack.c.b16 %v1181, %v1180
        %v1209 = vpack.c.b16 %v1183, %v1182
        %v1210 = vpack.c.b16 %v1185, %v1184
        %v1211 = vpack.c.b16 %v1187, %v1186
        %v1212 = vpack.c.b16 %v1189, %v1188
        %v1213 = vpack.c.b16 %v1191, %v1190
        %v1214 = vpack.c.b16 %v1193, %v1192
        %v1215 = vpack.c.b16 %v1195, %v1194
        %v1216 = vpack.c.b16 %v1197, %v1196
        %v1217 = vpack.c.b16 %v1199, %v1198
        %v1218 = vpack.c.b16 %v1201, %v1200
        %v1219 = vpack.c.b16 %v1203, %v1202
        %v1221 = vshrl.u32 %v1204, 16
        %v1223 = vrot.slane %v1221, 7
        %v1224 = vshll.u32 %v1204, 16
        %v1226 = vor.u32 %v1223, %v1224
        %v1228 = vshrl.u32 %v1205, 16
        %v1230 = vrot.slane %v1228, 7
        %v1231 = vshll.u32 %v1205, 16
        %v1233 = vor.u32 %v1230, %v1231
        %v1235 = vshrl.u32 %v1206, 16
        %v1237 = vrot.slane %v1235, 7
        %v1238 = vshll.u32 %v1206, 16
        %v1240 = vor.u32 %v1237, %v1238
        %v1242 = vshrl.u32 %v1207, 16
        %v1244 = vrot.slane %v1242, 7
        %v1245 = vshll.u32 %v1207, 16
        %v1247 = vor.u32 %v1244, %v1245
        %v1249 = vshrl.u32 %v1208, 16
        %v1251 = vrot.slane %v1249, 7
        %v1252 = vshll.u32 %v1208, 16
        %v1254 = vor.u32 %v1251, %v1252
        %v1256 = vshrl.u32 %v1209, 16
        %v1258 = vrot.slane %v1256, 7
        %v1259 = vshll.u32 %v1209, 16
        %v1261 = vor.u32 %v1258, %v1259
        %v1263 = vshrl.u32 %v1210, 16
        %v1265 = vrot.slane %v1263, 7
        %v1266 = vshll.u32 %v1210, 16
        %v1268 = vor.u32 %v1265, %v1266
        %v1270 = vshrl.u32 %v1211, 16
        %v1272 = vrot.slane %v1270, 7
        %v1273 = vshll.u32 %v1211, 16
        %v1275 = vor.u32 %v1272, %v1273
        %v1277 = vshrl.u32 %v1212, 16
        %v1279 = vrot.slane %v1277, 7
        %v1280 = vshll.u32 %v1212, 16
        %v1282 = vor.u32 %v1279, %v1280
        %v1284 = vshrl.u32 %v1213, 16
        %v1286 = vrot.slane %v1284, 7
        %v1287 = vshll.u32 %v1213, 16
        %v1289 = vor.u32 %v1286, %v1287
        %v1291 = vshrl.u32 %v1214, 16
        %v1293 = vrot.slane %v1291, 7
        %v1294 = vshll.u32 %v1214, 16
        %v1296 = vor.u32 %v1293, %v1294
        %v1298 = vshrl.u32 %v1215, 16
        %v1300 = vrot.slane %v1298, 7
        %v1301 = vshll.u32 %v1215, 16
        %v1303 = vor.u32 %v1300, %v1301
        %v1305 = vshrl.u32 %v1216, 16
        %v1307 = vrot.slane %v1305, 7
        %v1308 = vshll.u32 %v1216, 16
        %v1310 = vor.u32 %v1307, %v1308
        %v1312 = vshrl.u32 %v1217, 16
        %v1314 = vrot.slane %v1312, 7
        %v1315 = vshll.u32 %v1217, 16
        %v1317 = vor.u32 %v1314, %v1315
        %v1319 = vshrl.u32 %v1218, 16
        %v1321 = vrot.slane %v1319, 7
        %v1322 = vshll.u32 %v1218, 16
        %v1324 = vor.u32 %v1321, %v1322
        %v1326 = vshrl.u32 %v1219, 16
        %v1328 = vrot.slane %v1326, 7
        %v1329 = vshll.u32 %v1219, 16
        %v1331 = vor.u32 %v1328, %v1329
        %vm1348 = vcmask 1040384
        %vm1349 = vsmask.f32 256
        %vm1350 = vmand %vm1348, %vm1349
        %v1351 = vsel %vm1350, 0, %v1226
        %v1352 = vsel %vm1350, 0, %v1233
        %v1353 = vsel %vm1350, 0, %v1240
        %v1354 = vsel %vm1350, 0, %v1247
        %v1355 = vsel %vm1350, 0, %v1254
        %v1356 = vsel %vm1350, 0, %v1261
        %v1357 = vsel %vm1350, 0, %v1268
        %v1358 = vsel %vm1350, 0, %v1275
        %v1359 = vsel %vm1350, 0, %v1282
        %v1360 = vsel %vm1350, 0, %v1289
        %v1361 = vsel %vm1350, 0, %v1296
        %v1362 = vsel %vm1350, 0, %v1303
        %v1363 = vsel %vm1350, 0, %v1310
        %v1364 = vsel %vm1350, 0, %v1317
        %v1365 = vsel %vm1350, 0, %v1324
        %v1366 = vsel %vm1350, 0, %v1331
        %v1367 = vrot.slane %v1224, 1
        %v1368 = vor.u32 %v1221, %v1367
        %v1369 = vrot.slane %v1231, 1
        %v1370 = vor.u32 %v1228, %v1369
        %v1371 = vrot.slane %v1238, 1
        %v1372 = vor.u32 %v1235, %v1371
        %v1373 = vrot.slane %v1245, 1
        %v1374 = vor.u32 %v1242, %v1373
        %v1375 = vrot.slane %v1252, 1
        %v1376 = vor.u32 %v1249, %v1375
        %v1377 = vrot.slane %v1259, 1
        %v1378 = vor.u32 %v1256, %v1377
        %v1379 = vrot.slane %v1266, 1
        %v1380 = vor.u32 %v1263, %v1379
        %v1381 = vrot.slane %v1273, 1
        %v1382 = vor.u32 %v1270, %v1381
        %v1383 = vrot.slane %v1280, 1
        %v1384 = vor.u32 %v1277, %v1383
        %v1385 = vrot.slane %v1287, 1
        %v1386 = vor.u32 %v1284, %v1385
        %v1387 = vrot.slane %v1294, 1
        %v1388 = vor.u32 %v1291, %v1387
        %v1389 = vrot.slane %v1301, 1
        %v1390 = vor.u32 %v1298, %v1389
        %v1391 = vrot.slane %v1308, 1
        %v1392 = vor.u32 %v1305, %v1391
        %v1393 = vrot.slane %v1315, 1
        %v1394 = vor.u32 %v1312, %v1393
        %v1395 = vrot.slane %v1322, 1
        %v1396 = vor.u32 %v1319, %v1395
        %v1397 = vrot.slane %v1329, 1
        %v1398 = vor.u32 %v1326, %v1397
        %vm1415 = vcmask 1047552
        %vm1416 = vsmask.f32 7424
        %vm1417 = vmand %vm1415, %vm1416
        %v1418 = vsel %vm1417, %v1368, 0
        %v1419 = vsel %vm1417, %v1370, 0
        %v1420 = vsel %vm1417, %v1372, 0
        %v1421 = vsel %vm1417, %v1374, 0
        %v1422 = vsel %vm1417, %v1376, 0
        %v1423 = vsel %vm1417, %v1378, 0
        %v1424 = vsel %vm1417, %v1380, 0
        %v1425 = vsel %vm1417, %v1382, 0
        %v1426 = vsel %vm1417, %v1384, 0
        %v1427 = vsel %vm1417, %v1386, 0
        %v1428 = vsel %vm1417, %v1388, 0
        %v1429 = vsel %vm1417, %v1390, 0
        %v1430 = vsel %vm1417, %v1392, 0
        %v1431 = vsel %vm1417, %v1394, 0
        %v1432 = vsel %vm1417, %v1396, 0
        %v1433 = vsel %vm1417, %v1398, 0
        %1434 = vrot.lane.b32.xlu0 %v1204, 16
        %v1435 = vpop.permute.xlu0 %1434
        %1436 = vrot.lane.b32.xlu0 %v1205, 16
        %v1437 = vpop.permute.xlu0 %1436
        %1438 = vrot.lane.b32.xlu0 %v1206, 16
        %v1439 = vpop.permute.xlu0 %1438
        %1440 = vrot.lane.b32.xlu0 %v1207, 16
        %v1441 = vpop.permute.xlu0 %1440
        %1442 = vrot.lane.b32.xlu0 %v1208, 16
        %v1443 = vpop.permute.xlu0 %1442
        %1444 = vrot.lane.b32.xlu0 %v1209, 16
        %v1445 = vpop.permute.xlu0 %1444
        %1446 = vrot.lane.b32.xlu0 %v1210, 16
        %v1447 = vpop.permute.xlu0 %1446
        %1448 = vrot.lane.b32.xlu0 %v1211, 16
        %v1449 = vpop.permute.xlu0 %1448
        %1450 = vrot.lane.b32.xlu0 %v1212, 16
        %v1451 = vpop.permute.xlu0 %1450
        %1452 = vrot.lane.b32.xlu0 %v1213, 16
        %v1453 = vpop.permute.xlu0 %1452
        %1454 = vrot.lane.b32.xlu0 %v1214, 16
        %v1455 = vpop.permute.xlu0 %1454
        %1456 = vrot.lane.b32.xlu0 %v1215, 16
        %v1457 = vpop.permute.xlu0 %1456
        %1458 = vrot.lane.b32.xlu0 %v1216, 16
        %v1459 = vpop.permute.xlu0 %1458
        %1460 = vrot.lane.b32.xlu0 %v1217, 16
        %v1461 = vpop.permute.xlu0 %1460
        %1462 = vrot.lane.b32.xlu0 %v1218, 16
        %v1463 = vpop.permute.xlu0 %1462
        %1464 = vrot.lane.b32.xlu0 %v1219, 16
        %v1465 = vpop.permute.xlu0 %1464
        %1482 = vrot.lane.b32.xlu0 %v1418, 32
        %v1483 = vpop.permute.xlu0 %1482
        %1484 = vrot.lane.b32.xlu0 %v1419, 32
        %v1485 = vpop.permute.xlu0 %1484
        %1486 = vrot.lane.b32.xlu0 %v1420, 32
        %v1487 = vpop.permute.xlu0 %1486
        %1488 = vrot.lane.b32.xlu0 %v1421, 32
        %v1489 = vpop.permute.xlu0 %1488
        %1490 = vrot.lane.b32.xlu0 %v1422, 32
        %v1491 = vpop.permute.xlu0 %1490
        %1492 = vrot.lane.b32.xlu0 %v1423, 32
        %v1493 = vpop.permute.xlu0 %1492
        %1494 = vrot.lane.b32.xlu0 %v1424, 32
        %v1495 = vpop.permute.xlu0 %1494
        %1496 = vrot.lane.b32.xlu0 %v1425, 32
        %v1497 = vpop.permute.xlu0 %1496
        %1498 = vrot.lane.b32.xlu0 %v1426, 32
        %v1499 = vpop.permute.xlu0 %1498
        %1500 = vrot.lane.b32.xlu0 %v1427, 32
        %v1501 = vpop.permute.xlu0 %1500
        %1502 = vrot.lane.b32.xlu0 %v1428, 32
        %v1503 = vpop.permute.xlu0 %1502
        %1504 = vrot.lane.b32.xlu0 %v1429, 32
        %v1505 = vpop.permute.xlu0 %1504
        %1506 = vrot.lane.b32.xlu0 %v1430, 32
        %v1507 = vpop.permute.xlu0 %1506
        %1508 = vrot.lane.b32.xlu0 %v1431, 32
        %v1509 = vpop.permute.xlu0 %1508
        %1510 = vrot.lane.b32.xlu0 %v1432, 32
        %v1511 = vpop.permute.xlu0 %1510
        %1512 = vrot.lane.b32.xlu0 %v1433, 32
        %v1513 = vpop.permute.xlu0 %1512
        %vm1514 = vcmask 130048
        %v1517 = vsel %vm1514, %v1351, %v1435
        %v1520 = vsel %vm1514, %v1352, %v1437
        %v1523 = vsel %vm1514, %v1353, %v1439
        %v1526 = vsel %vm1514, %v1354, %v1441
        %v1529 = vsel %vm1514, %v1355, %v1443
        %v1532 = vsel %vm1514, %v1356, %v1445
        %v1535 = vsel %vm1514, %v1357, %v1447
        %v1538 = vsel %vm1514, %v1358, %v1449
        %v1541 = vsel %vm1514, %v1359, %v1451
        %v1544 = vsel %vm1514, %v1360, %v1453
        %v1547 = vsel %vm1514, %v1361, %v1455
        %v1550 = vsel %vm1514, %v1362, %v1457
        %v1553 = vsel %vm1514, %v1363, %v1459
        %v1556 = vsel %vm1514, %v1364, %v1461
        %v1559 = vsel %vm1514, %v1365, %v1463
        %v1562 = vsel %vm1514, %v1366, %v1465
        %v1564 = vsel %vm866, %v1517, %v1483
        %v1566 = vsel %vm866, %v1520, %v1485
        %v1568 = vsel %vm866, %v1523, %v1487
        %v1570 = vsel %vm866, %v1526, %v1489
        %v1572 = vsel %vm866, %v1529, %v1491
        %v1574 = vsel %vm866, %v1532, %v1493
        %v1576 = vsel %vm866, %v1535, %v1495
        %v1578 = vsel %vm866, %v1538, %v1497
        %v1580 = vsel %vm866, %v1541, %v1499
        %v1582 = vsel %vm866, %v1544, %v1501
        %v1584 = vsel %vm866, %v1547, %v1503
        %v1586 = vsel %vm866, %v1550, %v1505
        %v1588 = vsel %vm866, %v1553, %v1507
        %v1590 = vsel %vm866, %v1556, %v1509
        %v1592 = vsel %vm866, %v1559, %v1511
        %v1594 = vsel %vm866, %v1562, %v1513
        %v1595 = vld [vmem:[%s8] sm:$0xf]
        %v1596 = vld [vmem:[%s8 + $0x4] sm:$0xf]
        %v1597 = vld [vmem:[%s8 + $0x8] sm:$0xf]
        %v1598 = vld [vmem:[%s8 + $0xc] sm:$0xf]
        %v1599 = vld [vmem:[%s8 + $0x10] sm:$0xf]
        %v1600 = vld [vmem:[%s8 + $0x14] sm:$0xf]
        %v1601 = vld [vmem:[%s8 + $0x18] sm:$0xf]
        %v1602 = vld [vmem:[%s8 + $0x1c] sm:$0xf]
        %v1603 = vld [vmem:[%s8 + $0x20] sm:$0xf]
        %v1604 = vld [vmem:[%s8 + $0x24] sm:$0xf]
        %v1605 = vld [vmem:[%s8 + $0x28] sm:$0xf]
        %v1606 = vld [vmem:[%s8 + $0x2c] sm:$0xf]
        %v1607 = vld [vmem:[%s8 + $0x30] sm:$0xf]
        %v1608 = vld [vmem:[%s8 + $0x34] sm:$0xf]
        %v1609 = vld [vmem:[%s8 + $0x38] sm:$0xf]
        %v1610 = vld [vmem:[%s8 + $0x3c] sm:$0xf]
        %v1611 = vld [vmem:[%s8 + $0x40] sm:$0xf]
        %v1612 = vld [vmem:[%s8 + $0x44] sm:$0xf]
        %v1619 = vunpack.c.l.b16 %v1595
        %v1620 = vunpack.c.l.b16 %v1596
        %v1621 = vunpack.c.l.b16 %v1597
        %v1622 = vunpack.c.l.b16 %v1598
        %v1623 = vunpack.c.l.b16 %v1599
        %v1624 = vunpack.c.l.b16 %v1600
        %v1625 = vpack.c.b16 %v1620, %v1619
        %v1626 = vpack.c.b16 %v1622, %v1621
        %v1627 = vpack.c.b16 %v1624, %v1623
        %vm1631 = vcmask 392192
        %v1632 = vsel %vm1631, %v1564, 0
        %v1634 = vsel %vm1631, %v1566, 0
        %v1636 = vsel %vm1631, %v1568, 0
        %v1638 = vsel %vm1631, %v1570, 0
        %v1640 = vsel %vm1631, %v1572, 0
        %v1642 = vsel %vm1631, %v1574, 0
        %v1644 = vsel %vm1631, %v1576, 0
        %v1646 = vsel %vm1631, %v1578, 0
        %v1648 = vsel %vm1631, %v1580, 0
        %v1650 = vsel %vm1631, %v1582, 0
        %v1652 = vsel %vm1631, %v1584, 0
        %v1654 = vsel %vm1631, %v1586, 0
        %v1656 = vsel %vm1631, %v1588, 0
        %v1658 = vsel %vm1631, %v1590, 0
        %v1660 = vsel %vm1631, %v1592, 0
        %v1662 = vsel %vm1631, %v1594, 0
        %1664 = vmatpush.bf16.msra.mxu0 0
        %1665 = vmatpush.bf16.msra.mxu0 0
        %1666 = vmatpush.bf16.msra.mxu0 0
        %1667 = vmatpush.bf16.msra.mxu0 0
        %1668 = vmatpush.bf16.msra.mxu0 0
        %1669 = vmatpush.bf16.msra.mxu0 %v1627
        %1670 = vmatpush.bf16.msra.mxu0 %v1626
        %1671 = vmatpush.bf16.msra.mxu0 %v1625
        %1672 = vmatmul.bf16.gmra.mxu0 %v1632
        %v1673 = vpop.f32.mrf.mxu0
        %v1674 = vadd.f32 0.0, %v1673
        %v1675 = vpop.f32.mrf.mxu0
        %v1676 = vadd.f32 0.0, %v1675
        %1677 = vmatmul.bf16.gmra.mxu0 %v1634
        %v1678 = vpop.f32.mrf.mxu0
        %v1679 = vadd.f32 0.0, %v1678
        %v1680 = vpop.f32.mrf.mxu0
        %v1681 = vadd.f32 0.0, %v1680
        %1682 = vmatmul.bf16.gmra.mxu0 %v1636
        %v1683 = vpop.f32.mrf.mxu0
        %v1684 = vadd.f32 0.0, %v1683
        %v1685 = vpop.f32.mrf.mxu0
        %v1686 = vadd.f32 0.0, %v1685
        %1687 = vmatmul.bf16.gmra.mxu0 %v1638
        %v1688 = vpop.f32.mrf.mxu0
        %v1689 = vadd.f32 0.0, %v1688
        %v1690 = vpop.f32.mrf.mxu0
        %v1691 = vadd.f32 0.0, %v1690
        %1692 = vmatmul.bf16.gmra.mxu0 %v1640
        %v1693 = vpop.f32.mrf.mxu0
        %v1694 = vadd.f32 0.0, %v1693
        %v1695 = vpop.f32.mrf.mxu0
        %v1696 = vadd.f32 0.0, %v1695
        %1697 = vmatmul.bf16.gmra.mxu0 %v1642
        %v1698 = vpop.f32.mrf.mxu0
        %v1699 = vadd.f32 0.0, %v1698
        %v1700 = vpop.f32.mrf.mxu0
        %v1701 = vadd.f32 0.0, %v1700
        %1702 = vmatmul.bf16.gmra.mxu0 %v1644
        %v1703 = vpop.f32.mrf.mxu0
        %v1704 = vadd.f32 0.0, %v1703
        %v1705 = vpop.f32.mrf.mxu0
        %v1706 = vadd.f32 0.0, %v1705
        %1707 = vmatmul.bf16.gmra.mxu0 %v1646
        %v1708 = vpop.f32.mrf.mxu0
        %v1709 = vadd.f32 0.0, %v1708
        %v1710 = vpop.f32.mrf.mxu0
        %v1711 = vadd.f32 0.0, %v1710
        %1712 = vmatmul.bf16.gmra.mxu0 %v1648
        %v1713 = vpop.f32.mrf.mxu0
        %v1714 = vadd.f32 0.0, %v1713
        %v1715 = vpop.f32.mrf.mxu0
        %v1716 = vadd.f32 0.0, %v1715
        %1717 = vmatmul.bf16.gmra.mxu0 %v1650
        %v1718 = vpop.f32.mrf.mxu0
        %v1719 = vadd.f32 0.0, %v1718
        %v1720 = vpop.f32.mrf.mxu0
        %v1721 = vadd.f32 0.0, %v1720
        %1722 = vmatmul.bf16.gmra.mxu0 %v1652
        %v1723 = vpop.f32.mrf.mxu0
        %v1724 = vadd.f32 0.0, %v1723
        %v1725 = vpop.f32.mrf.mxu0
        %v1726 = vadd.f32 0.0, %v1725
        %1727 = vmatmul.bf16.gmra.mxu0 %v1654
        %v1728 = vpop.f32.mrf.mxu0
        %v1729 = vadd.f32 0.0, %v1728
        %v1730 = vpop.f32.mrf.mxu0
        %v1731 = vadd.f32 0.0, %v1730
        %1732 = vmatmul.bf16.gmra.mxu0 %v1656
        %v1733 = vpop.f32.mrf.mxu0
        %v1734 = vadd.f32 0.0, %v1733
        %v1735 = vpop.f32.mrf.mxu0
        %v1736 = vadd.f32 0.0, %v1735
        %1737 = vmatmul.bf16.gmra.mxu0 %v1658
        %v1738 = vpop.f32.mrf.mxu0
        %v1739 = vadd.f32 0.0, %v1738
        %v1740 = vpop.f32.mrf.mxu0
        %v1741 = vadd.f32 0.0, %v1740
        %1742 = vmatmul.bf16.gmra.mxu0 %v1660
        %v1743 = vpop.f32.mrf.mxu0
        %v1744 = vadd.f32 0.0, %v1743
        %v1745 = vpop.f32.mrf.mxu0
        %v1746 = vadd.f32 0.0, %v1745
        %1747 = vmatmul.bf16.gmra.mxu0 %v1662
        %v1748 = vpop.f32.mrf.mxu0
        %v1749 = vpop.f32.mrf.mxu0
        %1750 = vdwg.mxu0
        %v1757 = vunpack.c.l.b16 %v1601
        %v1758 = vunpack.c.l.b16 %v1602
        %v1759 = vunpack.c.l.b16 %v1603
        %v1760 = vunpack.c.l.b16 %v1604
        %v1761 = vunpack.c.l.b16 %v1605
        %v1762 = vunpack.c.l.b16 %v1606
        %v1763 = vpack.c.b16 %v1758, %v1757
        %v1764 = vpack.c.b16 %v1760, %v1759
        %v1765 = vpack.c.b16 %v1762, %v1761
        %1769 = vmatpush.bf16.msra.mxu0 0
        %1770 = vmatpush.bf16.msra.mxu0 0
        %1771 = vmatpush.bf16.msra.mxu0 0
        %1772 = vmatpush.bf16.msra.mxu0 0
        %1773 = vmatpush.bf16.msra.mxu0 0
        %1774 = vmatpush.bf16.msra.mxu0 %v1765
        %1775 = vmatpush.bf16.msra.mxu0 %v1764
        %1776 = vmatpush.bf16.msra.mxu0 %v1763
        %1777 = vmatmul.bf16.gmra.mxu0 %v1632
        %v1778 = vpop.f32.mrf.mxu0
        %v1779 = vadd.f32 0.0, %v1778
        %v1780 = vpop.f32.mrf.mxu0
        %v1781 = vadd.f32 0.0, %v1780
        %1782 = vmatmul.bf16.gmra.mxu0 %v1634
        %v1783 = vpop.f32.mrf.mxu0
        %v1784 = vadd.f32 0.0, %v1783
        %v1785 = vpop.f32.mrf.mxu0
        %v1786 = vadd.f32 0.0, %v1785
        %1787 = vmatmul.bf16.gmra.mxu0 %v1636
        %v1788 = vpop.f32.mrf.mxu0
        %v1789 = vadd.f32 0.0, %v1788
        %v1790 = vpop.f32.mrf.mxu0
        %v1791 = vadd.f32 0.0, %v1790
        %1792 = vmatmul.bf16.gmra.mxu0 %v1638
        %v1793 = vpop.f32.mrf.mxu0
        %v1794 = vadd.f32 0.0, %v1793
        %v1795 = vpop.f32.mrf.mxu0
        %v1796 = vadd.f32 0.0, %v1795
        %1797 = vmatmul.bf16.gmra.mxu0 %v1640
        %v1798 = vpop.f32.mrf.mxu0
        %v1799 = vadd.f32 0.0, %v1798
        %v1800 = vpop.f32.mrf.mxu0
        %v1801 = vadd.f32 0.0, %v1800
        %1802 = vmatmul.bf16.gmra.mxu0 %v1642
        %v1803 = vpop.f32.mrf.mxu0
        %v1804 = vadd.f32 0.0, %v1803
        %v1805 = vpop.f32.mrf.mxu0
        %v1806 = vadd.f32 0.0, %v1805
        %1807 = vmatmul.bf16.gmra.mxu0 %v1644
        %v1808 = vpop.f32.mrf.mxu0
        %v1809 = vadd.f32 0.0, %v1808
        %v1810 = vpop.f32.mrf.mxu0
        %v1811 = vadd.f32 0.0, %v1810
        %1812 = vmatmul.bf16.gmra.mxu0 %v1646
        %v1813 = vpop.f32.mrf.mxu0
        %v1814 = vadd.f32 0.0, %v1813
        %v1815 = vpop.f32.mrf.mxu0
        %v1816 = vadd.f32 0.0, %v1815
        %1817 = vmatmul.bf16.gmra.mxu0 %v1648
        %v1818 = vpop.f32.mrf.mxu0
        %v1819 = vadd.f32 0.0, %v1818
        %v1820 = vpop.f32.mrf.mxu0
        %v1821 = vadd.f32 0.0, %v1820
        %1822 = vmatmul.bf16.gmra.mxu0 %v1650
        %v1823 = vpop.f32.mrf.mxu0
        %v1824 = vadd.f32 0.0, %v1823
        %v1825 = vpop.f32.mrf.mxu0
        %v1826 = vadd.f32 0.0, %v1825
        %1827 = vmatmul.bf16.gmra.mxu0 %v1652
        %v1828 = vpop.f32.mrf.mxu0
        %v1829 = vadd.f32 0.0, %v1828
        %v1830 = vpop.f32.mrf.mxu0
        %v1831 = vadd.f32 0.0, %v1830
        %1832 = vmatmul.bf16.gmra.mxu0 %v1654
        %v1833 = vpop.f32.mrf.mxu0
        %v1834 = vadd.f32 0.0, %v1833
        %v1835 = vpop.f32.mrf.mxu0
        %v1836 = vadd.f32 0.0, %v1835
        %1837 = vmatmul.bf16.gmra.mxu0 %v1656
        %v1838 = vpop.f32.mrf.mxu0
        %v1839 = vadd.f32 0.0, %v1838
        %v1840 = vpop.f32.mrf.mxu0
        %v1841 = vadd.f32 0.0, %v1840
        %1842 = vmatmul.bf16.gmra.mxu0 %v1658
        %v1843 = vpop.f32.mrf.mxu0
        %v1844 = vadd.f32 0.0, %v1843
        %v1845 = vpop.f32.mrf.mxu0
        %v1846 = vadd.f32 0.0, %v1845
        %1847 = vmatmul.bf16.gmra.mxu0 %v1660
        %v1848 = vpop.f32.mrf.mxu0
        %v1849 = vadd.f32 0.0, %v1848
        %v1850 = vpop.f32.mrf.mxu0
        %v1851 = vadd.f32 0.0, %v1850
        %1852 = vmatmul.bf16.gmra.mxu0 %v1662
        %v1853 = vpop.f32.mrf.mxu0
        %v1854 = vadd.f32 0.0, %v1853
        %v1855 = vpop.f32.mrf.mxu0
        %v1856 = vadd.f32 0.0, %v1855
        %1857 = vdwg.mxu0
        %v1864 = vunpack.c.l.b16 %v1607
        %v1865 = vunpack.c.l.b16 %v1608
        %v1866 = vunpack.c.l.b16 %v1609
        %v1867 = vunpack.c.l.b16 %v1610
        %v1868 = vunpack.c.l.b16 %v1611
        %v1869 = vunpack.c.l.b16 %v1612
        %v1870 = vpack.c.b16 %v1865, %v1864
        %v1871 = vpack.c.b16 %v1867, %v1866
        %v1872 = vpack.c.b16 %v1869, %v1868
        %1876 = vmatpush.bf16.msra.mxu0 0
        %1877 = vmatpush.bf16.msra.mxu0 0
        %1878 = vmatpush.bf16.msra.mxu0 0
        %1879 = vmatpush.bf16.msra.mxu0 0
        %1880 = vmatpush.bf16.msra.mxu0 0
        %1881 = vmatpush.bf16.msra.mxu0 %v1872
        %1882 = vmatpush.bf16.msra.mxu0 %v1871
        %1883 = vmatpush.bf16.msra.mxu0 %v1870
        %1884 = vmatmul.bf16.gmra.mxu0 %v1632
        %v1885 = vpop.f32.mrf.mxu0
        %v1886 = vpop.f32.mrf.mxu0
        %1887 = vmatmul.bf16.gmra.mxu0 %v1634
        %v1888 = vpop.f32.mrf.mxu0
        %v1889 = vadd.f32 0.0, %v1888
        %v1890 = vpop.f32.mrf.mxu0
        %v1891 = vadd.f32 0.0, %v1890
        %1892 = vmatmul.bf16.gmra.mxu0 %v1636
        %v1893 = vpop.f32.mrf.mxu0
        %v1894 = vadd.f32 0.0, %v1893
        %v1895 = vpop.f32.mrf.mxu0
        %v1896 = vadd.f32 0.0, %v1895
        %1897 = vmatmul.bf16.gmra.mxu0 %v1638
        %v1898 = vpop.f32.mrf.mxu0
        %v1899 = vadd.f32 0.0, %v1898
        %v1900 = vpop.f32.mrf.mxu0
        %v1901 = vadd.f32 0.0, %v1900
        %1902 = vmatmul.bf16.gmra.mxu0 %v1640
        %v1903 = vpop.f32.mrf.mxu0
        %v1904 = vadd.f32 0.0, %v1903
        %v1905 = vpop.f32.mrf.mxu0
        %v1906 = vadd.f32 0.0, %v1905
        %1907 = vmatmul.bf16.gmra.mxu0 %v1642
        %v1908 = vpop.f32.mrf.mxu0
        %v1909 = vadd.f32 0.0, %v1908
        %v1910 = vpop.f32.mrf.mxu0
        %v1911 = vadd.f32 0.0, %v1910
        %1912 = vmatmul.bf16.gmra.mxu0 %v1644
        %v1913 = vpop.f32.mrf.mxu0
        %v1914 = vadd.f32 0.0, %v1913
        %v1915 = vpop.f32.mrf.mxu0
        %v1916 = vadd.f32 0.0, %v1915
        %1917 = vmatmul.bf16.gmra.mxu0 %v1646
        %v1918 = vpop.f32.mrf.mxu0
        %v1919 = vadd.f32 0.0, %v1918
        %v1920 = vpop.f32.mrf.mxu0
        %v1921 = vadd.f32 0.0, %v1920
        %1922 = vmatmul.bf16.gmra.mxu0 %v1648
        %v1923 = vpop.f32.mrf.mxu0
        %v1924 = vadd.f32 0.0, %v1923
        %v1925 = vpop.f32.mrf.mxu0
        %v1926 = vadd.f32 0.0, %v1925
        %1927 = vmatmul.bf16.gmra.mxu0 %v1650
        %v1928 = vpop.f32.mrf.mxu0
        %v1929 = vadd.f32 0.0, %v1928
        %v1930 = vpop.f32.mrf.mxu0
        %v1931 = vadd.f32 0.0, %v1930
        %1932 = vmatmul.bf16.gmra.mxu0 %v1652
        %v1933 = vpop.f32.mrf.mxu0
        %v1934 = vadd.f32 0.0, %v1933
        %v1935 = vpop.f32.mrf.mxu0
        %v1936 = vadd.f32 0.0, %v1935
        %1937 = vmatmul.bf16.gmra.mxu0 %v1654
        %v1938 = vpop.f32.mrf.mxu0
        %v1939 = vadd.f32 0.0, %v1938
        %v1940 = vpop.f32.mrf.mxu0
        %v1941 = vadd.f32 0.0, %v1940
        %1942 = vmatmul.bf16.gmra.mxu0 %v1656
        %v1943 = vpop.f32.mrf.mxu0
        %v1944 = vadd.f32 0.0, %v1943
        %v1945 = vpop.f32.mrf.mxu0
        %v1946 = vadd.f32 0.0, %v1945
        %1947 = vmatmul.bf16.gmra.mxu0 %v1658
        %v1948 = vpop.f32.mrf.mxu0
        %v1949 = vadd.f32 0.0, %v1948
        %v1950 = vpop.f32.mrf.mxu0
        %v1951 = vadd.f32 0.0, %v1950
        %1952 = vmatmul.bf16.gmra.mxu0 %v1660
        %v1953 = vpop.f32.mrf.mxu0
        %v1954 = vadd.f32 0.0, %v1953
        %v1955 = vpop.f32.mrf.mxu0
        %v1956 = vadd.f32 0.0, %v1955
        %1957 = vmatmul.bf16.gmra.mxu0 %v1662
        %v1958 = vpop.f32.mrf.mxu0
        %v1959 = vadd.f32 0.0, %v1958
        %v1960 = vpop.f32.mrf.mxu0
        %v1961 = vadd.f32 0.0, %v1960
        %1962 = vdwg.mxu0
        %v1963 = vadd.f32 %v1779, 0.0
        %v1964 = vadd.f32 %v1781, 0.0
        %v1965 = vadd.f32 %v1674, %v1784
        %v1966 = vadd.f32 %v1676, %v1786
        %v1967 = vadd.f32 %v1679, %v1789
        %v1968 = vadd.f32 %v1681, %v1791
        %v1969 = vadd.f32 %v1684, %v1794
        %v1970 = vadd.f32 %v1686, %v1796
        %v1971 = vadd.f32 %v1689, %v1799
        %v1972 = vadd.f32 %v1691, %v1801
        %v1973 = vadd.f32 %v1694, %v1804
        %v1974 = vadd.f32 %v1696, %v1806
        %v1975 = vadd.f32 %v1699, %v1809
        %v1976 = vadd.f32 %v1701, %v1811
        %v1977 = vadd.f32 %v1704, %v1814
        %v1978 = vadd.f32 %v1706, %v1816
        %v1979 = vadd.f32 %v1709, %v1819
        %v1980 = vadd.f32 %v1711, %v1821
        %v1981 = vadd.f32 %v1714, %v1824
        %v1982 = vadd.f32 %v1716, %v1826
        %v1983 = vadd.f32 %v1719, %v1829
        %v1984 = vadd.f32 %v1721, %v1831
        %v1985 = vadd.f32 %v1724, %v1834
        %v1986 = vadd.f32 %v1726, %v1836
        %v1987 = vadd.f32 %v1729, %v1839
        %v1988 = vadd.f32 %v1731, %v1841
        %v1989 = vadd.f32 %v1734, %v1844
        %v1990 = vadd.f32 %v1736, %v1846
        %v1991 = vadd.f32 %v1739, %v1849
        %v1992 = vadd.f32 %v1741, %v1851
        %v1993 = vadd.f32 %v1744, %v1854
        %v1994 = vadd.f32 %v1746, %v1856
        %v1995 = vadd.f32 %v1963, %v1889
        %v1996 = vadd.f32 %v1964, %v1891
        %v1997 = vadd.f32 %v1965, %v1894
        %v1998 = vadd.f32 %v1966, %v1896
        %v1999 = vadd.f32 %v1967, %v1899
        %v2000 = vadd.f32 %v1968, %v1901
        %v2001 = vadd.f32 %v1969, %v1904
        %v2002 = vadd.f32 %v1970, %v1906
        %v2003 = vadd.f32 %v1971, %v1909
        %v2004 = vadd.f32 %v1972, %v1911
        %v2005 = vadd.f32 %v1973, %v1914
        %v2006 = vadd.f32 %v1974, %v1916
        %v2007 = vadd.f32 %v1975, %v1919
        %v2008 = vadd.f32 %v1976, %v1921
        %v2009 = vadd.f32 %v1977, %v1924
        %v2010 = vadd.f32 %v1978, %v1926
        %v2011 = vadd.f32 %v1979, %v1929
        %v2012 = vadd.f32 %v1980, %v1931
        %v2013 = vadd.f32 %v1981, %v1934
        %v2014 = vadd.f32 %v1982, %v1936
        %v2015 = vadd.f32 %v1983, %v1939
        %v2016 = vadd.f32 %v1984, %v1941
        %v2017 = vadd.f32 %v1985, %v1944
        %v2018 = vadd.f32 %v1986, %v1946
        %v2019 = vadd.f32 %v1987, %v1949
        %v2020 = vadd.f32 %v1988, %v1951
        %v2021 = vadd.f32 %v1989, %v1954
        %v2022 = vadd.f32 %v1990, %v1956
        %v2023 = vadd.f32 %v1991, %v1959
        %v2024 = vadd.f32 %v1992, %v1961
        %v2025 = vadd.f32 %v1993, 0.0
        %v2026 = vadd.f32 %v1994, 0.0
        %v2027 = vld [vmem:[%s9] sm:$0x1]
        %v2029 = vperm.slane %v2027, 0
        %v2031 = vmul.f32 %v1995, %v2029
        %v2032 = vmul.f32 %v1996, %v2029
        %v2033 = vmul.f32 %v1997, %v2029
        %v2034 = vmul.f32 %v1998, %v2029
        %v2035 = vmul.f32 %v1999, %v2029
        %v2036 = vmul.f32 %v2000, %v2029
        %v2037 = vmul.f32 %v2001, %v2029
        %v2038 = vmul.f32 %v2002, %v2029
        %v2039 = vmul.f32 %v2003, %v2029
        %v2040 = vmul.f32 %v2004, %v2029
        %v2041 = vmul.f32 %v2005, %v2029
        %v2042 = vmul.f32 %v2006, %v2029
        %v2043 = vmul.f32 %v2007, %v2029
        %v2044 = vmul.f32 %v2008, %v2029
        %v2045 = vmul.f32 %v2009, %v2029
        %v2046 = vmul.f32 %v2010, %v2029
        %v2047 = vmul.f32 %v2011, %v2029
        %v2048 = vmul.f32 %v2012, %v2029
        %v2049 = vmul.f32 %v2013, %v2029
        %v2050 = vmul.f32 %v2014, %v2029
        %v2051 = vmul.f32 %v2015, %v2029
        %v2052 = vmul.f32 %v2016, %v2029
        %v2053 = vmul.f32 %v2017, %v2029
        %v2054 = vmul.f32 %v2018, %v2029
        %v2055 = vmul.f32 %v2019, %v2029
        %v2056 = vmul.f32 %v2020, %v2029
        %v2057 = vmul.f32 %v2021, %v2029
        %v2058 = vmul.f32 %v2022, %v2029
        %v2059 = vmul.f32 %v2023, %v2029
        %v2060 = vmul.f32 %v2024, %v2029
        %v2061 = vmul.f32 %v2025, %v2029
        %v2062 = vmul.f32 %v2026, %v2029
        %v2063 = vld [vmem:[%s10] sm:$0x1]
        %v2065 = vperm.slane %v2063, 0
        %v2067 = vadd.f32 %v2031, %v2065
        %v2068 = vadd.f32 %v2032, %v2065
        %v2069 = vadd.f32 %v2033, %v2065
        %v2070 = vadd.f32 %v2034, %v2065
        %v2071 = vadd.f32 %v2035, %v2065
        %v2072 = vadd.f32 %v2036, %v2065
        %v2073 = vadd.f32 %v2037, %v2065
        %v2074 = vadd.f32 %v2038, %v2065
        %v2075 = vadd.f32 %v2039, %v2065
        %v2076 = vadd.f32 %v2040, %v2065
        %v2077 = vadd.f32 %v2041, %v2065
        %v2078 = vadd.f32 %v2042, %v2065
        %v2079 = vadd.f32 %v2043, %v2065
        %v2080 = vadd.f32 %v2044, %v2065
        %v2081 = vadd.f32 %v2045, %v2065
        %v2082 = vadd.f32 %v2046, %v2065
        %v2083 = vadd.f32 %v2047, %v2065
        %v2084 = vadd.f32 %v2048, %v2065
        %v2085 = vadd.f32 %v2049, %v2065
        %v2086 = vadd.f32 %v2050, %v2065
        %v2087 = vadd.f32 %v2051, %v2065
        %v2088 = vadd.f32 %v2052, %v2065
        %v2089 = vadd.f32 %v2053, %v2065
        %v2090 = vadd.f32 %v2054, %v2065
        %v2091 = vadd.f32 %v2055, %v2065
        %v2092 = vadd.f32 %v2056, %v2065
        %v2093 = vadd.f32 %v2057, %v2065
        %v2094 = vadd.f32 %v2058, %v2065
        %v2095 = vadd.f32 %v2059, %v2065
        %v2096 = vadd.f32 %v2060, %v2065
        %v2097 = vadd.f32 %v2061, %v2065
        %v2098 = vadd.f32 %v2062, %v2065
        %v2099 = vmax.f32 %v2067, 0.0
        %v2100 = vmax.f32 %v2068, 0.0
        %v2101 = vmax.f32 %v2069, 0.0
        %v2102 = vmax.f32 %v2070, 0.0
        %v2103 = vmax.f32 %v2071, 0.0
        %v2104 = vmax.f32 %v2072, 0.0
        %v2105 = vmax.f32 %v2073, 0.0
        %v2106 = vmax.f32 %v2074, 0.0
        %v2107 = vmax.f32 %v2075, 0.0
        %v2108 = vmax.f32 %v2076, 0.0
        %v2109 = vmax.f32 %v2077, 0.0
        %v2110 = vmax.f32 %v2078, 0.0
        %v2111 = vmax.f32 %v2079, 0.0
        %v2112 = vmax.f32 %v2080, 0.0
        %v2113 = vmax.f32 %v2081, 0.0
        %v2114 = vmax.f32 %v2082, 0.0
        %v2115 = vmax.f32 %v2083, 0.0
        %v2116 = vmax.f32 %v2084, 0.0
        %v2117 = vmax.f32 %v2085, 0.0
        %v2118 = vmax.f32 %v2086, 0.0
        %v2119 = vmax.f32 %v2087, 0.0
        %v2120 = vmax.f32 %v2088, 0.0
        %v2121 = vmax.f32 %v2089, 0.0
        %v2122 = vmax.f32 %v2090, 0.0
        %v2123 = vmax.f32 %v2091, 0.0
        %v2124 = vmax.f32 %v2092, 0.0
        %v2125 = vmax.f32 %v2093, 0.0
        %v2126 = vmax.f32 %v2094, 0.0
        %v2127 = vmax.f32 %v2095, 0.0
        %v2128 = vmax.f32 %v2096, 0.0
        %v2129 = vmax.f32 %v2097, 0.0
        %v2130 = vmax.f32 %v2098, 0.0
        %v2131 = vpack.c.bf16 %v2100, %v2099
        %v2132 = vpack.c.bf16 %v2102, %v2101
        %v2133 = vpack.c.bf16 %v2104, %v2103
        %v2134 = vpack.c.bf16 %v2106, %v2105
        %v2135 = vpack.c.bf16 %v2108, %v2107
        %v2136 = vpack.c.bf16 %v2110, %v2109
        %v2137 = vpack.c.bf16 %v2112, %v2111
        %v2138 = vpack.c.bf16 %v2114, %v2113
        %v2139 = vpack.c.bf16 %v2116, %v2115
        %v2140 = vpack.c.bf16 %v2118, %v2117
        %v2141 = vpack.c.bf16 %v2120, %v2119
        %v2142 = vpack.c.bf16 %v2122, %v2121
        %v2143 = vpack.c.bf16 %v2124, %v2123
        %v2144 = vpack.c.bf16 %v2126, %v2125
        %v2145 = vpack.c.bf16 %v2128, %v2127
        %v2146 = vpack.c.bf16 %v2130, %v2129
        %v2147 = vld [vmem:[%s11] sm:$0xf]
        %v2148 = vld [vmem:[%s11 + $0x4] sm:$0xf]
        %v2151 = vunpack.c.l.b16 %v2147
        %v2152 = vunpack.c.l.b16 %v2148
        %v2153 = vpack.c.b16 %v2152, %v2151
        %v2156 = vsel %vm1514, %v2131, 0
        %v2159 = vsel %vm1514, %v2132, 0
        %v2162 = vsel %vm1514, %v2133, 0
        %v2165 = vsel %vm1514, %v2134, 0
        %v2168 = vsel %vm1514, %v2135, 0
        %v2171 = vsel %vm1514, %v2136, 0
        %v2174 = vsel %vm1514, %v2137, 0
        %v2177 = vsel %vm1514, %v2138, 0
        %v2180 = vsel %vm1514, %v2139, 0
        %v2183 = vsel %vm1514, %v2140, 0
        %v2186 = vsel %vm1514, %v2141, 0
        %v2189 = vsel %vm1514, %v2142, 0
        %v2192 = vsel %vm1514, %v2143, 0
        %v2195 = vsel %vm1514, %v2144, 0
        %v2198 = vsel %vm1514, %v2145, 0
        %v2201 = vsel %vm1514, %v2146, 0
        %2203 = vmatpush.bf16.msra.mxu0 0
        %2204 = vmatpush.bf16.msra.mxu0 0
        %2205 = vmatpush.bf16.msra.mxu0 0
        %2206 = vmatpush.bf16.msra.mxu0 0
        %2207 = vmatpush.bf16.msra.mxu0 0
        %2208 = vmatpush.bf16.msra.mxu0 0
        %2209 = vmatpush.bf16.msra.mxu0 0
        %2210 = vmatpush.bf16.msra.mxu0 %v2153
        %2211 = vmatmul.bf16.gmra.mxu0 %v2156
        %v2212 = vpop.f32.mrf.mxu0
        %v2213 = vadd.f32 %v698, %v2212
        %v2214 = vpop.f32.mrf.mxu0
        %v2215 = vadd.f32 %v699, %v2214
        %2216 = vmatmul.bf16.gmra.mxu0 %v2159
        %v2217 = vpop.f32.mrf.mxu0
        %v2218 = vadd.f32 %v700, %v2217
        %v2219 = vpop.f32.mrf.mxu0
        %v2220 = vadd.f32 %v701, %v2219
        %2221 = vmatmul.bf16.gmra.mxu0 %v2162
        %v2222 = vpop.f32.mrf.mxu0
        %v2223 = vadd.f32 %v702, %v2222
        %v2224 = vpop.f32.mrf.mxu0
        %v2225 = vadd.f32 %v703, %v2224
        %2226 = vmatmul.bf16.gmra.mxu0 %v2165
        %v2227 = vpop.f32.mrf.mxu0
        %v2228 = vadd.f32 %v704, %v2227
        %v2229 = vpop.f32.mrf.mxu0
        %v2230 = vadd.f32 %v705, %v2229
        %2231 = vmatmul.bf16.gmra.mxu0 %v2168
        %v2232 = vpop.f32.mrf.mxu0
        %v2233 = vadd.f32 %v706, %v2232
        %v2234 = vpop.f32.mrf.mxu0
        %v2235 = vadd.f32 %v707, %v2234
        %2236 = vmatmul.bf16.gmra.mxu0 %v2171
        %v2237 = vpop.f32.mrf.mxu0
        %v2238 = vadd.f32 %v708, %v2237
        %v2239 = vpop.f32.mrf.mxu0
        %v2240 = vadd.f32 %v709, %v2239
        %2241 = vmatmul.bf16.gmra.mxu0 %v2174
        %v2242 = vpop.f32.mrf.mxu0
        %v2243 = vadd.f32 %v710, %v2242
        %v2244 = vpop.f32.mrf.mxu0
        %v2245 = vadd.f32 %v711, %v2244
        %2246 = vmatmul.bf16.gmra.mxu0 %v2177
        %v2247 = vpop.f32.mrf.mxu0
        %v2248 = vadd.f32 %v712, %v2247
        %v2249 = vpop.f32.mrf.mxu0
        %v2250 = vadd.f32 %v713, %v2249
        %2251 = vmatmul.bf16.gmra.mxu0 %v2180
        %v2252 = vpop.f32.mrf.mxu0
        %v2253 = vadd.f32 %v714, %v2252
        %v2254 = vpop.f32.mrf.mxu0
        %v2255 = vadd.f32 %v715, %v2254
        %2256 = vmatmul.bf16.gmra.mxu0 %v2183
        %v2257 = vpop.f32.mrf.mxu0
        %v2258 = vadd.f32 %v716, %v2257
        %v2259 = vpop.f32.mrf.mxu0
        %v2260 = vadd.f32 %v717, %v2259
        %2261 = vmatmul.bf16.gmra.mxu0 %v2186
        %v2262 = vpop.f32.mrf.mxu0
        %v2263 = vadd.f32 %v718, %v2262
        %v2264 = vpop.f32.mrf.mxu0
        %v2265 = vadd.f32 %v719, %v2264
        %2266 = vmatmul.bf16.gmra.mxu0 %v2189
        %v2267 = vpop.f32.mrf.mxu0
        %v2268 = vadd.f32 %v720, %v2267
        %v2269 = vpop.f32.mrf.mxu0
        %v2270 = vadd.f32 %v721, %v2269
        %2271 = vmatmul.bf16.gmra.mxu0 %v2192
        %v2272 = vpop.f32.mrf.mxu0
        %v2273 = vadd.f32 %v722, %v2272
        %v2274 = vpop.f32.mrf.mxu0
        %v2275 = vadd.f32 %v723, %v2274
        %2276 = vmatmul.bf16.gmra.mxu0 %v2195
        %v2277 = vpop.f32.mrf.mxu0
        %v2278 = vadd.f32 %v724, %v2277
        %v2279 = vpop.f32.mrf.mxu0
        %v2280 = vadd.f32 %v725, %v2279
        %2281 = vmatmul.bf16.gmra.mxu0 %v2198
        %v2282 = vpop.f32.mrf.mxu0
        %v2283 = vadd.f32 %v726, %v2282
        %v2284 = vpop.f32.mrf.mxu0
        %v2285 = vadd.f32 %v727, %v2284
        %2286 = vmatmul.bf16.gmra.mxu0 %v2201
        %v2287 = vpop.f32.mrf.mxu0
        %v2288 = vadd.f32 %v728, %v2287
        %v2289 = vpop.f32.mrf.mxu0
        %v2290 = vadd.f32 %v729, %v2289
        %2291 = vdwg.mxu0
        %v2292 = vmax.f32 %v2213, 0.0
        %v2293 = vmax.f32 %v2215, 0.0
        %v2294 = vmax.f32 %v2218, 0.0
        %v2295 = vmax.f32 %v2220, 0.0
        %v2296 = vmax.f32 %v2223, 0.0
        %v2297 = vmax.f32 %v2225, 0.0
        %v2298 = vmax.f32 %v2228, 0.0
        %v2299 = vmax.f32 %v2230, 0.0
        %v2300 = vmax.f32 %v2233, 0.0
        %v2301 = vmax.f32 %v2235, 0.0
        %v2302 = vmax.f32 %v2238, 0.0
        %v2303 = vmax.f32 %v2240, 0.0
        %v2304 = vmax.f32 %v2243, 0.0
        %v2305 = vmax.f32 %v2245, 0.0
        %v2306 = vmax.f32 %v2248, 0.0
        %v2307 = vmax.f32 %v2250, 0.0
        %v2308 = vmax.f32 %v2253, 0.0
        %v2309 = vmax.f32 %v2255, 0.0
        %v2310 = vmax.f32 %v2258, 0.0
        %v2311 = vmax.f32 %v2260, 0.0
        %v2312 = vmax.f32 %v2263, 0.0
        %v2313 = vmax.f32 %v2265, 0.0
        %v2314 = vmax.f32 %v2268, 0.0
        %v2315 = vmax.f32 %v2270, 0.0
        %v2316 = vmax.f32 %v2273, 0.0
        %v2317 = vmax.f32 %v2275, 0.0
        %v2318 = vmax.f32 %v2278, 0.0
        %v2319 = vmax.f32 %v2280, 0.0
        %v2320 = vmax.f32 %v2283, 0.0
        %v2321 = vmax.f32 %v2285, 0.0
        %v2322 = vmax.f32 %v2288, 0.0
        %v2323 = vmax.f32 %v2290, 0.0
        %v2324 = vld [vmem:[%s696] sm:$0xf]
        %v2325 = vld [vmem:[%s696 + $0x4] sm:$0xf]
        %v2326 = vld [vmem:[%s696 + $0x8] sm:$0xf]
        %v2327 = vld [vmem:[%s696 + $0xc] sm:$0xf]
        %v2328 = vld [vmem:[%s696 + $0x10] sm:$0xf]
        %v2329 = vld [vmem:[%s696 + $0x14] sm:$0xf]
        %v2330 = vld [vmem:[%s696 + $0x18] sm:$0xf]
        %v2331 = vld [vmem:[%s696 + $0x1c] sm:$0xf]
        %v2332 = vunpack.c.l.bf16 %v2324
        %v2333 = vunpack.c.l.bf16 %v2325
        %v2334 = vunpack.c.l.bf16 %v2326
        %v2335 = vunpack.c.l.bf16 %v2327
        %v2336 = vunpack.c.l.bf16 %v2328
        %v2337 = vunpack.c.l.bf16 %v2329
        %v2338 = vunpack.c.l.bf16 %v2330
        %v2339 = vunpack.c.l.bf16 %v2331
        %v2340 = vld [vmem:[%s12] sm:$0x1]
        %v2342 = vperm.slane %v2340, 0
        %v2344 = vmul.f32 %v2332, %v2342
        %v2345 = vmul.f32 %v2333, %v2342
        %v2346 = vmul.f32 %v2334, %v2342
        %v2347 = vmul.f32 %v2335, %v2342
        %v2348 = vmul.f32 %v2336, %v2342
        %v2349 = vmul.f32 %v2337, %v2342
        %v2350 = vmul.f32 %v2338, %v2342
        %v2351 = vmul.f32 %v2339, %v2342
        %v2352 = vld [vmem:[%s13] sm:$0x1]
        %v2354 = vperm.slane %v2352, 0
        %v2356 = vadd.f32 %v2344, %v2354
        %v2357 = vadd.f32 %v2345, %v2354
        %v2358 = vadd.f32 %v2346, %v2354
        %v2359 = vadd.f32 %v2347, %v2354
        %v2360 = vadd.f32 %v2348, %v2354
        %v2361 = vadd.f32 %v2349, %v2354
        %v2362 = vadd.f32 %v2350, %v2354
        %v2363 = vadd.f32 %v2351, %v2354
        %v2364 = vmax.f32 %v2356, 0.0
        %v2365 = vmax.f32 %v2357, 0.0
        %v2366 = vmax.f32 %v2358, 0.0
        %v2367 = vmax.f32 %v2359, 0.0
        %v2368 = vmax.f32 %v2360, 0.0
        %v2369 = vmax.f32 %v2361, 0.0
        %v2370 = vmax.f32 %v2362, 0.0
        %v2371 = vmax.f32 %v2363, 0.0
        %v2372 = vpack.c.bf16 %v2365, %v2364
        %v2373 = vpack.c.bf16 %v2367, %v2366
        %v2374 = vpack.c.bf16 %v2369, %v2368
        %v2375 = vpack.c.bf16 %v2371, %v2370
        %v2376 = vld [vmem:[%s14] sm:$0xf]
        %v2377 = vld [vmem:[%s14 + $0x4] sm:$0xf]
        %v2378 = vld [vmem:[%s14 + $0x8] sm:$0xf]
        %v2379 = vld [vmem:[%s14 + $0xc] sm:$0xf]
        %v2384 = vunpack.c.l.b16 %v2376
        %v2385 = vunpack.c.l.b16 %v2377
        %v2386 = vunpack.c.l.b16 %v2378
        %v2387 = vunpack.c.l.b16 %v2379
        %v2388 = vpack.c.b16 %v2385, %v2384
        %v2389 = vpack.c.b16 %v2387, %v2386
        %v2393 = vsel %vm866, %v2372, 0
        %v2396 = vsel %vm866, %v2373, 0
        %v2399 = vsel %vm866, %v2374, 0
        %v2402 = vsel %vm866, %v2375, 0
        %2404 = vmatpush.bf16.msra.mxu0 0
        %2405 = vmatpush.bf16.msra.mxu0 0
        %2406 = vmatpush.bf16.msra.mxu0 0
        %2407 = vmatpush.bf16.msra.mxu0 0
        %2408 = vmatpush.bf16.msra.mxu0 0
        %2409 = vmatpush.bf16.msra.mxu0 0
        %2410 = vmatpush.bf16.msra.mxu0 %v2389
        %2411 = vmatpush.bf16.msra.mxu0 %v2388
        %2412 = vmatmul.bf16.gmra.mxu0 %v2393
        %v2413 = vpop.f32.mrf.mxu0
        %v2414 = vadd.f32 0.0, %v2413
        %v2415 = vpop.f32.mrf.mxu0
        %v2416 = vadd.f32 0.0, %v2415
        %2417 = vmatmul.bf16.gmra.mxu0 %v2396
        %v2418 = vpop.f32.mrf.mxu0
        %v2419 = vadd.f32 0.0, %v2418
        %v2420 = vpop.f32.mrf.mxu0
        %v2421 = vadd.f32 0.0, %v2420
        %2422 = vmatmul.bf16.gmra.mxu0 %v2399
        %v2423 = vpop.f32.mrf.mxu0
        %v2424 = vadd.f32 0.0, %v2423
        %v2425 = vpop.f32.mrf.mxu0
        %v2426 = vadd.f32 0.0, %v2425
        %2427 = vmatmul.bf16.gmra.mxu0 %v2402
        %v2428 = vpop.f32.mrf.mxu0
        %v2429 = vadd.f32 0.0, %v2428
        %v2430 = vpop.f32.mrf.mxu0
        %v2431 = vadd.f32 0.0, %v2430
        %2432 = vdwg.mxu0
        %v2433 = vld [vmem:[%s15] sm:$0x1]
        %v2435 = vperm.slane %v2433, 0
        %v2437 = vmul.f32 %v2414, %v2435
        %v2438 = vmul.f32 %v2416, %v2435
        %v2439 = vmul.f32 %v2419, %v2435
        %v2440 = vmul.f32 %v2421, %v2435
        %v2441 = vmul.f32 %v2424, %v2435
        %v2442 = vmul.f32 %v2426, %v2435
        %v2443 = vmul.f32 %v2429, %v2435
        %v2444 = vmul.f32 %v2431, %v2435
        %v2445 = vld [vmem:[%s16] sm:$0x1]
        %v2447 = vperm.slane %v2445, 0
        %v2449 = vadd.f32 %v2437, %v2447
        %v2450 = vadd.f32 %v2438, %v2447
        %v2451 = vadd.f32 %v2439, %v2447
        %v2452 = vadd.f32 %v2440, %v2447
        %v2453 = vadd.f32 %v2441, %v2447
        %v2454 = vadd.f32 %v2442, %v2447
        %v2455 = vadd.f32 %v2443, %v2447
        %v2456 = vadd.f32 %v2444, %v2447
        %v2457 = vmax.f32 %v2449, 0.0
        %v2458 = vmax.f32 %v2450, 0.0
        %v2459 = vmax.f32 %v2451, 0.0
        %v2460 = vmax.f32 %v2452, 0.0
        %v2461 = vmax.f32 %v2453, 0.0
        %v2462 = vmax.f32 %v2454, 0.0
        %v2463 = vmax.f32 %v2455, 0.0
        %v2464 = vmax.f32 %v2456, 0.0
        %v2465 = vpack.c.bf16 %v2457, %v2457
        %v2466 = vpack.c.bf16 %v2458, %v2458
        %v2467 = vpack.c.bf16 %v2459, %v2459
        %v2468 = vpack.c.bf16 %v2460, %v2460
        %v2469 = vpack.c.bf16 %v2461, %v2461
        %v2470 = vpack.c.bf16 %v2462, %v2462
        %v2471 = vpack.c.bf16 %v2463, %v2463
        %v2472 = vpack.c.bf16 %v2464, %v2464
        %v2481 = vunpack.c.l.b16 %v2465
        %v2482 = vunpack.c.l.b16 %v2466
        %v2483 = vunpack.c.l.b16 %v2467
        %v2484 = vunpack.c.l.b16 %v2468
        %v2485 = vunpack.c.l.b16 %v2469
        %v2486 = vunpack.c.l.b16 %v2470
        %v2487 = vunpack.c.l.b16 %v2471
        %v2488 = vunpack.c.l.b16 %v2472
        %v2489 = vpack.c.b16 %v2481, %v2481
        %v2490 = vpack.c.b16 %v2482, %v2482
        %v2491 = vpack.c.b16 %v2483, %v2483
        %v2492 = vpack.c.b16 %v2484, %v2484
        %v2493 = vpack.c.b16 %v2485, %v2485
        %v2494 = vpack.c.b16 %v2486, %v2486
        %v2495 = vpack.c.b16 %v2487, %v2487
        %v2496 = vpack.c.b16 %v2488, %v2488
        %v2498 = vshrl.u32 %v2489, 16
        %v2500 = vrot.slane %v2498, 7
        %v2501 = vshll.u32 %v2489, 16
        %v2503 = vor.u32 %v2500, %v2501
        %v2505 = vshrl.u32 %v2490, 16
        %v2507 = vrot.slane %v2505, 7
        %v2508 = vshll.u32 %v2490, 16
        %v2510 = vor.u32 %v2507, %v2508
        %v2512 = vshrl.u32 %v2491, 16
        %v2514 = vrot.slane %v2512, 7
        %v2515 = vshll.u32 %v2491, 16
        %v2517 = vor.u32 %v2514, %v2515
        %v2519 = vshrl.u32 %v2492, 16
        %v2521 = vrot.slane %v2519, 7
        %v2522 = vshll.u32 %v2492, 16
        %v2524 = vor.u32 %v2521, %v2522
        %v2526 = vshrl.u32 %v2493, 16
        %v2528 = vrot.slane %v2526, 7
        %v2529 = vshll.u32 %v2493, 16
        %v2531 = vor.u32 %v2528, %v2529
        %v2533 = vshrl.u32 %v2494, 16
        %v2535 = vrot.slane %v2533, 7
        %v2536 = vshll.u32 %v2494, 16
        %v2538 = vor.u32 %v2535, %v2536
        %v2540 = vshrl.u32 %v2495, 16
        %v2542 = vrot.slane %v2540, 7
        %v2543 = vshll.u32 %v2495, 16
        %v2545 = vor.u32 %v2542, %v2543
        %v2547 = vshrl.u32 %v2496, 16
        %v2549 = vrot.slane %v2547, 7
        %v2550 = vshll.u32 %v2496, 16
        %v2552 = vor.u32 %v2549, %v2550
        %v2561 = vsel %vm1350, 0, %v2503
        %v2562 = vsel %vm1350, 0, %v2510
        %v2563 = vsel %vm1350, 0, %v2517
        %v2564 = vsel %vm1350, 0, %v2524
        %v2565 = vsel %vm1350, 0, %v2531
        %v2566 = vsel %vm1350, 0, %v2538
        %v2567 = vsel %vm1350, 0, %v2545
        %v2568 = vsel %vm1350, 0, %v2552
        %v2569 = vrot.slane %v2501, 1
        %v2570 = vor.u32 %v2498, %v2569
        %v2571 = vrot.slane %v2508, 1
        %v2572 = vor.u32 %v2505, %v2571
        %v2573 = vrot.slane %v2515, 1
        %v2574 = vor.u32 %v2512, %v2573
        %v2575 = vrot.slane %v2522, 1
        %v2576 = vor.u32 %v2519, %v2575
        %v2577 = vrot.slane %v2529, 1
        %v2578 = vor.u32 %v2526, %v2577
        %v2579 = vrot.slane %v2536, 1
        %v2580 = vor.u32 %v2533, %v2579
        %v2581 = vrot.slane %v2543, 1
        %v2582 = vor.u32 %v2540, %v2581
        %v2583 = vrot.slane %v2550, 1
        %v2584 = vor.u32 %v2547, %v2583
        %vm2593 = vcmask 1043456
        %vm2594 = vsmask.f32 3328
        %vm2595 = vmand %vm2593, %vm2594
        %v2596 = vsel %vm2595, %v2570, 0
        %v2597 = vsel %vm2595, %v2572, 0
        %v2598 = vsel %vm2595, %v2574, 0
        %v2599 = vsel %vm2595, %v2576, 0
        %v2600 = vsel %vm2595, %v2578, 0
        %v2601 = vsel %vm2595, %v2580, 0
        %v2602 = vsel %vm2595, %v2582, 0
        %v2603 = vsel %vm2595, %v2584, 0
        %2604 = vrot.lane.b32.xlu0 %v2489, 16
        %v2605 = vpop.permute.xlu0 %2604
        %2606 = vrot.lane.b32.xlu0 %v2490, 16
        %v2607 = vpop.permute.xlu0 %2606
        %2608 = vrot.lane.b32.xlu0 %v2491, 16
        %v2609 = vpop.permute.xlu0 %2608
        %2610 = vrot.lane.b32.xlu0 %v2492, 16
        %v2611 = vpop.permute.xlu0 %2610
        %2612 = vrot.lane.b32.xlu0 %v2493, 16
        %v2613 = vpop.permute.xlu0 %2612
        %2614 = vrot.lane.b32.xlu0 %v2494, 16
        %v2615 = vpop.permute.xlu0 %2614
        %2616 = vrot.lane.b32.xlu0 %v2495, 16
        %v2617 = vpop.permute.xlu0 %2616
        %2618 = vrot.lane.b32.xlu0 %v2496, 16
        %v2619 = vpop.permute.xlu0 %2618
        %2628 = vrot.lane.b32.xlu0 %v2596, 32
        %v2629 = vpop.permute.xlu0 %2628
        %2630 = vrot.lane.b32.xlu0 %v2597, 32
        %v2631 = vpop.permute.xlu0 %2630
        %2632 = vrot.lane.b32.xlu0 %v2598, 32
        %v2633 = vpop.permute.xlu0 %2632
        %2634 = vrot.lane.b32.xlu0 %v2599, 32
        %v2635 = vpop.permute.xlu0 %2634
        %2636 = vrot.lane.b32.xlu0 %v2600, 32
        %v2637 = vpop.permute.xlu0 %2636
        %2638 = vrot.lane.b32.xlu0 %v2601, 32
        %v2639 = vpop.permute.xlu0 %2638
        %2640 = vrot.lane.b32.xlu0 %v2602, 32
        %v2641 = vpop.permute.xlu0 %2640
        %2642 = vrot.lane.b32.xlu0 %v2603, 32
        %v2643 = vpop.permute.xlu0 %2642
        %v2646 = vsel %vm1514, %v2561, %v2605
        %v2649 = vsel %vm1514, %v2562, %v2607
        %v2652 = vsel %vm1514, %v2563, %v2609
        %v2655 = vsel %vm1514, %v2564, %v2611
        %v2658 = vsel %vm1514, %v2565, %v2613
        %v2661 = vsel %vm1514, %v2566, %v2615
        %v2664 = vsel %vm1514, %v2567, %v2617
        %v2667 = vsel %vm1514, %v2568, %v2619
        %v2669 = vsel %vm866, %v2646, %v2629
        %v2671 = vsel %vm866, %v2649, %v2631
        %v2673 = vsel %vm866, %v2652, %v2633
        %v2675 = vsel %vm866, %v2655, %v2635
        %v2677 = vsel %vm866, %v2658, %v2637
        %v2679 = vsel %vm866, %v2661, %v2639
        %v2681 = vsel %vm866, %v2664, %v2641
        %v2683 = vsel %vm866, %v2667, %v2643
        %v2684 = vld [vmem:[%s17] sm:$0xf]
        %v2685 = vld [vmem:[%s17 + $0x4] sm:$0xf]
        %v2686 = vld [vmem:[%s17 + $0x8] sm:$0xf]
        %v2687 = vld [vmem:[%s17 + $0xc] sm:$0xf]
        %v2688 = vld [vmem:[%s17 + $0x10] sm:$0xf]
        %v2689 = vld [vmem:[%s17 + $0x14] sm:$0xf]
        %v2690 = vld [vmem:[%s17 + $0x18] sm:$0xf]
        %v2691 = vld [vmem:[%s17 + $0x1c] sm:$0xf]
        %v2692 = vld [vmem:[%s17 + $0x20] sm:$0xf]
        %v2693 = vld [vmem:[%s17 + $0x24] sm:$0xf]
        %v2694 = vld [vmem:[%s17 + $0x28] sm:$0xf]
        %v2695 = vld [vmem:[%s17 + $0x2c] sm:$0xf]
        %v2696 = vld [vmem:[%s17 + $0x30] sm:$0xf]
        %v2697 = vld [vmem:[%s17 + $0x34] sm:$0xf]
        %v2698 = vld [vmem:[%s17 + $0x38] sm:$0xf]
        %v2699 = vld [vmem:[%s17 + $0x3c] sm:$0xf]
        %v2700 = vld [vmem:[%s17 + $0x40] sm:$0xf]
        %v2701 = vld [vmem:[%s17 + $0x44] sm:$0xf]
        %v2710 = vunpack.c.l.b16 %v2669
        %v2711 = vunpack.c.l.b16 %v2671
        %v2712 = vunpack.c.l.b16 %v2673
        %v2713 = vunpack.c.l.b16 %v2675
        %v2714 = vunpack.c.l.b16 %v2677
        %v2715 = vunpack.c.l.b16 %v2679
        %v2716 = vunpack.c.l.b16 %v2681
        %v2717 = vunpack.c.l.b16 %v2683
        %v2718 = vpack.c.b16 %v2711, %v2710
        %v2719 = vpack.c.b16 %v2713, %v2712
        %v2720 = vpack.c.b16 %v2715, %v2714
        %v2721 = vpack.c.b16 %v2717, %v2716
        %v2728 = vunpack.c.l.b16 %v2684
        %v2729 = vunpack.c.l.b16 %v2685
        %v2730 = vunpack.c.l.b16 %v2686
        %v2731 = vunpack.c.l.b16 %v2687
        %v2732 = vunpack.c.l.b16 %v2688
        %v2733 = vunpack.c.l.b16 %v2689
        %v2734 = vpack.c.b16 %v2729, %v2728
        %v2735 = vpack.c.b16 %v2731, %v2730
        %v2736 = vpack.c.b16 %v2733, %v2732
        %v2741 = vsel %vm1631, %v2718, 0
        %v2744 = vsel %vm1631, %v2719, 0
        %v2747 = vsel %vm1631, %v2720, 0
        %v2750 = vsel %vm1631, %v2721, 0
        %2752 = vmatpush.bf16.msra.mxu0 0
        %2753 = vmatpush.bf16.msra.mxu0 0
        %2754 = vmatpush.bf16.msra.mxu0 0
        %2755 = vmatpush.bf16.msra.mxu0 0
        %2756 = vmatpush.bf16.msra.mxu0 0
        %2757 = vmatpush.bf16.msra.mxu0 %v2736
        %2758 = vmatpush.bf16.msra.mxu0 %v2735
        %2759 = vmatpush.bf16.msra.mxu0 %v2734
        %2760 = vmatmul.bf16.gmra.mxu0 %v2741
        %v2761 = vpop.f32.mrf.mxu0
        %v2762 = vadd.f32 0.0, %v2761
        %v2763 = vpop.f32.mrf.mxu0
        %v2764 = vadd.f32 0.0, %v2763
        %2765 = vmatmul.bf16.gmra.mxu0 %v2744
        %v2766 = vpop.f32.mrf.mxu0
        %v2767 = vadd.f32 0.0, %v2766
        %v2768 = vpop.f32.mrf.mxu0
        %v2769 = vadd.f32 0.0, %v2768
        %2770 = vmatmul.bf16.gmra.mxu0 %v2747
        %v2771 = vpop.f32.mrf.mxu0
        %v2772 = vadd.f32 0.0, %v2771
        %v2773 = vpop.f32.mrf.mxu0
        %v2774 = vadd.f32 0.0, %v2773
        %2775 = vmatmul.bf16.gmra.mxu0 %v2750
        %v2776 = vpop.f32.mrf.mxu0
        %v2777 = vadd.f32 0.0, %v2776
        %v2778 = vpop.f32.mrf.mxu0
        %2779 = vdwg.mxu0
        %v2786 = vunpack.c.l.b16 %v2690
        %v2787 = vunpack.c.l.b16 %v2691
        %v2788 = vunpack.c.l.b16 %v2692
        %v2789 = vunpack.c.l.b16 %v2693
        %v2790 = vunpack.c.l.b16 %v2694
        %v2791 = vunpack.c.l.b16 %v2695
        %v2792 = vpack.c.b16 %v2787, %v2786
        %v2793 = vpack.c.b16 %v2789, %v2788
        %v2794 = vpack.c.b16 %v2791, %v2790
        %2798 = vmatpush.bf16.msra.mxu0 0
        %2799 = vmatpush.bf16.msra.mxu0 0
        %2800 = vmatpush.bf16.msra.mxu0 0
        %2801 = vmatpush.bf16.msra.mxu0 0
        %2802 = vmatpush.bf16.msra.mxu0 0
        %2803 = vmatpush.bf16.msra.mxu0 %v2794
        %2804 = vmatpush.bf16.msra.mxu0 %v2793
        %2805 = vmatpush.bf16.msra.mxu0 %v2792
        %2806 = vmatmul.bf16.gmra.mxu0 %v2741
        %v2807 = vpop.f32.mrf.mxu0
        %v2808 = vadd.f32 0.0, %v2807
        %v2809 = vpop.f32.mrf.mxu0
        %v2810 = vadd.f32 0.0, %v2809
        %2811 = vmatmul.bf16.gmra.mxu0 %v2744
        %v2812 = vpop.f32.mrf.mxu0
        %v2813 = vadd.f32 0.0, %v2812
        %v2814 = vpop.f32.mrf.mxu0
        %v2815 = vadd.f32 0.0, %v2814
        %2816 = vmatmul.bf16.gmra.mxu0 %v2747
        %v2817 = vpop.f32.mrf.mxu0
        %v2818 = vadd.f32 0.0, %v2817
        %v2819 = vpop.f32.mrf.mxu0
        %v2820 = vadd.f32 0.0, %v2819
        %2821 = vmatmul.bf16.gmra.mxu0 %v2750
        %v2822 = vpop.f32.mrf.mxu0
        %v2823 = vadd.f32 0.0, %v2822
        %v2824 = vpop.f32.mrf.mxu0
        %v2825 = vadd.f32 0.0, %v2824
        %2826 = vdwg.mxu0
        %v2833 = vunpack.c.l.b16 %v2696
        %v2834 = vunpack.c.l.b16 %v2697
        %v2835 = vunpack.c.l.b16 %v2698
        %v2836 = vunpack.c.l.b16 %v2699
        %v2837 = vunpack.c.l.b16 %v2700
        %v2838 = vunpack.c.l.b16 %v2701
        %v2839 = vpack.c.b16 %v2834, %v2833
        %v2840 = vpack.c.b16 %v2836, %v2835
        %v2841 = vpack.c.b16 %v2838, %v2837
        %2845 = vmatpush.bf16.msra.mxu0 0
        %2846 = vmatpush.bf16.msra.mxu0 0
        %2847 = vmatpush.bf16.msra.mxu0 0
        %2848 = vmatpush.bf16.msra.mxu0 0
        %2849 = vmatpush.bf16.msra.mxu0 0
        %2850 = vmatpush.bf16.msra.mxu0 %v2841
        %2851 = vmatpush.bf16.msra.mxu0 %v2840
        %2852 = vmatpush.bf16.msra.mxu0 %v2839
        %2853 = vmatmul.bf16.gmra.mxu0 %v2741
        %v2854 = vpop.f32.mrf.mxu0
        %v2855 = vpop.f32.mrf.mxu0
        %v2856 = vadd.f32 0.0, %v2855
        %2857 = vmatmul.bf16.gmra.mxu0 %v2744
        %v2858 = vpop.f32.mrf.mxu0
        %v2859 = vadd.f32 0.0, %v2858
        %v2860 = vpop.f32.mrf.mxu0
        %v2861 = vadd.f32 0.0, %v2860
        %2862 = vmatmul.bf16.gmra.mxu0 %v2747
        %v2863 = vpop.f32.mrf.mxu0
        %v2864 = vadd.f32 0.0, %v2863
        %v2865 = vpop.f32.mrf.mxu0
        %v2866 = vadd.f32 0.0, %v2865
        %2867 = vmatmul.bf16.gmra.mxu0 %v2750
        %v2868 = vpop.f32.mrf.mxu0
        %v2869 = vadd.f32 0.0, %v2868
        %v2870 = vpop.f32.mrf.mxu0
        %v2871 = vadd.f32 0.0, %v2870
        %2872 = vdwg.mxu0
        %v2873 = vadd.f32 %v2808, 0.0
        %v2874 = vadd.f32 %v2762, %v2810
        %v2875 = vadd.f32 %v2764, %v2813
        %v2876 = vadd.f32 %v2767, %v2815
        %v2877 = vadd.f32 %v2769, %v2818
        %v2878 = vadd.f32 %v2772, %v2820
        %v2879 = vadd.f32 %v2774, %v2823
        %v2880 = vadd.f32 %v2777, %v2825
        %v2881 = vadd.f32 %v2873, %v2856
        %v2882 = vadd.f32 %v2874, %v2859
        %v2883 = vadd.f32 %v2875, %v2861
        %v2884 = vadd.f32 %v2876, %v2864
        %v2885 = vadd.f32 %v2877, %v2866
        %v2886 = vadd.f32 %v2878, %v2869
        %v2887 = vadd.f32 %v2879, %v2871
        %v2888 = vadd.f32 %v2880, 0.0
        %v2889 = vld [vmem:[%s18] sm:$0x1]
        %v2891 = vperm.slane %v2889, 0
        %v2893 = vmul.f32 %v2881, %v2891
        %v2894 = vmul.f32 %v2882, %v2891
        %v2895 = vmul.f32 %v2883, %v2891
        %v2896 = vmul.f32 %v2884, %v2891
        %v2897 = vmul.f32 %v2885, %v2891
        %v2898 = vmul.f32 %v2886, %v2891
        %v2899 = vmul.f32 %v2887, %v2891
        %v2900 = vmul.f32 %v2888, %v2891
        %v2901 = vld [vmem:[%s19] sm:$0x1]
        %v2903 = vperm.slane %v2901, 0
        %v2905 = vadd.f32 %v2893, %v2903
        %v2906 = vadd.f32 %v2894, %v2903
        %v2907 = vadd.f32 %v2895, %v2903
        %v2908 = vadd.f32 %v2896, %v2903
        %v2909 = vadd.f32 %v2897, %v2903
        %v2910 = vadd.f32 %v2898, %v2903
        %v2911 = vadd.f32 %v2899, %v2903
        %v2912 = vadd.f32 %v2900, %v2903
        %v2913 = vmax.f32 %v2905, 0.0
        %v2914 = vmax.f32 %v2906, 0.0
        %v2915 = vmax.f32 %v2907, 0.0
        %v2916 = vmax.f32 %v2908, 0.0
        %v2917 = vmax.f32 %v2909, 0.0
        %v2918 = vmax.f32 %v2910, 0.0
        %v2919 = vmax.f32 %v2911, 0.0
        %v2920 = vmax.f32 %v2912, 0.0
        %v2921 = vpack.c.bf16 %v2914, %v2913
        %v2922 = vpack.c.bf16 %v2916, %v2915
        %v2923 = vpack.c.bf16 %v2918, %v2917
        %v2924 = vpack.c.bf16 %v2920, %v2919
        %v2925 = vld [vmem:[%s20] sm:$0xf]
        %v2926 = vld [vmem:[%s20 + $0x4] sm:$0xf]
        %v2929 = vunpack.c.l.b16 %v2925
        %v2930 = vunpack.c.l.b16 %v2926
        %v2931 = vpack.c.b16 %v2930, %v2929
        %v2934 = vsel %vm1514, %v2921, 0
        %v2937 = vsel %vm1514, %v2922, 0
        %v2940 = vsel %vm1514, %v2923, 0
        %v2943 = vsel %vm1514, %v2924, 0
        %2945 = vmatpush.bf16.msra.mxu0 0
        %2946 = vmatpush.bf16.msra.mxu0 0
        %2947 = vmatpush.bf16.msra.mxu0 0
        %2948 = vmatpush.bf16.msra.mxu0 0
        %2949 = vmatpush.bf16.msra.mxu0 0
        %2950 = vmatpush.bf16.msra.mxu0 0
        %2951 = vmatpush.bf16.msra.mxu0 0
        %2952 = vmatpush.bf16.msra.mxu0 %v2931
        %2953 = vmatmul.bf16.gmra.mxu0 %v2934
        %v2954 = vpop.f32.mrf.mxu0
        %v2955 = vadd.f32 %v2332, %v2954
        %v2956 = vpop.f32.mrf.mxu0
        %v2957 = vadd.f32 %v2333, %v2956
        %2958 = vmatmul.bf16.gmra.mxu0 %v2937
        %v2959 = vpop.f32.mrf.mxu0
        %v2960 = vadd.f32 %v2334, %v2959
        %v2961 = vpop.f32.mrf.mxu0
        %v2962 = vadd.f32 %v2335, %v2961
        %2963 = vmatmul.bf16.gmra.mxu0 %v2940
        %v2964 = vpop.f32.mrf.mxu0
        %v2965 = vadd.f32 %v2336, %v2964
        %v2966 = vpop.f32.mrf.mxu0
        %v2967 = vadd.f32 %v2337, %v2966
        %2968 = vmatmul.bf16.gmra.mxu0 %v2943
        %v2969 = vpop.f32.mrf.mxu0
        %v2970 = vadd.f32 %v2338, %v2969
        %v2971 = vpop.f32.mrf.mxu0
        %v2972 = vadd.f32 %v2339, %v2971
        %2973 = vdwg.mxu0
        %v2974 = vmax.f32 %v2955, 0.0
        %v2975 = vmax.f32 %v2957, 0.0
        %v2976 = vmax.f32 %v2960, 0.0
        %v2977 = vmax.f32 %v2962, 0.0
        %v2978 = vmax.f32 %v2965, 0.0
        %v2979 = vmax.f32 %v2967, 0.0
        %v2980 = vmax.f32 %v2970, 0.0
        %v2981 = vmax.f32 %v2972, 0.0
        %v2982 = vpack.c.bf16 %v2974, %v2974
        %v2983 = vpack.c.bf16 %v2975, %v2975
        %v2984 = vpack.c.bf16 %v2976, %v2976
        %v2985 = vpack.c.bf16 %v2977, %v2977
        %v2986 = vpack.c.bf16 %v2978, %v2978
        %v2987 = vpack.c.bf16 %v2979, %v2979
        %v2988 = vpack.c.bf16 %v2980, %v2980
        %v2989 = vpack.c.bf16 %v2981, %v2981
        %v2990 = vld [vmem:[%s2] sm:$0xf]
        %v2991 = vld [vmem:[%s2 + $0x4] sm:$0xf]
        %v2994 = vunpack.c.l.b16 %v2990
        %v2995 = vunpack.c.l.b16 %v2991
        %v2996 = vpack.c.b16 %v2995, %v2994
        %vm2997 = vcmask 64512
        %v2999 = vsel %vm2997, %v2996, 0
        %vm3001 = vcmask 1043456
        %v3003 = vsel %vm3001, %v2982, 0
        %3005 = vmatpush.bf16.msra.mxu0 0
        %3006 = vmatpush.bf16.msra.mxu0 0
        %3007 = vmatpush.bf16.msra.mxu0 0
        %3008 = vmatpush.bf16.msra.mxu0 0
        %3009 = vmatpush.bf16.msra.mxu0 0
        %3010 = vmatpush.bf16.msra.mxu0 0
        %3011 = vmatpush.bf16.msra.mxu0 0
        %3012 = vmatpush.bf16.msra.mxu0 %v3003
        %3013 = vmatmul.bf16.gmra.mxu0 %v2999
        %v3014 = vpop.f32.mrf.mxu0
        %v3015 = vadd.f32 0.0, %v3014
        %v3016 = vpop.f32.mrf.mxu0
        %v3017 = vadd.f32 0.0, %v3016
        %3018 = vdwg.mxu0
        %v3020 = vsel %vm3001, %v2983, 0
        %3022 = vmatpush.bf16.msra.mxu0 0
        %3023 = vmatpush.bf16.msra.mxu0 0
        %3024 = vmatpush.bf16.msra.mxu0 0
        %3025 = vmatpush.bf16.msra.mxu0 0
        %3026 = vmatpush.bf16.msra.mxu0 0
        %3027 = vmatpush.bf16.msra.mxu0 0
        %3028 = vmatpush.bf16.msra.mxu0 0
        %3029 = vmatpush.bf16.msra.mxu0 %v3020
        %3030 = vmatmul.bf16.gmra.mxu0 %v2999
        %v3031 = vpop.f32.mrf.mxu0
        %v3032 = vadd.f32 0.0, %v3031
        %v3033 = vpop.f32.mrf.mxu0
        %v3034 = vadd.f32 0.0, %v3033
        %3035 = vdwg.mxu0
        %v3037 = vsel %vm3001, %v2984, 0
        %3039 = vmatpush.bf16.msra.mxu0 0
        %3040 = vmatpush.bf16.msra.mxu0 0
        %3041 = vmatpush.bf16.msra.mxu0 0
        %3042 = vmatpush.bf16.msra.mxu0 0
        %3043 = vmatpush.bf16.msra.mxu0 0
        %3044 = vmatpush.bf16.msra.mxu0 0
        %3045 = vmatpush.bf16.msra.mxu0 0
        %3046 = vmatpush.bf16.msra.mxu0 %v3037
        %3047 = vmatmul.bf16.gmra.mxu0 %v2999
        %v3048 = vpop.f32.mrf.mxu0
        %v3049 = vadd.f32 0.0, %v3048
        %v3050 = vpop.f32.mrf.mxu0
        %v3051 = vadd.f32 0.0, %v3050
        %3052 = vdwg.mxu0
        %v3054 = vsel %vm3001, %v2985, 0
        %3056 = vmatpush.bf16.msra.mxu0 0
        %3057 = vmatpush.bf16.msra.mxu0 0
        %3058 = vmatpush.bf16.msra.mxu0 0
        %3059 = vmatpush.bf16.msra.mxu0 0
        %3060 = vmatpush.bf16.msra.mxu0 0
        %3061 = vmatpush.bf16.msra.mxu0 0
        %3062 = vmatpush.bf16.msra.mxu0 0
        %3063 = vmatpush.bf16.msra.mxu0 %v3054
        %3064 = vmatmul.bf16.gmra.mxu0 %v2999
        %v3065 = vpop.f32.mrf.mxu0
        %v3066 = vadd.f32 0.0, %v3065
        %v3067 = vpop.f32.mrf.mxu0
        %v3068 = vadd.f32 0.0, %v3067
        %3069 = vdwg.mxu0
        %v3071 = vsel %vm3001, %v2986, 0
        %3073 = vmatpush.bf16.msra.mxu0 0
        %3074 = vmatpush.bf16.msra.mxu0 0
        %3075 = vmatpush.bf16.msra.mxu0 0
        %3076 = vmatpush.bf16.msra.mxu0 0
        %3077 = vmatpush.bf16.msra.mxu0 0
        %3078 = vmatpush.bf16.msra.mxu0 0
        %3079 = vmatpush.bf16.msra.mxu0 0
        %3080 = vmatpush.bf16.msra.mxu0 %v3071
        %3081 = vmatmul.bf16.gmra.mxu0 %v2999
        %v3082 = vpop.f32.mrf.mxu0
        %v3083 = vadd.f32 0.0, %v3082
        %v3084 = vpop.f32.mrf.mxu0
        %v3085 = vadd.f32 0.0, %v3084
        %3086 = vdwg.mxu0
        %v3088 = vsel %vm3001, %v2987, 0
        %3090 = vmatpush.bf16.msra.mxu0 0
        %3091 = vmatpush.bf16.msra.mxu0 0
        %3092 = vmatpush.bf16.msra.mxu0 0
        %3093 = vmatpush.bf16.msra.mxu0 0
        %3094 = vmatpush.bf16.msra.mxu0 0
        %3095 = vmatpush.bf16.msra.mxu0 0
        %3096 = vmatpush.bf16.msra.mxu0 0
        %3097 = vmatpush.bf16.msra.mxu0 %v3088
        %3098 = vmatmul.bf16.gmra.mxu0 %v2999
        %v3099 = vpop.f32.mrf.mxu0
        %v3100 = vadd.f32 0.0, %v3099
        %v3101 = vpop.f32.mrf.mxu0
        %v3102 = vadd.f32 0.0, %v3101
        %3103 = vdwg.mxu0
        %v3105 = vsel %vm3001, %v2988, 0
        %3107 = vmatpush.bf16.msra.mxu0 0
        %3108 = vmatpush.bf16.msra.mxu0 0
        %3109 = vmatpush.bf16.msra.mxu0 0
        %3110 = vmatpush.bf16.msra.mxu0 0
        %3111 = vmatpush.bf16.msra.mxu0 0
        %3112 = vmatpush.bf16.msra.mxu0 0
        %3113 = vmatpush.bf16.msra.mxu0 0
        %3114 = vmatpush.bf16.msra.mxu0 %v3105
        %3115 = vmatmul.bf16.gmra.mxu0 %v2999
        %v3116 = vpop.f32.mrf.mxu0
        %v3117 = vadd.f32 0.0, %v3116
        %v3118 = vpop.f32.mrf.mxu0
        %v3119 = vadd.f32 0.0, %v3118
        %3120 = vdwg.mxu0
        %v3122 = vsel %vm3001, %v2989, 0
        %3124 = vmatpush.bf16.msra.mxu0 0
        %3125 = vmatpush.bf16.msra.mxu0 0
        %3126 = vmatpush.bf16.msra.mxu0 0
        %3127 = vmatpush.bf16.msra.mxu0 0
        %3128 = vmatpush.bf16.msra.mxu0 0
        %3129 = vmatpush.bf16.msra.mxu0 0
        %3130 = vmatpush.bf16.msra.mxu0 0
        %3131 = vmatpush.bf16.msra.mxu0 %v3122
        %3132 = vmatmul.bf16.gmra.mxu0 %v2999
        %v3133 = vpop.f32.mrf.mxu0
        %v3134 = vadd.f32 0.0, %v3133
        %v3135 = vpop.f32.mrf.mxu0
        %v3136 = vadd.f32 0.0, %v3135
        %3137 = vdwg.mxu0
        %v3138 = vadd.f32 %v2292, %v3015
        %v3139 = vadd.f32 %v2293, %v3017
        %v3140 = vadd.f32 %v2294, %v3015
        %v3141 = vadd.f32 %v2295, %v3017
        %v3142 = vadd.f32 %v2296, %v3032
        %v3143 = vadd.f32 %v2297, %v3034
        %v3144 = vadd.f32 %v2298, %v3032
        %v3145 = vadd.f32 %v2299, %v3034
        %v3146 = vadd.f32 %v2300, %v3049
        %v3147 = vadd.f32 %v2301, %v3051
        %v3148 = vadd.f32 %v2302, %v3049
        %v3149 = vadd.f32 %v2303, %v3051
        %v3150 = vadd.f32 %v2304, %v3066
        %v3151 = vadd.f32 %v2305, %v3068
        %v3152 = vadd.f32 %v2306, %v3066
        %v3153 = vadd.f32 %v2307, %v3068
        %v3154 = vadd.f32 %v2308, %v3083
        %v3155 = vadd.f32 %v2309, %v3085
        %v3156 = vadd.f32 %v2310, %v3083
        %v3157 = vadd.f32 %v2311, %v3085
        %v3158 = vadd.f32 %v2312, %v3100
        %v3159 = vadd.f32 %v2313, %v3102
        %v3160 = vadd.f32 %v2314, %v3100
        %v3161 = vadd.f32 %v2315, %v3102
        %v3162 = vadd.f32 %v2316, %v3117
        %v3163 = vadd.f32 %v2317, %v3119
        %v3164 = vadd.f32 %v2318, %v3117
        %v3165 = vadd.f32 %v2319, %v3119
        %v3166 = vadd.f32 %v2320, %v3134
        %v3167 = vadd.f32 %v2321, %v3136
        %v3168 = vadd.f32 %v2322, %v3134
        %v3169 = vadd.f32 %v2323, %v3136
        %3170 = vst.msk [vmem:[%s691] sm:$0xff] %vm866, %v3138
        %3171 = vst.msk [vmem:[%s691 + $0x8] sm:$0xff] %vm866, %v3139
        %3172 = vst.msk [vmem:[%s691 + $0x10] sm:$0xff] %vm866, %v3140
        %3173 = vst.msk [vmem:[%s691 + $0x18] sm:$0xff] %vm866, %v3141
        %3174 = vst.msk [vmem:[%s691 + $0x20] sm:$0xff] %vm866, %v3142
        %3175 = vst.msk [vmem:[%s691 + $0x28] sm:$0xff] %vm866, %v3143
        %3176 = vst.msk [vmem:[%s691 + $0x30] sm:$0xff] %vm866, %v3144
        %3177 = vst.msk [vmem:[%s691 + $0x38] sm:$0xff] %vm866, %v3145
        %3178 = vst.msk [vmem:[%s691 + $0x40] sm:$0xff] %vm866, %v3146
        %3179 = vst.msk [vmem:[%s691 + $0x48] sm:$0xff] %vm866, %v3147
        %3180 = vst.msk [vmem:[%s691 + $0x50] sm:$0xff] %vm866, %v3148
        %3181 = vst.msk [vmem:[%s691 + $0x58] sm:$0xff] %vm866, %v3149
        %3182 = vst.msk [vmem:[%s691 + $0x60] sm:$0xff] %vm866, %v3150
        %3183 = vst.msk [vmem:[%s691 + $0x68] sm:$0xff] %vm866, %v3151
        %3184 = vst.msk [vmem:[%s691 + $0x70] sm:$0xff] %vm866, %v3152
        %3185 = vst.msk [vmem:[%s691 + $0x78] sm:$0xff] %vm866, %v3153
        %3186 = vst.msk [vmem:[%s691 + $0x80] sm:$0xff] %vm866, %v3154
        %3187 = vst.msk [vmem:[%s691 + $0x88] sm:$0xff] %vm866, %v3155
        %3188 = vst.msk [vmem:[%s691 + $0x90] sm:$0xff] %vm866, %v3156
        %3189 = vst.msk [vmem:[%s691 + $0x98] sm:$0xff] %vm866, %v3157
        %3190 = vst.msk [vmem:[%s691 + $0xa0] sm:$0xff] %vm866, %v3158
        %3191 = vst.msk [vmem:[%s691 + $0xa8] sm:$0xff] %vm866, %v3159
        %3192 = vst.msk [vmem:[%s691 + $0xb0] sm:$0xff] %vm866, %v3160
        %3193 = vst.msk [vmem:[%s691 + $0xb8] sm:$0xff] %vm866, %v3161
        %3194 = vst.msk [vmem:[%s691 + $0xc0] sm:$0xff] %vm866, %v3162
        %3195 = vst.msk [vmem:[%s691 + $0xc8] sm:$0xff] %vm866, %v3163
        %3196 = vst.msk [vmem:[%s691 + $0xd0] sm:$0xff] %vm866, %v3164
        %3197 = vst.msk [vmem:[%s691 + $0xd8] sm:$0xff] %vm866, %v3165
        %3198 = vst.msk [vmem:[%s691 + $0xe0] sm:$0xff] %vm866, %v3166
        %3199 = vst.msk [vmem:[%s691 + $0xe8] sm:$0xff] %vm866, %v3167
        %3200 = vst.msk [vmem:[%s691 + $0xf0] sm:$0xff] %vm866, %v3168
        %3201 = vst.msk [vmem:[%s691 + $0xf8] sm:$0xff] %vm866, %v3169
        %s3202 = sand.u32 %s497, 1
        %s3203 = scalar_lea.sflag [#allocation4], %s3202
        %s3204 = sand.u32 %s497, 1
        %s3205 = smul.addr %s3204, 256
        %s3206 = scalar_lea.vmem [#allocation5], %s3205
        // Predicated region
        $region109: #{model.7} parent=103 // pred_check
          %p3207 = pneg %p507
        $region110: #{model.7} parent=103 // pred_check_branch
          %3209 = sbr.rel (%p3207) target = $region112
        $region111: #{model.7} parent=103 // pred_region
          %3211 = vsyncadd %s3203, 0
          %s3212 = smul.addr %s38, 32
          %s3213 = smul.addr %s3212, 8
          %s3214 = scalar_lea.hbm %s21, %s3213
          %s3215 = sshll.u32 %s3206, 4
          %s3216 = int_to_ptr.vmem [resolvable:$true] %s3215
          %s3217 = sshll.u32 %s3214, 4
          %s3218 = int_to_ptr.hbm [resolvable:$true] %s3217
          %3223 = dma.vmem_to_hbm [thread:$0]  %s3216, 4096, %s3218, %s3203, 128, 128, 8
        $region112: #{model.7} parent=103 // pred_fallthru
          _
      $region104: #{model.7} parent=5 // pred_fallthru
        _
      %p3224 = scmp.le.s32.totalorder 2, %s33
      // Predicated region
      $region113: #{model.7} parent=5 // pred_check
        %p3225 = pneg %p3224
      $region114: #{model.7} parent=5 // pred_check_branch
        %3227 = sbr.rel (%p3225) target = $region116
      $region115: #{model.7} parent=5 // pred_region
        %s3228 = ssub.s32 %s33, 2
        // Predicated region
        $region117: #{model.7} parent=115 // pred_check
          %p3229 = pneg %p513
        $region118: #{model.7} parent=115 // pred_check_branch
          %3231 = sbr.rel (%p3229) target = $region120
        $region119: #{model.7} parent=115 // pred_region
          %s3232 = sand.u32 %s498, 1
          %s3233 = scalar_lea.sflag [#allocation4], %s3232
          %s3234 = sand.u32 %s498, 1
          %s3235 = smul.addr %s3234, 256
          %s3236 = scalar_lea.vmem [#allocation5], %s3235
          %3238 = dma.done %s3233, 4096
        $region120: #{model.7} parent=115 // pred_fallthru
          _
      $region116: #{model.7} parent=5 // pred_fallthru
        _
    $region6: #{model.7} parent=1 // loop_footer
      %s37 = sadd.s32 1, %s33
    $region7: #{model.7} parent=1 // loop_footer_branch
      %32 = sbr.rel target = $region3
    $region8: #{model.7} parent=1 // loop_exit
      _
    %3239 = vsyncpa [#allocation3], 1
    %s3240 = scalar_lea.sflag [#allocation3], 1
    %3241 = vsyncpa %s3240, 1
    %3242 = vsyncpa [#allocation4], 1
    %s3243 = scalar_lea.sflag [#allocation4], 1
    %3244 = vsyncpa %s3243, 1

</llo_original>
